<compile_context>
chip_gen: v6e
topology: v6e:2x2x1
jax: 0.10.0
libtpu: 0.0.40
codegen_flags: <defaults>
</compile_context>

<pallas_src>
import functools

import jax
import jax.numpy as jnp
from jax import lax
from jax.experimental import pallas as pl
from jax.experimental.pallas import tpu as pltpu


# ----------------------------------------------------------------------------- BlockSpec helpers

def _full_spec(shape):
    """Whole array resident, identical block for every grid step (no re-DMA)."""
    zeros = (0,) * len(shape)
    return pl.BlockSpec(tuple(shape), lambda b: zeros)


def _batch_spec(shape):
    """Block the leading (batch) dim only; last dims stay full (8/128-safe)."""
    rest = (0,) * (len(shape) - 1)
    return pl.BlockSpec((1,) + tuple(shape[1:]), lambda b: (b,) + rest)


# ----------------------------------------------------------------------------- fused ViT encoder kernel

def _encoder_kernel(patches_ref, pos_bias_ref, patch_w_ref,
                    ln1_g_ref, ln1_b_ref, qkv_w_ref, out_w_ref, out_b_ref,
                    ln2_g_ref, ln2_b_ref, ff1_w_ref, ff1_b_ref, ff2_w_ref, ff2_b_ref,
                    dec_w_ref, dec_b_ref, o_ref, *, depth, heads, dim_head, eps):
    """One batch element, fully VMEM-resident.

    patches_ref : (1, N, patch_dim)  N = num_patches + 1, row 0 all-zero (cls slot)
    pos_bias_ref: (1, N, dim)        row 0 = cls_token + pos[0]; rows 1.. = pos + patch_bias
    per-layer params are stacked along a leading `depth` axis.
    o_ref       : (1, N, patch_dim)  decoded tokens (row 0 = decoded cls, dropped by caller)
    """
    inner = heads * dim_head
    scale = dim_head ** -0.5

    def layernorm(x, g, b):
        mu = jnp.mean(x, axis=-1, keepdims=True)
        var = jnp.mean((x - mu) * (x - mu), axis=-1, keepdims=True)
        return (x - mu) * lax.rsqrt(var + eps) * g + b

    # patch embedding; cls token, pos embedding and the patch-linear bias are all
    # pre-folded into pos_bias, so a single matmul + add builds the token matrix.
    x = jnp.dot(patches_ref[0], patch_w_ref[...],
                preferred_element_type=jnp.float32) + pos_bias_ref[0]        # (N, dim)

    for l in range(depth):                      # static unroll (depth is tiny)
        # ---------------- attention ----------------
        xn = layernorm(x, ln1_g_ref[l], ln1_b_ref[l])
        qkv = jnp.dot(xn, qkv_w_ref[l], preferred_element_type=jnp.float32)  # (N, 3*inner)

        head_outs = []
        for h in range(heads):                  # static unroll over heads
            q = qkv[:, h * dim_head:(h + 1) * dim_head] * scale
            k = qkv[:, inner + h * dim_head:inner + (h + 1) * dim_head]
            v = qkv[:, 2 * inner + h * dim_head:2 * inner + (h + 1) * dim_head]
            # q @ k^T as an NT matmul (contract last dims) -- no explicit transpose.
            s = lax.dot_general(q, k, (((1,), (1,)), ((), ())),
                                preferred_element_type=jnp.float32)          # (N, N)
            s = s - jnp.max(s, axis=-1, keepdims=True)
            p = jnp.exp(s)
            p = p * pl.reciprocal(jnp.sum(p, axis=-1, keepdims=True), approx=True)
            head_outs.append(jnp.dot(p, v, preferred_element_type=jnp.float32))
        attn = jnp.concatenate(head_outs, axis=-1)                           # (N, inner)
        attn = jnp.dot(attn, out_w_ref[l],
                       preferred_element_type=jnp.float32) + out_b_ref[l]
        x = x + attn

        # ---------------- feed-forward ----------------
        xn = layernorm(x, ln2_g_ref[l], ln2_b_ref[l])
        h1 = jnp.dot(xn, ff1_w_ref[l], preferred_element_type=jnp.float32) + ff1_b_ref[l]
        h1 = 0.5 * h1 * (1.0 + lax.erf(h1 * 0.7071067811865476))             # exact GELU
        h2 = jnp.dot(h1, ff2_w_ref[l], preferred_element_type=jnp.float32) + ff2_b_ref[l]
        x = x + h2

    # decoder Linear(dim, patch_dim); cls row decoded too, caller drops it.
    o_ref[0] = jnp.dot(x, dec_w_ref[...],
                       preferred_element_type=jnp.float32) + dec_b_ref[...]


def vit_encode_decode(patches, params, cfg):
    """patches: (B, n, patch_dim) -> decoded tokens (B, n, patch_dim)."""
    B, n, patch_dim = patches.shape
    depth, heads, dim_head = cfg["depth"], cfg["heads"], cfg["dim_head"]
    N = n + 1

    # Row 0 of the patch matrix is the (zero) cls slot; cls token, pos embedding
    # and the patch-embedding bias are folded into a single additive term.
    patches_pad = jnp.pad(patches, ((0, 0), (1, 0), (0, 0)))                  # (B, N, pd)
    pos = params["pos_embedding"][:, :N]                                      # (1, N, dim)
    pos_bias = jnp.concatenate(
        [pos[:, :1] + params["cls_token"],
         pos[:, 1:] + params["patch_b"][None, None, :]], axis=1)              # (1, N, dim)

    L = params["layers"]
    stack = lambda name: jnp.stack([lp[name] for lp in L])                    # (depth, K, M)
    stackv = lambda name: jnp.stack([lp[name].reshape(1, -1) for lp in L])    # (depth, 1, M)

    weight_args = [
        params["patch_w"],
        stackv("ln1_g"), stackv("ln1_b"), stack("qkv_w"),
        stack("out_w"), stackv("out_b"),
        stackv("ln2_g"), stackv("ln2_b"),
        stack("ff1_w"), stackv("ff1_b"), stack("ff2_w"), stackv("ff2_b"),
        params["dec_w"], params["dec_b"].reshape(1, -1),
    ]

    kernel = functools.partial(_encoder_kernel, depth=depth, heads=heads,
                               dim_head=dim_head, eps=1e-5)
    out = pl.pallas_call(
        kernel,
        out_shape=jax.ShapeDtypeStruct((B, N, patch_dim), jnp.float32),
        grid=(B,),
        in_specs=[_batch_spec(patches_pad.shape), _full_spec(pos_bias.shape)]
                 + [_full_spec(a.shape) for a in weight_args],
        out_specs=_batch_spec((B, N, patch_dim)),
        compiler_params=pltpu.CompilerParams(dimension_semantics=("parallel",)),
    )(patches_pad, pos_bias, *weight_args)

    return out[:, 1:]                                                         # drop cls


# ----------------------------------------------------------------------------- conv head kernels (NHWC, shifted-window matmuls)

def _conv3x3_relu_kernel(xp_ref, w_ref, b_ref, o_ref):
    """3x3 conv (padding done by caller) + bias + ReLU on one batch element.
    xp_ref: (1, H+2, W+2, Cin)  w_ref: (9, Cin, Cout)  b_ref: (1, Cout)
    o_ref : (1, H, W, Cout)
    """
    H, W, Cout = o_ref.shape[1], o_ref.shape[2], o_ref.shape[3]
    Cin = xp_ref.shape[3]
    xp = xp_ref[0]                                           # (H+2, W+2, Cin) in VMEM
    acc = None
    for kh in range(3):
        for kw in range(3):
            xs = xp[kh:kh + H, kw:kw + W, :].reshape(H * W, Cin)
            d = jnp.dot(xs, w_ref[kh * 3 + kw], preferred_element_type=jnp.float32)
            acc = d if acc is None else acc + d
    y = jnp.maximum(acc + b_ref[...], 0.0)
    o_ref[0] = y.reshape(H, W, Cout)


def _conv3x3_relu_1x1_kernel(xp_ref, w2_ref, b2_ref, w3_ref, b3_ref, o_ref):
    """Fused 3x3 conv + ReLU + 1x1 conv on one batch element (NHWC)."""
    H, W, NC = o_ref.shape[1], o_ref.shape[2], o_ref.shape[3]
    Cin = xp_ref.shape[3]
    xp = xp_ref[0]
    acc = None
    for kh in range(3):
        for kw in range(3):
            xs = xp[kh:kh + H, kw:kw + W, :].reshape(H * W, Cin)
            d = jnp.dot(xs, w2_ref[kh * 3 + kw], preferred_element_type=jnp.float32)
            acc = d if acc is None else acc + d
    h = jnp.maximum(acc + b2_ref[...], 0.0)
    y = jnp.dot(h, w3_ref[...], preferred_element_type=jnp.float32) + b3_ref[...]
    o_ref[0] = y.reshape(H, W, NC)


def conv3x3_relu_nhwc(x, w, b):
    """x: (B,H,W,Cin) NHWC; w: (Cout,Cin,3,3) torch layout; stride=1, padding=1."""
    B, H, W, Cin = x.shape
    Cout = w.shape[0]
    xp = jnp.pad(x, ((0, 0), (1, 1), (1, 1), (0, 0)))
    wm = w.transpose(2, 3, 1, 0).reshape(9, Cin, Cout)
    return pl.pallas_call(
        _conv3x3_relu_kernel,
        out_shape=jax.ShapeDtypeStruct((B, H, W, Cout), jnp.float32),
        grid=(B,),
        in_specs=[_batch_spec(xp.shape), _full_spec(wm.shape), _full_spec((1, Cout))],
        out_specs=_batch_spec((B, H, W, Cout)),
        compiler_params=pltpu.CompilerParams(dimension_semantics=("parallel",)),
    )(xp, wm, b.reshape(1, Cout))


def conv3x3_relu_conv1x1_nhwc(x, w2, b2, w3, b3):
    """Fused (3x3 conv, pad=1) + ReLU + (1x1 conv).  NHWC in/out."""
    B, H, W, Cin = x.shape
    Cmid = w2.shape[0]
    NC = w3.shape[0]
    xp = jnp.pad(x, ((0, 0), (1, 1), (1, 1), (0, 0)))
    w2m = w2.transpose(2, 3, 1, 0).reshape(9, Cin, Cmid)
    w3m = w3.reshape(NC, Cmid).T
    return pl.pallas_call(
        _conv3x3_relu_1x1_kernel,
        out_shape=jax.ShapeDtypeStruct((B, H, W, NC), jnp.float32),
        grid=(B,),
        in_specs=[_batch_spec(xp.shape), _full_spec(w2m.shape), _full_spec((1, Cmid)),
                  _full_spec(w3m.shape), _full_spec((1, NC))],
        out_specs=_batch_spec((B, H, W, NC)),
        compiler_params=pltpu.CompilerParams(dimension_semantics=("parallel",)),
    )(xp, w2m, b2.reshape(1, Cmid), w3m, b3.reshape(1, NC))


# ----------------------------------------------------------------------------- model

CFG = dict(image_size=16, patch_size=4, dim=32, depth=2, heads=4, dim_head=8,
           mlp_dim=64, num_classes=3, channels=3)


def init_params(key, cfg):
    c = cfg
    p1 = c["patch_size"]
    patch_dim = c["channels"] * p1 * p1
    num_patches = (c["image_size"] // p1) ** 2
    inner_dim = c["heads"] * c["dim_head"]

    keys = iter(jax.random.split(key, 64))
    nrm = lambda shape, s=0.02: (s * jax.random.normal(next(keys), shape)).astype(jnp.float32)

    params = {
        "pos_embedding": nrm((1, num_patches + 1, c["dim"]), 1.0),
        "cls_token": nrm((1, 1, c["dim"]), 1.0),
        "patch_w": nrm((patch_dim, c["dim"])),
        "patch_b": nrm((c["dim"],)),
        "dec_w": nrm((c["dim"], patch_dim)),
        "dec_b": nrm((patch_dim,)),
        "conv1_w": nrm((64, c["channels"], 3, 3)),
        "conv1_b": nrm((64,)),
        "conv2_w": nrm((32, 64, 3, 3)),
        "conv2_b": nrm((32,)),
        "conv3_w": nrm((c["num_classes"], 32, 1, 1)),
        "conv3_b": nrm((c["num_classes"],)),
        "layers": [],
    }
    for _ in range(c["depth"]):
        params["layers"].append({
            "ln1_g": jnp.ones((c["dim"],), jnp.float32),
            "ln1_b": jnp.zeros((c["dim"],), jnp.float32),
            "qkv_w": nrm((c["dim"], inner_dim * 3)),          # bias=False in torch
            "out_w": nrm((inner_dim, c["dim"])),
            "out_b": nrm((c["dim"],)),
            "ln2_g": jnp.ones((c["dim"],), jnp.float32),
            "ln2_b": jnp.zeros((c["dim"],), jnp.float32),
            "ff1_w": nrm((c["dim"], c["mlp_dim"])),
            "ff1_b": nrm((c["mlp_dim"],)),
            "ff2_w": nrm((c["mlp_dim"], c["dim"])),
            "ff2_b": nrm((c["dim"],)),
        })
    return params


def vit_segmentation_forward(params, img, cfg):
    """img: (B, C, H, W) NCHW float32 -> (B, num_classes, H, W)."""
    B, C, H, W = img.shape
    p = cfg["patch_size"]
    h, w = H // p, W // p
    n = h * w

    # patchify: 'b c (h p1) (w p2) -> b (h w) (p1 p2 c)'   (pure data movement)
    patches = img.reshape(B, C, h, p, w, p).transpose(0, 2, 4, 3, 5, 1).reshape(B, n, p * p * C)

    # fused patch-embed + cls/pos + transformer + decoder linear (1 pallas_call)
    tokens = vit_encode_decode(patches, params, cfg)                          # (B, n, p*p*C)

    # un-patchify straight to NHWC: 'b (h w) (p1 p2 c) -> b (h p1) (w p2) c'
    y = tokens.reshape(B, h, w, p, p, C).transpose(0, 1, 3, 2, 4, 5).reshape(B, h * p, w * p, C)

    # conv head, NHWC end-to-end (2 pallas_calls)
    y = conv3x3_relu_nhwc(y, params["conv1_w"], params["conv1_b"])
    y = conv3x3_relu_conv1x1_nhwc(y, params["conv2_w"], params["conv2_b"],
                                  params["conv3_w"], params["conv3_b"])
    return y.transpose(0, 3, 1, 2)                                            # NHWC -> NCHW


# ----------------------------------------------------------------------------- main

if __name__ == "__main__":
    key = jax.random.PRNGKey(0)
    pkey, xkey = jax.random.split(key)

    params = init_params(pkey, CFG)
    img = jax.random.normal(
        xkey, (2, CFG["channels"], CFG["image_size"], CFG["image_size"]), dtype=jnp.float32)

    fwd = jax.jit(lambda prm, x: vit_segmentation_forward(prm, x, CFG))
    out = jax.block_until_ready(fwd(params, img))

    assert out.shape == (2, CFG["num_classes"], CFG["image_size"], CFG["image_size"]), out.shape
    assert out.dtype == jnp.float32
    print("KERNEL_OK")
</pallas_src>

<mosaic_0001>
module attributes {stable_mosaic.version = 11 : i64} {
  func.func @_encoder_kernel(%arg0: i32, %arg1: memref<1x17x48xf32, #tpu.memory_space<vmem>>, %arg2: memref<1x17x32xf32, #tpu.memory_space<vmem>>, %arg3: memref<48x32xf32, #tpu.memory_space<vmem>>, %arg4: memref<2x1x32xf32, #tpu.memory_space<vmem>>, %arg5: memref<2x1x32xf32, #tpu.memory_space<vmem>>, %arg6: memref<2x32x96xf32, #tpu.memory_space<vmem>>, %arg7: memref<2x32x32xf32, #tpu.memory_space<vmem>>, %arg8: memref<2x1x32xf32, #tpu.memory_space<vmem>>, %arg9: memref<2x1x32xf32, #tpu.memory_space<vmem>>, %arg10: memref<2x1x32xf32, #tpu.memory_space<vmem>>, %arg11: memref<2x32x64xf32, #tpu.memory_space<vmem>>, %arg12: memref<2x1x64xf32, #tpu.memory_space<vmem>>, %arg13: memref<2x64x32xf32, #tpu.memory_space<vmem>>, %arg14: memref<2x1x32xf32, #tpu.memory_space<vmem>>, %arg15: memref<32x48xf32, #tpu.memory_space<vmem>>, %arg16: memref<1x48xf32, #tpu.memory_space<vmem>>, %arg17: memref<1x17x48xf32, #tpu.memory_space<vmem>>) attributes {dimension_semantics = [#tpu.dimension_semantics<parallel>], iteration_bounds = array<i64: 2>, scalar_prefetch = 0 : i64, scratch_operands = 0 : i64, tpu.core_type = #tpu.core_type<tc>, window_params = [{transform_indices = @transform_0, window_bounds = array<i64: 1, 17, 48>}, {pipeline_mode = #tpu.pipeline_mode<synchronous>, transform_indices = @transform_1, window_bounds = array<i64: 1, 17, 32>}, {pipeline_mode = #tpu.pipeline_mode<synchronous>, transform_indices = @transform_2, window_bounds = array<i64: 48, 32>}, {pipeline_mode = #tpu.pipeline_mode<synchronous>, transform_indices = @transform_3, window_bounds = array<i64: 2, 1, 32>}, {pipeline_mode = #tpu.pipeline_mode<synchronous>, transform_indices = @transform_4, window_bounds = array<i64: 2, 1, 32>}, {pipeline_mode = #tpu.pipeline_mode<synchronous>, transform_indices = @transform_5, window_bounds = array<i64: 2, 32, 96>}, {pipeline_mode = #tpu.pipeline_mode<synchronous>, transform_indices = @transform_6, window_bounds = array<i64: 2, 32, 32>}, {pipeline_mode = #tpu.pipeline_mode<synchronous>, transform_indices = @transform_7, window_bounds = array<i64: 2, 1, 32>}, {pipeline_mode = #tpu.pipeline_mode<synchronous>, transform_indices = @transform_8, window_bounds = array<i64: 2, 1, 32>}, {pipeline_mode = #tpu.pipeline_mode<synchronous>, transform_indices = @transform_9, window_bounds = array<i64: 2, 1, 32>}, {pipeline_mode = #tpu.pipeline_mode<synchronous>, transform_indices = @transform_10, window_bounds = array<i64: 2, 32, 64>}, {pipeline_mode = #tpu.pipeline_mode<synchronous>, transform_indices = @transform_11, window_bounds = array<i64: 2, 1, 64>}, {pipeline_mode = #tpu.pipeline_mode<synchronous>, transform_indices = @transform_12, window_bounds = array<i64: 2, 64, 32>}, {pipeline_mode = #tpu.pipeline_mode<synchronous>, transform_indices = @transform_13, window_bounds = array<i64: 2, 1, 32>}, {pipeline_mode = #tpu.pipeline_mode<synchronous>, transform_indices = @transform_14, window_bounds = array<i64: 32, 48>}, {pipeline_mode = #tpu.pipeline_mode<synchronous>, transform_indices = @transform_15, window_bounds = array<i64: 1, 48>}, {transform_indices = @transform_16, window_bounds = array<i64: 1, 17, 48>}]} {
    %c0 = arith.constant 0 : index
    %c0_0 = arith.constant 0 : index
    %c0_1 = arith.constant 0 : index
    %0 = vector.load %arg1[%c0, %c0_0, %c0_1] : memref<1x17x48xf32, #tpu.memory_space<vmem>>, vector<1x17x48xf32>
    %1 = vector.shape_cast %0 : vector<1x17x48xf32> to vector<17x48xf32>
    %c0_2 = arith.constant 0 : index
    %c0_3 = arith.constant 0 : index
    %2 = vector.load %arg3[%c0_2, %c0_3] : memref<48x32xf32, #tpu.memory_space<vmem>>, vector<48x32xf32>
    %cst = arith.constant dense<0.000000e+00> : vector<17x32xf32>
    %3 = tpu.matmul %1, %2, %cst {dimension_numbers = #tpu.dot_dimension_numbers<[1], [0], [0], [1], [0, 0, 1, 1], [], []>} : vector<17x48xf32>, vector<48x32xf32>, vector<17x32xf32> -> vector<17x32xf32>
    %c0_4 = arith.constant 0 : index
    %c0_5 = arith.constant 0 : index
    %c0_6 = arith.constant 0 : index
    %4 = vector.load %arg2[%c0_4, %c0_5, %c0_6] : memref<1x17x32xf32, #tpu.memory_space<vmem>>, vector<1x17x32xf32>
    %5 = vector.shape_cast %4 : vector<1x17x32xf32> to vector<17x32xf32>
    %6 = arith.addf %3, %5 : vector<17x32xf32>
    %c0_7 = arith.constant 0 : index
    %c0_8 = arith.constant 0 : index
    %c0_9 = arith.constant 0 : index
    %7 = vector.load %arg4[%c0_7, %c0_8, %c0_9] : memref<2x1x32xf32, #tpu.memory_space<vmem>>, vector<1x1x32xf32>
    %8 = vector.shape_cast %7 : vector<1x1x32xf32> to vector<1x32xf32>
    %c0_10 = arith.constant 0 : index
    %c0_11 = arith.constant 0 : index
    %c0_12 = arith.constant 0 : index
    %9 = vector.load %arg5[%c0_10, %c0_11, %c0_12] : memref<2x1x32xf32, #tpu.memory_space<vmem>>, vector<1x1x32xf32>
    %10 = vector.shape_cast %9 : vector<1x1x32xf32> to vector<1x32xf32>
    %cst_13 = arith.constant dense<0.000000e+00> : vector<17xf32>
    %11 = vector.multi_reduction <add>, %6, %cst_13 [1] : vector<17x32xf32> to vector<17xf32>
    %12 = vector.shape_cast %11 : vector<17xf32> to vector<17x1xf32>
    %cst_14 = arith.constant 3.200000e+01 : f32
    %13 = vector.broadcast %cst_14 : f32 to vector<17x1xf32>
    %14 = arith.divf %12, %13 : vector<17x1xf32>
    %15 = vector.broadcast %14 : vector<17x1xf32> to vector<17x32xf32>
    %16 = arith.subf %6, %15 : vector<17x32xf32>
    %17 = vector.broadcast %14 : vector<17x1xf32> to vector<17x32xf32>
    %18 = arith.subf %6, %17 : vector<17x32xf32>
    %19 = arith.mulf %16, %18 : vector<17x32xf32>
    %cst_15 = arith.constant dense<0.000000e+00> : vector<17xf32>
    %20 = vector.multi_reduction <add>, %19, %cst_15 [1] : vector<17x32xf32> to vector<17xf32>
    %21 = vector.shape_cast %20 : vector<17xf32> to vector<17x1xf32>
    %cst_16 = arith.constant 3.200000e+01 : f32
    %22 = vector.broadcast %cst_16 : f32 to vector<17x1xf32>
    %23 = arith.divf %21, %22 : vector<17x1xf32>
    %24 = vector.broadcast %14 : vector<17x1xf32> to vector<17x32xf32>
    %25 = arith.subf %6, %24 : vector<17x32xf32>
    %cst_17 = arith.constant 9.99999974E-6 : f32
    %26 = vector.broadcast %cst_17 : f32 to vector<17x1xf32>
    %27 = arith.addf %23, %26 : vector<17x1xf32>
    %28 = math.rsqrt %27 : vector<17x1xf32>
    %29 = vector.broadcast %28 : vector<17x1xf32> to vector<17x32xf32>
    %30 = arith.mulf %25, %29 : vector<17x32xf32>
    %31 = vector.broadcast %8 : vector<1x32xf32> to vector<17x32xf32>
    %32 = arith.mulf %30, %31 : vector<17x32xf32>
    %33 = vector.broadcast %10 : vector<1x32xf32> to vector<17x32xf32>
    %34 = arith.addf %32, %33 : vector<17x32xf32>
    %c0_18 = arith.constant 0 : index
    %c0_19 = arith.constant 0 : index
    %c0_20 = arith.constant 0 : index
    %35 = vector.load %arg6[%c0_18, %c0_19, %c0_20] : memref<2x32x96xf32, #tpu.memory_space<vmem>>, vector<1x32x96xf32>
    %36 = vector.shape_cast %35 : vector<1x32x96xf32> to vector<32x96xf32>
    %cst_21 = arith.constant dense<0.000000e+00> : vector<17x96xf32>
    %37 = tpu.matmul %34, %36, %cst_21 {dimension_numbers = #tpu.dot_dimension_numbers<[1], [0], [0], [1], [0, 0, 1, 1], [], []>} : vector<17x32xf32>, vector<32x96xf32>, vector<17x96xf32> -> vector<17x96xf32>
    %38 = vector.extract_strided_slice %37 {offsets = [0, 0], sizes = [17, 8], strides = [1, 1]} : vector<17x96xf32> to vector<17x8xf32>
    %cst_22 = arith.constant 0.353553385 : f32
    %39 = vector.broadcast %cst_22 : f32 to vector<17x8xf32>
    %40 = arith.mulf %38, %39 : vector<17x8xf32>
    %41 = vector.extract_strided_slice %37 {offsets = [0, 32], sizes = [17, 8], strides = [1, 1]} : vector<17x96xf32> to vector<17x8xf32>
    %42 = vector.extract_strided_slice %37 {offsets = [0, 64], sizes = [17, 8], strides = [1, 1]} : vector<17x96xf32> to vector<17x8xf32>
    %cst_23 = arith.constant dense<0.000000e+00> : vector<17x17xf32>
    %43 = tpu.matmul %40, %41, %cst_23 {dimension_numbers = #tpu.dot_dimension_numbers<[1], [1], [0], [0], [0, 0, 1, 0], [], []>} : vector<17x8xf32>, vector<17x8xf32>, vector<17x17xf32> -> vector<17x17xf32>
    %cst_24 = arith.constant dense<0xFF800000> : vector<17xf32>
    %44 = vector.multi_reduction <maximumf>, %43, %cst_24 [1] : vector<17x17xf32> to vector<17xf32>
    %45 = vector.shape_cast %44 : vector<17xf32> to vector<17x1xf32>
    %46 = vector.broadcast %45 : vector<17x1xf32> to vector<17x17xf32>
    %47 = arith.subf %43, %46 : vector<17x17xf32>
    %48 = math.exp %47 : vector<17x17xf32>
    %cst_25 = arith.constant dense<0.000000e+00> : vector<17xf32>
    %49 = vector.multi_reduction <add>, %48, %cst_25 [1] : vector<17x17xf32> to vector<17xf32>
    %50 = vector.shape_cast %49 : vector<17xf32> to vector<17x1xf32>
    %51 = tpu.reciprocal %50 {approx = true} : vector<17x1xf32> -> vector<17x1xf32>
    %52 = vector.broadcast %51 : vector<17x1xf32> to vector<17x17xf32>
    %53 = arith.mulf %48, %52 : vector<17x17xf32>
    %cst_26 = arith.constant dense<0.000000e+00> : vector<17x8xf32>
    %54 = tpu.matmul %53, %42, %cst_26 {dimension_numbers = #tpu.dot_dimension_numbers<[1], [0], [0], [1], [0, 0, 1, 1], [], []>} : vector<17x17xf32>, vector<17x8xf32>, vector<17x8xf32> -> vector<17x8xf32>
    %55 = vector.extract_strided_slice %37 {offsets = [0, 8], sizes = [17, 8], strides = [1, 1]} : vector<17x96xf32> to vector<17x8xf32>
    %cst_27 = arith.constant 0.353553385 : f32
    %56 = vector.broadcast %cst_27 : f32 to vector<17x8xf32>
    %57 = arith.mulf %55, %56 : vector<17x8xf32>
    %58 = vector.extract_strided_slice %37 {offsets = [0, 40], sizes = [17, 8], strides = [1, 1]} : vector<17x96xf32> to vector<17x8xf32>
    %59 = vector.extract_strided_slice %37 {offsets = [0, 72], sizes = [17, 8], strides = [1, 1]} : vector<17x96xf32> to vector<17x8xf32>
    %cst_28 = arith.constant dense<0.000000e+00> : vector<17x17xf32>
    %60 = tpu.matmul %57, %58, %cst_28 {dimension_numbers = #tpu.dot_dimension_numbers<[1], [1], [0], [0], [0, 0, 1, 0], [], []>} : vector<17x8xf32>, vector<17x8xf32>, vector<17x17xf32> -> vector<17x17xf32>
    %cst_29 = arith.constant dense<0xFF800000> : vector<17xf32>
    %61 = vector.multi_reduction <maximumf>, %60, %cst_29 [1] : vector<17x17xf32> to vector<17xf32>
    %62 = vector.shape_cast %61 : vector<17xf32> to vector<17x1xf32>
    %63 = vector.broadcast %62 : vector<17x1xf32> to vector<17x17xf32>
    %64 = arith.subf %60, %63 : vector<17x17xf32>
    %65 = math.exp %64 : vector<17x17xf32>
    %cst_30 = arith.constant dense<0.000000e+00> : vector<17xf32>
    %66 = vector.multi_reduction <add>, %65, %cst_30 [1] : vector<17x17xf32> to vector<17xf32>
    %67 = vector.shape_cast %66 : vector<17xf32> to vector<17x1xf32>
    %68 = tpu.reciprocal %67 {approx = true} : vector<17x1xf32> -> vector<17x1xf32>
    %69 = vector.broadcast %68 : vector<17x1xf32> to vector<17x17xf32>
    %70 = arith.mulf %65, %69 : vector<17x17xf32>
    %cst_31 = arith.constant dense<0.000000e+00> : vector<17x8xf32>
    %71 = tpu.matmul %70, %59, %cst_31 {dimension_numbers = #tpu.dot_dimension_numbers<[1], [0], [0], [1], [0, 0, 1, 1], [], []>} : vector<17x17xf32>, vector<17x8xf32>, vector<17x8xf32> -> vector<17x8xf32>
    %72 = vector.extract_strided_slice %37 {offsets = [0, 16], sizes = [17, 8], strides = [1, 1]} : vector<17x96xf32> to vector<17x8xf32>
    %cst_32 = arith.constant 0.353553385 : f32
    %73 = vector.broadcast %cst_32 : f32 to vector<17x8xf32>
    %74 = arith.mulf %72, %73 : vector<17x8xf32>
    %75 = vector.extract_strided_slice %37 {offsets = [0, 48], sizes = [17, 8], strides = [1, 1]} : vector<17x96xf32> to vector<17x8xf32>
    %76 = vector.extract_strided_slice %37 {offsets = [0, 80], sizes = [17, 8], strides = [1, 1]} : vector<17x96xf32> to vector<17x8xf32>
    %cst_33 = arith.constant dense<0.000000e+00> : vector<17x17xf32>
    %77 = tpu.matmul %74, %75, %cst_33 {dimension_numbers = #tpu.dot_dimension_numbers<[1], [1], [0], [0], [0, 0, 1, 0], [], []>} : vector<17x8xf32>, vector<17x8xf32>, vector<17x17xf32> -> vector<17x17xf32>
    %cst_34 = arith.constant dense<0xFF800000> : vector<17xf32>
    %78 = vector.multi_reduction <maximumf>, %77, %cst_34 [1] : vector<17x17xf32> to vector<17xf32>
    %79 = vector.shape_cast %78 : vector<17xf32> to vector<17x1xf32>
    %80 = vector.broadcast %79 : vector<17x1xf32> to vector<17x17xf32>
    %81 = arith.subf %77, %80 : vector<17x17xf32>
    %82 = math.exp %81 : vector<17x17xf32>
    %cst_35 = arith.constant dense<0.000000e+00> : vector<17xf32>
    %83 = vector.multi_reduction <add>, %82, %cst_35 [1] : vector<17x17xf32> to vector<17xf32>
    %84 = vector.shape_cast %83 : vector<17xf32> to vector<17x1xf32>
    %85 = tpu.reciprocal %84 {approx = true} : vector<17x1xf32> -> vector<17x1xf32>
    %86 = vector.broadcast %85 : vector<17x1xf32> to vector<17x17xf32>
    %87 = arith.mulf %82, %86 : vector<17x17xf32>
    %cst_36 = arith.constant dense<0.000000e+00> : vector<17x8xf32>
    %88 = tpu.matmul %87, %76, %cst_36 {dimension_numbers = #tpu.dot_dimension_numbers<[1], [0], [0], [1], [0, 0, 1, 1], [], []>} : vector<17x17xf32>, vector<17x8xf32>, vector<17x8xf32> -> vector<17x8xf32>
    %89 = vector.extract_strided_slice %37 {offsets = [0, 24], sizes = [17, 8], strides = [1, 1]} : vector<17x96xf32> to vector<17x8xf32>
    %cst_37 = arith.constant 0.353553385 : f32
    %90 = vector.broadcast %cst_37 : f32 to vector<17x8xf32>
    %91 = arith.mulf %89, %90 : vector<17x8xf32>
    %92 = vector.extract_strided_slice %37 {offsets = [0, 56], sizes = [17, 8], strides = [1, 1]} : vector<17x96xf32> to vector<17x8xf32>
    %93 = vector.extract_strided_slice %37 {offsets = [0, 88], sizes = [17, 8], strides = [1, 1]} : vector<17x96xf32> to vector<17x8xf32>
    %cst_38 = arith.constant dense<0.000000e+00> : vector<17x17xf32>
    %94 = tpu.matmul %91, %92, %cst_38 {dimension_numbers = #tpu.dot_dimension_numbers<[1], [1], [0], [0], [0, 0, 1, 0], [], []>} : vector<17x8xf32>, vector<17x8xf32>, vector<17x17xf32> -> vector<17x17xf32>
    %cst_39 = arith.constant dense<0xFF800000> : vector<17xf32>
    %95 = vector.multi_reduction <maximumf>, %94, %cst_39 [1] : vector<17x17xf32> to vector<17xf32>
    %96 = vector.shape_cast %95 : vector<17xf32> to vector<17x1xf32>
    %97 = vector.broadcast %96 : vector<17x1xf32> to vector<17x17xf32>
    %98 = arith.subf %94, %97 : vector<17x17xf32>
    %99 = math.exp %98 : vector<17x17xf32>
    %cst_40 = arith.constant dense<0.000000e+00> : vector<17xf32>
    %100 = vector.multi_reduction <add>, %99, %cst_40 [1] : vector<17x17xf32> to vector<17xf32>
    %101 = vector.shape_cast %100 : vector<17xf32> to vector<17x1xf32>
    %102 = tpu.reciprocal %101 {approx = true} : vector<17x1xf32> -> vector<17x1xf32>
    %103 = vector.broadcast %102 : vector<17x1xf32> to vector<17x17xf32>
    %104 = arith.mulf %99, %103 : vector<17x17xf32>
    %cst_41 = arith.constant dense<0.000000e+00> : vector<17x8xf32>
    %105 = tpu.matmul %104, %93, %cst_41 {dimension_numbers = #tpu.dot_dimension_numbers<[1], [0], [0], [1], [0, 0, 1, 1], [], []>} : vector<17x17xf32>, vector<17x8xf32>, vector<17x8xf32> -> vector<17x8xf32>
    %106 = tpu.concatenate %54, %71, %88, %105 in 1 : vector<17x8xf32>, vector<17x8xf32>, vector<17x8xf32>, vector<17x8xf32> -> vector<17x32xf32>
    %c0_42 = arith.constant 0 : index
    %c0_43 = arith.constant 0 : index
    %c0_44 = arith.constant 0 : index
    %107 = vector.load %arg7[%c0_42, %c0_43, %c0_44] : memref<2x32x32xf32, #tpu.memory_space<vmem>>, vector<1x32x32xf32>
    %108 = vector.shape_cast %107 : vector<1x32x32xf32> to vector<32x32xf32>
    %cst_45 = arith.constant dense<0.000000e+00> : vector<17x32xf32>
    %109 = tpu.matmul %106, %108, %cst_45 {dimension_numbers = #tpu.dot_dimension_numbers<[1], [0], [0], [1], [0, 0, 1, 1], [], []>} : vector<17x32xf32>, vector<32x32xf32>, vector<17x32xf32> -> vector<17x32xf32>
    %c0_46 = arith.constant 0 : index
    %c0_47 = arith.constant 0 : index
    %c0_48 = arith.constant 0 : index
    %110 = vector.load %arg8[%c0_46, %c0_47, %c0_48] : memref<2x1x32xf32, #tpu.memory_space<vmem>>, vector<1x1x32xf32>
    %111 = vector.shape_cast %110 : vector<1x1x32xf32> to vector<1x32xf32>
    %112 = vector.broadcast %111 : vector<1x32xf32> to vector<17x32xf32>
    %113 = arith.addf %109, %112 : vector<17x32xf32>
    %114 = arith.addf %6, %113 : vector<17x32xf32>
    %c0_49 = arith.constant 0 : index
    %c0_50 = arith.constant 0 : index
    %c0_51 = arith.constant 0 : index
    %115 = vector.load %arg9[%c0_49, %c0_50, %c0_51] : memref<2x1x32xf32, #tpu.memory_space<vmem>>, vector<1x1x32xf32>
    %116 = vector.shape_cast %115 : vector<1x1x32xf32> to vector<1x32xf32>
    %c0_52 = arith.constant 0 : index
    %c0_53 = arith.constant 0 : index
    %c0_54 = arith.constant 0 : index
    %117 = vector.load %arg10[%c0_52, %c0_53, %c0_54] : memref<2x1x32xf32, #tpu.memory_space<vmem>>, vector<1x1x32xf32>
    %118 = vector.shape_cast %117 : vector<1x1x32xf32> to vector<1x32xf32>
    %cst_55 = arith.constant dense<0.000000e+00> : vector<17xf32>
    %119 = vector.multi_reduction <add>, %114, %cst_55 [1] : vector<17x32xf32> to vector<17xf32>
    %120 = vector.shape_cast %119 : vector<17xf32> to vector<17x1xf32>
    %cst_56 = arith.constant 3.200000e+01 : f32
    %121 = vector.broadcast %cst_56 : f32 to vector<17x1xf32>
    %122 = arith.divf %120, %121 : vector<17x1xf32>
    %123 = vector.broadcast %122 : vector<17x1xf32> to vector<17x32xf32>
    %124 = arith.subf %114, %123 : vector<17x32xf32>
    %125 = vector.broadcast %122 : vector<17x1xf32> to vector<17x32xf32>
    %126 = arith.subf %114, %125 : vector<17x32xf32>
    %127 = arith.mulf %124, %126 : vector<17x32xf32>
    %cst_57 = arith.constant dense<0.000000e+00> : vector<17xf32>
    %128 = vector.multi_reduction <add>, %127, %cst_57 [1] : vector<17x32xf32> to vector<17xf32>
    %129 = vector.shape_cast %128 : vector<17xf32> to vector<17x1xf32>
    %cst_58 = arith.constant 3.200000e+01 : f32
    %130 = vector.broadcast %cst_58 : f32 to vector<17x1xf32>
    %131 = arith.divf %129, %130 : vector<17x1xf32>
    %132 = vector.broadcast %122 : vector<17x1xf32> to vector<17x32xf32>
    %133 = arith.subf %114, %132 : vector<17x32xf32>
    %cst_59 = arith.constant 9.99999974E-6 : f32
    %134 = vector.broadcast %cst_59 : f32 to vector<17x1xf32>
    %135 = arith.addf %131, %134 : vector<17x1xf32>
    %136 = math.rsqrt %135 : vector<17x1xf32>
    %137 = vector.broadcast %136 : vector<17x1xf32> to vector<17x32xf32>
    %138 = arith.mulf %133, %137 : vector<17x32xf32>
    %139 = vector.broadcast %116 : vector<1x32xf32> to vector<17x32xf32>
    %140 = arith.mulf %138, %139 : vector<17x32xf32>
    %141 = vector.broadcast %118 : vector<1x32xf32> to vector<17x32xf32>
    %142 = arith.addf %140, %141 : vector<17x32xf32>
    %c0_60 = arith.constant 0 : index
    %c0_61 = arith.constant 0 : index
    %c0_62 = arith.constant 0 : index
    %143 = vector.load %arg11[%c0_60, %c0_61, %c0_62] : memref<2x32x64xf32, #tpu.memory_space<vmem>>, vector<1x32x64xf32>
    %144 = vector.shape_cast %143 : vector<1x32x64xf32> to vector<32x64xf32>
    %cst_63 = arith.constant dense<0.000000e+00> : vector<17x64xf32>
    %145 = tpu.matmul %142, %144, %cst_63 {dimension_numbers = #tpu.dot_dimension_numbers<[1], [0], [0], [1], [0, 0, 1, 1], [], []>} : vector<17x32xf32>, vector<32x64xf32>, vector<17x64xf32> -> vector<17x64xf32>
    %c0_64 = arith.constant 0 : index
    %c0_65 = arith.constant 0 : index
    %c0_66 = arith.constant 0 : index
    %146 = vector.load %arg12[%c0_64, %c0_65, %c0_66] : memref<2x1x64xf32, #tpu.memory_space<vmem>>, vector<1x1x64xf32>
    %147 = vector.shape_cast %146 : vector<1x1x64xf32> to vector<1x64xf32>
    %148 = vector.broadcast %147 : vector<1x64xf32> to vector<17x64xf32>
    %149 = arith.addf %145, %148 : vector<17x64xf32>
    %cst_67 = arith.constant 5.000000e-01 : f32
    %150 = vector.broadcast %cst_67 : f32 to vector<17x64xf32>
    %151 = arith.mulf %150, %149 : vector<17x64xf32>
    %cst_68 = arith.constant 0.707106769 : f32
    %152 = vector.broadcast %cst_68 : f32 to vector<17x64xf32>
    %153 = arith.mulf %149, %152 : vector<17x64xf32>
    %154 = math.erf %153 : vector<17x64xf32>
    %cst_69 = arith.constant 1.000000e+00 : f32
    %155 = vector.broadcast %cst_69 : f32 to vector<17x64xf32>
    %156 = arith.addf %155, %154 : vector<17x64xf32>
    %157 = arith.mulf %151, %156 : vector<17x64xf32>
    %c0_70 = arith.constant 0 : index
    %c0_71 = arith.constant 0 : index
    %c0_72 = arith.constant 0 : index
    %158 = vector.load %arg13[%c0_70, %c0_71, %c0_72] : memref<2x64x32xf32, #tpu.memory_space<vmem>>, vector<1x64x32xf32>
    %159 = vector.shape_cast %158 : vector<1x64x32xf32> to vector<64x32xf32>
    %cst_73 = arith.constant dense<0.000000e+00> : vector<17x32xf32>
    %160 = tpu.matmul %157, %159, %cst_73 {dimension_numbers = #tpu.dot_dimension_numbers<[1], [0], [0], [1], [0, 0, 1, 1], [], []>} : vector<17x64xf32>, vector<64x32xf32>, vector<17x32xf32> -> vector<17x32xf32>
    %c0_74 = arith.constant 0 : index
    %c0_75 = arith.constant 0 : index
    %c0_76 = arith.constant 0 : index
    %161 = vector.load %arg14[%c0_74, %c0_75, %c0_76] : memref<2x1x32xf32, #tpu.memory_space<vmem>>, vector<1x1x32xf32>
    %162 = vector.shape_cast %161 : vector<1x1x32xf32> to vector<1x32xf32>
    %163 = vector.broadcast %162 : vector<1x32xf32> to vector<17x32xf32>
    %164 = arith.addf %160, %163 : vector<17x32xf32>
    %165 = arith.addf %114, %164 : vector<17x32xf32>
    %c1 = arith.constant 1 : index
    %c0_77 = arith.constant 0 : index
    %c0_78 = arith.constant 0 : index
    %166 = vector.load %arg4[%c1, %c0_77, %c0_78] : memref<2x1x32xf32, #tpu.memory_space<vmem>>, vector<1x1x32xf32>
    %167 = vector.shape_cast %166 : vector<1x1x32xf32> to vector<1x32xf32>
    %c1_79 = arith.constant 1 : index
    %c0_80 = arith.constant 0 : index
    %c0_81 = arith.constant 0 : index
    %168 = vector.load %arg5[%c1_79, %c0_80, %c0_81] : memref<2x1x32xf32, #tpu.memory_space<vmem>>, vector<1x1x32xf32>
    %169 = vector.shape_cast %168 : vector<1x1x32xf32> to vector<1x32xf32>
    %cst_82 = arith.constant dense<0.000000e+00> : vector<17xf32>
    %170 = vector.multi_reduction <add>, %165, %cst_82 [1] : vector<17x32xf32> to vector<17xf32>
    %171 = vector.shape_cast %170 : vector<17xf32> to vector<17x1xf32>
    %cst_83 = arith.constant 3.200000e+01 : f32
    %172 = vector.broadcast %cst_83 : f32 to vector<17x1xf32>
    %173 = arith.divf %171, %172 : vector<17x1xf32>
    %174 = vector.broadcast %173 : vector<17x1xf32> to vector<17x32xf32>
    %175 = arith.subf %165, %174 : vector<17x32xf32>
    %176 = vector.broadcast %173 : vector<17x1xf32> to vector<17x32xf32>
    %177 = arith.subf %165, %176 : vector<17x32xf32>
    %178 = arith.mulf %175, %177 : vector<17x32xf32>
    %cst_84 = arith.constant dense<0.000000e+00> : vector<17xf32>
    %179 = vector.multi_reduction <add>, %178, %cst_84 [1] : vector<17x32xf32> to vector<17xf32>
    %180 = vector.shape_cast %179 : vector<17xf32> to vector<17x1xf32>
    %cst_85 = arith.constant 3.200000e+01 : f32
    %181 = vector.broadcast %cst_85 : f32 to vector<17x1xf32>
    %182 = arith.divf %180, %181 : vector<17x1xf32>
    %183 = vector.broadcast %173 : vector<17x1xf32> to vector<17x32xf32>
    %184 = arith.subf %165, %183 : vector<17x32xf32>
    %cst_86 = arith.constant 9.99999974E-6 : f32
    %185 = vector.broadcast %cst_86 : f32 to vector<17x1xf32>
    %186 = arith.addf %182, %185 : vector<17x1xf32>
    %187 = math.rsqrt %186 : vector<17x1xf32>
    %188 = vector.broadcast %187 : vector<17x1xf32> to vector<17x32xf32>
    %189 = arith.mulf %184, %188 : vector<17x32xf32>
    %190 = vector.broadcast %167 : vector<1x32xf32> to vector<17x32xf32>
    %191 = arith.mulf %189, %190 : vector<17x32xf32>
    %192 = vector.broadcast %169 : vector<1x32xf32> to vector<17x32xf32>
    %193 = arith.addf %191, %192 : vector<17x32xf32>
    %c1_87 = arith.constant 1 : index
    %c0_88 = arith.constant 0 : index
    %c0_89 = arith.constant 0 : index
    %194 = vector.load %arg6[%c1_87, %c0_88, %c0_89] : memref<2x32x96xf32, #tpu.memory_space<vmem>>, vector<1x32x96xf32>
    %195 = vector.shape_cast %194 : vector<1x32x96xf32> to vector<32x96xf32>
    %cst_90 = arith.constant dense<0.000000e+00> : vector<17x96xf32>
    %196 = tpu.matmul %193, %195, %cst_90 {dimension_numbers = #tpu.dot_dimension_numbers<[1], [0], [0], [1], [0, 0, 1, 1], [], []>} : vector<17x32xf32>, vector<32x96xf32>, vector<17x96xf32> -> vector<17x96xf32>
    %197 = vector.extract_strided_slice %196 {offsets = [0, 0], sizes = [17, 8], strides = [1, 1]} : vector<17x96xf32> to vector<17x8xf32>
    %cst_91 = arith.constant 0.353553385 : f32
    %198 = vector.broadcast %cst_91 : f32 to vector<17x8xf32>
    %199 = arith.mulf %197, %198 : vector<17x8xf32>
    %200 = vector.extract_strided_slice %196 {offsets = [0, 32], sizes = [17, 8], strides = [1, 1]} : vector<17x96xf32> to vector<17x8xf32>
    %201 = vector.extract_strided_slice %196 {offsets = [0, 64], sizes = [17, 8], strides = [1, 1]} : vector<17x96xf32> to vector<17x8xf32>
    %cst_92 = arith.constant dense<0.000000e+00> : vector<17x17xf32>
    %202 = tpu.matmul %199, %200, %cst_92 {dimension_numbers = #tpu.dot_dimension_numbers<[1], [1], [0], [0], [0, 0, 1, 0], [], []>} : vector<17x8xf32>, vector<17x8xf32>, vector<17x17xf32> -> vector<17x17xf32>
    %cst_93 = arith.constant dense<0xFF800000> : vector<17xf32>
    %203 = vector.multi_reduction <maximumf>, %202, %cst_93 [1] : vector<17x17xf32> to vector<17xf32>
    %204 = vector.shape_cast %203 : vector<17xf32> to vector<17x1xf32>
    %205 = vector.broadcast %204 : vector<17x1xf32> to vector<17x17xf32>
    %206 = arith.subf %202, %205 : vector<17x17xf32>
    %207 = math.exp %206 : vector<17x17xf32>
    %cst_94 = arith.constant dense<0.000000e+00> : vector<17xf32>
    %208 = vector.multi_reduction <add>, %207, %cst_94 [1] : vector<17x17xf32> to vector<17xf32>
    %209 = vector.shape_cast %208 : vector<17xf32> to vector<17x1xf32>
    %210 = tpu.reciprocal %209 {approx = true} : vector<17x1xf32> -> vector<17x1xf32>
    %211 = vector.broadcast %210 : vector<17x1xf32> to vector<17x17xf32>
    %212 = arith.mulf %207, %211 : vector<17x17xf32>
    %cst_95 = arith.constant dense<0.000000e+00> : vector<17x8xf32>
    %213 = tpu.matmul %212, %201, %cst_95 {dimension_numbers = #tpu.dot_dimension_numbers<[1], [0], [0], [1], [0, 0, 1, 1], [], []>} : vector<17x17xf32>, vector<17x8xf32>, vector<17x8xf32> -> vector<17x8xf32>
    %214 = vector.extract_strided_slice %196 {offsets = [0, 8], sizes = [17, 8], strides = [1, 1]} : vector<17x96xf32> to vector<17x8xf32>
    %cst_96 = arith.constant 0.353553385 : f32
    %215 = vector.broadcast %cst_96 : f32 to vector<17x8xf32>
    %216 = arith.mulf %214, %215 : vector<17x8xf32>
    %217 = vector.extract_strided_slice %196 {offsets = [0, 40], sizes = [17, 8], strides = [1, 1]} : vector<17x96xf32> to vector<17x8xf32>
    %218 = vector.extract_strided_slice %196 {offsets = [0, 72], sizes = [17, 8], strides = [1, 1]} : vector<17x96xf32> to vector<17x8xf32>
    %cst_97 = arith.constant dense<0.000000e+00> : vector<17x17xf32>
    %219 = tpu.matmul %216, %217, %cst_97 {dimension_numbers = #tpu.dot_dimension_numbers<[1], [1], [0], [0], [0, 0, 1, 0], [], []>} : vector<17x8xf32>, vector<17x8xf32>, vector<17x17xf32> -> vector<17x17xf32>
    %cst_98 = arith.constant dense<0xFF800000> : vector<17xf32>
    %220 = vector.multi_reduction <maximumf>, %219, %cst_98 [1] : vector<17x17xf32> to vector<17xf32>
    %221 = vector.shape_cast %220 : vector<17xf32> to vector<17x1xf32>
    %222 = vector.broadcast %221 : vector<17x1xf32> to vector<17x17xf32>
    %223 = arith.subf %219, %222 : vector<17x17xf32>
    %224 = math.exp %223 : vector<17x17xf32>
    %cst_99 = arith.constant dense<0.000000e+00> : vector<17xf32>
    %225 = vector.multi_reduction <add>, %224, %cst_99 [1] : vector<17x17xf32> to vector<17xf32>
    %226 = vector.shape_cast %225 : vector<17xf32> to vector<17x1xf32>
    %227 = tpu.reciprocal %226 {approx = true} : vector<17x1xf32> -> vector<17x1xf32>
    %228 = vector.broadcast %227 : vector<17x1xf32> to vector<17x17xf32>
    %229 = arith.mulf %224, %228 : vector<17x17xf32>
    %cst_100 = arith.constant dense<0.000000e+00> : vector<17x8xf32>
    %230 = tpu.matmul %229, %218, %cst_100 {dimension_numbers = #tpu.dot_dimension_numbers<[1], [0], [0], [1], [0, 0, 1, 1], [], []>} : vector<17x17xf32>, vector<17x8xf32>, vector<17x8xf32> -> vector<17x8xf32>
    %231 = vector.extract_strided_slice %196 {offsets = [0, 16], sizes = [17, 8], strides = [1, 1]} : vector<17x96xf32> to vector<17x8xf32>
    %cst_101 = arith.constant 0.353553385 : f32
    %232 = vector.broadcast %cst_101 : f32 to vector<17x8xf32>
    %233 = arith.mulf %231, %232 : vector<17x8xf32>
    %234 = vector.extract_strided_slice %196 {offsets = [0, 48], sizes = [17, 8], strides = [1, 1]} : vector<17x96xf32> to vector<17x8xf32>
    %235 = vector.extract_strided_slice %196 {offsets = [0, 80], sizes = [17, 8], strides = [1, 1]} : vector<17x96xf32> to vector<17x8xf32>
    %cst_102 = arith.constant dense<0.000000e+00> : vector<17x17xf32>
    %236 = tpu.matmul %233, %234, %cst_102 {dimension_numbers = #tpu.dot_dimension_numbers<[1], [1], [0], [0], [0, 0, 1, 0], [], []>} : vector<17x8xf32>, vector<17x8xf32>, vector<17x17xf32> -> vector<17x17xf32>
    %cst_103 = arith.constant dense<0xFF800000> : vector<17xf32>
    %237 = vector.multi_reduction <maximumf>, %236, %cst_103 [1] : vector<17x17xf32> to vector<17xf32>
    %238 = vector.shape_cast %237 : vector<17xf32> to vector<17x1xf32>
    %239 = vector.broadcast %238 : vector<17x1xf32> to vector<17x17xf32>
    %240 = arith.subf %236, %239 : vector<17x17xf32>
    %241 = math.exp %240 : vector<17x17xf32>
    %cst_104 = arith.constant dense<0.000000e+00> : vector<17xf32>
    %242 = vector.multi_reduction <add>, %241, %cst_104 [1] : vector<17x17xf32> to vector<17xf32>
    %243 = vector.shape_cast %242 : vector<17xf32> to vector<17x1xf32>
    %244 = tpu.reciprocal %243 {approx = true} : vector<17x1xf32> -> vector<17x1xf32>
    %245 = vector.broadcast %244 : vector<17x1xf32> to vector<17x17xf32>
    %246 = arith.mulf %241, %245 : vector<17x17xf32>
    %cst_105 = arith.constant dense<0.000000e+00> : vector<17x8xf32>
    %247 = tpu.matmul %246, %235, %cst_105 {dimension_numbers = #tpu.dot_dimension_numbers<[1], [0], [0], [1], [0, 0, 1, 1], [], []>} : vector<17x17xf32>, vector<17x8xf32>, vector<17x8xf32> -> vector<17x8xf32>
    %248 = vector.extract_strided_slice %196 {offsets = [0, 24], sizes = [17, 8], strides = [1, 1]} : vector<17x96xf32> to vector<17x8xf32>
    %cst_106 = arith.constant 0.353553385 : f32
    %249 = vector.broadcast %cst_106 : f32 to vector<17x8xf32>
    %250 = arith.mulf %248, %249 : vector<17x8xf32>
    %251 = vector.extract_strided_slice %196 {offsets = [0, 56], sizes = [17, 8], strides = [1, 1]} : vector<17x96xf32> to vector<17x8xf32>
    %252 = vector.extract_strided_slice %196 {offsets = [0, 88], sizes = [17, 8], strides = [1, 1]} : vector<17x96xf32> to vector<17x8xf32>
    %cst_107 = arith.constant dense<0.000000e+00> : vector<17x17xf32>
    %253 = tpu.matmul %250, %251, %cst_107 {dimension_numbers = #tpu.dot_dimension_numbers<[1], [1], [0], [0], [0, 0, 1, 0], [], []>} : vector<17x8xf32>, vector<17x8xf32>, vector<17x17xf32> -> vector<17x17xf32>
    %cst_108 = arith.constant dense<0xFF800000> : vector<17xf32>
    %254 = vector.multi_reduction <maximumf>, %253, %cst_108 [1] : vector<17x17xf32> to vector<17xf32>
    %255 = vector.shape_cast %254 : vector<17xf32> to vector<17x1xf32>
    %256 = vector.broadcast %255 : vector<17x1xf32> to vector<17x17xf32>
    %257 = arith.subf %253, %256 : vector<17x17xf32>
    %258 = math.exp %257 : vector<17x17xf32>
    %cst_109 = arith.constant dense<0.000000e+00> : vector<17xf32>
    %259 = vector.multi_reduction <add>, %258, %cst_109 [1] : vector<17x17xf32> to vector<17xf32>
    %260 = vector.shape_cast %259 : vector<17xf32> to vector<17x1xf32>
    %261 = tpu.reciprocal %260 {approx = true} : vector<17x1xf32> -> vector<17x1xf32>
    %262 = vector.broadcast %261 : vector<17x1xf32> to vector<17x17xf32>
    %263 = arith.mulf %258, %262 : vector<17x17xf32>
    %cst_110 = arith.constant dense<0.000000e+00> : vector<17x8xf32>
    %264 = tpu.matmul %263, %252, %cst_110 {dimension_numbers = #tpu.dot_dimension_numbers<[1], [0], [0], [1], [0, 0, 1, 1], [], []>} : vector<17x17xf32>, vector<17x8xf32>, vector<17x8xf32> -> vector<17x8xf32>
    %265 = tpu.concatenate %213, %230, %247, %264 in 1 : vector<17x8xf32>, vector<17x8xf32>, vector<17x8xf32>, vector<17x8xf32> -> vector<17x32xf32>
    %c1_111 = arith.constant 1 : index
    %c0_112 = arith.constant 0 : index
    %c0_113 = arith.constant 0 : index
    %266 = vector.load %arg7[%c1_111, %c0_112, %c0_113] : memref<2x32x32xf32, #tpu.memory_space<vmem>>, vector<1x32x32xf32>
    %267 = vector.shape_cast %266 : vector<1x32x32xf32> to vector<32x32xf32>
    %cst_114 = arith.constant dense<0.000000e+00> : vector<17x32xf32>
    %268 = tpu.matmul %265, %267, %cst_114 {dimension_numbers = #tpu.dot_dimension_numbers<[1], [0], [0], [1], [0, 0, 1, 1], [], []>} : vector<17x32xf32>, vector<32x32xf32>, vector<17x32xf32> -> vector<17x32xf32>
    %c1_115 = arith.constant 1 : index
    %c0_116 = arith.constant 0 : index
    %c0_117 = arith.constant 0 : index
    %269 = vector.load %arg8[%c1_115, %c0_116, %c0_117] : memref<2x1x32xf32, #tpu.memory_space<vmem>>, vector<1x1x32xf32>
    %270 = vector.shape_cast %269 : vector<1x1x32xf32> to vector<1x32xf32>
    %271 = vector.broadcast %270 : vector<1x32xf32> to vector<17x32xf32>
    %272 = arith.addf %268, %271 : vector<17x32xf32>
    %273 = arith.addf %165, %272 : vector<17x32xf32>
    %c1_118 = arith.constant 1 : index
    %c0_119 = arith.constant 0 : index
    %c0_120 = arith.constant 0 : index
    %274 = vector.load %arg9[%c1_118, %c0_119, %c0_120] : memref<2x1x32xf32, #tpu.memory_space<vmem>>, vector<1x1x32xf32>
    %275 = vector.shape_cast %274 : vector<1x1x32xf32> to vector<1x32xf32>
    %c1_121 = arith.constant 1 : index
    %c0_122 = arith.constant 0 : index
    %c0_123 = arith.constant 0 : index
    %276 = vector.load %arg10[%c1_121, %c0_122, %c0_123] : memref<2x1x32xf32, #tpu.memory_space<vmem>>, vector<1x1x32xf32>
    %277 = vector.shape_cast %276 : vector<1x1x32xf32> to vector<1x32xf32>
    %cst_124 = arith.constant dense<0.000000e+00> : vector<17xf32>
    %278 = vector.multi_reduction <add>, %273, %cst_124 [1] : vector<17x32xf32> to vector<17xf32>
    %279 = vector.shape_cast %278 : vector<17xf32> to vector<17x1xf32>
    %cst_125 = arith.constant 3.200000e+01 : f32
    %280 = vector.broadcast %cst_125 : f32 to vector<17x1xf32>
    %281 = arith.divf %279, %280 : vector<17x1xf32>
    %282 = vector.broadcast %281 : vector<17x1xf32> to vector<17x32xf32>
    %283 = arith.subf %273, %282 : vector<17x32xf32>
    %284 = vector.broadcast %281 : vector<17x1xf32> to vector<17x32xf32>
    %285 = arith.subf %273, %284 : vector<17x32xf32>
    %286 = arith.mulf %283, %285 : vector<17x32xf32>
    %cst_126 = arith.constant dense<0.000000e+00> : vector<17xf32>
    %287 = vector.multi_reduction <add>, %286, %cst_126 [1] : vector<17x32xf32> to vector<17xf32>
    %288 = vector.shape_cast %287 : vector<17xf32> to vector<17x1xf32>
    %cst_127 = arith.constant 3.200000e+01 : f32
    %289 = vector.broadcast %cst_127 : f32 to vector<17x1xf32>
    %290 = arith.divf %288, %289 : vector<17x1xf32>
    %291 = vector.broadcast %281 : vector<17x1xf32> to vector<17x32xf32>
    %292 = arith.subf %273, %291 : vector<17x32xf32>
    %cst_128 = arith.constant 9.99999974E-6 : f32
    %293 = vector.broadcast %cst_128 : f32 to vector<17x1xf32>
    %294 = arith.addf %290, %293 : vector<17x1xf32>
    %295 = math.rsqrt %294 : vector<17x1xf32>
    %296 = vector.broadcast %295 : vector<17x1xf32> to vector<17x32xf32>
    %297 = arith.mulf %292, %296 : vector<17x32xf32>
    %298 = vector.broadcast %275 : vector<1x32xf32> to vector<17x32xf32>
    %299 = arith.mulf %297, %298 : vector<17x32xf32>
    %300 = vector.broadcast %277 : vector<1x32xf32> to vector<17x32xf32>
    %301 = arith.addf %299, %300 : vector<17x32xf32>
    %c1_129 = arith.constant 1 : index
    %c0_130 = arith.constant 0 : index
    %c0_131 = arith.constant 0 : index
    %302 = vector.load %arg11[%c1_129, %c0_130, %c0_131] : memref<2x32x64xf32, #tpu.memory_space<vmem>>, vector<1x32x64xf32>
    %303 = vector.shape_cast %302 : vector<1x32x64xf32> to vector<32x64xf32>
    %cst_132 = arith.constant dense<0.000000e+00> : vector<17x64xf32>
    %304 = tpu.matmul %301, %303, %cst_132 {dimension_numbers = #tpu.dot_dimension_numbers<[1], [0], [0], [1], [0, 0, 1, 1], [], []>} : vector<17x32xf32>, vector<32x64xf32>, vector<17x64xf32> -> vector<17x64xf32>
    %c1_133 = arith.constant 1 : index
    %c0_134 = arith.constant 0 : index
    %c0_135 = arith.constant 0 : index
    %305 = vector.load %arg12[%c1_133, %c0_134, %c0_135] : memref<2x1x64xf32, #tpu.memory_space<vmem>>, vector<1x1x64xf32>
    %306 = vector.shape_cast %305 : vector<1x1x64xf32> to vector<1x64xf32>
    %307 = vector.broadcast %306 : vector<1x64xf32> to vector<17x64xf32>
    %308 = arith.addf %304, %307 : vector<17x64xf32>
    %cst_136 = arith.constant 5.000000e-01 : f32
    %309 = vector.broadcast %cst_136 : f32 to vector<17x64xf32>
    %310 = arith.mulf %309, %308 : vector<17x64xf32>
    %cst_137 = arith.constant 0.707106769 : f32
    %311 = vector.broadcast %cst_137 : f32 to vector<17x64xf32>
    %312 = arith.mulf %308, %311 : vector<17x64xf32>
    %313 = math.erf %312 : vector<17x64xf32>
    %cst_138 = arith.constant 1.000000e+00 : f32
    %314 = vector.broadcast %cst_138 : f32 to vector<17x64xf32>
    %315 = arith.addf %314, %313 : vector<17x64xf32>
    %316 = arith.mulf %310, %315 : vector<17x64xf32>
    %c1_139 = arith.constant 1 : index
    %c0_140 = arith.constant 0 : index
    %c0_141 = arith.constant 0 : index
    %317 = vector.load %arg13[%c1_139, %c0_140, %c0_141] : memref<2x64x32xf32, #tpu.memory_space<vmem>>, vector<1x64x32xf32>
    %318 = vector.shape_cast %317 : vector<1x64x32xf32> to vector<64x32xf32>
    %cst_142 = arith.constant dense<0.000000e+00> : vector<17x32xf32>
    %319 = tpu.matmul %316, %318, %cst_142 {dimension_numbers = #tpu.dot_dimension_numbers<[1], [0], [0], [1], [0, 0, 1, 1], [], []>} : vector<17x64xf32>, vector<64x32xf32>, vector<17x32xf32> -> vector<17x32xf32>
    %c1_143 = arith.constant 1 : index
    %c0_144 = arith.constant 0 : index
    %c0_145 = arith.constant 0 : index
    %320 = vector.load %arg14[%c1_143, %c0_144, %c0_145] : memref<2x1x32xf32, #tpu.memory_space<vmem>>, vector<1x1x32xf32>
    %321 = vector.shape_cast %320 : vector<1x1x32xf32> to vector<1x32xf32>
    %322 = vector.broadcast %321 : vector<1x32xf32> to vector<17x32xf32>
    %323 = arith.addf %319, %322 : vector<17x32xf32>
    %324 = arith.addf %273, %323 : vector<17x32xf32>
    %c0_146 = arith.constant 0 : index
    %c0_147 = arith.constant 0 : index
    %325 = vector.load %arg15[%c0_146, %c0_147] : memref<32x48xf32, #tpu.memory_space<vmem>>, vector<32x48xf32>
    %cst_148 = arith.constant dense<0.000000e+00> : vector<17x48xf32>
    %326 = tpu.matmul %324, %325, %cst_148 {dimension_numbers = #tpu.dot_dimension_numbers<[1], [0], [0], [1], [0, 0, 1, 1], [], []>} : vector<17x32xf32>, vector<32x48xf32>, vector<17x48xf32> -> vector<17x48xf32>
    %c0_149 = arith.constant 0 : index
    %c0_150 = arith.constant 0 : index
    %327 = vector.load %arg16[%c0_149, %c0_150] : memref<1x48xf32, #tpu.memory_space<vmem>>, vector<1x48xf32>
    %328 = vector.broadcast %327 : vector<1x48xf32> to vector<17x48xf32>
    %329 = arith.addf %326, %328 : vector<17x48xf32>
    %c0_151 = arith.constant 0 : index
    %c0_152 = arith.constant 0 : index
    %c0_153 = arith.constant 0 : index
    %330 = vector.load %arg17[%c0_151, %c0_152, %c0_153] : memref<1x17x48xf32, #tpu.memory_space<vmem>>, vector<1x17x48xf32>
    %331 = vector.shape_cast %330 : vector<1x17x48xf32> to vector<17x48xf32>
    %332 = vector.shape_cast %329 : vector<17x48xf32> to vector<1x17x48xf32>
    tpu.vector_store %arg17[%c0_151, %c0_152, %c0_153], %332 {strides = array<i32>} : memref<1x17x48xf32, #tpu.memory_space<vmem>>, vector<1x17x48xf32>,
    return
  }
  func.func @transform_0(%arg0: i32) -> (i32, i32, i32) {
    %c0_i32 = arith.constant 0 : i32
    %c0_i32_0 = arith.constant 0 : i32
    %c0_i32_1 = arith.constant 0 : i32
    return %arg0, %c0_i32, %c0_i32_0 : i32, i32, i32
  }
  func.func @transform_1(%arg0: i32) -> (i32, i32, i32) {
    %c0_i32 = arith.constant 0 : i32
    %c0_i32_0 = arith.constant 0 : i32
    %c0_i32_1 = arith.constant 0 : i32
    %c0_i32_2 = arith.constant 0 : i32
    return %c0_i32, %c0_i32_0, %c0_i32_1 : i32, i32, i32
  }
  func.func @transform_2(%arg0: i32) -> (i32, i32) {
    %c0_i32 = arith.constant 0 : i32
    %c0_i32_0 = arith.constant 0 : i32
    %c0_i32_1 = arith.constant 0 : i32
    return %c0_i32, %c0_i32_0 : i32, i32
  }
  func.func @transform_3(%arg0: i32) -> (i32, i32, i32) {
    %c0_i32 = arith.constant 0 : i32
    %c0_i32_0 = arith.constant 0 : i32
    %c0_i32_1 = arith.constant 0 : i32
    %c0_i32_2 = arith.constant 0 : i32
    return %c0_i32, %c0_i32_0, %c0_i32_1 : i32, i32, i32
  }
  func.func @transform_4(%arg0: i32) -> (i32, i32, i32) {
    %c0_i32 = arith.constant 0 : i32
    %c0_i32_0 = arith.constant 0 : i32
    %c0_i32_1 = arith.constant 0 : i32
    %c0_i32_2 = arith.constant 0 : i32
    return %c0_i32, %c0_i32_0, %c0_i32_1 : i32, i32, i32
  }
  func.func @transform_5(%arg0: i32) -> (i32, i32, i32) {
    %c0_i32 = arith.constant 0 : i32
    %c0_i32_0 = arith.constant 0 : i32
    %c0_i32_1 = arith.constant 0 : i32
    %c0_i32_2 = arith.constant 0 : i32
    return %c0_i32, %c0_i32_0, %c0_i32_1 : i32, i32, i32
  }
  func.func @transform_6(%arg0: i32) -> (i32, i32, i32) {
    %c0_i32 = arith.constant 0 : i32
    %c0_i32_0 = arith.constant 0 : i32
    %c0_i32_1 = arith.constant 0 : i32
    %c0_i32_2 = arith.constant 0 : i32
    return %c0_i32, %c0_i32_0, %c0_i32_1 : i32, i32, i32
  }
  func.func @transform_7(%arg0: i32) -> (i32, i32, i32) {
    %c0_i32 = arith.constant 0 : i32
    %c0_i32_0 = arith.constant 0 : i32
    %c0_i32_1 = arith.constant 0 : i32
    %c0_i32_2 = arith.constant 0 : i32
    return %c0_i32, %c0_i32_0, %c0_i32_1 : i32, i32, i32
  }
  func.func @transform_8(%arg0: i32) -> (i32, i32, i32) {
    %c0_i32 = arith.constant 0 : i32
    %c0_i32_0 = arith.constant 0 : i32
    %c0_i32_1 = arith.constant 0 : i32
    %c0_i32_2 = arith.constant 0 : i32
    return %c0_i32, %c0_i32_0, %c0_i32_1 : i32, i32, i32
  }
  func.func @transform_9(%arg0: i32) -> (i32, i32, i32) {
    %c0_i32 = arith.constant 0 : i32
    %c0_i32_0 = arith.constant 0 : i32
    %c0_i32_1 = arith.constant 0 : i32
    %c0_i32_2 = arith.constant 0 : i32
    return %c0_i32, %c0_i32_0, %c0_i32_1 : i32, i32, i32
  }
  func.func @transform_10(%arg0: i32) -> (i32, i32, i32) {
    %c0_i32 = arith.constant 0 : i32
    %c0_i32_0 = arith.constant 0 : i32
    %c0_i32_1 = arith.constant 0 : i32
    %c0_i32_2 = arith.constant 0 : i32
    return %c0_i32, %c0_i32_0, %c0_i32_1 : i32, i32, i32
  }
  func.func @transform_11(%arg0: i32) -> (i32, i32, i32) {
    %c0_i32 = arith.constant 0 : i32
    %c0_i32_0 = arith.constant 0 : i32
    %c0_i32_1 = arith.constant 0 : i32
    %c0_i32_2 = arith.constant 0 : i32
    return %c0_i32, %c0_i32_0, %c0_i32_1 : i32, i32, i32
  }
  func.func @transform_12(%arg0: i32) -> (i32, i32, i32) {
    %c0_i32 = arith.constant 0 : i32
    %c0_i32_0 = arith.constant 0 : i32
    %c0_i32_1 = arith.constant 0 : i32
    %c0_i32_2 = arith.constant 0 : i32
    return %c0_i32, %c0_i32_0, %c0_i32_1 : i32, i32, i32
  }
  func.func @transform_13(%arg0: i32) -> (i32, i32, i32) {
    %c0_i32 = arith.constant 0 : i32
    %c0_i32_0 = arith.constant 0 : i32
    %c0_i32_1 = arith.constant 0 : i32
    %c0_i32_2 = arith.constant 0 : i32
    return %c0_i32, %c0_i32_0, %c0_i32_1 : i32, i32, i32
  }
  func.func @transform_14(%arg0: i32) -> (i32, i32) {
    %c0_i32 = arith.constant 0 : i32
    %c0_i32_0 = arith.constant 0 : i32
    %c0_i32_1 = arith.constant 0 : i32
    return %c0_i32, %c0_i32_0 : i32, i32
  }
  func.func @transform_15(%arg0: i32) -> (i32, i32) {
    %c0_i32 = arith.constant 0 : i32
    %c0_i32_0 = arith.constant 0 : i32
    %c0_i32_1 = arith.constant 0 : i32
    return %c0_i32, %c0_i32_0 : i32, i32
  }
  func.func @transform_16(%arg0: i32) -> (i32, i32, i32) {
    %c0_i32 = arith.constant 0 : i32
    %c0_i32_0 = arith.constant 0 : i32
    %c0_i32_1 = arith.constant 0 : i32
    return %arg0, %c0_i32, %c0_i32_0 : i32, i32, i32
  }
}

module attributes {stable_mosaic.version = 11 : i64} {
  func.func @_conv3x3_relu_kernel(%arg0: i32, %arg1: memref<1x18x18x3xf32, #tpu.memory_space<vmem>>, %arg2: memref<9x3x64xf32, #tpu.memory_space<vmem>>, %arg3: memref<1x64xf32, #tpu.memory_space<vmem>>, %arg4: memref<1x16x16x64xf32, #tpu.memory_space<vmem>>) attributes {dimension_semantics = [#tpu.dimension_semantics<parallel>], iteration_bounds = array<i64: 2>, scalar_prefetch = 0 : i64, scratch_operands = 0 : i64, tpu.core_type = #tpu.core_type<tc>, window_params = [{transform_indices = @transform_0, window_bounds = array<i64: 1, 18, 18, 3>}, {pipeline_mode = #tpu.pipeline_mode<synchronous>, transform_indices = @transform_1, window_bounds = array<i64: 9, 3, 64>}, {pipeline_mode = #tpu.pipeline_mode<synchronous>, transform_indices = @transform_2, window_bounds = array<i64: 1, 64>}, {transform_indices = @transform_3, window_bounds = array<i64: 1, 16, 16, 64>}]} {
    %c0 = arith.constant 0 : index
    %c0_0 = arith.constant 0 : index
    %c0_1 = arith.constant 0 : index
    %c0_2 = arith.constant 0 : index
    %0 = vector.load %arg1[%c0, %c0_0, %c0_1, %c0_2] : memref<1x18x18x3xf32, #tpu.memory_space<vmem>>, vector<1x18x18x3xf32>
    %1 = vector.shape_cast %0 : vector<1x18x18x3xf32> to vector<18x18x3xf32>
    %2 = vector.extract_strided_slice %1 {offsets = [0, 0, 0], sizes = [16, 16, 3], strides = [1, 1, 1]} : vector<18x18x3xf32> to vector<16x16x3xf32>
    %3 = vector.shape_cast %2 : vector<16x16x3xf32> to vector<256x3xf32>
    %c0_3 = arith.constant 0 : index
    %c0_4 = arith.constant 0 : index
    %c0_5 = arith.constant 0 : index
    %4 = vector.load %arg2[%c0_3, %c0_4, %c0_5] : memref<9x3x64xf32, #tpu.memory_space<vmem>>, vector<1x3x64xf32>
    %5 = vector.shape_cast %4 : vector<1x3x64xf32> to vector<3x64xf32>
    %cst = arith.constant dense<0.000000e+00> : vector<256x64xf32>
    %6 = tpu.matmul %3, %5, %cst {dimension_numbers = #tpu.dot_dimension_numbers<[1], [0], [0], [1], [0, 0, 1, 1], [], []>} : vector<256x3xf32>, vector<3x64xf32>, vector<256x64xf32> -> vector<256x64xf32>
    %7 = vector.extract_strided_slice %1 {offsets = [0, 1, 0], sizes = [16, 16, 3], strides = [1, 1, 1]} : vector<18x18x3xf32> to vector<16x16x3xf32>
    %8 = vector.shape_cast %7 : vector<16x16x3xf32> to vector<256x3xf32>
    %c1 = arith.constant 1 : index
    %c0_6 = arith.constant 0 : index
    %c0_7 = arith.constant 0 : index
    %9 = vector.load %arg2[%c1, %c0_6, %c0_7] : memref<9x3x64xf32, #tpu.memory_space<vmem>>, vector<1x3x64xf32>
    %10 = vector.shape_cast %9 : vector<1x3x64xf32> to vector<3x64xf32>
    %cst_8 = arith.constant dense<0.000000e+00> : vector<256x64xf32>
    %11 = tpu.matmul %8, %10, %cst_8 {dimension_numbers = #tpu.dot_dimension_numbers<[1], [0], [0], [1], [0, 0, 1, 1], [], []>} : vector<256x3xf32>, vector<3x64xf32>, vector<256x64xf32> -> vector<256x64xf32>
    %12 = arith.addf %6, %11 : vector<256x64xf32>
    %13 = vector.extract_strided_slice %1 {offsets = [0, 2, 0], sizes = [16, 16, 3], strides = [1, 1, 1]} : vector<18x18x3xf32> to vector<16x16x3xf32>
    %14 = vector.shape_cast %13 : vector<16x16x3xf32> to vector<256x3xf32>
    %c2 = arith.constant 2 : index
    %c0_9 = arith.constant 0 : index
    %c0_10 = arith.constant 0 : index
    %15 = vector.load %arg2[%c2, %c0_9, %c0_10] : memref<9x3x64xf32, #tpu.memory_space<vmem>>, vector<1x3x64xf32>
    %16 = vector.shape_cast %15 : vector<1x3x64xf32> to vector<3x64xf32>
    %cst_11 = arith.constant dense<0.000000e+00> : vector<256x64xf32>
    %17 = tpu.matmul %14, %16, %cst_11 {dimension_numbers = #tpu.dot_dimension_numbers<[1], [0], [0], [1], [0, 0, 1, 1], [], []>} : vector<256x3xf32>, vector<3x64xf32>, vector<256x64xf32> -> vector<256x64xf32>
    %18 = arith.addf %12, %17 : vector<256x64xf32>
    %19 = vector.extract_strided_slice %1 {offsets = [1, 0, 0], sizes = [16, 16, 3], strides = [1, 1, 1]} : vector<18x18x3xf32> to vector<16x16x3xf32>
    %20 = vector.shape_cast %19 : vector<16x16x3xf32> to vector<256x3xf32>
    %c3 = arith.constant 3 : index
    %c0_12 = arith.constant 0 : index
    %c0_13 = arith.constant 0 : index
    %21 = vector.load %arg2[%c3, %c0_12, %c0_13] : memref<9x3x64xf32, #tpu.memory_space<vmem>>, vector<1x3x64xf32>
    %22 = vector.shape_cast %21 : vector<1x3x64xf32> to vector<3x64xf32>
    %cst_14 = arith.constant dense<0.000000e+00> : vector<256x64xf32>
    %23 = tpu.matmul %20, %22, %cst_14 {dimension_numbers = #tpu.dot_dimension_numbers<[1], [0], [0], [1], [0, 0, 1, 1], [], []>} : vector<256x3xf32>, vector<3x64xf32>, vector<256x64xf32> -> vector<256x64xf32>
    %24 = arith.addf %18, %23 : vector<256x64xf32>
    %25 = vector.extract_strided_slice %1 {offsets = [1, 1, 0], sizes = [16, 16, 3], strides = [1, 1, 1]} : vector<18x18x3xf32> to vector<16x16x3xf32>
    %26 = vector.shape_cast %25 : vector<16x16x3xf32> to vector<256x3xf32>
    %c4 = arith.constant 4 : index
    %c0_15 = arith.constant 0 : index
    %c0_16 = arith.constant 0 : index
    %27 = vector.load %arg2[%c4, %c0_15, %c0_16] : memref<9x3x64xf32, #tpu.memory_space<vmem>>, vector<1x3x64xf32>
    %28 = vector.shape_cast %27 : vector<1x3x64xf32> to vector<3x64xf32>
    %cst_17 = arith.constant dense<0.000000e+00> : vector<256x64xf32>
    %29 = tpu.matmul %26, %28, %cst_17 {dimension_numbers = #tpu.dot_dimension_numbers<[1], [0], [0], [1], [0, 0, 1, 1], [], []>} : vector<256x3xf32>, vector<3x64xf32>, vector<256x64xf32> -> vector<256x64xf32>
    %30 = arith.addf %24, %29 : vector<256x64xf32>
    %31 = vector.extract_strided_slice %1 {offsets = [1, 2, 0], sizes = [16, 16, 3], strides = [1, 1, 1]} : vector<18x18x3xf32> to vector<16x16x3xf32>
    %32 = vector.shape_cast %31 : vector<16x16x3xf32> to vector<256x3xf32>
    %c5 = arith.constant 5 : index
    %c0_18 = arith.constant 0 : index
    %c0_19 = arith.constant 0 : index
    %33 = vector.load %arg2[%c5, %c0_18, %c0_19] : memref<9x3x64xf32, #tpu.memory_space<vmem>>, vector<1x3x64xf32>
    %34 = vector.shape_cast %33 : vector<1x3x64xf32> to vector<3x64xf32>
    %cst_20 = arith.constant dense<0.000000e+00> : vector<256x64xf32>
    %35 = tpu.matmul %32, %34, %cst_20 {dimension_numbers = #tpu.dot_dimension_numbers<[1], [0], [0], [1], [0, 0, 1, 1], [], []>} : vector<256x3xf32>, vector<3x64xf32>, vector<256x64xf32> -> vector<256x64xf32>
    %36 = arith.addf %30, %35 : vector<256x64xf32>
    %37 = vector.extract_strided_slice %1 {offsets = [2, 0, 0], sizes = [16, 16, 3], strides = [1, 1, 1]} : vector<18x18x3xf32> to vector<16x16x3xf32>
    %38 = vector.shape_cast %37 : vector<16x16x3xf32> to vector<256x3xf32>
    %c6 = arith.constant 6 : index
    %c0_21 = arith.constant 0 : index
    %c0_22 = arith.constant 0 : index
    %39 = vector.load %arg2[%c6, %c0_21, %c0_22] : memref<9x3x64xf32, #tpu.memory_space<vmem>>, vector<1x3x64xf32>
    %40 = vector.shape_cast %39 : vector<1x3x64xf32> to vector<3x64xf32>
    %cst_23 = arith.constant dense<0.000000e+00> : vector<256x64xf32>
    %41 = tpu.matmul %38, %40, %cst_23 {dimension_numbers = #tpu.dot_dimension_numbers<[1], [0], [0], [1], [0, 0, 1, 1], [], []>} : vector<256x3xf32>, vector<3x64xf32>, vector<256x64xf32> -> vector<256x64xf32>
    %42 = arith.addf %36, %41 : vector<256x64xf32>
    %43 = vector.extract_strided_slice %1 {offsets = [2, 1, 0], sizes = [16, 16, 3], strides = [1, 1, 1]} : vector<18x18x3xf32> to vector<16x16x3xf32>
    %44 = vector.shape_cast %43 : vector<16x16x3xf32> to vector<256x3xf32>
    %c7 = arith.constant 7 : index
    %c0_24 = arith.constant 0 : index
    %c0_25 = arith.constant 0 : index
    %45 = vector.load %arg2[%c7, %c0_24, %c0_25] : memref<9x3x64xf32, #tpu.memory_space<vmem>>, vector<1x3x64xf32>
    %46 = vector.shape_cast %45 : vector<1x3x64xf32> to vector<3x64xf32>
    %cst_26 = arith.constant dense<0.000000e+00> : vector<256x64xf32>
    %47 = tpu.matmul %44, %46, %cst_26 {dimension_numbers = #tpu.dot_dimension_numbers<[1], [0], [0], [1], [0, 0, 1, 1], [], []>} : vector<256x3xf32>, vector<3x64xf32>, vector<256x64xf32> -> vector<256x64xf32>
    %48 = arith.addf %42, %47 : vector<256x64xf32>
    %49 = vector.extract_strided_slice %1 {offsets = [2, 2, 0], sizes = [16, 16, 3], strides = [1, 1, 1]} : vector<18x18x3xf32> to vector<16x16x3xf32>
    %50 = vector.shape_cast %49 : vector<16x16x3xf32> to vector<256x3xf32>
    %c8 = arith.constant 8 : index
    %c0_27 = arith.constant 0 : index
    %c0_28 = arith.constant 0 : index
    %51 = vector.load %arg2[%c8, %c0_27, %c0_28] : memref<9x3x64xf32, #tpu.memory_space<vmem>>, vector<1x3x64xf32>
    %52 = vector.shape_cast %51 : vector<1x3x64xf32> to vector<3x64xf32>
    %cst_29 = arith.constant dense<0.000000e+00> : vector<256x64xf32>
    %53 = tpu.matmul %50, %52, %cst_29 {dimension_numbers = #tpu.dot_dimension_numbers<[1], [0], [0], [1], [0, 0, 1, 1], [], []>} : vector<256x3xf32>, vector<3x64xf32>, vector<256x64xf32> -> vector<256x64xf32>
    %54 = arith.addf %48, %53 : vector<256x64xf32>
    %c0_30 = arith.constant 0 : index
    %c0_31 = arith.constant 0 : index
    %55 = vector.load %arg3[%c0_30, %c0_31] : memref<1x64xf32, #tpu.memory_space<vmem>>, vector<1x64xf32>
    %56 = vector.broadcast %55 : vector<1x64xf32> to vector<256x64xf32>
    %57 = arith.addf %54, %56 : vector<256x64xf32>
    %cst_32 = arith.constant 0.000000e+00 : f32
    %58 = vector.broadcast %cst_32 : f32 to vector<256x64xf32>
    %59 = arith.maximumf %57, %58 : vector<256x64xf32>
    %60 = vector.shape_cast %59 : vector<256x64xf32> to vector<16x16x64xf32>
    %c0_33 = arith.constant 0 : index
    %c0_34 = arith.constant 0 : index
    %c0_35 = arith.constant 0 : index
    %c0_36 = arith.constant 0 : index
    %61 = vector.load %arg4[%c0_33, %c0_34, %c0_35, %c0_36] : memref<1x16x16x64xf32, #tpu.memory_space<vmem>>, vector<1x16x16x64xf32>
    %62 = vector.shape_cast %61 : vector<1x16x16x64xf32> to vector<16x16x64xf32>
    %63 = vector.shape_cast %60 : vector<16x16x64xf32> to vector<1x16x16x64xf32>
    tpu.vector_store %arg4[%c0_33, %c0_34, %c0_35, %c0_36], %63 {strides = array<i32>} : memref<1x16x16x64xf32, #tpu.memory_space<vmem>>, vector<1x16x16x64xf32>,
    return
  }
  func.func @transform_0(%arg0: i32) -> (i32, i32, i32, i32) {
    %c0_i32 = arith.constant 0 : i32
    %c0_i32_0 = arith.constant 0 : i32
    %c0_i32_1 = arith.constant 0 : i32
    %c0_i32_2 = arith.constant 0 : i32
    return %arg0, %c0_i32, %c0_i32_0, %c0_i32_1 : i32, i32, i32, i32
  }
  func.func @transform_1(%arg0: i32) -> (i32, i32, i32) {
    %c0_i32 = arith.constant 0 : i32
    %c0_i32_0 = arith.constant 0 : i32
    %c0_i32_1 = arith.constant 0 : i32
    %c0_i32_2 = arith.constant 0 : i32
    return %c0_i32, %c0_i32_0, %c0_i32_1 : i32, i32, i32
  }
  func.func @transform_2(%arg0: i32) -> (i32, i32) {
    %c0_i32 = arith.constant 0 : i32
    %c0_i32_0 = arith.constant 0 : i32
    %c0_i32_1 = arith.constant 0 : i32
    return %c0_i32, %c0_i32_0 : i32, i32
  }
  func.func @transform_3(%arg0: i32) -> (i32, i32, i32, i32) {
    %c0_i32 = arith.constant 0 : i32
    %c0_i32_0 = arith.constant 0 : i32
    %c0_i32_1 = arith.constant 0 : i32
    %c0_i32_2 = arith.constant 0 : i32
    return %arg0, %c0_i32, %c0_i32_0, %c0_i32_1 : i32, i32, i32, i32
  }
}

module attributes {stable_mosaic.version = 11 : i64} {
  func.func @_conv3x3_relu_1x1_kernel(%arg0: i32, %arg1: memref<1x18x18x64xf32, #tpu.memory_space<vmem>>, %arg2: memref<9x64x32xf32, #tpu.memory_space<vmem>>, %arg3: memref<1x32xf32, #tpu.memory_space<vmem>>, %arg4: memref<32x3xf32, #tpu.memory_space<vmem>>, %arg5: memref<1x3xf32, #tpu.memory_space<vmem>>, %arg6: memref<1x16x16x3xf32, #tpu.memory_space<vmem>>) attributes {dimension_semantics = [#tpu.dimension_semantics<parallel>], iteration_bounds = array<i64: 2>, scalar_prefetch = 0 : i64, scratch_operands = 0 : i64, tpu.core_type = #tpu.core_type<tc>, window_params = [{transform_indices = @transform_0, window_bounds = array<i64: 1, 18, 18, 64>}, {pipeline_mode = #tpu.pipeline_mode<synchronous>, transform_indices = @transform_1, window_bounds = array<i64: 9, 64, 32>}, {pipeline_mode = #tpu.pipeline_mode<synchronous>, transform_indices = @transform_2, window_bounds = array<i64: 1, 32>}, {pipeline_mode = #tpu.pipeline_mode<synchronous>, transform_indices = @transform_3, window_bounds = array<i64: 32, 3>}, {pipeline_mode = #tpu.pipeline_mode<synchronous>, transform_indices = @transform_4, window_bounds = array<i64: 1, 3>}, {transform_indices = @transform_5, window_bounds = array<i64: 1, 16, 16, 3>}]} {
    %c0 = arith.constant 0 : index
    %c0_0 = arith.constant 0 : index
    %c0_1 = arith.constant 0 : index
    %c0_2 = arith.constant 0 : index
    %0 = vector.load %arg1[%c0, %c0_0, %c0_1, %c0_2] : memref<1x18x18x64xf32, #tpu.memory_space<vmem>>, vector<1x18x18x64xf32>
    %1 = vector.shape_cast %0 : vector<1x18x18x64xf32> to vector<18x18x64xf32>
    %2 = vector.extract_strided_slice %1 {offsets = [0, 0, 0], sizes = [16, 16, 64], strides = [1, 1, 1]} : vector<18x18x64xf32> to vector<16x16x64xf32>
    %3 = vector.shape_cast %2 : vector<16x16x64xf32> to vector<256x64xf32>
    %c0_3 = arith.constant 0 : index
    %c0_4 = arith.constant 0 : index
    %c0_5 = arith.constant 0 : index
    %4 = vector.load %arg2[%c0_3, %c0_4, %c0_5] : memref<9x64x32xf32, #tpu.memory_space<vmem>>, vector<1x64x32xf32>
    %5 = vector.shape_cast %4 : vector<1x64x32xf32> to vector<64x32xf32>
    %cst = arith.constant dense<0.000000e+00> : vector<256x32xf32>
    %6 = tpu.matmul %3, %5, %cst {dimension_numbers = #tpu.dot_dimension_numbers<[1], [0], [0], [1], [0, 0, 1, 1], [], []>} : vector<256x64xf32>, vector<64x32xf32>, vector<256x32xf32> -> vector<256x32xf32>
    %7 = vector.extract_strided_slice %1 {offsets = [0, 1, 0], sizes = [16, 16, 64], strides = [1, 1, 1]} : vector<18x18x64xf32> to vector<16x16x64xf32>
    %8 = vector.shape_cast %7 : vector<16x16x64xf32> to vector<256x64xf32>
    %c1 = arith.constant 1 : index
    %c0_6 = arith.constant 0 : index
    %c0_7 = arith.constant 0 : index
    %9 = vector.load %arg2[%c1, %c0_6, %c0_7] : memref<9x64x32xf32, #tpu.memory_space<vmem>>, vector<1x64x32xf32>
    %10 = vector.shape_cast %9 : vector<1x64x32xf32> to vector<64x32xf32>
    %cst_8 = arith.constant dense<0.000000e+00> : vector<256x32xf32>
    %11 = tpu.matmul %8, %10, %cst_8 {dimension_numbers = #tpu.dot_dimension_numbers<[1], [0], [0], [1], [0, 0, 1, 1], [], []>} : vector<256x64xf32>, vector<64x32xf32>, vector<256x32xf32> -> vector<256x32xf32>
    %12 = arith.addf %6, %11 : vector<256x32xf32>
    %13 = vector.extract_strided_slice %1 {offsets = [0, 2, 0], sizes = [16, 16, 64], strides = [1, 1, 1]} : vector<18x18x64xf32> to vector<16x16x64xf32>
    %14 = vector.shape_cast %13 : vector<16x16x64xf32> to vector<256x64xf32>
    %c2 = arith.constant 2 : index
    %c0_9 = arith.constant 0 : index
    %c0_10 = arith.constant 0 : index
    %15 = vector.load %arg2[%c2, %c0_9, %c0_10] : memref<9x64x32xf32, #tpu.memory_space<vmem>>, vector<1x64x32xf32>
    %16 = vector.shape_cast %15 : vector<1x64x32xf32> to vector<64x32xf32>
    %cst_11 = arith.constant dense<0.000000e+00> : vector<256x32xf32>
    %17 = tpu.matmul %14, %16, %cst_11 {dimension_numbers = #tpu.dot_dimension_numbers<[1], [0], [0], [1], [0, 0, 1, 1], [], []>} : vector<256x64xf32>, vector<64x32xf32>, vector<256x32xf32> -> vector<256x32xf32>
    %18 = arith.addf %12, %17 : vector<256x32xf32>
    %19 = vector.extract_strided_slice %1 {offsets = [1, 0, 0], sizes = [16, 16, 64], strides = [1, 1, 1]} : vector<18x18x64xf32> to vector<16x16x64xf32>
    %20 = vector.shape_cast %19 : vector<16x16x64xf32> to vector<256x64xf32>
    %c3 = arith.constant 3 : index
    %c0_12 = arith.constant 0 : index
    %c0_13 = arith.constant 0 : index
    %21 = vector.load %arg2[%c3, %c0_12, %c0_13] : memref<9x64x32xf32, #tpu.memory_space<vmem>>, vector<1x64x32xf32>
    %22 = vector.shape_cast %21 : vector<1x64x32xf32> to vector<64x32xf32>
    %cst_14 = arith.constant dense<0.000000e+00> : vector<256x32xf32>
    %23 = tpu.matmul %20, %22, %cst_14 {dimension_numbers = #tpu.dot_dimension_numbers<[1], [0], [0], [1], [0, 0, 1, 1], [], []>} : vector<256x64xf32>, vector<64x32xf32>, vector<256x32xf32> -> vector<256x32xf32>
    %24 = arith.addf %18, %23 : vector<256x32xf32>
    %25 = vector.extract_strided_slice %1 {offsets = [1, 1, 0], sizes = [16, 16, 64], strides = [1, 1, 1]} : vector<18x18x64xf32> to vector<16x16x64xf32>
    %26 = vector.shape_cast %25 : vector<16x16x64xf32> to vector<256x64xf32>
    %c4 = arith.constant 4 : index
    %c0_15 = arith.constant 0 : index
    %c0_16 = arith.constant 0 : index
    %27 = vector.load %arg2[%c4, %c0_15, %c0_16] : memref<9x64x32xf32, #tpu.memory_space<vmem>>, vector<1x64x32xf32>
    %28 = vector.shape_cast %27 : vector<1x64x32xf32> to vector<64x32xf32>
    %cst_17 = arith.constant dense<0.000000e+00> : vector<256x32xf32>
    %29 = tpu.matmul %26, %28, %cst_17 {dimension_numbers = #tpu.dot_dimension_numbers<[1], [0], [0], [1], [0, 0, 1, 1], [], []>} : vector<256x64xf32>, vector<64x32xf32>, vector<256x32xf32> -> vector<256x32xf32>
    %30 = arith.addf %24, %29 : vector<256x32xf32>
    %31 = vector.extract_strided_slice %1 {offsets = [1, 2, 0], sizes = [16, 16, 64], strides = [1, 1, 1]} : vector<18x18x64xf32> to vector<16x16x64xf32>
    %32 = vector.shape_cast %31 : vector<16x16x64xf32> to vector<256x64xf32>
    %c5 = arith.constant 5 : index
    %c0_18 = arith.constant 0 : index
    %c0_19 = arith.constant 0 : index
    %33 = vector.load %arg2[%c5, %c0_18, %c0_19] : memref<9x64x32xf32, #tpu.memory_space<vmem>>, vector<1x64x32xf32>
    %34 = vector.shape_cast %33 : vector<1x64x32xf32> to vector<64x32xf32>
    %cst_20 = arith.constant dense<0.000000e+00> : vector<256x32xf32>
    %35 = tpu.matmul %32, %34, %cst_20 {dimension_numbers = #tpu.dot_dimension_numbers<[1], [0], [0], [1], [0, 0, 1, 1], [], []>} : vector<256x64xf32>, vector<64x32xf32>, vector<256x32xf32> -> vector<256x32xf32>
    %36 = arith.addf %30, %35 : vector<256x32xf32>
    %37 = vector.extract_strided_slice %1 {offsets = [2, 0, 0], sizes = [16, 16, 64], strides = [1, 1, 1]} : vector<18x18x64xf32> to vector<16x16x64xf32>
    %38 = vector.shape_cast %37 : vector<16x16x64xf32> to vector<256x64xf32>
    %c6 = arith.constant 6 : index
    %c0_21 = arith.constant 0 : index
    %c0_22 = arith.constant 0 : index
    %39 = vector.load %arg2[%c6, %c0_21, %c0_22] : memref<9x64x32xf32, #tpu.memory_space<vmem>>, vector<1x64x32xf32>
    %40 = vector.shape_cast %39 : vector<1x64x32xf32> to vector<64x32xf32>
    %cst_23 = arith.constant dense<0.000000e+00> : vector<256x32xf32>
    %41 = tpu.matmul %38, %40, %cst_23 {dimension_numbers = #tpu.dot_dimension_numbers<[1], [0], [0], [1], [0, 0, 1, 1], [], []>} : vector<256x64xf32>, vector<64x32xf32>, vector<256x32xf32> -> vector<256x32xf32>
    %42 = arith.addf %36, %41 : vector<256x32xf32>
    %43 = vector.extract_strided_slice %1 {offsets = [2, 1, 0], sizes = [16, 16, 64], strides = [1, 1, 1]} : vector<18x18x64xf32> to vector<16x16x64xf32>
    %44 = vector.shape_cast %43 : vector<16x16x64xf32> to vector<256x64xf32>
    %c7 = arith.constant 7 : index
    %c0_24 = arith.constant 0 : index
    %c0_25 = arith.constant 0 : index
    %45 = vector.load %arg2[%c7, %c0_24, %c0_25] : memref<9x64x32xf32, #tpu.memory_space<vmem>>, vector<1x64x32xf32>
    %46 = vector.shape_cast %45 : vector<1x64x32xf32> to vector<64x32xf32>
    %cst_26 = arith.constant dense<0.000000e+00> : vector<256x32xf32>
    %47 = tpu.matmul %44, %46, %cst_26 {dimension_numbers = #tpu.dot_dimension_numbers<[1], [0], [0], [1], [0, 0, 1, 1], [], []>} : vector<256x64xf32>, vector<64x32xf32>, vector<256x32xf32> -> vector<256x32xf32>
    %48 = arith.addf %42, %47 : vector<256x32xf32>
    %49 = vector.extract_strided_slice %1 {offsets = [2, 2, 0], sizes = [16, 16, 64], strides = [1, 1, 1]} : vector<18x18x64xf32> to vector<16x16x64xf32>
    %50 = vector.shape_cast %49 : vector<16x16x64xf32> to vector<256x64xf32>
    %c8 = arith.constant 8 : index
    %c0_27 = arith.constant 0 : index
    %c0_28 = arith.constant 0 : index
    %51 = vector.load %arg2[%c8, %c0_27, %c0_28] : memref<9x64x32xf32, #tpu.memory_space<vmem>>, vector<1x64x32xf32>
    %52 = vector.shape_cast %51 : vector<1x64x32xf32> to vector<64x32xf32>
    %cst_29 = arith.constant dense<0.000000e+00> : vector<256x32xf32>
    %53 = tpu.matmul %50, %52, %cst_29 {dimension_numbers = #tpu.dot_dimension_numbers<[1], [0], [0], [1], [0, 0, 1, 1], [], []>} : vector<256x64xf32>, vector<64x32xf32>, vector<256x32xf32> -> vector<256x32xf32>
    %54 = arith.addf %48, %53 : vector<256x32xf32>
    %c0_30 = arith.constant 0 : index
    %c0_31 = arith.constant 0 : index
    %55 = vector.load %arg3[%c0_30, %c0_31] : memref<1x32xf32, #tpu.memory_space<vmem>>, vector<1x32xf32>
    %56 = vector.broadcast %55 : vector<1x32xf32> to vector<256x32xf32>
    %57 = arith.addf %54, %56 : vector<256x32xf32>
    %cst_32 = arith.constant 0.000000e+00 : f32
    %58 = vector.broadcast %cst_32 : f32 to vector<256x32xf32>
    %59 = arith.maximumf %57, %58 : vector<256x32xf32>
    %c0_33 = arith.constant 0 : index
    %c0_34 = arith.constant 0 : index
    %60 = vector.load %arg4[%c0_33, %c0_34] : memref<32x3xf32, #tpu.memory_space<vmem>>, vector<32x3xf32>
    %cst_35 = arith.constant dense<0.000000e+00> : vector<256x3xf32>
    %61 = tpu.matmul %59, %60, %cst_35 {dimension_numbers = #tpu.dot_dimension_numbers<[1], [0], [0], [1], [0, 0, 1, 1], [], []>} : vector<256x32xf32>, vector<32x3xf32>, vector<256x3xf32> -> vector<256x3xf32>
    %c0_36 = arith.constant 0 : index
    %c0_37 = arith.constant 0 : index
    %62 = vector.load %arg5[%c0_36, %c0_37] : memref<1x3xf32, #tpu.memory_space<vmem>>, vector<1x3xf32>
    %63 = vector.broadcast %62 : vector<1x3xf32> to vector<256x3xf32>
    %64 = arith.addf %61, %63 : vector<256x3xf32>
    %65 = vector.shape_cast %64 : vector<256x3xf32> to vector<16x16x3xf32>
    %c0_38 = arith.constant 0 : index
    %c0_39 = arith.constant 0 : index
    %c0_40 = arith.constant 0 : index
    %c0_41 = arith.constant 0 : index
    %66 = vector.load %arg6[%c0_38, %c0_39, %c0_40, %c0_41] : memref<1x16x16x3xf32, #tpu.memory_space<vmem>>, vector<1x16x16x3xf32>
    %67 = vector.shape_cast %66 : vector<1x16x16x3xf32> to vector<16x16x3xf32>
    %68 = vector.shape_cast %65 : vector<16x16x3xf32> to vector<1x16x16x3xf32>
    tpu.vector_store %arg6[%c0_38, %c0_39, %c0_40, %c0_41], %68 {strides = array<i32>} : memref<1x16x16x3xf32, #tpu.memory_space<vmem>>, vector<1x16x16x3xf32>,
    return
  }
  func.func @transform_0(%arg0: i32) -> (i32, i32, i32, i32) {
    %c0_i32 = arith.constant 0 : i32
    %c0_i32_0 = arith.constant 0 : i32
    %c0_i32_1 = arith.constant 0 : i32
    %c0_i32_2 = arith.constant 0 : i32
    return %arg0, %c0_i32, %c0_i32_0, %c0_i32_1 : i32, i32, i32, i32
  }
  func.func @transform_1(%arg0: i32) -> (i32, i32, i32) {
    %c0_i32 = arith.constant 0 : i32
    %c0_i32_0 = arith.constant 0 : i32
    %c0_i32_1 = arith.constant 0 : i32
    %c0_i32_2 = arith.constant 0 : i32
    return %c0_i32, %c0_i32_0, %c0_i32_1 : i32, i32, i32
  }
  func.func @transform_2(%arg0: i32) -> (i32, i32) {
    %c0_i32 = arith.constant 0 : i32
    %c0_i32_0 = arith.constant 0 : i32
    %c0_i32_1 = arith.constant 0 : i32
    return %c0_i32, %c0_i32_0 : i32, i32
  }
  func.func @transform_3(%arg0: i32) -> (i32, i32) {
    %c0_i32 = arith.constant 0 : i32
    %c0_i32_0 = arith.constant 0 : i32
    %c0_i32_1 = arith.constant 0 : i32
    return %c0_i32, %c0_i32_0 : i32, i32
  }
  func.func @transform_4(%arg0: i32) -> (i32, i32) {
    %c0_i32 = arith.constant 0 : i32
    %c0_i32_0 = arith.constant 0 : i32
    %c0_i32_1 = arith.constant 0 : i32
    return %c0_i32, %c0_i32_0 : i32, i32
  }
  func.func @transform_5(%arg0: i32) -> (i32, i32, i32, i32) {
    %c0_i32 = arith.constant 0 : i32
    %c0_i32_0 = arith.constant 0 : i32
    %c0_i32_1 = arith.constant 0 : i32
    %c0_i32_2 = arith.constant 0 : i32
    return %arg0, %c0_i32, %c0_i32_0, %c0_i32_1 : i32, i32, i32, i32
  }
}

</mosaic_0001>

<llo_original>
// kernel: _lambda_.3
$region0: #{_lambda_.3}
  #allocation0 [shape = 'u32[]', space=smem, size = 0x4, offset = 0x4, fixed_abs, tag = 'smem constant byte address 0x4 - core index']
  #allocation1 [shape = 'u32[144,128]{1,0:T(1,128)}', space=vmem, size = 0x12000, scoped, tag = 'internal scratch']
  %s0 = inlined_call_operand.vmem [shape: f32[2,17,48], index: 0, kind: input, shape index: {}]
  %s1 = inlined_call_operand.vmem [shape: f32[1,17,32], index: 1, kind: input, shape index: {}]
  %s2 = inlined_call_operand.vmem [shape: f32[48,32], index: 2, kind: input, shape index: {}]
  %s3 = inlined_call_operand.vmem [shape: f32[2,1,32], index: 3, kind: input, shape index: {}]
  %s4 = inlined_call_operand.vmem [shape: f32[2,1,32], index: 4, kind: input, shape index: {}]
  %s5 = inlined_call_operand.vmem [shape: f32[2,32,96], index: 5, kind: input, shape index: {}]
  %s6 = inlined_call_operand.vmem [shape: f32[2,32,32], index: 6, kind: input, shape index: {}]
  %s7 = inlined_call_operand.vmem [shape: f32[2,1,32], index: 7, kind: input, shape index: {}]
  %s8 = inlined_call_operand.vmem [shape: f32[2,1,32], index: 8, kind: input, shape index: {}]
  %s9 = inlined_call_operand.vmem [shape: f32[2,1,32], index: 9, kind: input, shape index: {}]
  %s10 = inlined_call_operand.vmem [shape: f32[2,32,64], index: 10, kind: input, shape index: {}]
  %s11 = inlined_call_operand.vmem [shape: f32[2,1,64], index: 11, kind: input, shape index: {}]
  %s12 = inlined_call_operand.vmem [shape: f32[2,64,32], index: 12, kind: input, shape index: {}]
  %s13 = inlined_call_operand.vmem [shape: f32[2,1,32], index: 13, kind: input, shape index: {}]
  %s14 = inlined_call_operand.vmem [shape: f32[32,48], index: 14, kind: input, shape index: {}]
  %s15 = inlined_call_operand.vmem [shape: f32[1,48], index: 15, kind: input, shape index: {}]
  %s16 = inlined_call_operand.vmem [shape: f32[2,17,48], index: 16, kind: output, shape index: {}]
  %s17 = sld [smem:[#allocation0]]
  $region97: #{_lambda_.3} parent=0
    _
  %s19 = ssub.s32 1, %s17
  %s20 = scalar_select 0, %s19, %s17
  loop: start=0, step=1, limit=4
  $region2: #{_lambda_.3} parent=0 // loop_pre_header
    _
  $region3: #{_lambda_.3} parent=0 // loop_header
    %s22 = sphi 0, %s26
    %p23 = scmp.ge.s32.totalorder %s22, 4
    %s32 = sphi 0, %s34
    %s35 = sphi 0, %s32
    %s36 = sphi 0, %s35
    %s52 = sphi 0, %s36
    %s56 = sphi 0, %s56
    %s58 = sphi 0, %s56
    %s59 = sphi 0, %s58
    %s73 = sphi 0, %s59
    %s77 = sphi 0, %s77
    %s79 = sphi 0, %s77
    %s80 = sphi 0, %s79
    %s94 = sphi 0, %s80
    %s98 = sphi 0, %s98
    %s100 = sphi 0, %s98
    %s101 = sphi 0, %s100
    %s115 = sphi 0, %s101
    %s119 = sphi 0, %s119
    %s121 = sphi 0, %s119
    %s122 = sphi 0, %s121
    %s136 = sphi 0, %s122
    %s140 = sphi 0, %s140
    %s142 = sphi 0, %s140
    %s143 = sphi 0, %s142
    %s157 = sphi 0, %s143
    %s161 = sphi 0, %s161
    %s163 = sphi 0, %s161
    %s164 = sphi 0, %s163
    %s178 = sphi 0, %s164
    %s182 = sphi 0, %s182
    %s184 = sphi 0, %s182
    %s185 = sphi 0, %s184
    %s199 = sphi 0, %s185
    %s203 = sphi 0, %s203
    %s205 = sphi 0, %s203
    %s206 = sphi 0, %s205
    %s220 = sphi 0, %s206
    %s224 = sphi 0, %s224
    %s226 = sphi 0, %s224
    %s227 = sphi 0, %s226
    %s241 = sphi 0, %s227
    %s245 = sphi 0, %s245
    %s247 = sphi 0, %s245
    %s248 = sphi 0, %s247
    %s262 = sphi 0, %s248
    %s266 = sphi 0, %s266
    %s268 = sphi 0, %s266
    %s269 = sphi 0, %s268
    %s283 = sphi 0, %s269
    %s287 = sphi 0, %s287
    %s289 = sphi 0, %s287
    %s290 = sphi 0, %s289
    %s304 = sphi 0, %s290
    %s308 = sphi 0, %s308
    %s310 = sphi 0, %s308
    %s311 = sphi 0, %s310
    %s325 = sphi 0, %s311
    %s329 = sphi 0, %s329
    %s331 = sphi 0, %s329
    %s332 = sphi 0, %s331
    %s346 = sphi 0, %s332
    %s350 = sphi 0, %s350
    %s352 = sphi 0, %s350
    %s353 = sphi 0, %s352
    %s367 = sphi 0, %s353
    %s373 = sphi 0, %s375
    %s376 = sphi 0, %s373
    %s377 = sphi 0, %s376
    %s393 = sphi 0, %s377
  $region4: #{_lambda_.3} parent=0 // loop_header_branch
    %25 = sbr.rel (%p23) target = $region8
  $region5: #{_lambda_.3} parent=0 // loop_body
    %s27 = ssub.s32 %s22, 1
    %s28 = ssub.s32 %s22, 2
    %s29 = sadd.s32 %s22, 1
    %s30 = ssub.s32 %s22, %s29
    %p31 = scmp.eq.s32.totalorder %s30, 0
    %s33 = sadd.s32 %s32, 1
    %s34 = scalar_select %p31, %s32, %s33
    %p37 = pneg %p31
    %p38 = scmp.eq.s32.totalorder %s22, 1
    %p39 = por %p37, %p38
    %p40 = scmp.ne.s32.totalorder %s32, %s35
    %p41 = scmp.eq.s32.totalorder %s22, 0
    %p42 = por %p40, %p41
    %p43 = scmp.ne.s32.totalorder %s32, %s35
    %p44 = scmp.eq.s32.totalorder %s27, 1
    %p45 = por %p43, %p44
    %p46 = scmp.ne.s32.totalorder %s35, %s36
    %p47 = scmp.eq.s32.totalorder %s27, 0
    %p48 = por %p46, %p47
    %p49 = scmp.ne.s32.totalorder %s35, %s36
    %p50 = scmp.eq.s32.totalorder %s28, 1
    %p51 = por %p49, %p50
    %p53 = scmp.ne.s32.totalorder %s36, %s52
    %p54 = scmp.eq.s32.totalorder %s28, 0
    %p55 = por %p53, %p54
    %s57 = sadd.s32 %s56, 1
    %p60 = scmp.eq.s32.totalorder %s22, 1
    %p61 = scmp.ne.s32.totalorder %s56, %s58
    %p62 = scmp.eq.s32.totalorder %s22, 0
    %p63 = por %p61, %p62
    %p64 = scmp.ne.s32.totalorder %s56, %s58
    %p65 = scmp.eq.s32.totalorder %s27, 1
    %p66 = por %p64, %p65
    %p67 = scmp.ne.s32.totalorder %s58, %s59
    %p68 = scmp.eq.s32.totalorder %s27, 0
    %p69 = por %p67, %p68
    %p70 = scmp.ne.s32.totalorder %s58, %s59
    %p71 = scmp.eq.s32.totalorder %s28, 1
    %p72 = por %p70, %p71
    %p74 = scmp.ne.s32.totalorder %s59, %s73
    %p75 = scmp.eq.s32.totalorder %s28, 0
    %p76 = por %p74, %p75
    %s78 = sadd.s32 %s77, 1
    %p81 = scmp.eq.s32.totalorder %s22, 1
    %p82 = scmp.ne.s32.totalorder %s77, %s79
    %p83 = scmp.eq.s32.totalorder %s22, 0
    %p84 = por %p82, %p83
    %p85 = scmp.ne.s32.totalorder %s77, %s79
    %p86 = scmp.eq.s32.totalorder %s27, 1
    %p87 = por %p85, %p86
    %p88 = scmp.ne.s32.totalorder %s79, %s80
    %p89 = scmp.eq.s32.totalorder %s27, 0
    %p90 = por %p88, %p89
    %p91 = scmp.ne.s32.totalorder %s79, %s80
    %p92 = scmp.eq.s32.totalorder %s28, 1
    %p93 = por %p91, %p92
    %p95 = scmp.ne.s32.totalorder %s80, %s94
    %p96 = scmp.eq.s32.totalorder %s28, 0
    %p97 = por %p95, %p96
    %s99 = sadd.s32 %s98, 1
    %p102 = scmp.eq.s32.totalorder %s22, 1
    %p103 = scmp.ne.s32.totalorder %s98, %s100
    %p104 = scmp.eq.s32.totalorder %s22, 0
    %p105 = por %p103, %p104
    %p106 = scmp.ne.s32.totalorder %s98, %s100
    %p107 = scmp.eq.s32.totalorder %s27, 1
    %p108 = por %p106, %p107
    %p109 = scmp.ne.s32.totalorder %s100, %s101
    %p110 = scmp.eq.s32.totalorder %s27, 0
    %p111 = por %p109, %p110
    %p112 = scmp.ne.s32.totalorder %s100, %s101
    %p113 = scmp.eq.s32.totalorder %s28, 1
    %p114 = por %p112, %p113
    %p116 = scmp.ne.s32.totalorder %s101, %s115
    %p117 = scmp.eq.s32.totalorder %s28, 0
    %p118 = por %p116, %p117
    %s120 = sadd.s32 %s119, 1
    %p123 = scmp.eq.s32.totalorder %s22, 1
    %p124 = scmp.ne.s32.totalorder %s119, %s121
    %p125 = scmp.eq.s32.totalorder %s22, 0
    %p126 = por %p124, %p125
    %p127 = scmp.ne.s32.totalorder %s119, %s121
    %p128 = scmp.eq.s32.totalorder %s27, 1
    %p129 = por %p127, %p128
    %p130 = scmp.ne.s32.totalorder %s121, %s122
    %p131 = scmp.eq.s32.totalorder %s27, 0
    %p132 = por %p130, %p131
    %p133 = scmp.ne.s32.totalorder %s121, %s122
    %p134 = scmp.eq.s32.totalorder %s28, 1
    %p135 = por %p133, %p134
    %p137 = scmp.ne.s32.totalorder %s122, %s136
    %p138 = scmp.eq.s32.totalorder %s28, 0
    %p139 = por %p137, %p138
    %s141 = sadd.s32 %s140, 1
    %p144 = scmp.eq.s32.totalorder %s22, 1
    %p145 = scmp.ne.s32.totalorder %s140, %s142
    %p146 = scmp.eq.s32.totalorder %s22, 0
    %p147 = por %p145, %p146
    %p148 = scmp.ne.s32.totalorder %s140, %s142
    %p149 = scmp.eq.s32.totalorder %s27, 1
    %p150 = por %p148, %p149
    %p151 = scmp.ne.s32.totalorder %s142, %s143
    %p152 = scmp.eq.s32.totalorder %s27, 0
    %p153 = por %p151, %p152
    %p154 = scmp.ne.s32.totalorder %s142, %s143
    %p155 = scmp.eq.s32.totalorder %s28, 1
    %p156 = por %p154, %p155
    %p158 = scmp.ne.s32.totalorder %s143, %s157
    %p159 = scmp.eq.s32.totalorder %s28, 0
    %p160 = por %p158, %p159
    %s162 = sadd.s32 %s161, 1
    %p165 = scmp.eq.s32.totalorder %s22, 1
    %p166 = scmp.ne.s32.totalorder %s161, %s163
    %p167 = scmp.eq.s32.totalorder %s22, 0
    %p168 = por %p166, %p167
    %p169 = scmp.ne.s32.totalorder %s161, %s163
    %p170 = scmp.eq.s32.totalorder %s27, 1
    %p171 = por %p169, %p170
    %p172 = scmp.ne.s32.totalorder %s163, %s164
    %p173 = scmp.eq.s32.totalorder %s27, 0
    %p174 = por %p172, %p173
    %p175 = scmp.ne.s32.totalorder %s163, %s164
    %p176 = scmp.eq.s32.totalorder %s28, 1
    %p177 = por %p175, %p176
    %p179 = scmp.ne.s32.totalorder %s164, %s178
    %p180 = scmp.eq.s32.totalorder %s28, 0
    %p181 = por %p179, %p180
    %s183 = sadd.s32 %s182, 1
    %p186 = scmp.eq.s32.totalorder %s22, 1
    %p187 = scmp.ne.s32.totalorder %s182, %s184
    %p188 = scmp.eq.s32.totalorder %s22, 0
    %p189 = por %p187, %p188
    %p190 = scmp.ne.s32.totalorder %s182, %s184
    %p191 = scmp.eq.s32.totalorder %s27, 1
    %p192 = por %p190, %p191
    %p193 = scmp.ne.s32.totalorder %s184, %s185
    %p194 = scmp.eq.s32.totalorder %s27, 0
    %p195 = por %p193, %p194
    %p196 = scmp.ne.s32.totalorder %s184, %s185
    %p197 = scmp.eq.s32.totalorder %s28, 1
    %p198 = por %p196, %p197
    %p200 = scmp.ne.s32.totalorder %s185, %s199
    %p201 = scmp.eq.s32.totalorder %s28, 0
    %p202 = por %p200, %p201
    %s204 = sadd.s32 %s203, 1
    %p207 = scmp.eq.s32.totalorder %s22, 1
    %p208 = scmp.ne.s32.totalorder %s203, %s205
    %p209 = scmp.eq.s32.totalorder %s22, 0
    %p210 = por %p208, %p209
    %p211 = scmp.ne.s32.totalorder %s203, %s205
    %p212 = scmp.eq.s32.totalorder %s27, 1
    %p213 = por %p211, %p212
    %p214 = scmp.ne.s32.totalorder %s205, %s206
    %p215 = scmp.eq.s32.totalorder %s27, 0
    %p216 = por %p214, %p215
    %p217 = scmp.ne.s32.totalorder %s205, %s206
    %p218 = scmp.eq.s32.totalorder %s28, 1
    %p219 = por %p217, %p218
    %p221 = scmp.ne.s32.totalorder %s206, %s220
    %p222 = scmp.eq.s32.totalorder %s28, 0
    %p223 = por %p221, %p222
    %s225 = sadd.s32 %s224, 1
    %p228 = scmp.eq.s32.totalorder %s22, 1
    %p229 = scmp.ne.s32.totalorder %s224, %s226
    %p230 = scmp.eq.s32.totalorder %s22, 0
    %p231 = por %p229, %p230
    %p232 = scmp.ne.s32.totalorder %s224, %s226
    %p233 = scmp.eq.s32.totalorder %s27, 1
    %p234 = por %p232, %p233
    %p235 = scmp.ne.s32.totalorder %s226, %s227
    %p236 = scmp.eq.s32.totalorder %s27, 0
    %p237 = por %p235, %p236
    %p238 = scmp.ne.s32.totalorder %s226, %s227
    %p239 = scmp.eq.s32.totalorder %s28, 1
    %p240 = por %p238, %p239
    %p242 = scmp.ne.s32.totalorder %s227, %s241
    %p243 = scmp.eq.s32.totalorder %s28, 0
    %p244 = por %p242, %p243
    %s246 = sadd.s32 %s245, 1
    %p249 = scmp.eq.s32.totalorder %s22, 1
    %p250 = scmp.ne.s32.totalorder %s245, %s247
    %p251 = scmp.eq.s32.totalorder %s22, 0
    %p252 = por %p250, %p251
    %p253 = scmp.ne.s32.totalorder %s245, %s247
    %p254 = scmp.eq.s32.totalorder %s27, 1
    %p255 = por %p253, %p254
    %p256 = scmp.ne.s32.totalorder %s247, %s248
    %p257 = scmp.eq.s32.totalorder %s27, 0
    %p258 = por %p256, %p257
    %p259 = scmp.ne.s32.totalorder %s247, %s248
    %p260 = scmp.eq.s32.totalorder %s28, 1
    %p261 = por %p259, %p260
    %p263 = scmp.ne.s32.totalorder %s248, %s262
    %p264 = scmp.eq.s32.totalorder %s28, 0
    %p265 = por %p263, %p264
    %s267 = sadd.s32 %s266, 1
    %p270 = scmp.eq.s32.totalorder %s22, 1
    %p271 = scmp.ne.s32.totalorder %s266, %s268
    %p272 = scmp.eq.s32.totalorder %s22, 0
    %p273 = por %p271, %p272
    %p274 = scmp.ne.s32.totalorder %s266, %s268
    %p275 = scmp.eq.s32.totalorder %s27, 1
    %p276 = por %p274, %p275
    %p277 = scmp.ne.s32.totalorder %s268, %s269
    %p278 = scmp.eq.s32.totalorder %s27, 0
    %p279 = por %p277, %p278
    %p280 = scmp.ne.s32.totalorder %s268, %s269
    %p281 = scmp.eq.s32.totalorder %s28, 1
    %p282 = por %p280, %p281
    %p284 = scmp.ne.s32.totalorder %s269, %s283
    %p285 = scmp.eq.s32.totalorder %s28, 0
    %p286 = por %p284, %p285
    %s288 = sadd.s32 %s287, 1
    %p291 = scmp.eq.s32.totalorder %s22, 1
    %p292 = scmp.ne.s32.totalorder %s287, %s289
    %p293 = scmp.eq.s32.totalorder %s22, 0
    %p294 = por %p292, %p293
    %p295 = scmp.ne.s32.totalorder %s287, %s289
    %p296 = scmp.eq.s32.totalorder %s27, 1
    %p297 = por %p295, %p296
    %p298 = scmp.ne.s32.totalorder %s289, %s290
    %p299 = scmp.eq.s32.totalorder %s27, 0
    %p300 = por %p298, %p299
    %p301 = scmp.ne.s32.totalorder %s289, %s290
    %p302 = scmp.eq.s32.totalorder %s28, 1
    %p303 = por %p301, %p302
    %p305 = scmp.ne.s32.totalorder %s290, %s304
    %p306 = scmp.eq.s32.totalorder %s28, 0
    %p307 = por %p305, %p306
    %s309 = sadd.s32 %s308, 1
    %p312 = scmp.eq.s32.totalorder %s22, 1
    %p313 = scmp.ne.s32.totalorder %s308, %s310
    %p314 = scmp.eq.s32.totalorder %s22, 0
    %p315 = por %p313, %p314
    %p316 = scmp.ne.s32.totalorder %s308, %s310
    %p317 = scmp.eq.s32.totalorder %s27, 1
    %p318 = por %p316, %p317
    %p319 = scmp.ne.s32.totalorder %s310, %s311
    %p320 = scmp.eq.s32.totalorder %s27, 0
    %p321 = por %p319, %p320
    %p322 = scmp.ne.s32.totalorder %s310, %s311
    %p323 = scmp.eq.s32.totalorder %s28, 1
    %p324 = por %p322, %p323
    %p326 = scmp.ne.s32.totalorder %s311, %s325
    %p327 = scmp.eq.s32.totalorder %s28, 0
    %p328 = por %p326, %p327
    %s330 = sadd.s32 %s329, 1
    %p333 = scmp.eq.s32.totalorder %s22, 1
    %p334 = scmp.ne.s32.totalorder %s329, %s331
    %p335 = scmp.eq.s32.totalorder %s22, 0
    %p336 = por %p334, %p335
    %p337 = scmp.ne.s32.totalorder %s329, %s331
    %p338 = scmp.eq.s32.totalorder %s27, 1
    %p339 = por %p337, %p338
    %p340 = scmp.ne.s32.totalorder %s331, %s332
    %p341 = scmp.eq.s32.totalorder %s27, 0
    %p342 = por %p340, %p341
    %p343 = scmp.ne.s32.totalorder %s331, %s332
    %p344 = scmp.eq.s32.totalorder %s28, 1
    %p345 = por %p343, %p344
    %p347 = scmp.ne.s32.totalorder %s332, %s346
    %p348 = scmp.eq.s32.totalorder %s28, 0
    %p349 = por %p347, %p348
    %s351 = sadd.s32 %s350, 1
    %p354 = scmp.eq.s32.totalorder %s22, 1
    %p355 = scmp.ne.s32.totalorder %s350, %s352
    %p356 = scmp.eq.s32.totalorder %s22, 0
    %p357 = por %p355, %p356
    %p358 = scmp.ne.s32.totalorder %s350, %s352
    %p359 = scmp.eq.s32.totalorder %s27, 1
    %p360 = por %p358, %p359
    %p361 = scmp.ne.s32.totalorder %s352, %s353
    %p362 = scmp.eq.s32.totalorder %s27, 0
    %p363 = por %p361, %p362
    %p364 = scmp.ne.s32.totalorder %s352, %s353
    %p365 = scmp.eq.s32.totalorder %s28, 1
    %p366 = por %p364, %p365
    %p368 = scmp.ne.s32.totalorder %s353, %s367
    %p369 = scmp.eq.s32.totalorder %s28, 0
    %p370 = por %p368, %p369
    %s371 = ssub.s32 %s22, %s29
    %p372 = scmp.eq.s32.totalorder %s371, 0
    %s374 = sadd.s32 %s373, 1
    %s375 = scalar_select %p372, %s373, %s374
    %p378 = pneg %p372
    %p379 = scmp.eq.s32.totalorder %s22, 1
    %p380 = por %p378, %p379
    %p381 = scmp.ne.s32.totalorder %s373, %s376
    %p382 = scmp.eq.s32.totalorder %s22, 0
    %p383 = por %p381, %p382
    %p384 = scmp.ne.s32.totalorder %s373, %s376
    %p385 = scmp.eq.s32.totalorder %s27, 1
    %p386 = por %p384, %p385
    %p387 = scmp.ne.s32.totalorder %s376, %s377
    %p388 = scmp.eq.s32.totalorder %s27, 0
    %p389 = por %p387, %p388
    %p390 = scmp.ne.s32.totalorder %s376, %s377
    %p391 = scmp.eq.s32.totalorder %s28, 1
    %p392 = por %p390, %p391
    %p394 = scmp.ne.s32.totalorder %s377, %s393
    %p395 = scmp.eq.s32.totalorder %s28, 0
    %p396 = por %p394, %p395
    %p397 = scmp.le.s32.totalorder 1, %s22
    %p398 = scmp.lt.s32.totalorder %s22, 3
    %p399 = pnand %p397, %p398
    %p400 = pneg %p399
    // Predicated region
    $region9: #{_lambda_.3} parent=5 // pred_check
      _
    $region10: #{_lambda_.3} parent=5 // pred_check_branch
      %402 = sbr.rel (%p399) target = $region12
    $region11: #{_lambda_.3} parent=5 // pred_region
      %s403 = ssub.s32 %s22, 1
      // Predicated region
      $region13: #{_lambda_.3} parent=11 // pred_check
        %p404 = pneg %p69
      $region14: #{_lambda_.3} parent=11 // pred_check_branch
        %406 = sbr.rel (%p404) target = $region16
      $region15: #{_lambda_.3} parent=11 // pred_region
        _
      $region16: #{_lambda_.3} parent=11 // pred_fallthru
        _
      // Predicated region
      $region17: #{_lambda_.3} parent=11 // pred_check
        %p407 = pneg %p90
      $region18: #{_lambda_.3} parent=11 // pred_check_branch
        %409 = sbr.rel (%p407) target = $region20
      $region19: #{_lambda_.3} parent=11 // pred_region
        _
      $region20: #{_lambda_.3} parent=11 // pred_fallthru
        _
      // Predicated region
      $region21: #{_lambda_.3} parent=11 // pred_check
        %p410 = pneg %p111
      $region22: #{_lambda_.3} parent=11 // pred_check_branch
        %412 = sbr.rel (%p410) target = $region24
      $region23: #{_lambda_.3} parent=11 // pred_region
        _
      $region24: #{_lambda_.3} parent=11 // pred_fallthru
        _
      // Predicated region
      $region25: #{_lambda_.3} parent=11 // pred_check
        %p413 = pneg %p132
      $region26: #{_lambda_.3} parent=11 // pred_check_branch
        %415 = sbr.rel (%p413) target = $region28
      $region27: #{_lambda_.3} parent=11 // pred_region
        _
      $region28: #{_lambda_.3} parent=11 // pred_fallthru
        _
      // Predicated region
      $region29: #{_lambda_.3} parent=11 // pred_check
        %p416 = pneg %p153
      $region30: #{_lambda_.3} parent=11 // pred_check_branch
        %418 = sbr.rel (%p416) target = $region32
      $region31: #{_lambda_.3} parent=11 // pred_region
        _
      $region32: #{_lambda_.3} parent=11 // pred_fallthru
        _
      // Predicated region
      $region33: #{_lambda_.3} parent=11 // pred_check
        %p419 = pneg %p174
      $region34: #{_lambda_.3} parent=11 // pred_check_branch
        %421 = sbr.rel (%p419) target = $region36
      $region35: #{_lambda_.3} parent=11 // pred_region
        _
      $region36: #{_lambda_.3} parent=11 // pred_fallthru
        _
      // Predicated region
      $region37: #{_lambda_.3} parent=11 // pred_check
        %p422 = pneg %p195
      $region38: #{_lambda_.3} parent=11 // pred_check_branch
        %424 = sbr.rel (%p422) target = $region40
      $region39: #{_lambda_.3} parent=11 // pred_region
        _
      $region40: #{_lambda_.3} parent=11 // pred_fallthru
        _
      // Predicated region
      $region41: #{_lambda_.3} parent=11 // pred_check
        %p425 = pneg %p216
      $region42: #{_lambda_.3} parent=11 // pred_check_branch
        %427 = sbr.rel (%p425) target = $region44
      $region43: #{_lambda_.3} parent=11 // pred_region
        _
      $region44: #{_lambda_.3} parent=11 // pred_fallthru
        _
      // Predicated region
      $region45: #{_lambda_.3} parent=11 // pred_check
        %p428 = pneg %p237
      $region46: #{_lambda_.3} parent=11 // pred_check_branch
        %430 = sbr.rel (%p428) target = $region48
      $region47: #{_lambda_.3} parent=11 // pred_region
        _
      $region48: #{_lambda_.3} parent=11 // pred_fallthru
        _
      // Predicated region
      $region49: #{_lambda_.3} parent=11 // pred_check
        %p431 = pneg %p258
      $region50: #{_lambda_.3} parent=11 // pred_check_branch
        %433 = sbr.rel (%p431) target = $region52
      $region51: #{_lambda_.3} parent=11 // pred_region
        _
      $region52: #{_lambda_.3} parent=11 // pred_fallthru
        _
      // Predicated region
      $region53: #{_lambda_.3} parent=11 // pred_check
        %p434 = pneg %p279
      $region54: #{_lambda_.3} parent=11 // pred_check_branch
        %436 = sbr.rel (%p434) target = $region56
      $region55: #{_lambda_.3} parent=11 // pred_region
        _
      $region56: #{_lambda_.3} parent=11 // pred_fallthru
        _
      // Predicated region
      $region57: #{_lambda_.3} parent=11 // pred_check
        %p437 = pneg %p300
      $region58: #{_lambda_.3} parent=11 // pred_check_branch
        %439 = sbr.rel (%p437) target = $region60
      $region59: #{_lambda_.3} parent=11 // pred_region
        _
      $region60: #{_lambda_.3} parent=11 // pred_fallthru
        _
      // Predicated region
      $region61: #{_lambda_.3} parent=11 // pred_check
        %p440 = pneg %p321
      $region62: #{_lambda_.3} parent=11 // pred_check_branch
        %442 = sbr.rel (%p440) target = $region64
      $region63: #{_lambda_.3} parent=11 // pred_region
        _
      $region64: #{_lambda_.3} parent=11 // pred_fallthru
        _
      // Predicated region
      $region65: #{_lambda_.3} parent=11 // pred_check
        %p443 = pneg %p342
      $region66: #{_lambda_.3} parent=11 // pred_check_branch
        %445 = sbr.rel (%p443) target = $region68
      $region67: #{_lambda_.3} parent=11 // pred_region
        _
      $region68: #{_lambda_.3} parent=11 // pred_fallthru
        _
      // Predicated region
      $region69: #{_lambda_.3} parent=11 // pred_check
        %p446 = pneg %p363
      $region70: #{_lambda_.3} parent=11 // pred_check_branch
        %448 = sbr.rel (%p446) target = $region72
      $region71: #{_lambda_.3} parent=11 // pred_region
        _
      $region72: #{_lambda_.3} parent=11 // pred_fallthru
        _
    $region12: #{_lambda_.3} parent=5 // pred_fallthru
      _
    %p449 = scmp.lt.s32.totalorder %s22, 2
    // Predicated region
    $region73: #{_lambda_.3} parent=5 // pred_check
      %p450 = pneg %p449
    $region74: #{_lambda_.3} parent=5 // pred_check_branch
      %452 = sbr.rel (%p450) target = $region76
    $region75: #{_lambda_.3} parent=5 // pred_region
      // Predicated region
      $region77: #{_lambda_.3} parent=75 // pred_check
        %p453 = pneg %p42
      $region78: #{_lambda_.3} parent=75 // pred_check_branch
        %455 = sbr.rel (%p453) target = $region80
      $region79: #{_lambda_.3} parent=75 // pred_region
        %p456 = scmp.lt.s32.totalorder %s22, 1
        %s457 = scalar_select %p456, %s22, 1
        %s458 = smul.addr %s457, 3
        %s459 = smul.addr %s458, 8
        %s460 = scalar_lea.vmem %s0, %s459
      $region80: #{_lambda_.3} parent=75 // pred_fallthru
        _
    $region76: #{_lambda_.3} parent=5 // pred_fallthru
      _
    %p461 = scmp.le.s32.totalorder 1, %s22
    %p462 = scmp.lt.s32.totalorder %s22, 3
    %p463 = pnand %p461, %p462
    %p464 = pneg %p463
    // Predicated region
    $region81: #{_lambda_.3} parent=5 // pred_check
      _
    $region82: #{_lambda_.3} parent=5 // pred_check_branch
      %466 = sbr.rel (%p463) target = $region84
    $region83: #{_lambda_.3} parent=5 // pred_region
      %s467 = ssub.s32 %s22, 1
      %p468 = scmp.lt.s32.totalorder %s27, 1
      %s469 = scalar_select %p468, %s27, 1
      %s470 = smul.addr %s469, 3
      %s471 = smul.addr %s470, 8
      %s472 = scalar_lea.vmem %s0, %s471
      %p473 = pneg %p48
      %p474 = pneg %p45
      %p475 = pneg %p69
      %p476 = pneg %p66
      %p477 = pneg %p90
      %p478 = pneg %p87
      %p479 = pneg %p111
      %p480 = pneg %p108
      %p481 = pneg %p132
      %p482 = pneg %p129
      %p483 = pneg %p153
      %p484 = pneg %p150
      %p485 = pneg %p174
      %p486 = pneg %p171
      %p487 = pneg %p195
      %p488 = pneg %p192
      %p489 = pneg %p216
      %p490 = pneg %p213
      %p491 = pneg %p237
      %p492 = pneg %p234
      %p493 = pneg %p258
      %p494 = pneg %p255
      %p495 = pneg %p279
      %p496 = pneg %p276
      %p497 = pneg %p300
      %p498 = pneg %p297
      %p499 = pneg %p321
      %p500 = pneg %p318
      %p501 = pneg %p342
      %p502 = pneg %p339
      %p503 = pneg %p363
      %p504 = pneg %p360
      %p505 = pneg %p389
      %p506 = pneg %p386
      %p507 = scmp.lt.s32.totalorder %s27, 1
      %s508 = scalar_select %p507, %s27, 1
      %s509 = smul.addr %s508, 3
      %s510 = smul.addr %s509, 8
      %s511 = scalar_lea.vmem %s16, %s510
      %p512 = scmp.lt.s32.totalorder %s27, 1
      %s513 = scalar_select %p512, %s27, 1
      %s514 = smul.addr %s513, 3
      %s515 = smul.addr %s514, 8
      %s516 = scalar_lea.vmem %s0, %s515
      %p517 = scmp.lt.s32.totalorder %s27, 1
      %s518 = scalar_select %p517, %s27, 1
      %s519 = smul.addr %s518, 3
      %s520 = smul.addr %s519, 8
      %s521 = scalar_lea.vmem %s16, %s520
      %v522 = vld [vmem:[%s516] sm:$0xff]
      %v523 = vld [vmem:[%s516 + $0x8] sm:$0xff]
      %v524 = vld [vmem:[%s516 + $0x10] sm:$0x1]
      %v525 = vld [vmem:[%s2] sm:$0xff]
      %v526 = vld [vmem:[%s2 + $0x8] sm:$0xff]
      %v527 = vld [vmem:[%s2 + $0x10] sm:$0xff]
      %v528 = vld [vmem:[%s2 + $0x18] sm:$0xff]
      %v529 = vld [vmem:[%s2 + $0x20] sm:$0xff]
      %v530 = vld [vmem:[%s2 + $0x28] sm:$0xff]
      %v531 = vld [vmem:[%s1] sm:$0xff]
      %v532 = vld [vmem:[%s1 + $0x8] sm:$0xff]
      %v533 = vld [vmem:[%s1 + $0x10] sm:$0x1]
      %vm534 = vcmask 392192
      %v536 = vsel %vm534, %v522, 0
      %v539 = vsel %vm534, %v523, 0
      %v542 = vsel %vm534, %v524, 0
      %544 = vmatprep.subr.mxu0 0.0
      %545 = vmatpush1.msra.mxu0 0.0
      %546 = vmatprep.subr.mxu0 0.0
      %547 = vmatpush1.msra.mxu0 0.0
      %548 = vmatprep.subr.mxu0 0.0
      %549 = vmatpush1.msra.mxu0 0.0
      %550 = vmatprep.subr.mxu0 0.0
      %551 = vmatpush1.msra.mxu0 0.0
      %552 = vmatprep.subr.mxu0 0.0
      %553 = vmatpush1.msra.mxu0 0.0
      %554 = vmatprep.subr.mxu0 0.0
      %555 = vmatpush1.msra.mxu0 0.0
      %556 = vmatprep.subr.mxu0 0.0
      %557 = vmatpush1.msra.mxu0 0.0
      %558 = vmatprep.subr.mxu0 0.0
      %559 = vmatpush1.msra.mxu0 0.0
      %560 = vmatprep.subr.mxu0 0.0
      %561 = vmatpush1.msra.mxu0 0.0
      %562 = vmatprep.subr.mxu0 0.0
      %563 = vmatpush1.msra.mxu0 0.0
      %564 = vmatprep.subr.mxu0 0.0
      %565 = vmatpush1.msra.mxu0 %v530
      %566 = vmatprep.subr.mxu0 0.0
      %567 = vmatpush1.msra.mxu0 %v529
      %568 = vmatprep.subr.mxu0 0.0
      %569 = vmatpush1.msra.mxu0 %v528
      %570 = vmatprep.subr.mxu0 0.0
      %571 = vmatpush1.msra.mxu0 %v527
      %572 = vmatprep.subr.mxu0 0.0
      %573 = vmatpush1.msra.mxu0 %v526
      %574 = vmatprep.subr.mxu0 0.0
      %575 = vmatpush1.msra.mxu0 %v525
      %576 = vmatprep.subr.mxu0 0.0
      %577 = vmatpush2.msra.mxu0 0.0
      %578 = vmatprep.subr.mxu0 0.0
      %579 = vmatpush2.msra.mxu0 0.0
      %580 = vmatprep.subr.mxu0 0.0
      %581 = vmatpush2.msra.mxu0 0.0
      %582 = vmatprep.subr.mxu0 0.0
      %583 = vmatpush2.msra.mxu0 0.0
      %584 = vmatprep.subr.mxu0 0.0
      %585 = vmatpush2.msra.mxu0 0.0
      %586 = vmatprep.subr.mxu0 0.0
      %587 = vmatpush2.msra.mxu0 0.0
      %588 = vmatprep.subr.mxu0 0.0
      %589 = vmatpush2.msra.mxu0 0.0
      %590 = vmatprep.subr.mxu0 0.0
      %591 = vmatpush2.msra.mxu0 0.0
      %592 = vmatprep.subr.mxu0 0.0
      %593 = vmatpush2.msra.mxu0 0.0
      %594 = vmatprep.subr.mxu0 0.0
      %595 = vmatpush2.msra.mxu0 0.0
      %596 = vmatprep.subr.mxu0 0.0
      %597 = vmatpush2.msra.mxu0 0.0
      %598 = vmatprep.subr.mxu0 0.0
      %599 = vmatpush2.msra.mxu0 0.0
      %600 = vmatprep.subr.mxu0 0.0
      %601 = vmatpush2.msra.mxu0 0.0
      %602 = vmatprep.subr.mxu0 0.0
      %603 = vmatpush2.msra.mxu0 0.0
      %604 = vmatprep.subr.mxu0 0.0
      %605 = vmatpush2.msra.mxu0 0.0
      %606 = vmatprep.subr.mxu0 0.0
      %607 = vmatpush2.msra.mxu0 0.0
      %608 = vmatprep.mubr.f32.mxu0 0.0
      %609 = vmatmul.mubr.f32.gmra.mxu0 %v536
      %v610 = vpop.f32.mrf.mxu0
      %v611 = vadd.f32 %v531, %v610
      %v612 = vpop.f32.mrf.mxu0
      %613 = vmatprep.mubr.f32.mxu0 0.0
      %614 = vmatmul.mubr.f32.gmra.mxu0 %v539
      %v615 = vpop.f32.mrf.mxu0
      %v616 = vadd.f32 %v532, %v615
      %v617 = vpop.f32.mrf.mxu0
      %618 = vmatprep.mubr.f32.mxu0 0.0
      %619 = vmatmul.mubr.f32.gmra.mxu0 %v542
      %v620 = vpop.f32.mrf.mxu0
      %v621 = vadd.f32 %v533, %v620
      %v622 = vpop.f32.mrf.mxu0
      %623 = vdwg.mxu0
      %v624 = vld [vmem:[%s3] sm:$0x1]
      %v625 = vld [vmem:[%s4] sm:$0x1]
      %vm626 = vcmask 261120
      %v627 = vsel %vm626, %v611, 0.0
      %628 = vadd.xlane.f32.xlu0 %v627
      %v629 = vpop.xlane.xlu0 %628
      %v630 = vsel %vm626, %v616, 0.0
      %631 = vadd.xlane.f32.xlu0 %v630
      %v632 = vpop.xlane.xlu0 %631
      %vm633 = vcmask 253952
      %v634 = vsel %vm633, %v621, 0.0
      %635 = vadd.xlane.f32.xlu0 %v634
      %v636 = vpop.xlane.xlu0 %635
      %v637 = vrcp.pop 32.0
      %v638 = vmul.f32 %v629, %v637
      %v639 = vmul.f32 %v632, %v637
      %v640 = vmul.f32 %v636, %v637
      %v641 = vsub.f32 %v611, %v638
      %v642 = vsub.f32 %v616, %v639
      %v643 = vsub.f32 %v621, %v640
      %v644 = vmul.f32 %v641, %v641
      %v645 = vmul.f32 %v642, %v642
      %v646 = vmul.f32 %v643, %v643
      %v647 = vsel %vm626, %v644, 0.0
      %648 = vadd.xlane.f32.xlu0 %v647
      %v649 = vpop.xlane.xlu0 %648
      %v650 = vsel %vm626, %v645, 0.0
      %651 = vadd.xlane.f32.xlu0 %v650
      %v652 = vpop.xlane.xlu0 %651
      %v653 = vsel %vm633, %v646, 0.0
      %654 = vadd.xlane.f32.xlu0 %v653
      %v655 = vpop.xlane.xlu0 %654
      %v656 = vmul.f32 %v649, %v637
      %v657 = vmul.f32 %v652, %v637
      %v658 = vmul.f32 %v655, %v637
      %v659 = vadd.f32 %v656, 1e-05
      %v660 = vadd.f32 %v657, 1e-05
      %v661 = vadd.f32 %v658, 1e-05
      %v662 = vrsqrt.pop %v659
      %v663 = vrsqrt.pop %v660
      %v664 = vrsqrt.pop %v661
      %v665 = vmul.f32 %v641, %v662
      %v666 = vmul.f32 %v642, %v663
      %v667 = vmul.f32 %v643, %v664
      %v669 = vlaneseq
      %v670 = vshrl.u32 %v669, 7
      %v671 = vsub.s32 0, %v670
      %v672 = vrot.slane %v624, %v671
      %v674 = vmul.f32 %v665, %v672
      %v675 = vmul.f32 %v666, %v672
      %v676 = vmul.f32 %v667, %v672
      %v678 = vlaneseq
      %v679 = vshrl.u32 %v678, 7
      %v680 = vsub.s32 0, %v679
      %v681 = vrot.slane %v625, %v680
      %v683 = vadd.f32 %v674, %v681
      %v684 = vadd.f32 %v675, %v681
      %v685 = vadd.f32 %v676, %v681
      %v686 = vld [vmem:[%s5] sm:$0xff]
      %v687 = vld [vmem:[%s5 + $0x8] sm:$0xff]
      %v688 = vld [vmem:[%s5 + $0x10] sm:$0xff]
      %v689 = vld [vmem:[%s5 + $0x18] sm:$0xff]
      %v691 = vsel %vm626, %v683, 0
      %v694 = vsel %vm626, %v684, 0
      %v697 = vsel %vm626, %v685, 0
      %699 = vmatprep.subr.mxu0 0.0
      %700 = vmatpush1.msra.mxu0 0.0
      %701 = vmatprep.subr.mxu0 0.0
      %702 = vmatpush1.msra.mxu0 0.0
      %703 = vmatprep.subr.mxu0 0.0
      %704 = vmatpush1.msra.mxu0 0.0
      %705 = vmatprep.subr.mxu0 0.0
      %706 = vmatpush1.msra.mxu0 0.0
      %707 = vmatprep.subr.mxu0 0.0
      %708 = vmatpush1.msra.mxu0 0.0
      %709 = vmatprep.subr.mxu0 0.0
      %710 = vmatpush1.msra.mxu0 0.0
      %711 = vmatprep.subr.mxu0 0.0
      %712 = vmatpush1.msra.mxu0 0.0
      %713 = vmatprep.subr.mxu0 0.0
      %714 = vmatpush1.msra.mxu0 0.0
      %715 = vmatprep.subr.mxu0 0.0
      %716 = vmatpush1.msra.mxu0 0.0
      %717 = vmatprep.subr.mxu0 0.0
      %718 = vmatpush1.msra.mxu0 0.0
      %719 = vmatprep.subr.mxu0 0.0
      %720 = vmatpush1.msra.mxu0 0.0
      %721 = vmatprep.subr.mxu0 0.0
      %722 = vmatpush1.msra.mxu0 0.0
      %723 = vmatprep.subr.mxu0 0.0
      %724 = vmatpush1.msra.mxu0 %v689
      %725 = vmatprep.subr.mxu0 0.0
      %726 = vmatpush1.msra.mxu0 %v688
      %727 = vmatprep.subr.mxu0 0.0
      %728 = vmatpush1.msra.mxu0 %v687
      %729 = vmatprep.subr.mxu0 0.0
      %730 = vmatpush1.msra.mxu0 %v686
      %731 = vmatprep.subr.mxu0 0.0
      %732 = vmatpush2.msra.mxu0 0.0
      %733 = vmatprep.subr.mxu0 0.0
      %734 = vmatpush2.msra.mxu0 0.0
      %735 = vmatprep.subr.mxu0 0.0
      %736 = vmatpush2.msra.mxu0 0.0
      %737 = vmatprep.subr.mxu0 0.0
      %738 = vmatpush2.msra.mxu0 0.0
      %739 = vmatprep.subr.mxu0 0.0
      %740 = vmatpush2.msra.mxu0 0.0
      %741 = vmatprep.subr.mxu0 0.0
      %742 = vmatpush2.msra.mxu0 0.0
      %743 = vmatprep.subr.mxu0 0.0
      %744 = vmatpush2.msra.mxu0 0.0
      %745 = vmatprep.subr.mxu0 0.0
      %746 = vmatpush2.msra.mxu0 0.0
      %747 = vmatprep.subr.mxu0 0.0
      %748 = vmatpush2.msra.mxu0 0.0
      %749 = vmatprep.subr.mxu0 0.0
      %750 = vmatpush2.msra.mxu0 0.0
      %751 = vmatprep.subr.mxu0 0.0
      %752 = vmatpush2.msra.mxu0 0.0
      %753 = vmatprep.subr.mxu0 0.0
      %754 = vmatpush2.msra.mxu0 0.0
      %755 = vmatprep.subr.mxu0 0.0
      %756 = vmatpush2.msra.mxu0 0.0
      %757 = vmatprep.subr.mxu0 0.0
      %758 = vmatpush2.msra.mxu0 0.0
      %759 = vmatprep.subr.mxu0 0.0
      %760 = vmatpush2.msra.mxu0 0.0
      %761 = vmatprep.subr.mxu0 0.0
      %762 = vmatpush2.msra.mxu0 0.0
      %763 = vmatprep.mubr.f32.mxu0 0.0
      %764 = vmatmul.mubr.f32.gmra.mxu0 %v691
      %v765 = vpop.f32.mrf.mxu0
      %v766 = vadd.f32 0.0, %v765
      %v767 = vpop.f32.mrf.mxu0
      %768 = vmatprep.mubr.f32.mxu0 0.0
      %769 = vmatmul.mubr.f32.gmra.mxu0 %v694
      %v770 = vpop.f32.mrf.mxu0
      %v771 = vadd.f32 0.0, %v770
      %v772 = vpop.f32.mrf.mxu0
      %773 = vmatprep.mubr.f32.mxu0 0.0
      %774 = vmatmul.mubr.f32.gmra.mxu0 %v697
      %v775 = vpop.f32.mrf.mxu0
      %v776 = vadd.f32 0.0, %v775
      %v777 = vpop.f32.mrf.mxu0
      %778 = vdwg.mxu0
      %v779 = vmul.f32 %v766, 0.35355338
      %v780 = vmul.f32 %v771, 0.35355338
      %v781 = vmul.f32 %v776, 0.35355338
      %785 = vrot.lane.b32.xlu0 %v766, 96
      %v786 = vpop.permute.xlu0 %785
      %787 = vrot.lane.b32.xlu0 %v771, 96
      %v788 = vpop.permute.xlu0 %787
      %789 = vrot.lane.b32.xlu0 %v776, 96
      %v790 = vpop.permute.xlu0 %789
      %vm791 = vcmask 64512
      %v793 = vsel %vm791, %v779, 0
      %v796 = vsel %vm791, %v780, 0
      %v799 = vsel %vm791, %v781, 0
      %v801 = vsel %vm791, %v786, 0
      %v803 = vsel %vm791, %v788, 0
      %v805 = vsel %vm791, %v790, 0
      %807 = vmatprep.subr.mxu0 0.0
      %808 = vmatpush1.xpose.msra.mxu0 0.0
      %809 = vmatprep.subr.mxu0 0.0
      %810 = vmatpush1.xpose.msra.mxu0 0.0
      %811 = vmatprep.subr.mxu0 0.0
      %812 = vmatpush1.xpose.msra.mxu0 0.0
      %813 = vmatprep.subr.mxu0 0.0
      %814 = vmatpush1.xpose.msra.mxu0 0.0
      %815 = vmatprep.subr.mxu0 0.0
      %816 = vmatpush1.xpose.msra.mxu0 0.0
      %817 = vmatprep.subr.mxu0 0.0
      %818 = vmatpush1.xpose.msra.mxu0 0.0
      %819 = vmatprep.subr.mxu0 0.0
      %820 = vmatpush1.xpose.msra.mxu0 0.0
      %821 = vmatprep.subr.mxu0 0.0
      %822 = vmatpush1.xpose.msra.mxu0 0.0
      %823 = vmatprep.subr.mxu0 0.0
      %824 = vmatpush1.xpose.msra.mxu0 0.0
      %825 = vmatprep.subr.mxu0 0.0
      %826 = vmatpush1.xpose.msra.mxu0 0.0
      %827 = vmatprep.subr.mxu0 0.0
      %828 = vmatpush1.xpose.msra.mxu0 0.0
      %829 = vmatprep.subr.mxu0 0.0
      %830 = vmatpush1.xpose.msra.mxu0 0.0
      %831 = vmatprep.subr.mxu0 0.0
      %832 = vmatpush1.xpose.msra.mxu0 0.0
      %833 = vmatprep.subr.mxu0 0.0
      %834 = vmatpush1.xpose.msra.mxu0 %v805
      %835 = vmatprep.subr.mxu0 0.0
      %836 = vmatpush1.xpose.msra.mxu0 %v803
      %837 = vmatprep.subr.mxu0 0.0
      %838 = vmatpush1.xpose.msra.mxu0 %v801
      %839 = vmatprep.subr.mxu0 0.0
      %840 = vmatpush2.xpose.msra.mxu0 0.0
      %841 = vmatprep.subr.mxu0 0.0
      %842 = vmatpush2.xpose.msra.mxu0 0.0
      %843 = vmatprep.subr.mxu0 0.0
      %844 = vmatpush2.xpose.msra.mxu0 0.0
      %845 = vmatprep.subr.mxu0 0.0
      %846 = vmatpush2.xpose.msra.mxu0 0.0
      %847 = vmatprep.subr.mxu0 0.0
      %848 = vmatpush2.xpose.msra.mxu0 0.0
      %849 = vmatprep.subr.mxu0 0.0
      %850 = vmatpush2.xpose.msra.mxu0 0.0
      %851 = vmatprep.subr.mxu0 0.0
      %852 = vmatpush2.xpose.msra.mxu0 0.0
      %853 = vmatprep.subr.mxu0 0.0
      %854 = vmatpush2.xpose.msra.mxu0 0.0
      %855 = vmatprep.subr.mxu0 0.0
      %856 = vmatpush2.xpose.msra.mxu0 0.0
      %857 = vmatprep.subr.mxu0 0.0
      %858 = vmatpush2.xpose.msra.mxu0 0.0
      %859 = vmatprep.subr.mxu0 0.0
      %860 = vmatpush2.xpose.msra.mxu0 0.0
      %861 = vmatprep.subr.mxu0 0.0
      %862 = vmatpush2.xpose.msra.mxu0 0.0
      %863 = vmatprep.subr.mxu0 0.0
      %864 = vmatpush2.xpose.msra.mxu0 0.0
      %865 = vmatprep.subr.mxu0 0.0
      %866 = vmatpush2.xpose.msra.mxu0 0.0
      %867 = vmatprep.subr.mxu0 0.0
      %868 = vmatpush2.xpose.msra.mxu0 0.0
      %869 = vmatprep.subr.mxu0 0.0
      %870 = vmatpush2.xpose.msra.mxu0 0.0
      %871 = vmatprep.mubr.f32.mxu0 0.0
      %872 = vmatmul.mubr.f32.gmra.mxu0 %v793
      %v873 = vpop.f32.mrf.mxu0
      %v874 = vadd.f32 0.0, %v873
      %v875 = vpop.f32.mrf.mxu0
      %876 = vmatprep.mubr.f32.mxu0 0.0
      %877 = vmatmul.mubr.f32.gmra.mxu0 %v796
      %v878 = vpop.f32.mrf.mxu0
      %v879 = vadd.f32 0.0, %v878
      %v880 = vpop.f32.mrf.mxu0
      %881 = vmatprep.mubr.f32.mxu0 0.0
      %882 = vmatmul.mubr.f32.gmra.mxu0 %v799
      %v883 = vpop.f32.mrf.mxu0
      %v884 = vadd.f32 0.0, %v883
      %v885 = vpop.f32.mrf.mxu0
      %886 = vdwg.mxu0
      %vm887 = vcmask 138240
      %v888 = vsel %vm887, %v874, -inf
      %889 = vmax.xlane.f32.xlu0 %v888
      %v890 = vpop.xlane.xlu0 %889
      %v891 = vsel %vm887, %v879, -inf
      %892 = vmax.xlane.f32.xlu0 %v891
      %v893 = vpop.xlane.xlu0 %892
      %vm894 = vcmask 131072
      %v895 = vsel %vm894, %v884, -inf
      %896 = vmax.xlane.f32.xlu0 %v895
      %v897 = vpop.xlane.xlu0 %896
      %v898 = vsub.f32 %v874, %v890
      %v899 = vsub.f32 %v879, %v893
      %v900 = vsub.f32 %v884, %v897
      %v901 = vmul.f32 %v898, 1.442695
      %v902 = vpow.pop %v901
      %v903 = vmul.f32 %v899, 1.442695
      %v904 = vpow.pop %v903
      %v905 = vmul.f32 %v900, 1.442695
      %v906 = vpow.pop %v905
      %v907 = vsel %vm887, %v902, 0.0
      %908 = vadd.xlane.f32.xlu0 %v907
      %v909 = vpop.xlane.xlu0 %908
      %v910 = vsel %vm887, %v904, 0.0
      %911 = vadd.xlane.f32.xlu0 %v910
      %v912 = vpop.xlane.xlu0 %911
      %v913 = vsel %vm894, %v906, 0.0
      %914 = vadd.xlane.f32.xlu0 %v913
      %v915 = vpop.xlane.xlu0 %914
      %v916 = vrcp.pop %v909
      %v917 = vrcp.pop %v912
      %v918 = vrcp.pop %v915
      %v919 = vmul.f32 %v902, %v916
      %v920 = vmul.f32 %v904, %v917
      %v921 = vmul.f32 %v906, %v918
      %922 = vrot.lane.b32.xlu0 %v766, 64
      %v923 = vpop.permute.xlu0 %922
      %924 = vrot.lane.b32.xlu0 %v771, 64
      %v925 = vpop.permute.xlu0 %924
      %926 = vrot.lane.b32.xlu0 %v776, 64
      %v927 = vpop.permute.xlu0 %926
      %v931 = vsel %vm887, %v919, 0
      %v934 = vsel %vm887, %v920, 0
      %v937 = vsel %vm887, %v921, 0
      %vm939 = vcmask 1040384
      %v940 = vsel %vm939, %v927, 0
      %942 = vmatprep.subr.mxu0 0.0
      %943 = vmatpush1.msra.mxu0 0.0
      %944 = vmatprep.subr.mxu0 0.0
      %945 = vmatpush1.msra.mxu0 0.0
      %946 = vmatprep.subr.mxu0 0.0
      %947 = vmatpush1.msra.mxu0 0.0
      %948 = vmatprep.subr.mxu0 0.0
      %949 = vmatpush1.msra.mxu0 0.0
      %950 = vmatprep.subr.mxu0 0.0
      %951 = vmatpush1.msra.mxu0 0.0
      %952 = vmatprep.subr.mxu0 0.0
      %953 = vmatpush1.msra.mxu0 0.0
      %954 = vmatprep.subr.mxu0 0.0
      %955 = vmatpush1.msra.mxu0 0.0
      %956 = vmatprep.subr.mxu0 0.0
      %957 = vmatpush1.msra.mxu0 0.0
      %958 = vmatprep.subr.mxu0 0.0
      %959 = vmatpush1.msra.mxu0 0.0
      %960 = vmatprep.subr.mxu0 0.0
      %961 = vmatpush1.msra.mxu0 0.0
      %962 = vmatprep.subr.mxu0 0.0
      %963 = vmatpush1.msra.mxu0 0.0
      %964 = vmatprep.subr.mxu0 0.0
      %965 = vmatpush1.msra.mxu0 0.0
      %966 = vmatprep.subr.mxu0 0.0
      %967 = vmatpush1.msra.mxu0 0.0
      %968 = vmatprep.subr.mxu0 0.0
      %969 = vmatpush1.msra.mxu0 %v940
      %970 = vmatprep.subr.mxu0 0.0
      %971 = vmatpush1.msra.mxu0 %v925
      %972 = vmatprep.subr.mxu0 0.0
      %973 = vmatpush1.msra.mxu0 %v923
      %974 = vmatprep.subr.mxu0 0.0
      %975 = vmatpush2.msra.mxu0 0.0
      %976 = vmatprep.subr.mxu0 0.0
      %977 = vmatpush2.msra.mxu0 0.0
      %978 = vmatprep.subr.mxu0 0.0
      %979 = vmatpush2.msra.mxu0 0.0
      %980 = vmatprep.subr.mxu0 0.0
      %981 = vmatpush2.msra.mxu0 0.0
      %982 = vmatprep.subr.mxu0 0.0
      %983 = vmatpush2.msra.mxu0 0.0
      %984 = vmatprep.subr.mxu0 0.0
      %985 = vmatpush2.msra.mxu0 0.0
      %986 = vmatprep.subr.mxu0 0.0
      %987 = vmatpush2.msra.mxu0 0.0
      %988 = vmatprep.subr.mxu0 0.0
      %989 = vmatpush2.msra.mxu0 0.0
      %990 = vmatprep.subr.mxu0 0.0
      %991 = vmatpush2.msra.mxu0 0.0
      %992 = vmatprep.subr.mxu0 0.0
      %993 = vmatpush2.msra.mxu0 0.0
      %994 = vmatprep.subr.mxu0 0.0
      %995 = vmatpush2.msra.mxu0 0.0
      %996 = vmatprep.subr.mxu0 0.0
      %997 = vmatpush2.msra.mxu0 0.0
      %998 = vmatprep.subr.mxu0 0.0
      %999 = vmatpush2.msra.mxu0 0.0
      %1000 = vmatprep.subr.mxu0 0.0
      %1001 = vmatpush2.msra.mxu0 0.0
      %1002 = vmatprep.subr.mxu0 0.0
      %1003 = vmatpush2.msra.mxu0 0.0
      %1004 = vmatprep.subr.mxu0 0.0
      %1005 = vmatpush2.msra.mxu0 0.0
      %1006 = vmatprep.mubr.f32.mxu0 0.0
      %1007 = vmatmul.mubr.f32.gmra.mxu0 %v931
      %v1008 = vpop.f32.mrf.mxu0
      %v1009 = vadd.f32 0.0, %v1008
      %v1010 = vpop.f32.mrf.mxu0
      %1011 = vmatprep.mubr.f32.mxu0 0.0
      %1012 = vmatmul.mubr.f32.gmra.mxu0 %v934
      %v1013 = vpop.f32.mrf.mxu0
      %v1014 = vadd.f32 0.0, %v1013
      %v1015 = vpop.f32.mrf.mxu0
      %1016 = vmatprep.mubr.f32.mxu0 0.0
      %1017 = vmatmul.mubr.f32.gmra.mxu0 %v937
      %v1018 = vpop.f32.mrf.mxu0
      %v1019 = vadd.f32 0.0, %v1018
      %v1020 = vpop.f32.mrf.mxu0
      %1021 = vdwg.mxu0
      %1022 = vrot.lane.b32.xlu0 %v779, 120
      %v1023 = vpop.permute.xlu0 %1022
      %1024 = vrot.lane.b32.xlu0 %v780, 120
      %v1025 = vpop.permute.xlu0 %1024
      %1026 = vrot.lane.b32.xlu0 %v781, 120
      %v1027 = vpop.permute.xlu0 %1026
      %1028 = vrot.lane.b32.xlu0 %v766, 88
      %v1029 = vpop.permute.xlu0 %1028
      %1030 = vrot.lane.b32.xlu0 %v771, 88
      %v1031 = vpop.permute.xlu0 %1030
      %1032 = vrot.lane.b32.xlu0 %v776, 88
      %v1033 = vpop.permute.xlu0 %1032
      %v1034 = vsel %vm791, %v1023, 0
      %v1036 = vsel %vm791, %v1025, 0
      %v1038 = vsel %vm791, %v1027, 0
      %v1040 = vsel %vm791, %v1029, 0
      %v1042 = vsel %vm791, %v1031, 0
      %v1044 = vsel %vm791, %v1033, 0
      %1046 = vmatprep.subr.mxu0 0.0
      %1047 = vmatpush1.xpose.msra.mxu0 0.0
      %1048 = vmatprep.subr.mxu0 0.0
      %1049 = vmatpush1.xpose.msra.mxu0 0.0
      %1050 = vmatprep.subr.mxu0 0.0
      %1051 = vmatpush1.xpose.msra.mxu0 0.0
      %1052 = vmatprep.subr.mxu0 0.0
      %1053 = vmatpush1.xpose.msra.mxu0 0.0
      %1054 = vmatprep.subr.mxu0 0.0
      %1055 = vmatpush1.xpose.msra.mxu0 0.0
      %1056 = vmatprep.subr.mxu0 0.0
      %1057 = vmatpush1.xpose.msra.mxu0 0.0
      %1058 = vmatprep.subr.mxu0 0.0
      %1059 = vmatpush1.xpose.msra.mxu0 0.0
      %1060 = vmatprep.subr.mxu0 0.0
      %1061 = vmatpush1.xpose.msra.mxu0 0.0
      %1062 = vmatprep.subr.mxu0 0.0
      %1063 = vmatpush1.xpose.msra.mxu0 0.0
      %1064 = vmatprep.subr.mxu0 0.0
      %1065 = vmatpush1.xpose.msra.mxu0 0.0
      %1066 = vmatprep.subr.mxu0 0.0
      %1067 = vmatpush1.xpose.msra.mxu0 0.0
      %1068 = vmatprep.subr.mxu0 0.0
      %1069 = vmatpush1.xpose.msra.mxu0 0.0
      %1070 = vmatprep.subr.mxu0 0.0
      %1071 = vmatpush1.xpose.msra.mxu0 0.0
      %1072 = vmatprep.subr.mxu0 0.0
      %1073 = vmatpush1.xpose.msra.mxu0 %v1044
      %1074 = vmatprep.subr.mxu0 0.0
      %1075 = vmatpush1.xpose.msra.mxu0 %v1042
      %1076 = vmatprep.subr.mxu0 0.0
      %1077 = vmatpush1.xpose.msra.mxu0 %v1040
      %1078 = vmatprep.subr.mxu0 0.0
      %1079 = vmatpush2.xpose.msra.mxu0 0.0
      %1080 = vmatprep.subr.mxu0 0.0
      %1081 = vmatpush2.xpose.msra.mxu0 0.0
      %1082 = vmatprep.subr.mxu0 0.0
      %1083 = vmatpush2.xpose.msra.mxu0 0.0
      %1084 = vmatprep.subr.mxu0 0.0
      %1085 = vmatpush2.xpose.msra.mxu0 0.0
      %1086 = vmatprep.subr.mxu0 0.0
      %1087 = vmatpush2.xpose.msra.mxu0 0.0
      %1088 = vmatprep.subr.mxu0 0.0
      %1089 = vmatpush2.xpose.msra.mxu0 0.0
      %1090 = vmatprep.subr.mxu0 0.0
      %1091 = vmatpush2.xpose.msra.mxu0 0.0
      %1092 = vmatprep.subr.mxu0 0.0
      %1093 = vmatpush2.xpose.msra.mxu0 0.0
      %1094 = vmatprep.subr.mxu0 0.0
      %1095 = vmatpush2.xpose.msra.mxu0 0.0
      %1096 = vmatprep.subr.mxu0 0.0
      %1097 = vmatpush2.xpose.msra.mxu0 0.0
      %1098 = vmatprep.subr.mxu0 0.0
      %1099 = vmatpush2.xpose.msra.mxu0 0.0
      %1100 = vmatprep.subr.mxu0 0.0
      %1101 = vmatpush2.xpose.msra.mxu0 0.0
      %1102 = vmatprep.subr.mxu0 0.0
      %1103 = vmatpush2.xpose.msra.mxu0 0.0
      %1104 = vmatprep.subr.mxu0 0.0
      %1105 = vmatpush2.xpose.msra.mxu0 0.0
      %1106 = vmatprep.subr.mxu0 0.0
      %1107 = vmatpush2.xpose.msra.mxu0 0.0
      %1108 = vmatprep.subr.mxu0 0.0
      %1109 = vmatpush2.xpose.msra.mxu0 0.0
      %1110 = vmatprep.mubr.f32.mxu0 0.0
      %1111 = vmatmul.mubr.f32.gmra.mxu0 %v1034
      %v1112 = vpop.f32.mrf.mxu0
      %v1113 = vadd.f32 0.0, %v1112
      %v1114 = vpop.f32.mrf.mxu0
      %1115 = vmatprep.mubr.f32.mxu0 0.0
      %1116 = vmatmul.mubr.f32.gmra.mxu0 %v1036
      %v1117 = vpop.f32.mrf.mxu0
      %v1118 = vadd.f32 0.0, %v1117
      %v1119 = vpop.f32.mrf.mxu0
      %1120 = vmatprep.mubr.f32.mxu0 0.0
      %1121 = vmatmul.mubr.f32.gmra.mxu0 %v1038
      %v1122 = vpop.f32.mrf.mxu0
      %v1123 = vadd.f32 0.0, %v1122
      %v1124 = vpop.f32.mrf.mxu0
      %1125 = vdwg.mxu0
      %v1126 = vsel %vm887, %v1113, -inf
      %1127 = vmax.xlane.f32.xlu0 %v1126
      %v1128 = vpop.xlane.xlu0 %1127
      %v1129 = vsel %vm887, %v1118, -inf
      %1130 = vmax.xlane.f32.xlu0 %v1129
      %v1131 = vpop.xlane.xlu0 %1130
      %v1132 = vsel %vm894, %v1123, -inf
      %1133 = vmax.xlane.f32.xlu0 %v1132
      %v1134 = vpop.xlane.xlu0 %1133
      %v1135 = vsub.f32 %v1113, %v1128
      %v1136 = vsub.f32 %v1118, %v1131
      %v1137 = vsub.f32 %v1123, %v1134
      %v1138 = vmul.f32 %v1135, 1.442695
      %v1139 = vpow.pop %v1138
      %v1140 = vmul.f32 %v1136, 1.442695
      %v1141 = vpow.pop %v1140
      %v1142 = vmul.f32 %v1137, 1.442695
      %v1143 = vpow.pop %v1142
      %v1144 = vsel %vm887, %v1139, 0.0
      %1145 = vadd.xlane.f32.xlu0 %v1144
      %v1146 = vpop.xlane.xlu0 %1145
      %v1147 = vsel %vm887, %v1141, 0.0
      %1148 = vadd.xlane.f32.xlu0 %v1147
      %v1149 = vpop.xlane.xlu0 %1148
      %v1150 = vsel %vm894, %v1143, 0.0
      %1151 = vadd.xlane.f32.xlu0 %v1150
      %v1152 = vpop.xlane.xlu0 %1151
      %v1153 = vrcp.pop %v1146
      %v1154 = vrcp.pop %v1149
      %v1155 = vrcp.pop %v1152
      %v1156 = vmul.f32 %v1139, %v1153
      %v1157 = vmul.f32 %v1141, %v1154
      %v1158 = vmul.f32 %v1143, %v1155
      %1159 = vrot.lane.b32.xlu0 %v766, 56
      %v1160 = vpop.permute.xlu0 %1159
      %1161 = vrot.lane.b32.xlu0 %v771, 56
      %v1162 = vpop.permute.xlu0 %1161
      %1163 = vrot.lane.b32.xlu0 %v776, 56
      %v1164 = vpop.permute.xlu0 %1163
      %v1168 = vsel %vm887, %v1156, 0
      %v1171 = vsel %vm887, %v1157, 0
      %v1174 = vsel %vm887, %v1158, 0
      %v1176 = vsel %vm939, %v1164, 0
      %1178 = vmatprep.subr.mxu0 0.0
      %1179 = vmatpush1.msra.mxu0 0.0
      %1180 = vmatprep.subr.mxu0 0.0
      %1181 = vmatpush1.msra.mxu0 0.0
      %1182 = vmatprep.subr.mxu0 0.0
      %1183 = vmatpush1.msra.mxu0 0.0
      %1184 = vmatprep.subr.mxu0 0.0
      %1185 = vmatpush1.msra.mxu0 0.0
      %1186 = vmatprep.subr.mxu0 0.0
      %1187 = vmatpush1.msra.mxu0 0.0
      %1188 = vmatprep.subr.mxu0 0.0
      %1189 = vmatpush1.msra.mxu0 0.0
      %1190 = vmatprep.subr.mxu0 0.0
      %1191 = vmatpush1.msra.mxu0 0.0
      %1192 = vmatprep.subr.mxu0 0.0
      %1193 = vmatpush1.msra.mxu0 0.0
      %1194 = vmatprep.subr.mxu0 0.0
      %1195 = vmatpush1.msra.mxu0 0.0
      %1196 = vmatprep.subr.mxu0 0.0
      %1197 = vmatpush1.msra.mxu0 0.0
      %1198 = vmatprep.subr.mxu0 0.0
      %1199 = vmatpush1.msra.mxu0 0.0
      %1200 = vmatprep.subr.mxu0 0.0
      %1201 = vmatpush1.msra.mxu0 0.0
      %1202 = vmatprep.subr.mxu0 0.0
      %1203 = vmatpush1.msra.mxu0 0.0
      %1204 = vmatprep.subr.mxu0 0.0
      %1205 = vmatpush1.msra.mxu0 %v1176
      %1206 = vmatprep.subr.mxu0 0.0
      %1207 = vmatpush1.msra.mxu0 %v1162
      %1208 = vmatprep.subr.mxu0 0.0
      %1209 = vmatpush1.msra.mxu0 %v1160
      %1210 = vmatprep.subr.mxu0 0.0
      %1211 = vmatpush2.msra.mxu0 0.0
      %1212 = vmatprep.subr.mxu0 0.0
      %1213 = vmatpush2.msra.mxu0 0.0
      %1214 = vmatprep.subr.mxu0 0.0
      %1215 = vmatpush2.msra.mxu0 0.0
      %1216 = vmatprep.subr.mxu0 0.0
      %1217 = vmatpush2.msra.mxu0 0.0
      %1218 = vmatprep.subr.mxu0 0.0
      %1219 = vmatpush2.msra.mxu0 0.0
      %1220 = vmatprep.subr.mxu0 0.0
      %1221 = vmatpush2.msra.mxu0 0.0
      %1222 = vmatprep.subr.mxu0 0.0
      %1223 = vmatpush2.msra.mxu0 0.0
      %1224 = vmatprep.subr.mxu0 0.0
      %1225 = vmatpush2.msra.mxu0 0.0
      %1226 = vmatprep.subr.mxu0 0.0
      %1227 = vmatpush2.msra.mxu0 0.0
      %1228 = vmatprep.subr.mxu0 0.0
      %1229 = vmatpush2.msra.mxu0 0.0
      %1230 = vmatprep.subr.mxu0 0.0
      %1231 = vmatpush2.msra.mxu0 0.0
      %1232 = vmatprep.subr.mxu0 0.0
      %1233 = vmatpush2.msra.mxu0 0.0
      %1234 = vmatprep.subr.mxu0 0.0
      %1235 = vmatpush2.msra.mxu0 0.0
      %1236 = vmatprep.subr.mxu0 0.0
      %1237 = vmatpush2.msra.mxu0 0.0
      %1238 = vmatprep.subr.mxu0 0.0
      %1239 = vmatpush2.msra.mxu0 0.0
      %1240 = vmatprep.subr.mxu0 0.0
      %1241 = vmatpush2.msra.mxu0 0.0
      %1242 = vmatprep.mubr.f32.mxu0 0.0
      %1243 = vmatmul.mubr.f32.gmra.mxu0 %v1168
      %v1244 = vpop.f32.mrf.mxu0
      %v1245 = vadd.f32 0.0, %v1244
      %v1246 = vpop.f32.mrf.mxu0
      %1247 = vmatprep.mubr.f32.mxu0 0.0
      %1248 = vmatmul.mubr.f32.gmra.mxu0 %v1171
      %v1249 = vpop.f32.mrf.mxu0
      %v1250 = vadd.f32 0.0, %v1249
      %v1251 = vpop.f32.mrf.mxu0
      %1252 = vmatprep.mubr.f32.mxu0 0.0
      %1253 = vmatmul.mubr.f32.gmra.mxu0 %v1174
      %v1254 = vpop.f32.mrf.mxu0
      %v1255 = vadd.f32 0.0, %v1254
      %v1256 = vpop.f32.mrf.mxu0
      %1257 = vdwg.mxu0
      %1258 = vrot.lane.b32.xlu0 %v779, 112
      %v1259 = vpop.permute.xlu0 %1258
      %1260 = vrot.lane.b32.xlu0 %v780, 112
      %v1261 = vpop.permute.xlu0 %1260
      %1262 = vrot.lane.b32.xlu0 %v781, 112
      %v1263 = vpop.permute.xlu0 %1262
      %1264 = vrot.lane.b32.xlu0 %v766, 80
      %v1265 = vpop.permute.xlu0 %1264
      %1266 = vrot.lane.b32.xlu0 %v771, 80
      %v1267 = vpop.permute.xlu0 %1266
      %1268 = vrot.lane.b32.xlu0 %v776, 80
      %v1269 = vpop.permute.xlu0 %1268
      %v1270 = vsel %vm791, %v1259, 0
      %v1272 = vsel %vm791, %v1261, 0
      %v1274 = vsel %vm791, %v1263, 0
      %v1276 = vsel %vm791, %v1265, 0
      %v1278 = vsel %vm791, %v1267, 0
      %v1280 = vsel %vm791, %v1269, 0
      %1282 = vmatprep.subr.mxu0 0.0
      %1283 = vmatpush1.xpose.msra.mxu0 0.0
      %1284 = vmatprep.subr.mxu0 0.0
      %1285 = vmatpush1.xpose.msra.mxu0 0.0
      %1286 = vmatprep.subr.mxu0 0.0
      %1287 = vmatpush1.xpose.msra.mxu0 0.0
      %1288 = vmatprep.subr.mxu0 0.0
      %1289 = vmatpush1.xpose.msra.mxu0 0.0
      %1290 = vmatprep.subr.mxu0 0.0
      %1291 = vmatpush1.xpose.msra.mxu0 0.0
      %1292 = vmatprep.subr.mxu0 0.0
      %1293 = vmatpush1.xpose.msra.mxu0 0.0
      %1294 = vmatprep.subr.mxu0 0.0
      %1295 = vmatpush1.xpose.msra.mxu0 0.0
      %1296 = vmatprep.subr.mxu0 0.0
      %1297 = vmatpush1.xpose.msra.mxu0 0.0
      %1298 = vmatprep.subr.mxu0 0.0
      %1299 = vmatpush1.xpose.msra.mxu0 0.0
      %1300 = vmatprep.subr.mxu0 0.0
      %1301 = vmatpush1.xpose.msra.mxu0 0.0
      %1302 = vmatprep.subr.mxu0 0.0
      %1303 = vmatpush1.xpose.msra.mxu0 0.0
      %1304 = vmatprep.subr.mxu0 0.0
      %1305 = vmatpush1.xpose.msra.mxu0 0.0
      %1306 = vmatprep.subr.mxu0 0.0
      %1307 = vmatpush1.xpose.msra.mxu0 0.0
      %1308 = vmatprep.subr.mxu0 0.0
      %1309 = vmatpush1.xpose.msra.mxu0 %v1280
      %1310 = vmatprep.subr.mxu0 0.0
      %1311 = vmatpush1.xpose.msra.mxu0 %v1278
      %1312 = vmatprep.subr.mxu0 0.0
      %1313 = vmatpush1.xpose.msra.mxu0 %v1276
      %1314 = vmatprep.subr.mxu0 0.0
      %1315 = vmatpush2.xpose.msra.mxu0 0.0
      %1316 = vmatprep.subr.mxu0 0.0
      %1317 = vmatpush2.xpose.msra.mxu0 0.0
      %1318 = vmatprep.subr.mxu0 0.0
      %1319 = vmatpush2.xpose.msra.mxu0 0.0
      %1320 = vmatprep.subr.mxu0 0.0
      %1321 = vmatpush2.xpose.msra.mxu0 0.0
      %1322 = vmatprep.subr.mxu0 0.0
      %1323 = vmatpush2.xpose.msra.mxu0 0.0
      %1324 = vmatprep.subr.mxu0 0.0
      %1325 = vmatpush2.xpose.msra.mxu0 0.0
      %1326 = vmatprep.subr.mxu0 0.0
      %1327 = vmatpush2.xpose.msra.mxu0 0.0
      %1328 = vmatprep.subr.mxu0 0.0
      %1329 = vmatpush2.xpose.msra.mxu0 0.0
      %1330 = vmatprep.subr.mxu0 0.0
      %1331 = vmatpush2.xpose.msra.mxu0 0.0
      %1332 = vmatprep.subr.mxu0 0.0
      %1333 = vmatpush2.xpose.msra.mxu0 0.0
      %1334 = vmatprep.subr.mxu0 0.0
      %1335 = vmatpush2.xpose.msra.mxu0 0.0
      %1336 = vmatprep.subr.mxu0 0.0
      %1337 = vmatpush2.xpose.msra.mxu0 0.0
      %1338 = vmatprep.subr.mxu0 0.0
      %1339 = vmatpush2.xpose.msra.mxu0 0.0
      %1340 = vmatprep.subr.mxu0 0.0
      %1341 = vmatpush2.xpose.msra.mxu0 0.0
      %1342 = vmatprep.subr.mxu0 0.0
      %1343 = vmatpush2.xpose.msra.mxu0 0.0
      %1344 = vmatprep.subr.mxu0 0.0
      %1345 = vmatpush2.xpose.msra.mxu0 0.0
      %1346 = vmatprep.mubr.f32.mxu0 0.0
      %1347 = vmatmul.mubr.f32.gmra.mxu0 %v1270
      %v1348 = vpop.f32.mrf.mxu0
      %v1349 = vadd.f32 0.0, %v1348
      %v1350 = vpop.f32.mrf.mxu0
      %1351 = vmatprep.mubr.f32.mxu0 0.0
      %1352 = vmatmul.mubr.f32.gmra.mxu0 %v1272
      %v1353 = vpop.f32.mrf.mxu0
      %v1354 = vadd.f32 0.0, %v1353
      %v1355 = vpop.f32.mrf.mxu0
      %1356 = vmatprep.mubr.f32.mxu0 0.0
      %1357 = vmatmul.mubr.f32.gmra.mxu0 %v1274
      %v1358 = vpop.f32.mrf.mxu0
      %v1359 = vadd.f32 0.0, %v1358
      %v1360 = vpop.f32.mrf.mxu0
      %1361 = vdwg.mxu0
      %v1362 = vsel %vm887, %v1349, -inf
      %1363 = vmax.xlane.f32.xlu0 %v1362
      %v1364 = vpop.xlane.xlu0 %1363
      %v1365 = vsel %vm887, %v1354, -inf
      %1366 = vmax.xlane.f32.xlu0 %v1365
      %v1367 = vpop.xlane.xlu0 %1366
      %v1368 = vsel %vm894, %v1359, -inf
      %1369 = vmax.xlane.f32.xlu0 %v1368
      %v1370 = vpop.xlane.xlu0 %1369
      %v1371 = vsub.f32 %v1349, %v1364
      %v1372 = vsub.f32 %v1354, %v1367
      %v1373 = vsub.f32 %v1359, %v1370
      %v1374 = vmul.f32 %v1371, 1.442695
      %v1375 = vpow.pop %v1374
      %v1376 = vmul.f32 %v1372, 1.442695
      %v1377 = vpow.pop %v1376
      %v1378 = vmul.f32 %v1373, 1.442695
      %v1379 = vpow.pop %v1378
      %v1380 = vsel %vm887, %v1375, 0.0
      %1381 = vadd.xlane.f32.xlu0 %v1380
      %v1382 = vpop.xlane.xlu0 %1381
      %v1383 = vsel %vm887, %v1377, 0.0
      %1384 = vadd.xlane.f32.xlu0 %v1383
      %v1385 = vpop.xlane.xlu0 %1384
      %v1386 = vsel %vm894, %v1379, 0.0
      %1387 = vadd.xlane.f32.xlu0 %v1386
      %v1388 = vpop.xlane.xlu0 %1387
      %v1389 = vrcp.pop %v1382
      %v1390 = vrcp.pop %v1385
      %v1391 = vrcp.pop %v1388
      %v1392 = vmul.f32 %v1375, %v1389
      %v1393 = vmul.f32 %v1377, %v1390
      %v1394 = vmul.f32 %v1379, %v1391
      %1395 = vrot.lane.b32.xlu0 %v766, 48
      %v1396 = vpop.permute.xlu0 %1395
      %1397 = vrot.lane.b32.xlu0 %v771, 48
      %v1398 = vpop.permute.xlu0 %1397
      %1399 = vrot.lane.b32.xlu0 %v776, 48
      %v1400 = vpop.permute.xlu0 %1399
      %v1404 = vsel %vm887, %v1392, 0
      %v1407 = vsel %vm887, %v1393, 0
      %v1410 = vsel %vm887, %v1394, 0
      %v1412 = vsel %vm939, %v1400, 0
      %1414 = vmatprep.subr.mxu0 0.0
      %1415 = vmatpush1.msra.mxu0 0.0
      %1416 = vmatprep.subr.mxu0 0.0
      %1417 = vmatpush1.msra.mxu0 0.0
      %1418 = vmatprep.subr.mxu0 0.0
      %1419 = vmatpush1.msra.mxu0 0.0
      %1420 = vmatprep.subr.mxu0 0.0
      %1421 = vmatpush1.msra.mxu0 0.0
      %1422 = vmatprep.subr.mxu0 0.0
      %1423 = vmatpush1.msra.mxu0 0.0
      %1424 = vmatprep.subr.mxu0 0.0
      %1425 = vmatpush1.msra.mxu0 0.0
      %1426 = vmatprep.subr.mxu0 0.0
      %1427 = vmatpush1.msra.mxu0 0.0
      %1428 = vmatprep.subr.mxu0 0.0
      %1429 = vmatpush1.msra.mxu0 0.0
      %1430 = vmatprep.subr.mxu0 0.0
      %1431 = vmatpush1.msra.mxu0 0.0
      %1432 = vmatprep.subr.mxu0 0.0
      %1433 = vmatpush1.msra.mxu0 0.0
      %1434 = vmatprep.subr.mxu0 0.0
      %1435 = vmatpush1.msra.mxu0 0.0
      %1436 = vmatprep.subr.mxu0 0.0
      %1437 = vmatpush1.msra.mxu0 0.0
      %1438 = vmatprep.subr.mxu0 0.0
      %1439 = vmatpush1.msra.mxu0 0.0
      %1440 = vmatprep.subr.mxu0 0.0
      %1441 = vmatpush1.msra.mxu0 %v1412
      %1442 = vmatprep.subr.mxu0 0.0
      %1443 = vmatpush1.msra.mxu0 %v1398
      %1444 = vmatprep.subr.mxu0 0.0
      %1445 = vmatpush1.msra.mxu0 %v1396
      %1446 = vmatprep.subr.mxu0 0.0
      %1447 = vmatpush2.msra.mxu0 0.0
      %1448 = vmatprep.subr.mxu0 0.0
      %1449 = vmatpush2.msra.mxu0 0.0
      %1450 = vmatprep.subr.mxu0 0.0
      %1451 = vmatpush2.msra.mxu0 0.0
      %1452 = vmatprep.subr.mxu0 0.0
      %1453 = vmatpush2.msra.mxu0 0.0
      %1454 = vmatprep.subr.mxu0 0.0
      %1455 = vmatpush2.msra.mxu0 0.0
      %1456 = vmatprep.subr.mxu0 0.0
      %1457 = vmatpush2.msra.mxu0 0.0
      %1458 = vmatprep.subr.mxu0 0.0
      %1459 = vmatpush2.msra.mxu0 0.0
      %1460 = vmatprep.subr.mxu0 0.0
      %1461 = vmatpush2.msra.mxu0 0.0
      %1462 = vmatprep.subr.mxu0 0.0
      %1463 = vmatpush2.msra.mxu0 0.0
      %1464 = vmatprep.subr.mxu0 0.0
      %1465 = vmatpush2.msra.mxu0 0.0
      %1466 = vmatprep.subr.mxu0 0.0
      %1467 = vmatpush2.msra.mxu0 0.0
      %1468 = vmatprep.subr.mxu0 0.0
      %1469 = vmatpush2.msra.mxu0 0.0
      %1470 = vmatprep.subr.mxu0 0.0
      %1471 = vmatpush2.msra.mxu0 0.0
      %1472 = vmatprep.subr.mxu0 0.0
      %1473 = vmatpush2.msra.mxu0 0.0
      %1474 = vmatprep.subr.mxu0 0.0
      %1475 = vmatpush2.msra.mxu0 0.0
      %1476 = vmatprep.subr.mxu0 0.0
      %1477 = vmatpush2.msra.mxu0 0.0
      %1478 = vmatprep.mubr.f32.mxu0 0.0
      %1479 = vmatmul.mubr.f32.gmra.mxu0 %v1404
      %v1480 = vpop.f32.mrf.mxu0
      %v1481 = vadd.f32 0.0, %v1480
      %v1482 = vpop.f32.mrf.mxu0
      %1483 = vmatprep.mubr.f32.mxu0 0.0
      %1484 = vmatmul.mubr.f32.gmra.mxu0 %v1407
      %v1485 = vpop.f32.mrf.mxu0
      %v1486 = vadd.f32 0.0, %v1485
      %v1487 = vpop.f32.mrf.mxu0
      %1488 = vmatprep.mubr.f32.mxu0 0.0
      %1489 = vmatmul.mubr.f32.gmra.mxu0 %v1410
      %v1490 = vpop.f32.mrf.mxu0
      %v1491 = vadd.f32 0.0, %v1490
      %v1492 = vpop.f32.mrf.mxu0
      %1493 = vdwg.mxu0
      %1494 = vrot.lane.b32.xlu0 %v779, 104
      %v1495 = vpop.permute.xlu0 %1494
      %1496 = vrot.lane.b32.xlu0 %v780, 104
      %v1497 = vpop.permute.xlu0 %1496
      %1498 = vrot.lane.b32.xlu0 %v781, 104
      %v1499 = vpop.permute.xlu0 %1498
      %1500 = vrot.lane.b32.xlu0 %v766, 72
      %v1501 = vpop.permute.xlu0 %1500
      %1502 = vrot.lane.b32.xlu0 %v771, 72
      %v1503 = vpop.permute.xlu0 %1502
      %1504 = vrot.lane.b32.xlu0 %v776, 72
      %v1505 = vpop.permute.xlu0 %1504
      %v1506 = vsel %vm791, %v1495, 0
      %v1508 = vsel %vm791, %v1497, 0
      %v1510 = vsel %vm791, %v1499, 0
      %v1512 = vsel %vm791, %v1501, 0
      %v1514 = vsel %vm791, %v1503, 0
      %v1516 = vsel %vm791, %v1505, 0
      %1518 = vmatprep.subr.mxu0 0.0
      %1519 = vmatpush1.xpose.msra.mxu0 0.0
      %1520 = vmatprep.subr.mxu0 0.0
      %1521 = vmatpush1.xpose.msra.mxu0 0.0
      %1522 = vmatprep.subr.mxu0 0.0
      %1523 = vmatpush1.xpose.msra.mxu0 0.0
      %1524 = vmatprep.subr.mxu0 0.0
      %1525 = vmatpush1.xpose.msra.mxu0 0.0
      %1526 = vmatprep.subr.mxu0 0.0
      %1527 = vmatpush1.xpose.msra.mxu0 0.0
      %1528 = vmatprep.subr.mxu0 0.0
      %1529 = vmatpush1.xpose.msra.mxu0 0.0
      %1530 = vmatprep.subr.mxu0 0.0
      %1531 = vmatpush1.xpose.msra.mxu0 0.0
      %1532 = vmatprep.subr.mxu0 0.0
      %1533 = vmatpush1.xpose.msra.mxu0 0.0
      %1534 = vmatprep.subr.mxu0 0.0
      %1535 = vmatpush1.xpose.msra.mxu0 0.0
      %1536 = vmatprep.subr.mxu0 0.0
      %1537 = vmatpush1.xpose.msra.mxu0 0.0
      %1538 = vmatprep.subr.mxu0 0.0
      %1539 = vmatpush1.xpose.msra.mxu0 0.0
      %1540 = vmatprep.subr.mxu0 0.0
      %1541 = vmatpush1.xpose.msra.mxu0 0.0
      %1542 = vmatprep.subr.mxu0 0.0
      %1543 = vmatpush1.xpose.msra.mxu0 0.0
      %1544 = vmatprep.subr.mxu0 0.0
      %1545 = vmatpush1.xpose.msra.mxu0 %v1516
      %1546 = vmatprep.subr.mxu0 0.0
      %1547 = vmatpush1.xpose.msra.mxu0 %v1514
      %1548 = vmatprep.subr.mxu0 0.0
      %1549 = vmatpush1.xpose.msra.mxu0 %v1512
      %1550 = vmatprep.subr.mxu0 0.0
      %1551 = vmatpush2.xpose.msra.mxu0 0.0
      %1552 = vmatprep.subr.mxu0 0.0
      %1553 = vmatpush2.xpose.msra.mxu0 0.0
      %1554 = vmatprep.subr.mxu0 0.0
      %1555 = vmatpush2.xpose.msra.mxu0 0.0
      %1556 = vmatprep.subr.mxu0 0.0
      %1557 = vmatpush2.xpose.msra.mxu0 0.0
      %1558 = vmatprep.subr.mxu0 0.0
      %1559 = vmatpush2.xpose.msra.mxu0 0.0
      %1560 = vmatprep.subr.mxu0 0.0
      %1561 = vmatpush2.xpose.msra.mxu0 0.0
      %1562 = vmatprep.subr.mxu0 0.0
      %1563 = vmatpush2.xpose.msra.mxu0 0.0
      %1564 = vmatprep.subr.mxu0 0.0
      %1565 = vmatpush2.xpose.msra.mxu0 0.0
      %1566 = vmatprep.subr.mxu0 0.0
      %1567 = vmatpush2.xpose.msra.mxu0 0.0
      %1568 = vmatprep.subr.mxu0 0.0
      %1569 = vmatpush2.xpose.msra.mxu0 0.0
      %1570 = vmatprep.subr.mxu0 0.0
      %1571 = vmatpush2.xpose.msra.mxu0 0.0
      %1572 = vmatprep.subr.mxu0 0.0
      %1573 = vmatpush2.xpose.msra.mxu0 0.0
      %1574 = vmatprep.subr.mxu0 0.0
      %1575 = vmatpush2.xpose.msra.mxu0 0.0
      %1576 = vmatprep.subr.mxu0 0.0
      %1577 = vmatpush2.xpose.msra.mxu0 0.0
      %1578 = vmatprep.subr.mxu0 0.0
      %1579 = vmatpush2.xpose.msra.mxu0 0.0
      %1580 = vmatprep.subr.mxu0 0.0
      %1581 = vmatpush2.xpose.msra.mxu0 0.0
      %1582 = vmatprep.mubr.f32.mxu0 0.0
      %1583 = vmatmul.mubr.f32.gmra.mxu0 %v1506
      %v1584 = vpop.f32.mrf.mxu0
      %v1585 = vadd.f32 0.0, %v1584
      %v1586 = vpop.f32.mrf.mxu0
      %1587 = vmatprep.mubr.f32.mxu0 0.0
      %1588 = vmatmul.mubr.f32.gmra.mxu0 %v1508
      %v1589 = vpop.f32.mrf.mxu0
      %v1590 = vadd.f32 0.0, %v1589
      %v1591 = vpop.f32.mrf.mxu0
      %1592 = vmatprep.mubr.f32.mxu0 0.0
      %1593 = vmatmul.mubr.f32.gmra.mxu0 %v1510
      %v1594 = vpop.f32.mrf.mxu0
      %v1595 = vadd.f32 0.0, %v1594
      %v1596 = vpop.f32.mrf.mxu0
      %1597 = vdwg.mxu0
      %v1598 = vsel %vm887, %v1585, -inf
      %1599 = vmax.xlane.f32.xlu0 %v1598
      %v1600 = vpop.xlane.xlu0 %1599
      %v1601 = vsel %vm887, %v1590, -inf
      %1602 = vmax.xlane.f32.xlu0 %v1601
      %v1603 = vpop.xlane.xlu0 %1602
      %v1604 = vsel %vm894, %v1595, -inf
      %1605 = vmax.xlane.f32.xlu0 %v1604
      %v1606 = vpop.xlane.xlu0 %1605
      %v1607 = vsub.f32 %v1585, %v1600
      %v1608 = vsub.f32 %v1590, %v1603
      %v1609 = vsub.f32 %v1595, %v1606
      %v1610 = vmul.f32 %v1607, 1.442695
      %v1611 = vpow.pop %v1610
      %v1612 = vmul.f32 %v1608, 1.442695
      %v1613 = vpow.pop %v1612
      %v1614 = vmul.f32 %v1609, 1.442695
      %v1615 = vpow.pop %v1614
      %v1616 = vsel %vm887, %v1611, 0.0
      %1617 = vadd.xlane.f32.xlu0 %v1616
      %v1618 = vpop.xlane.xlu0 %1617
      %v1619 = vsel %vm887, %v1613, 0.0
      %1620 = vadd.xlane.f32.xlu0 %v1619
      %v1621 = vpop.xlane.xlu0 %1620
      %v1622 = vsel %vm894, %v1615, 0.0
      %1623 = vadd.xlane.f32.xlu0 %v1622
      %v1624 = vpop.xlane.xlu0 %1623
      %v1625 = vrcp.pop %v1618
      %v1626 = vrcp.pop %v1621
      %v1627 = vrcp.pop %v1624
      %v1628 = vmul.f32 %v1611, %v1625
      %v1629 = vmul.f32 %v1613, %v1626
      %v1630 = vmul.f32 %v1615, %v1627
      %1631 = vrot.lane.b32.xlu0 %v766, 40
      %v1632 = vpop.permute.xlu0 %1631
      %1633 = vrot.lane.b32.xlu0 %v771, 40
      %v1634 = vpop.permute.xlu0 %1633
      %1635 = vrot.lane.b32.xlu0 %v776, 40
      %v1636 = vpop.permute.xlu0 %1635
      %v1640 = vsel %vm887, %v1628, 0
      %v1643 = vsel %vm887, %v1629, 0
      %v1646 = vsel %vm887, %v1630, 0
      %v1648 = vsel %vm939, %v1636, 0
      %1650 = vmatprep.subr.mxu0 0.0
      %1651 = vmatpush1.msra.mxu0 0.0
      %1652 = vmatprep.subr.mxu0 0.0
      %1653 = vmatpush1.msra.mxu0 0.0
      %1654 = vmatprep.subr.mxu0 0.0
      %1655 = vmatpush1.msra.mxu0 0.0
      %1656 = vmatprep.subr.mxu0 0.0
      %1657 = vmatpush1.msra.mxu0 0.0
      %1658 = vmatprep.subr.mxu0 0.0
      %1659 = vmatpush1.msra.mxu0 0.0
      %1660 = vmatprep.subr.mxu0 0.0
      %1661 = vmatpush1.msra.mxu0 0.0
      %1662 = vmatprep.subr.mxu0 0.0
      %1663 = vmatpush1.msra.mxu0 0.0
      %1664 = vmatprep.subr.mxu0 0.0
      %1665 = vmatpush1.msra.mxu0 0.0
      %1666 = vmatprep.subr.mxu0 0.0
      %1667 = vmatpush1.msra.mxu0 0.0
      %1668 = vmatprep.subr.mxu0 0.0
      %1669 = vmatpush1.msra.mxu0 0.0
      %1670 = vmatprep.subr.mxu0 0.0
      %1671 = vmatpush1.msra.mxu0 0.0
      %1672 = vmatprep.subr.mxu0 0.0
      %1673 = vmatpush1.msra.mxu0 0.0
      %1674 = vmatprep.subr.mxu0 0.0
      %1675 = vmatpush1.msra.mxu0 0.0
      %1676 = vmatprep.subr.mxu0 0.0
      %1677 = vmatpush1.msra.mxu0 %v1648
      %1678 = vmatprep.subr.mxu0 0.0
      %1679 = vmatpush1.msra.mxu0 %v1634
      %1680 = vmatprep.subr.mxu0 0.0
      %1681 = vmatpush1.msra.mxu0 %v1632
      %1682 = vmatprep.subr.mxu0 0.0
      %1683 = vmatpush2.msra.mxu0 0.0
      %1684 = vmatprep.subr.mxu0 0.0
      %1685 = vmatpush2.msra.mxu0 0.0
      %1686 = vmatprep.subr.mxu0 0.0
      %1687 = vmatpush2.msra.mxu0 0.0
      %1688 = vmatprep.subr.mxu0 0.0
      %1689 = vmatpush2.msra.mxu0 0.0
      %1690 = vmatprep.subr.mxu0 0.0
      %1691 = vmatpush2.msra.mxu0 0.0
      %1692 = vmatprep.subr.mxu0 0.0
      %1693 = vmatpush2.msra.mxu0 0.0
      %1694 = vmatprep.subr.mxu0 0.0
      %1695 = vmatpush2.msra.mxu0 0.0
      %1696 = vmatprep.subr.mxu0 0.0
      %1697 = vmatpush2.msra.mxu0 0.0
      %1698 = vmatprep.subr.mxu0 0.0
      %1699 = vmatpush2.msra.mxu0 0.0
      %1700 = vmatprep.subr.mxu0 0.0
      %1701 = vmatpush2.msra.mxu0 0.0
      %1702 = vmatprep.subr.mxu0 0.0
      %1703 = vmatpush2.msra.mxu0 0.0
      %1704 = vmatprep.subr.mxu0 0.0
      %1705 = vmatpush2.msra.mxu0 0.0
      %1706 = vmatprep.subr.mxu0 0.0
      %1707 = vmatpush2.msra.mxu0 0.0
      %1708 = vmatprep.subr.mxu0 0.0
      %1709 = vmatpush2.msra.mxu0 0.0
      %1710 = vmatprep.subr.mxu0 0.0
      %1711 = vmatpush2.msra.mxu0 0.0
      %1712 = vmatprep.subr.mxu0 0.0
      %1713 = vmatpush2.msra.mxu0 0.0
      %1714 = vmatprep.mubr.f32.mxu0 0.0
      %1715 = vmatmul.mubr.f32.gmra.mxu0 %v1640
      %v1716 = vpop.f32.mrf.mxu0
      %v1717 = vadd.f32 0.0, %v1716
      %v1718 = vpop.f32.mrf.mxu0
      %1719 = vmatprep.mubr.f32.mxu0 0.0
      %1720 = vmatmul.mubr.f32.gmra.mxu0 %v1643
      %v1721 = vpop.f32.mrf.mxu0
      %v1722 = vadd.f32 0.0, %v1721
      %v1723 = vpop.f32.mrf.mxu0
      %1724 = vmatprep.mubr.f32.mxu0 0.0
      %1725 = vmatmul.mubr.f32.gmra.mxu0 %v1646
      %v1726 = vpop.f32.mrf.mxu0
      %v1727 = vadd.f32 0.0, %v1726
      %v1728 = vpop.f32.mrf.mxu0
      %1729 = vdwg.mxu0
      %1733 = vrot.lane.b32.xlu0 %v1245, 8
      %v1734 = vpop.permute.xlu0 %1733
      %1735 = vrot.lane.b32.xlu0 %v1250, 8
      %v1736 = vpop.permute.xlu0 %1735
      %1737 = vrot.lane.b32.xlu0 %v1255, 8
      %v1738 = vpop.permute.xlu0 %1737
      %1745 = vrot.lane.b32.xlu0 %v1481, 16
      %v1746 = vpop.permute.xlu0 %1745
      %1747 = vrot.lane.b32.xlu0 %v1486, 16
      %v1748 = vpop.permute.xlu0 %1747
      %1749 = vrot.lane.b32.xlu0 %v1491, 16
      %v1750 = vpop.permute.xlu0 %1749
      %1757 = vrot.lane.b32.xlu0 %v1717, 24
      %v1758 = vpop.permute.xlu0 %1757
      %1759 = vrot.lane.b32.xlu0 %v1722, 24
      %v1760 = vpop.permute.xlu0 %1759
      %1761 = vrot.lane.b32.xlu0 %v1727, 24
      %v1762 = vpop.permute.xlu0 %1761
      %v1766 = vsel %vm791, %v1009, %v1734
      %v1767 = vsel %vm791, %v1014, %v1736
      %v1768 = vsel %vm791, %v1019, %v1738
      %vm1769 = vcmask 130048
      %v1770 = vsel %vm1769, %v1766, %v1746
      %v1771 = vsel %vm1769, %v1767, %v1748
      %v1772 = vsel %vm1769, %v1768, %v1750
      %vm1773 = vcmask 195584
      %v1774 = vsel %vm1773, %v1770, %v1758
      %v1775 = vsel %vm1773, %v1771, %v1760
      %v1776 = vsel %vm1773, %v1772, %v1762
      %v1777 = vld [vmem:[%s6] sm:$0xff]
      %v1778 = vld [vmem:[%s6 + $0x8] sm:$0xff]
      %v1779 = vld [vmem:[%s6 + $0x10] sm:$0xff]
      %v1780 = vld [vmem:[%s6 + $0x18] sm:$0xff]
      %v1781 = vld [vmem:[%s7] sm:$0x1]
      %v1783 = vlaneseq
      %v1784 = vshrl.u32 %v1783, 7
      %v1785 = vsub.s32 0, %v1784
      %v1786 = vrot.slane %v1781, %v1785
      %v1789 = vsel %vm626, %v1774, 0
      %v1792 = vsel %vm626, %v1775, 0
      %v1795 = vsel %vm626, %v1776, 0
      %1797 = vmatprep.subr.mxu0 0.0
      %1798 = vmatpush1.msra.mxu0 0.0
      %1799 = vmatprep.subr.mxu0 0.0
      %1800 = vmatpush1.msra.mxu0 0.0
      %1801 = vmatprep.subr.mxu0 0.0
      %1802 = vmatpush1.msra.mxu0 0.0
      %1803 = vmatprep.subr.mxu0 0.0
      %1804 = vmatpush1.msra.mxu0 0.0
      %1805 = vmatprep.subr.mxu0 0.0
      %1806 = vmatpush1.msra.mxu0 0.0
      %1807 = vmatprep.subr.mxu0 0.0
      %1808 = vmatpush1.msra.mxu0 0.0
      %1809 = vmatprep.subr.mxu0 0.0
      %1810 = vmatpush1.msra.mxu0 0.0
      %1811 = vmatprep.subr.mxu0 0.0
      %1812 = vmatpush1.msra.mxu0 0.0
      %1813 = vmatprep.subr.mxu0 0.0
      %1814 = vmatpush1.msra.mxu0 0.0
      %1815 = vmatprep.subr.mxu0 0.0
      %1816 = vmatpush1.msra.mxu0 0.0
      %1817 = vmatprep.subr.mxu0 0.0
      %1818 = vmatpush1.msra.mxu0 0.0
      %1819 = vmatprep.subr.mxu0 0.0
      %1820 = vmatpush1.msra.mxu0 0.0
      %1821 = vmatprep.subr.mxu0 0.0
      %1822 = vmatpush1.msra.mxu0 %v1780
      %1823 = vmatprep.subr.mxu0 0.0
      %1824 = vmatpush1.msra.mxu0 %v1779
      %1825 = vmatprep.subr.mxu0 0.0
      %1826 = vmatpush1.msra.mxu0 %v1778
      %1827 = vmatprep.subr.mxu0 0.0
      %1828 = vmatpush1.msra.mxu0 %v1777
      %1829 = vmatprep.subr.mxu0 0.0
      %1830 = vmatpush2.msra.mxu0 0.0
      %1831 = vmatprep.subr.mxu0 0.0
      %1832 = vmatpush2.msra.mxu0 0.0
      %1833 = vmatprep.subr.mxu0 0.0
      %1834 = vmatpush2.msra.mxu0 0.0
      %1835 = vmatprep.subr.mxu0 0.0
      %1836 = vmatpush2.msra.mxu0 0.0
      %1837 = vmatprep.subr.mxu0 0.0
      %1838 = vmatpush2.msra.mxu0 0.0
      %1839 = vmatprep.subr.mxu0 0.0
      %1840 = vmatpush2.msra.mxu0 0.0
      %1841 = vmatprep.subr.mxu0 0.0
      %1842 = vmatpush2.msra.mxu0 0.0
      %1843 = vmatprep.subr.mxu0 0.0
      %1844 = vmatpush2.msra.mxu0 0.0
      %1845 = vmatprep.subr.mxu0 0.0
      %1846 = vmatpush2.msra.mxu0 0.0
      %1847 = vmatprep.subr.mxu0 0.0
      %1848 = vmatpush2.msra.mxu0 0.0
      %1849 = vmatprep.subr.mxu0 0.0
      %1850 = vmatpush2.msra.mxu0 0.0
      %1851 = vmatprep.subr.mxu0 0.0
      %1852 = vmatpush2.msra.mxu0 0.0
      %1853 = vmatprep.subr.mxu0 0.0
      %1854 = vmatpush2.msra.mxu0 0.0
      %1855 = vmatprep.subr.mxu0 0.0
      %1856 = vmatpush2.msra.mxu0 0.0
      %1857 = vmatprep.subr.mxu0 0.0
      %1858 = vmatpush2.msra.mxu0 0.0
      %1859 = vmatprep.subr.mxu0 0.0
      %1860 = vmatpush2.msra.mxu0 0.0
      %1861 = vmatprep.mubr.f32.mxu0 0.0
      %1862 = vmatmul.mubr.f32.gmra.mxu0 %v1789
      %v1863 = vpop.f32.mrf.mxu0
      %v1864 = vadd.f32 %v1786, %v1863
      %v1865 = vpop.f32.mrf.mxu0
      %1866 = vmatprep.mubr.f32.mxu0 0.0
      %1867 = vmatmul.mubr.f32.gmra.mxu0 %v1792
      %v1868 = vpop.f32.mrf.mxu0
      %v1869 = vadd.f32 %v1786, %v1868
      %v1870 = vpop.f32.mrf.mxu0
      %1871 = vmatprep.mubr.f32.mxu0 0.0
      %1872 = vmatmul.mubr.f32.gmra.mxu0 %v1795
      %v1873 = vpop.f32.mrf.mxu0
      %v1874 = vadd.f32 %v1786, %v1873
      %v1875 = vpop.f32.mrf.mxu0
      %1876 = vdwg.mxu0
      %v1877 = vadd.f32 %v611, %v1864
      %v1878 = vadd.f32 %v616, %v1869
      %v1879 = vadd.f32 %v621, %v1874
      %v1880 = vld [vmem:[%s8] sm:$0x1]
      %v1881 = vld [vmem:[%s9] sm:$0x1]
      %v1882 = vsel %vm626, %v1877, 0.0
      %1883 = vadd.xlane.f32.xlu0 %v1882
      %v1884 = vpop.xlane.xlu0 %1883
      %v1885 = vsel %vm626, %v1878, 0.0
      %1886 = vadd.xlane.f32.xlu0 %v1885
      %v1887 = vpop.xlane.xlu0 %1886
      %v1888 = vsel %vm633, %v1879, 0.0
      %1889 = vadd.xlane.f32.xlu0 %v1888
      %v1890 = vpop.xlane.xlu0 %1889
      %v1891 = vmul.f32 %v1884, %v637
      %v1892 = vmul.f32 %v1887, %v637
      %v1893 = vmul.f32 %v1890, %v637
      %v1894 = vsub.f32 %v1877, %v1891
      %v1895 = vsub.f32 %v1878, %v1892
      %v1896 = vsub.f32 %v1879, %v1893
      %v1897 = vmul.f32 %v1894, %v1894
      %v1898 = vmul.f32 %v1895, %v1895
      %v1899 = vmul.f32 %v1896, %v1896
      %v1900 = vsel %vm626, %v1897, 0.0
      %1901 = vadd.xlane.f32.xlu0 %v1900
      %v1902 = vpop.xlane.xlu0 %1901
      %v1903 = vsel %vm626, %v1898, 0.0
      %1904 = vadd.xlane.f32.xlu0 %v1903
      %v1905 = vpop.xlane.xlu0 %1904
      %v1906 = vsel %vm633, %v1899, 0.0
      %1907 = vadd.xlane.f32.xlu0 %v1906
      %v1908 = vpop.xlane.xlu0 %1907
      %v1909 = vmul.f32 %v1902, %v637
      %v1910 = vmul.f32 %v1905, %v637
      %v1911 = vmul.f32 %v1908, %v637
      %v1912 = vadd.f32 %v1909, 1e-05
      %v1913 = vadd.f32 %v1910, 1e-05
      %v1914 = vadd.f32 %v1911, 1e-05
      %v1915 = vrsqrt.pop %v1912
      %v1916 = vrsqrt.pop %v1913
      %v1917 = vrsqrt.pop %v1914
      %v1918 = vmul.f32 %v1894, %v1915
      %v1919 = vmul.f32 %v1895, %v1916
      %v1920 = vmul.f32 %v1896, %v1917
      %v1922 = vlaneseq
      %v1923 = vshrl.u32 %v1922, 7
      %v1924 = vsub.s32 0, %v1923
      %v1925 = vrot.slane %v1880, %v1924
      %v1927 = vmul.f32 %v1918, %v1925
      %v1928 = vmul.f32 %v1919, %v1925
      %v1929 = vmul.f32 %v1920, %v1925
      %v1931 = vlaneseq
      %v1932 = vshrl.u32 %v1931, 7
      %v1933 = vsub.s32 0, %v1932
      %v1934 = vrot.slane %v1881, %v1933
      %v1936 = vadd.f32 %v1927, %v1934
      %v1937 = vadd.f32 %v1928, %v1934
      %v1938 = vadd.f32 %v1929, %v1934
      %v1939 = vld [vmem:[%s10] sm:$0xff]
      %v1940 = vld [vmem:[%s10 + $0x8] sm:$0xff]
      %v1941 = vld [vmem:[%s10 + $0x10] sm:$0xff]
      %v1942 = vld [vmem:[%s10 + $0x18] sm:$0xff]
      %v1943 = vld [vmem:[%s11] sm:$0x1]
      %v1945 = vlaneseq
      %v1946 = vshrl.u32 %v1945, 7
      %v1947 = vsub.s32 0, %v1946
      %v1948 = vrot.slane %v1943, %v1947
      %v1951 = vsel %vm626, %v1936, 0
      %v1954 = vsel %vm626, %v1937, 0
      %v1957 = vsel %vm626, %v1938, 0
      %1959 = vmatprep.subr.mxu0 0.0
      %1960 = vmatpush1.msra.mxu0 0.0
      %1961 = vmatprep.subr.mxu0 0.0
      %1962 = vmatpush1.msra.mxu0 0.0
      %1963 = vmatprep.subr.mxu0 0.0
      %1964 = vmatpush1.msra.mxu0 0.0
      %1965 = vmatprep.subr.mxu0 0.0
      %1966 = vmatpush1.msra.mxu0 0.0
      %1967 = vmatprep.subr.mxu0 0.0
      %1968 = vmatpush1.msra.mxu0 0.0
      %1969 = vmatprep.subr.mxu0 0.0
      %1970 = vmatpush1.msra.mxu0 0.0
      %1971 = vmatprep.subr.mxu0 0.0
      %1972 = vmatpush1.msra.mxu0 0.0
      %1973 = vmatprep.subr.mxu0 0.0
      %1974 = vmatpush1.msra.mxu0 0.0
      %1975 = vmatprep.subr.mxu0 0.0
      %1976 = vmatpush1.msra.mxu0 0.0
      %1977 = vmatprep.subr.mxu0 0.0
      %1978 = vmatpush1.msra.mxu0 0.0
      %1979 = vmatprep.subr.mxu0 0.0
      %1980 = vmatpush1.msra.mxu0 0.0
      %1981 = vmatprep.subr.mxu0 0.0
      %1982 = vmatpush1.msra.mxu0 0.0
      %1983 = vmatprep.subr.mxu0 0.0
      %1984 = vmatpush1.msra.mxu0 %v1942
      %1985 = vmatprep.subr.mxu0 0.0
      %1986 = vmatpush1.msra.mxu0 %v1941
      %1987 = vmatprep.subr.mxu0 0.0
      %1988 = vmatpush1.msra.mxu0 %v1940
      %1989 = vmatprep.subr.mxu0 0.0
      %1990 = vmatpush1.msra.mxu0 %v1939
      %1991 = vmatprep.subr.mxu0 0.0
      %1992 = vmatpush2.msra.mxu0 0.0
      %1993 = vmatprep.subr.mxu0 0.0
      %1994 = vmatpush2.msra.mxu0 0.0
      %1995 = vmatprep.subr.mxu0 0.0
      %1996 = vmatpush2.msra.mxu0 0.0
      %1997 = vmatprep.subr.mxu0 0.0
      %1998 = vmatpush2.msra.mxu0 0.0
      %1999 = vmatprep.subr.mxu0 0.0
      %2000 = vmatpush2.msra.mxu0 0.0
      %2001 = vmatprep.subr.mxu0 0.0
      %2002 = vmatpush2.msra.mxu0 0.0
      %2003 = vmatprep.subr.mxu0 0.0
      %2004 = vmatpush2.msra.mxu0 0.0
      %2005 = vmatprep.subr.mxu0 0.0
      %2006 = vmatpush2.msra.mxu0 0.0
      %2007 = vmatprep.subr.mxu0 0.0
      %2008 = vmatpush2.msra.mxu0 0.0
      %2009 = vmatprep.subr.mxu0 0.0
      %2010 = vmatpush2.msra.mxu0 0.0
      %2011 = vmatprep.subr.mxu0 0.0
      %2012 = vmatpush2.msra.mxu0 0.0
      %2013 = vmatprep.subr.mxu0 0.0
      %2014 = vmatpush2.msra.mxu0 0.0
      %2015 = vmatprep.subr.mxu0 0.0
      %2016 = vmatpush2.msra.mxu0 0.0
      %2017 = vmatprep.subr.mxu0 0.0
      %2018 = vmatpush2.msra.mxu0 0.0
      %2019 = vmatprep.subr.mxu0 0.0
      %2020 = vmatpush2.msra.mxu0 0.0
      %2021 = vmatprep.subr.mxu0 0.0
      %2022 = vmatpush2.msra.mxu0 0.0
      %2023 = vmatprep.mubr.f32.mxu0 0.0
      %2024 = vmatmul.mubr.f32.gmra.mxu0 %v1951
      %v2025 = vpop.f32.mrf.mxu0
      %v2026 = vadd.f32 %v1948, %v2025
      %v2027 = vpop.f32.mrf.mxu0
      %2028 = vmatprep.mubr.f32.mxu0 0.0
      %2029 = vmatmul.mubr.f32.gmra.mxu0 %v1954
      %v2030 = vpop.f32.mrf.mxu0
      %v2031 = vadd.f32 %v1948, %v2030
      %v2032 = vpop.f32.mrf.mxu0
      %2033 = vmatprep.mubr.f32.mxu0 0.0
      %2034 = vmatmul.mubr.f32.gmra.mxu0 %v1957
      %v2035 = vpop.f32.mrf.mxu0
      %v2036 = vadd.f32 %v1948, %v2035
      %v2037 = vpop.f32.mrf.mxu0
      %2038 = vdwg.mxu0
      %v2039 = vmul.f32 %v2026, 0.5
      %v2040 = vmul.f32 %v2031, 0.5
      %v2041 = vmul.f32 %v2036, 0.5
      %v2042 = vmul.f32 %v2026, 0.70710677
      %v2043 = vmul.f32 %v2031, 0.70710677
      %v2044 = vmul.f32 %v2036, 0.70710677
      %v2045 = verf.f32.pop %v2042
      %v2046 = verf.f32.pop %v2043
      %v2047 = verf.f32.pop %v2044
      %v2048 = vadd.f32 %v2045, 1.0
      %v2049 = vadd.f32 %v2046, 1.0
      %v2050 = vadd.f32 %v2047, 1.0
      %v2051 = vmul.f32 %v2039, %v2048
      %v2052 = vmul.f32 %v2040, %v2049
      %v2053 = vmul.f32 %v2041, %v2050
      %v2054 = vld [vmem:[%s12] sm:$0xff]
      %v2055 = vld [vmem:[%s12 + $0x8] sm:$0xff]
      %v2056 = vld [vmem:[%s12 + $0x10] sm:$0xff]
      %v2057 = vld [vmem:[%s12 + $0x18] sm:$0xff]
      %v2058 = vld [vmem:[%s12 + $0x20] sm:$0xff]
      %v2059 = vld [vmem:[%s12 + $0x28] sm:$0xff]
      %v2060 = vld [vmem:[%s12 + $0x30] sm:$0xff]
      %v2061 = vld [vmem:[%s12 + $0x38] sm:$0xff]
      %v2062 = vld [vmem:[%s13] sm:$0x1]
      %v2064 = vlaneseq
      %v2065 = vshrl.u32 %v2064, 7
      %v2066 = vsub.s32 0, %v2065
      %v2067 = vrot.slane %v2062, %v2066
      %vm2069 = vcmask 523264
      %v2071 = vsel %vm2069, %v2051, 0
      %v2074 = vsel %vm2069, %v2052, 0
      %v2077 = vsel %vm2069, %v2053, 0
      %2079 = vmatprep.subr.mxu0 0.0
      %2080 = vmatpush1.msra.mxu0 0.0
      %2081 = vmatprep.subr.mxu0 0.0
      %2082 = vmatpush1.msra.mxu0 0.0
      %2083 = vmatprep.subr.mxu0 0.0
      %2084 = vmatpush1.msra.mxu0 0.0
      %2085 = vmatprep.subr.mxu0 0.0
      %2086 = vmatpush1.msra.mxu0 0.0
      %2087 = vmatprep.subr.mxu0 0.0
      %2088 = vmatpush1.msra.mxu0 0.0
      %2089 = vmatprep.subr.mxu0 0.0
      %2090 = vmatpush1.msra.mxu0 0.0
      %2091 = vmatprep.subr.mxu0 0.0
      %2092 = vmatpush1.msra.mxu0 0.0
      %2093 = vmatprep.subr.mxu0 0.0
      %2094 = vmatpush1.msra.mxu0 0.0
      %2095 = vmatprep.subr.mxu0 0.0
      %2096 = vmatpush1.msra.mxu0 %v2061
      %2097 = vmatprep.subr.mxu0 0.0
      %2098 = vmatpush1.msra.mxu0 %v2060
      %2099 = vmatprep.subr.mxu0 0.0
      %2100 = vmatpush1.msra.mxu0 %v2059
      %2101 = vmatprep.subr.mxu0 0.0
      %2102 = vmatpush1.msra.mxu0 %v2058
      %2103 = vmatprep.subr.mxu0 0.0
      %2104 = vmatpush1.msra.mxu0 %v2057
      %2105 = vmatprep.subr.mxu0 0.0
      %2106 = vmatpush1.msra.mxu0 %v2056
      %2107 = vmatprep.subr.mxu0 0.0
      %2108 = vmatpush1.msra.mxu0 %v2055
      %2109 = vmatprep.subr.mxu0 0.0
      %2110 = vmatpush1.msra.mxu0 %v2054
      %2111 = vmatprep.subr.mxu0 0.0
      %2112 = vmatpush2.msra.mxu0 0.0
      %2113 = vmatprep.subr.mxu0 0.0
      %2114 = vmatpush2.msra.mxu0 0.0
      %2115 = vmatprep.subr.mxu0 0.0
      %2116 = vmatpush2.msra.mxu0 0.0
      %2117 = vmatprep.subr.mxu0 0.0
      %2118 = vmatpush2.msra.mxu0 0.0
      %2119 = vmatprep.subr.mxu0 0.0
      %2120 = vmatpush2.msra.mxu0 0.0
      %2121 = vmatprep.subr.mxu0 0.0
      %2122 = vmatpush2.msra.mxu0 0.0
      %2123 = vmatprep.subr.mxu0 0.0
      %2124 = vmatpush2.msra.mxu0 0.0
      %2125 = vmatprep.subr.mxu0 0.0
      %2126 = vmatpush2.msra.mxu0 0.0
      %2127 = vmatprep.subr.mxu0 0.0
      %2128 = vmatpush2.msra.mxu0 0.0
      %2129 = vmatprep.subr.mxu0 0.0
      %2130 = vmatpush2.msra.mxu0 0.0
      %2131 = vmatprep.subr.mxu0 0.0
      %2132 = vmatpush2.msra.mxu0 0.0
      %2133 = vmatprep.subr.mxu0 0.0
      %2134 = vmatpush2.msra.mxu0 0.0
      %2135 = vmatprep.subr.mxu0 0.0
      %2136 = vmatpush2.msra.mxu0 0.0
      %2137 = vmatprep.subr.mxu0 0.0
      %2138 = vmatpush2.msra.mxu0 0.0
      %2139 = vmatprep.subr.mxu0 0.0
      %2140 = vmatpush2.msra.mxu0 0.0
      %2141 = vmatprep.subr.mxu0 0.0
      %2142 = vmatpush2.msra.mxu0 0.0
      %2143 = vmatprep.mubr.f32.mxu0 0.0
      %2144 = vmatmul.mubr.f32.gmra.mxu0 %v2071
      %v2145 = vpop.f32.mrf.mxu0
      %v2146 = vadd.f32 %v2067, %v2145
      %v2147 = vpop.f32.mrf.mxu0
      %2148 = vmatprep.mubr.f32.mxu0 0.0
      %2149 = vmatmul.mubr.f32.gmra.mxu0 %v2074
      %v2150 = vpop.f32.mrf.mxu0
      %v2151 = vadd.f32 %v2067, %v2150
      %v2152 = vpop.f32.mrf.mxu0
      %2153 = vmatprep.mubr.f32.mxu0 0.0
      %2154 = vmatmul.mubr.f32.gmra.mxu0 %v2077
      %v2155 = vpop.f32.mrf.mxu0
      %v2156 = vadd.f32 %v2067, %v2155
      %v2157 = vpop.f32.mrf.mxu0
      %2158 = vdwg.mxu0
      %v2159 = vadd.f32 %v1877, %v2146
      %v2160 = vadd.f32 %v1878, %v2151
      %v2161 = vadd.f32 %v1879, %v2156
      %s2162 = scalar_lea.vmem %s3, 1
      %v2163 = vld [vmem:[%s2162] sm:$0x1]
      %s2164 = scalar_lea.vmem %s4, 1
      %v2165 = vld [vmem:[%s2164] sm:$0x1]
      %v2166 = vsel %vm626, %v2159, 0.0
      %2167 = vadd.xlane.f32.xlu0 %v2166
      %v2168 = vpop.xlane.xlu0 %2167
      %v2169 = vsel %vm626, %v2160, 0.0
      %2170 = vadd.xlane.f32.xlu0 %v2169
      %v2171 = vpop.xlane.xlu0 %2170
      %v2172 = vsel %vm633, %v2161, 0.0
      %2173 = vadd.xlane.f32.xlu0 %v2172
      %v2174 = vpop.xlane.xlu0 %2173
      %v2175 = vmul.f32 %v2168, %v637
      %v2176 = vmul.f32 %v2171, %v637
      %v2177 = vmul.f32 %v2174, %v637
      %v2178 = vsub.f32 %v2159, %v2175
      %v2179 = vsub.f32 %v2160, %v2176
      %v2180 = vsub.f32 %v2161, %v2177
      %v2181 = vmul.f32 %v2178, %v2178
      %v2182 = vmul.f32 %v2179, %v2179
      %v2183 = vmul.f32 %v2180, %v2180
      %v2184 = vsel %vm626, %v2181, 0.0
      %2185 = vadd.xlane.f32.xlu0 %v2184
      %v2186 = vpop.xlane.xlu0 %2185
      %v2187 = vsel %vm626, %v2182, 0.0
      %2188 = vadd.xlane.f32.xlu0 %v2187
      %v2189 = vpop.xlane.xlu0 %2188
      %v2190 = vsel %vm633, %v2183, 0.0
      %2191 = vadd.xlane.f32.xlu0 %v2190
      %v2192 = vpop.xlane.xlu0 %2191
      %v2193 = vmul.f32 %v2186, %v637
      %v2194 = vmul.f32 %v2189, %v637
      %v2195 = vmul.f32 %v2192, %v637
      %v2196 = vadd.f32 %v2193, 1e-05
      %v2197 = vadd.f32 %v2194, 1e-05
      %v2198 = vadd.f32 %v2195, 1e-05
      %v2199 = vrsqrt.pop %v2196
      %v2200 = vrsqrt.pop %v2197
      %v2201 = vrsqrt.pop %v2198
      %v2202 = vmul.f32 %v2178, %v2199
      %v2203 = vmul.f32 %v2179, %v2200
      %v2204 = vmul.f32 %v2180, %v2201
      %v2206 = vlaneseq
      %v2207 = vshrl.u32 %v2206, 7
      %v2208 = vsub.s32 0, %v2207
      %v2209 = vrot.slane %v2163, %v2208
      %v2211 = vmul.f32 %v2202, %v2209
      %v2212 = vmul.f32 %v2203, %v2209
      %v2213 = vmul.f32 %v2204, %v2209
      %v2215 = vlaneseq
      %v2216 = vshrl.u32 %v2215, 7
      %v2217 = vsub.s32 0, %v2216
      %v2218 = vrot.slane %v2165, %v2217
      %v2220 = vadd.f32 %v2211, %v2218
      %v2221 = vadd.f32 %v2212, %v2218
      %v2222 = vadd.f32 %v2213, %v2218
      %s2223 = scalar_lea.vmem %s5, 32
      %v2224 = vld [vmem:[%s2223] sm:$0xff]
      %v2225 = vld [vmem:[%s2223 + $0x8] sm:$0xff]
      %v2226 = vld [vmem:[%s2223 + $0x10] sm:$0xff]
      %v2227 = vld [vmem:[%s2223 + $0x18] sm:$0xff]
      %v2229 = vsel %vm626, %v2220, 0
      %v2232 = vsel %vm626, %v2221, 0
      %v2235 = vsel %vm626, %v2222, 0
      %2237 = vmatprep.subr.mxu0 0.0
      %2238 = vmatpush1.msra.mxu0 0.0
      %2239 = vmatprep.subr.mxu0 0.0
      %2240 = vmatpush1.msra.mxu0 0.0
      %2241 = vmatprep.subr.mxu0 0.0
      %2242 = vmatpush1.msra.mxu0 0.0
      %2243 = vmatprep.subr.mxu0 0.0
      %2244 = vmatpush1.msra.mxu0 0.0
      %2245 = vmatprep.subr.mxu0 0.0
      %2246 = vmatpush1.msra.mxu0 0.0
      %2247 = vmatprep.subr.mxu0 0.0
      %2248 = vmatpush1.msra.mxu0 0.0
      %2249 = vmatprep.subr.mxu0 0.0
      %2250 = vmatpush1.msra.mxu0 0.0
      %2251 = vmatprep.subr.mxu0 0.0
      %2252 = vmatpush1.msra.mxu0 0.0
      %2253 = vmatprep.subr.mxu0 0.0
      %2254 = vmatpush1.msra.mxu0 0.0
      %2255 = vmatprep.subr.mxu0 0.0
      %2256 = vmatpush1.msra.mxu0 0.0
      %2257 = vmatprep.subr.mxu0 0.0
      %2258 = vmatpush1.msra.mxu0 0.0
      %2259 = vmatprep.subr.mxu0 0.0
      %2260 = vmatpush1.msra.mxu0 0.0
      %2261 = vmatprep.subr.mxu0 0.0
      %2262 = vmatpush1.msra.mxu0 %v2227
      %2263 = vmatprep.subr.mxu0 0.0
      %2264 = vmatpush1.msra.mxu0 %v2226
      %2265 = vmatprep.subr.mxu0 0.0
      %2266 = vmatpush1.msra.mxu0 %v2225
      %2267 = vmatprep.subr.mxu0 0.0
      %2268 = vmatpush1.msra.mxu0 %v2224
      %2269 = vmatprep.subr.mxu0 0.0
      %2270 = vmatpush2.msra.mxu0 0.0
      %2271 = vmatprep.subr.mxu0 0.0
      %2272 = vmatpush2.msra.mxu0 0.0
      %2273 = vmatprep.subr.mxu0 0.0
      %2274 = vmatpush2.msra.mxu0 0.0
      %2275 = vmatprep.subr.mxu0 0.0
      %2276 = vmatpush2.msra.mxu0 0.0
      %2277 = vmatprep.subr.mxu0 0.0
      %2278 = vmatpush2.msra.mxu0 0.0
      %2279 = vmatprep.subr.mxu0 0.0
      %2280 = vmatpush2.msra.mxu0 0.0
      %2281 = vmatprep.subr.mxu0 0.0
      %2282 = vmatpush2.msra.mxu0 0.0
      %2283 = vmatprep.subr.mxu0 0.0
      %2284 = vmatpush2.msra.mxu0 0.0
      %2285 = vmatprep.subr.mxu0 0.0
      %2286 = vmatpush2.msra.mxu0 0.0
      %2287 = vmatprep.subr.mxu0 0.0
      %2288 = vmatpush2.msra.mxu0 0.0
      %2289 = vmatprep.subr.mxu0 0.0
      %2290 = vmatpush2.msra.mxu0 0.0
      %2291 = vmatprep.subr.mxu0 0.0
      %2292 = vmatpush2.msra.mxu0 0.0
      %2293 = vmatprep.subr.mxu0 0.0
      %2294 = vmatpush2.msra.mxu0 0.0
      %2295 = vmatprep.subr.mxu0 0.0
      %2296 = vmatpush2.msra.mxu0 0.0
      %2297 = vmatprep.subr.mxu0 0.0
      %2298 = vmatpush2.msra.mxu0 0.0
      %2299 = vmatprep.subr.mxu0 0.0
      %2300 = vmatpush2.msra.mxu0 0.0
      %2301 = vmatprep.mubr.f32.mxu0 0.0
      %2302 = vmatmul.mubr.f32.gmra.mxu0 %v2229
      %v2303 = vpop.f32.mrf.mxu0
      %v2304 = vadd.f32 0.0, %v2303
      %v2305 = vpop.f32.mrf.mxu0
      %2306 = vmatprep.mubr.f32.mxu0 0.0
      %2307 = vmatmul.mubr.f32.gmra.mxu0 %v2232
      %v2308 = vpop.f32.mrf.mxu0
      %v2309 = vadd.f32 0.0, %v2308
      %v2310 = vpop.f32.mrf.mxu0
      %2311 = vmatprep.mubr.f32.mxu0 0.0
      %2312 = vmatmul.mubr.f32.gmra.mxu0 %v2235
      %v2313 = vpop.f32.mrf.mxu0
      %v2314 = vadd.f32 0.0, %v2313
      %v2315 = vpop.f32.mrf.mxu0
      %2316 = vdwg.mxu0
      %v2317 = vmul.f32 %v2304, 0.35355338
      %v2318 = vmul.f32 %v2309, 0.35355338
      %v2319 = vmul.f32 %v2314, 0.35355338
      %2323 = vrot.lane.b32.xlu0 %v2304, 96
      %v2324 = vpop.permute.xlu0 %2323
      %2325 = vrot.lane.b32.xlu0 %v2309, 96
      %v2326 = vpop.permute.xlu0 %2325
      %2327 = vrot.lane.b32.xlu0 %v2314, 96
      %v2328 = vpop.permute.xlu0 %2327
      %v2330 = vsel %vm791, %v2317, 0
      %v2333 = vsel %vm791, %v2318, 0
      %v2336 = vsel %vm791, %v2319, 0
      %v2338 = vsel %vm791, %v2324, 0
      %v2340 = vsel %vm791, %v2326, 0
      %v2342 = vsel %vm791, %v2328, 0
      %2344 = vmatprep.subr.mxu0 0.0
      %2345 = vmatpush1.xpose.msra.mxu0 0.0
      %2346 = vmatprep.subr.mxu0 0.0
      %2347 = vmatpush1.xpose.msra.mxu0 0.0
      %2348 = vmatprep.subr.mxu0 0.0
      %2349 = vmatpush1.xpose.msra.mxu0 0.0
      %2350 = vmatprep.subr.mxu0 0.0
      %2351 = vmatpush1.xpose.msra.mxu0 0.0
      %2352 = vmatprep.subr.mxu0 0.0
      %2353 = vmatpush1.xpose.msra.mxu0 0.0
      %2354 = vmatprep.subr.mxu0 0.0
      %2355 = vmatpush1.xpose.msra.mxu0 0.0
      %2356 = vmatprep.subr.mxu0 0.0
      %2357 = vmatpush1.xpose.msra.mxu0 0.0
      %2358 = vmatprep.subr.mxu0 0.0
      %2359 = vmatpush1.xpose.msra.mxu0 0.0
      %2360 = vmatprep.subr.mxu0 0.0
      %2361 = vmatpush1.xpose.msra.mxu0 0.0
      %2362 = vmatprep.subr.mxu0 0.0
      %2363 = vmatpush1.xpose.msra.mxu0 0.0
      %2364 = vmatprep.subr.mxu0 0.0
      %2365 = vmatpush1.xpose.msra.mxu0 0.0
      %2366 = vmatprep.subr.mxu0 0.0
      %2367 = vmatpush1.xpose.msra.mxu0 0.0
      %2368 = vmatprep.subr.mxu0 0.0
      %2369 = vmatpush1.xpose.msra.mxu0 0.0
      %2370 = vmatprep.subr.mxu0 0.0
      %2371 = vmatpush1.xpose.msra.mxu0 %v2342
      %2372 = vmatprep.subr.mxu0 0.0
      %2373 = vmatpush1.xpose.msra.mxu0 %v2340
      %2374 = vmatprep.subr.mxu0 0.0
      %2375 = vmatpush1.xpose.msra.mxu0 %v2338
      %2376 = vmatprep.subr.mxu0 0.0
      %2377 = vmatpush2.xpose.msra.mxu0 0.0
      %2378 = vmatprep.subr.mxu0 0.0
      %2379 = vmatpush2.xpose.msra.mxu0 0.0
      %2380 = vmatprep.subr.mxu0 0.0
      %2381 = vmatpush2.xpose.msra.mxu0 0.0
      %2382 = vmatprep.subr.mxu0 0.0
      %2383 = vmatpush2.xpose.msra.mxu0 0.0
      %2384 = vmatprep.subr.mxu0 0.0
      %2385 = vmatpush2.xpose.msra.mxu0 0.0
      %2386 = vmatprep.subr.mxu0 0.0
      %2387 = vmatpush2.xpose.msra.mxu0 0.0
      %2388 = vmatprep.subr.mxu0 0.0
      %2389 = vmatpush2.xpose.msra.mxu0 0.0
      %2390 = vmatprep.subr.mxu0 0.0
      %2391 = vmatpush2.xpose.msra.mxu0 0.0
      %2392 = vmatprep.subr.mxu0 0.0
      %2393 = vmatpush2.xpose.msra.mxu0 0.0
      %2394 = vmatprep.subr.mxu0 0.0
      %2395 = vmatpush2.xpose.msra.mxu0 0.0
      %2396 = vmatprep.subr.mxu0 0.0
      %2397 = vmatpush2.xpose.msra.mxu0 0.0
      %2398 = vmatprep.subr.mxu0 0.0
      %2399 = vmatpush2.xpose.msra.mxu0 0.0
      %2400 = vmatprep.subr.mxu0 0.0
      %2401 = vmatpush2.xpose.msra.mxu0 0.0
      %2402 = vmatprep.subr.mxu0 0.0
      %2403 = vmatpush2.xpose.msra.mxu0 0.0
      %2404 = vmatprep.subr.mxu0 0.0
      %2405 = vmatpush2.xpose.msra.mxu0 0.0
      %2406 = vmatprep.subr.mxu0 0.0
      %2407 = vmatpush2.xpose.msra.mxu0 0.0
      %2408 = vmatprep.mubr.f32.mxu0 0.0
      %2409 = vmatmul.mubr.f32.gmra.mxu0 %v2330
      %v2410 = vpop.f32.mrf.mxu0
      %v2411 = vadd.f32 0.0, %v2410
      %v2412 = vpop.f32.mrf.mxu0
      %2413 = vmatprep.mubr.f32.mxu0 0.0
      %2414 = vmatmul.mubr.f32.gmra.mxu0 %v2333
      %v2415 = vpop.f32.mrf.mxu0
      %v2416 = vadd.f32 0.0, %v2415
      %v2417 = vpop.f32.mrf.mxu0
      %2418 = vmatprep.mubr.f32.mxu0 0.0
      %2419 = vmatmul.mubr.f32.gmra.mxu0 %v2336
      %v2420 = vpop.f32.mrf.mxu0
      %v2421 = vadd.f32 0.0, %v2420
      %v2422 = vpop.f32.mrf.mxu0
      %2423 = vdwg.mxu0
      %v2424 = vsel %vm887, %v2411, -inf
      %2425 = vmax.xlane.f32.xlu0 %v2424
      %v2426 = vpop.xlane.xlu0 %2425
      %v2427 = vsel %vm887, %v2416, -inf
      %2428 = vmax.xlane.f32.xlu0 %v2427
      %v2429 = vpop.xlane.xlu0 %2428
      %v2430 = vsel %vm894, %v2421, -inf
      %2431 = vmax.xlane.f32.xlu0 %v2430
      %v2432 = vpop.xlane.xlu0 %2431
      %v2433 = vsub.f32 %v2411, %v2426
      %v2434 = vsub.f32 %v2416, %v2429
      %v2435 = vsub.f32 %v2421, %v2432
      %v2436 = vmul.f32 %v2433, 1.442695
      %v2437 = vpow.pop %v2436
      %v2438 = vmul.f32 %v2434, 1.442695
      %v2439 = vpow.pop %v2438
      %v2440 = vmul.f32 %v2435, 1.442695
      %v2441 = vpow.pop %v2440
      %v2442 = vsel %vm887, %v2437, 0.0
      %2443 = vadd.xlane.f32.xlu0 %v2442
      %v2444 = vpop.xlane.xlu0 %2443
      %v2445 = vsel %vm887, %v2439, 0.0
      %2446 = vadd.xlane.f32.xlu0 %v2445
      %v2447 = vpop.xlane.xlu0 %2446
      %v2448 = vsel %vm894, %v2441, 0.0
      %2449 = vadd.xlane.f32.xlu0 %v2448
      %v2450 = vpop.xlane.xlu0 %2449
      %v2451 = vrcp.pop %v2444
      %v2452 = vrcp.pop %v2447
      %v2453 = vrcp.pop %v2450
      %v2454 = vmul.f32 %v2437, %v2451
      %v2455 = vmul.f32 %v2439, %v2452
      %v2456 = vmul.f32 %v2441, %v2453
      %2457 = vrot.lane.b32.xlu0 %v2304, 64
      %v2458 = vpop.permute.xlu0 %2457
      %2459 = vrot.lane.b32.xlu0 %v2309, 64
      %v2460 = vpop.permute.xlu0 %2459
      %2461 = vrot.lane.b32.xlu0 %v2314, 64
      %v2462 = vpop.permute.xlu0 %2461
      %v2466 = vsel %vm887, %v2454, 0
      %v2469 = vsel %vm887, %v2455, 0
      %v2472 = vsel %vm887, %v2456, 0
      %v2474 = vsel %vm939, %v2462, 0
      %2476 = vmatprep.subr.mxu0 0.0
      %2477 = vmatpush1.msra.mxu0 0.0
      %2478 = vmatprep.subr.mxu0 0.0
      %2479 = vmatpush1.msra.mxu0 0.0
      %2480 = vmatprep.subr.mxu0 0.0
      %2481 = vmatpush1.msra.mxu0 0.0
      %2482 = vmatprep.subr.mxu0 0.0
      %2483 = vmatpush1.msra.mxu0 0.0
      %2484 = vmatprep.subr.mxu0 0.0
      %2485 = vmatpush1.msra.mxu0 0.0
      %2486 = vmatprep.subr.mxu0 0.0
      %2487 = vmatpush1.msra.mxu0 0.0
      %2488 = vmatprep.subr.mxu0 0.0
      %2489 = vmatpush1.msra.mxu0 0.0
      %2490 = vmatprep.subr.mxu0 0.0
      %2491 = vmatpush1.msra.mxu0 0.0
      %2492 = vmatprep.subr.mxu0 0.0
      %2493 = vmatpush1.msra.mxu0 0.0
      %2494 = vmatprep.subr.mxu0 0.0
      %2495 = vmatpush1.msra.mxu0 0.0
      %2496 = vmatprep.subr.mxu0 0.0
      %2497 = vmatpush1.msra.mxu0 0.0
      %2498 = vmatprep.subr.mxu0 0.0
      %2499 = vmatpush1.msra.mxu0 0.0
      %2500 = vmatprep.subr.mxu0 0.0
      %2501 = vmatpush1.msra.mxu0 0.0
      %2502 = vmatprep.subr.mxu0 0.0
      %2503 = vmatpush1.msra.mxu0 %v2474
      %2504 = vmatprep.subr.mxu0 0.0
      %2505 = vmatpush1.msra.mxu0 %v2460
      %2506 = vmatprep.subr.mxu0 0.0
      %2507 = vmatpush1.msra.mxu0 %v2458
      %2508 = vmatprep.subr.mxu0 0.0
      %2509 = vmatpush2.msra.mxu0 0.0
      %2510 = vmatprep.subr.mxu0 0.0
      %2511 = vmatpush2.msra.mxu0 0.0
      %2512 = vmatprep.subr.mxu0 0.0
      %2513 = vmatpush2.msra.mxu0 0.0
      %2514 = vmatprep.subr.mxu0 0.0
      %2515 = vmatpush2.msra.mxu0 0.0
      %2516 = vmatprep.subr.mxu0 0.0
      %2517 = vmatpush2.msra.mxu0 0.0
      %2518 = vmatprep.subr.mxu0 0.0
      %2519 = vmatpush2.msra.mxu0 0.0
      %2520 = vmatprep.subr.mxu0 0.0
      %2521 = vmatpush2.msra.mxu0 0.0
      %2522 = vmatprep.subr.mxu0 0.0
      %2523 = vmatpush2.msra.mxu0 0.0
      %2524 = vmatprep.subr.mxu0 0.0
      %2525 = vmatpush2.msra.mxu0 0.0
      %2526 = vmatprep.subr.mxu0 0.0
      %2527 = vmatpush2.msra.mxu0 0.0
      %2528 = vmatprep.subr.mxu0 0.0
      %2529 = vmatpush2.msra.mxu0 0.0
      %2530 = vmatprep.subr.mxu0 0.0
      %2531 = vmatpush2.msra.mxu0 0.0
      %2532 = vmatprep.subr.mxu0 0.0
      %2533 = vmatpush2.msra.mxu0 0.0
      %2534 = vmatprep.subr.mxu0 0.0
      %2535 = vmatpush2.msra.mxu0 0.0
      %2536 = vmatprep.subr.mxu0 0.0
      %2537 = vmatpush2.msra.mxu0 0.0
      %2538 = vmatprep.subr.mxu0 0.0
      %2539 = vmatpush2.msra.mxu0 0.0
      %2540 = vmatprep.mubr.f32.mxu0 0.0
      %2541 = vmatmul.mubr.f32.gmra.mxu0 %v2466
      %v2542 = vpop.f32.mrf.mxu0
      %v2543 = vadd.f32 0.0, %v2542
      %v2544 = vpop.f32.mrf.mxu0
      %2545 = vmatprep.mubr.f32.mxu0 0.0
      %2546 = vmatmul.mubr.f32.gmra.mxu0 %v2469
      %v2547 = vpop.f32.mrf.mxu0
      %v2548 = vadd.f32 0.0, %v2547
      %v2549 = vpop.f32.mrf.mxu0
      %2550 = vmatprep.mubr.f32.mxu0 0.0
      %2551 = vmatmul.mubr.f32.gmra.mxu0 %v2472
      %v2552 = vpop.f32.mrf.mxu0
      %v2553 = vadd.f32 0.0, %v2552
      %v2554 = vpop.f32.mrf.mxu0
      %2555 = vdwg.mxu0
      %2556 = vrot.lane.b32.xlu0 %v2317, 120
      %v2557 = vpop.permute.xlu0 %2556
      %2558 = vrot.lane.b32.xlu0 %v2318, 120
      %v2559 = vpop.permute.xlu0 %2558
      %2560 = vrot.lane.b32.xlu0 %v2319, 120
      %v2561 = vpop.permute.xlu0 %2560
      %2562 = vrot.lane.b32.xlu0 %v2304, 88
      %v2563 = vpop.permute.xlu0 %2562
      %2564 = vrot.lane.b32.xlu0 %v2309, 88
      %v2565 = vpop.permute.xlu0 %2564
      %2566 = vrot.lane.b32.xlu0 %v2314, 88
      %v2567 = vpop.permute.xlu0 %2566
      %v2568 = vsel %vm791, %v2557, 0
      %v2570 = vsel %vm791, %v2559, 0
      %v2572 = vsel %vm791, %v2561, 0
      %v2574 = vsel %vm791, %v2563, 0
      %v2576 = vsel %vm791, %v2565, 0
      %v2578 = vsel %vm791, %v2567, 0
      %2580 = vmatprep.subr.mxu0 0.0
      %2581 = vmatpush1.xpose.msra.mxu0 0.0
      %2582 = vmatprep.subr.mxu0 0.0
      %2583 = vmatpush1.xpose.msra.mxu0 0.0
      %2584 = vmatprep.subr.mxu0 0.0
      %2585 = vmatpush1.xpose.msra.mxu0 0.0
      %2586 = vmatprep.subr.mxu0 0.0
      %2587 = vmatpush1.xpose.msra.mxu0 0.0
      %2588 = vmatprep.subr.mxu0 0.0
      %2589 = vmatpush1.xpose.msra.mxu0 0.0
      %2590 = vmatprep.subr.mxu0 0.0
      %2591 = vmatpush1.xpose.msra.mxu0 0.0
      %2592 = vmatprep.subr.mxu0 0.0
      %2593 = vmatpush1.xpose.msra.mxu0 0.0
      %2594 = vmatprep.subr.mxu0 0.0
      %2595 = vmatpush1.xpose.msra.mxu0 0.0
      %2596 = vmatprep.subr.mxu0 0.0
      %2597 = vmatpush1.xpose.msra.mxu0 0.0
      %2598 = vmatprep.subr.mxu0 0.0
      %2599 = vmatpush1.xpose.msra.mxu0 0.0
      %2600 = vmatprep.subr.mxu0 0.0
      %2601 = vmatpush1.xpose.msra.mxu0 0.0
      %2602 = vmatprep.subr.mxu0 0.0
      %2603 = vmatpush1.xpose.msra.mxu0 0.0
      %2604 = vmatprep.subr.mxu0 0.0
      %2605 = vmatpush1.xpose.msra.mxu0 0.0
      %2606 = vmatprep.subr.mxu0 0.0
      %2607 = vmatpush1.xpose.msra.mxu0 %v2578
      %2608 = vmatprep.subr.mxu0 0.0
      %2609 = vmatpush1.xpose.msra.mxu0 %v2576
      %2610 = vmatprep.subr.mxu0 0.0
      %2611 = vmatpush1.xpose.msra.mxu0 %v2574
      %2612 = vmatprep.subr.mxu0 0.0
      %2613 = vmatpush2.xpose.msra.mxu0 0.0
      %2614 = vmatprep.subr.mxu0 0.0
      %2615 = vmatpush2.xpose.msra.mxu0 0.0
      %2616 = vmatprep.subr.mxu0 0.0
      %2617 = vmatpush2.xpose.msra.mxu0 0.0
      %2618 = vmatprep.subr.mxu0 0.0
      %2619 = vmatpush2.xpose.msra.mxu0 0.0
      %2620 = vmatprep.subr.mxu0 0.0
      %2621 = vmatpush2.xpose.msra.mxu0 0.0
      %2622 = vmatprep.subr.mxu0 0.0
      %2623 = vmatpush2.xpose.msra.mxu0 0.0
      %2624 = vmatprep.subr.mxu0 0.0
      %2625 = vmatpush2.xpose.msra.mxu0 0.0
      %2626 = vmatprep.subr.mxu0 0.0
      %2627 = vmatpush2.xpose.msra.mxu0 0.0
      %2628 = vmatprep.subr.mxu0 0.0
      %2629 = vmatpush2.xpose.msra.mxu0 0.0
      %2630 = vmatprep.subr.mxu0 0.0
      %2631 = vmatpush2.xpose.msra.mxu0 0.0
      %2632 = vmatprep.subr.mxu0 0.0
      %2633 = vmatpush2.xpose.msra.mxu0 0.0
      %2634 = vmatprep.subr.mxu0 0.0
      %2635 = vmatpush2.xpose.msra.mxu0 0.0
      %2636 = vmatprep.subr.mxu0 0.0
      %2637 = vmatpush2.xpose.msra.mxu0 0.0
      %2638 = vmatprep.subr.mxu0 0.0
      %2639 = vmatpush2.xpose.msra.mxu0 0.0
      %2640 = vmatprep.subr.mxu0 0.0
      %2641 = vmatpush2.xpose.msra.mxu0 0.0
      %2642 = vmatprep.subr.mxu0 0.0
      %2643 = vmatpush2.xpose.msra.mxu0 0.0
      %2644 = vmatprep.mubr.f32.mxu0 0.0
      %2645 = vmatmul.mubr.f32.gmra.mxu0 %v2568
      %v2646 = vpop.f32.mrf.mxu0
      %v2647 = vadd.f32 0.0, %v2646
      %v2648 = vpop.f32.mrf.mxu0
      %2649 = vmatprep.mubr.f32.mxu0 0.0
      %2650 = vmatmul.mubr.f32.gmra.mxu0 %v2570
      %v2651 = vpop.f32.mrf.mxu0
      %v2652 = vadd.f32 0.0, %v2651
      %v2653 = vpop.f32.mrf.mxu0
      %2654 = vmatprep.mubr.f32.mxu0 0.0
      %2655 = vmatmul.mubr.f32.gmra.mxu0 %v2572
      %v2656 = vpop.f32.mrf.mxu0
      %v2657 = vadd.f32 0.0, %v2656
      %v2658 = vpop.f32.mrf.mxu0
      %2659 = vdwg.mxu0
      %v2660 = vsel %vm887, %v2647, -inf
      %2661 = vmax.xlane.f32.xlu0 %v2660
      %v2662 = vpop.xlane.xlu0 %2661
      %v2663 = vsel %vm887, %v2652, -inf
      %2664 = vmax.xlane.f32.xlu0 %v2663
      %v2665 = vpop.xlane.xlu0 %2664
      %v2666 = vsel %vm894, %v2657, -inf
      %2667 = vmax.xlane.f32.xlu0 %v2666
      %v2668 = vpop.xlane.xlu0 %2667
      %v2669 = vsub.f32 %v2647, %v2662
      %v2670 = vsub.f32 %v2652, %v2665
      %v2671 = vsub.f32 %v2657, %v2668
      %v2672 = vmul.f32 %v2669, 1.442695
      %v2673 = vpow.pop %v2672
      %v2674 = vmul.f32 %v2670, 1.442695
      %v2675 = vpow.pop %v2674
      %v2676 = vmul.f32 %v2671, 1.442695
      %v2677 = vpow.pop %v2676
      %v2678 = vsel %vm887, %v2673, 0.0
      %2679 = vadd.xlane.f32.xlu0 %v2678
      %v2680 = vpop.xlane.xlu0 %2679
      %v2681 = vsel %vm887, %v2675, 0.0
      %2682 = vadd.xlane.f32.xlu0 %v2681
      %v2683 = vpop.xlane.xlu0 %2682
      %v2684 = vsel %vm894, %v2677, 0.0
      %2685 = vadd.xlane.f32.xlu0 %v2684
      %v2686 = vpop.xlane.xlu0 %2685
      %v2687 = vrcp.pop %v2680
      %v2688 = vrcp.pop %v2683
      %v2689 = vrcp.pop %v2686
      %v2690 = vmul.f32 %v2673, %v2687
      %v2691 = vmul.f32 %v2675, %v2688
      %v2692 = vmul.f32 %v2677, %v2689
      %2693 = vrot.lane.b32.xlu0 %v2304, 56
      %v2694 = vpop.permute.xlu0 %2693
      %2695 = vrot.lane.b32.xlu0 %v2309, 56
      %v2696 = vpop.permute.xlu0 %2695
      %2697 = vrot.lane.b32.xlu0 %v2314, 56
      %v2698 = vpop.permute.xlu0 %2697
      %v2702 = vsel %vm887, %v2690, 0
      %v2705 = vsel %vm887, %v2691, 0
      %v2708 = vsel %vm887, %v2692, 0
      %v2710 = vsel %vm939, %v2698, 0
      %2712 = vmatprep.subr.mxu0 0.0
      %2713 = vmatpush1.msra.mxu0 0.0
      %2714 = vmatprep.subr.mxu0 0.0
      %2715 = vmatpush1.msra.mxu0 0.0
      %2716 = vmatprep.subr.mxu0 0.0
      %2717 = vmatpush1.msra.mxu0 0.0
      %2718 = vmatprep.subr.mxu0 0.0
      %2719 = vmatpush1.msra.mxu0 0.0
      %2720 = vmatprep.subr.mxu0 0.0
      %2721 = vmatpush1.msra.mxu0 0.0
      %2722 = vmatprep.subr.mxu0 0.0
      %2723 = vmatpush1.msra.mxu0 0.0
      %2724 = vmatprep.subr.mxu0 0.0
      %2725 = vmatpush1.msra.mxu0 0.0
      %2726 = vmatprep.subr.mxu0 0.0
      %2727 = vmatpush1.msra.mxu0 0.0
      %2728 = vmatprep.subr.mxu0 0.0
      %2729 = vmatpush1.msra.mxu0 0.0
      %2730 = vmatprep.subr.mxu0 0.0
      %2731 = vmatpush1.msra.mxu0 0.0
      %2732 = vmatprep.subr.mxu0 0.0
      %2733 = vmatpush1.msra.mxu0 0.0
      %2734 = vmatprep.subr.mxu0 0.0
      %2735 = vmatpush1.msra.mxu0 0.0
      %2736 = vmatprep.subr.mxu0 0.0
      %2737 = vmatpush1.msra.mxu0 0.0
      %2738 = vmatprep.subr.mxu0 0.0
      %2739 = vmatpush1.msra.mxu0 %v2710
      %2740 = vmatprep.subr.mxu0 0.0
      %2741 = vmatpush1.msra.mxu0 %v2696
      %2742 = vmatprep.subr.mxu0 0.0
      %2743 = vmatpush1.msra.mxu0 %v2694
      %2744 = vmatprep.subr.mxu0 0.0
      %2745 = vmatpush2.msra.mxu0 0.0
      %2746 = vmatprep.subr.mxu0 0.0
      %2747 = vmatpush2.msra.mxu0 0.0
      %2748 = vmatprep.subr.mxu0 0.0
      %2749 = vmatpush2.msra.mxu0 0.0
      %2750 = vmatprep.subr.mxu0 0.0
      %2751 = vmatpush2.msra.mxu0 0.0
      %2752 = vmatprep.subr.mxu0 0.0
      %2753 = vmatpush2.msra.mxu0 0.0
      %2754 = vmatprep.subr.mxu0 0.0
      %2755 = vmatpush2.msra.mxu0 0.0
      %2756 = vmatprep.subr.mxu0 0.0
      %2757 = vmatpush2.msra.mxu0 0.0
      %2758 = vmatprep.subr.mxu0 0.0
      %2759 = vmatpush2.msra.mxu0 0.0
      %2760 = vmatprep.subr.mxu0 0.0
      %2761 = vmatpush2.msra.mxu0 0.0
      %2762 = vmatprep.subr.mxu0 0.0
      %2763 = vmatpush2.msra.mxu0 0.0
      %2764 = vmatprep.subr.mxu0 0.0
      %2765 = vmatpush2.msra.mxu0 0.0
      %2766 = vmatprep.subr.mxu0 0.0
      %2767 = vmatpush2.msra.mxu0 0.0
      %2768 = vmatprep.subr.mxu0 0.0
      %2769 = vmatpush2.msra.mxu0 0.0
      %2770 = vmatprep.subr.mxu0 0.0
      %2771 = vmatpush2.msra.mxu0 0.0
      %2772 = vmatprep.subr.mxu0 0.0
      %2773 = vmatpush2.msra.mxu0 0.0
      %2774 = vmatprep.subr.mxu0 0.0
      %2775 = vmatpush2.msra.mxu0 0.0
      %2776 = vmatprep.mubr.f32.mxu0 0.0
      %2777 = vmatmul.mubr.f32.gmra.mxu0 %v2702
      %v2778 = vpop.f32.mrf.mxu0
      %v2779 = vadd.f32 0.0, %v2778
      %v2780 = vpop.f32.mrf.mxu0
      %2781 = vmatprep.mubr.f32.mxu0 0.0
      %2782 = vmatmul.mubr.f32.gmra.mxu0 %v2705
      %v2783 = vpop.f32.mrf.mxu0
      %v2784 = vadd.f32 0.0, %v2783
      %v2785 = vpop.f32.mrf.mxu0
      %2786 = vmatprep.mubr.f32.mxu0 0.0
      %2787 = vmatmul.mubr.f32.gmra.mxu0 %v2708
      %v2788 = vpop.f32.mrf.mxu0
      %v2789 = vadd.f32 0.0, %v2788
      %v2790 = vpop.f32.mrf.mxu0
      %2791 = vdwg.mxu0
      %2792 = vrot.lane.b32.xlu0 %v2317, 112
      %v2793 = vpop.permute.xlu0 %2792
      %2794 = vrot.lane.b32.xlu0 %v2318, 112
      %v2795 = vpop.permute.xlu0 %2794
      %2796 = vrot.lane.b32.xlu0 %v2319, 112
      %v2797 = vpop.permute.xlu0 %2796
      %2798 = vrot.lane.b32.xlu0 %v2304, 80
      %v2799 = vpop.permute.xlu0 %2798
      %2800 = vrot.lane.b32.xlu0 %v2309, 80
      %v2801 = vpop.permute.xlu0 %2800
      %2802 = vrot.lane.b32.xlu0 %v2314, 80
      %v2803 = vpop.permute.xlu0 %2802
      %v2804 = vsel %vm791, %v2793, 0
      %v2806 = vsel %vm791, %v2795, 0
      %v2808 = vsel %vm791, %v2797, 0
      %v2810 = vsel %vm791, %v2799, 0
      %v2812 = vsel %vm791, %v2801, 0
      %v2814 = vsel %vm791, %v2803, 0
      %2816 = vmatprep.subr.mxu0 0.0
      %2817 = vmatpush1.xpose.msra.mxu0 0.0
      %2818 = vmatprep.subr.mxu0 0.0
      %2819 = vmatpush1.xpose.msra.mxu0 0.0
      %2820 = vmatprep.subr.mxu0 0.0
      %2821 = vmatpush1.xpose.msra.mxu0 0.0
      %2822 = vmatprep.subr.mxu0 0.0
      %2823 = vmatpush1.xpose.msra.mxu0 0.0
      %2824 = vmatprep.subr.mxu0 0.0
      %2825 = vmatpush1.xpose.msra.mxu0 0.0
      %2826 = vmatprep.subr.mxu0 0.0
      %2827 = vmatpush1.xpose.msra.mxu0 0.0
      %2828 = vmatprep.subr.mxu0 0.0
      %2829 = vmatpush1.xpose.msra.mxu0 0.0
      %2830 = vmatprep.subr.mxu0 0.0
      %2831 = vmatpush1.xpose.msra.mxu0 0.0
      %2832 = vmatprep.subr.mxu0 0.0
      %2833 = vmatpush1.xpose.msra.mxu0 0.0
      %2834 = vmatprep.subr.mxu0 0.0
      %2835 = vmatpush1.xpose.msra.mxu0 0.0
      %2836 = vmatprep.subr.mxu0 0.0
      %2837 = vmatpush1.xpose.msra.mxu0 0.0
      %2838 = vmatprep.subr.mxu0 0.0
      %2839 = vmatpush1.xpose.msra.mxu0 0.0
      %2840 = vmatprep.subr.mxu0 0.0
      %2841 = vmatpush1.xpose.msra.mxu0 0.0
      %2842 = vmatprep.subr.mxu0 0.0
      %2843 = vmatpush1.xpose.msra.mxu0 %v2814
      %2844 = vmatprep.subr.mxu0 0.0
      %2845 = vmatpush1.xpose.msra.mxu0 %v2812
      %2846 = vmatprep.subr.mxu0 0.0
      %2847 = vmatpush1.xpose.msra.mxu0 %v2810
      %2848 = vmatprep.subr.mxu0 0.0
      %2849 = vmatpush2.xpose.msra.mxu0 0.0
      %2850 = vmatprep.subr.mxu0 0.0
      %2851 = vmatpush2.xpose.msra.mxu0 0.0
      %2852 = vmatprep.subr.mxu0 0.0
      %2853 = vmatpush2.xpose.msra.mxu0 0.0
      %2854 = vmatprep.subr.mxu0 0.0
      %2855 = vmatpush2.xpose.msra.mxu0 0.0
      %2856 = vmatprep.subr.mxu0 0.0
      %2857 = vmatpush2.xpose.msra.mxu0 0.0
      %2858 = vmatprep.subr.mxu0 0.0
      %2859 = vmatpush2.xpose.msra.mxu0 0.0
      %2860 = vmatprep.subr.mxu0 0.0
      %2861 = vmatpush2.xpose.msra.mxu0 0.0
      %2862 = vmatprep.subr.mxu0 0.0
      %2863 = vmatpush2.xpose.msra.mxu0 0.0
      %2864 = vmatprep.subr.mxu0 0.0
      %2865 = vmatpush2.xpose.msra.mxu0 0.0
      %2866 = vmatprep.subr.mxu0 0.0
      %2867 = vmatpush2.xpose.msra.mxu0 0.0
      %2868 = vmatprep.subr.mxu0 0.0
      %2869 = vmatpush2.xpose.msra.mxu0 0.0
      %2870 = vmatprep.subr.mxu0 0.0
      %2871 = vmatpush2.xpose.msra.mxu0 0.0
      %2872 = vmatprep.subr.mxu0 0.0
      %2873 = vmatpush2.xpose.msra.mxu0 0.0
      %2874 = vmatprep.subr.mxu0 0.0
      %2875 = vmatpush2.xpose.msra.mxu0 0.0
      %2876 = vmatprep.subr.mxu0 0.0
      %2877 = vmatpush2.xpose.msra.mxu0 0.0
      %2878 = vmatprep.subr.mxu0 0.0
      %2879 = vmatpush2.xpose.msra.mxu0 0.0
      %2880 = vmatprep.mubr.f32.mxu0 0.0
      %2881 = vmatmul.mubr.f32.gmra.mxu0 %v2804
      %v2882 = vpop.f32.mrf.mxu0
      %v2883 = vadd.f32 0.0, %v2882
      %v2884 = vpop.f32.mrf.mxu0
      %2885 = vmatprep.mubr.f32.mxu0 0.0
      %2886 = vmatmul.mubr.f32.gmra.mxu0 %v2806
      %v2887 = vpop.f32.mrf.mxu0
      %v2888 = vadd.f32 0.0, %v2887
      %v2889 = vpop.f32.mrf.mxu0
      %2890 = vmatprep.mubr.f32.mxu0 0.0
      %2891 = vmatmul.mubr.f32.gmra.mxu0 %v2808
      %v2892 = vpop.f32.mrf.mxu0
      %v2893 = vadd.f32 0.0, %v2892
      %v2894 = vpop.f32.mrf.mxu0
      %2895 = vdwg.mxu0
      %v2896 = vsel %vm887, %v2883, -inf
      %2897 = vmax.xlane.f32.xlu0 %v2896
      %v2898 = vpop.xlane.xlu0 %2897
      %v2899 = vsel %vm887, %v2888, -inf
      %2900 = vmax.xlane.f32.xlu0 %v2899
      %v2901 = vpop.xlane.xlu0 %2900
      %v2902 = vsel %vm894, %v2893, -inf
      %2903 = vmax.xlane.f32.xlu0 %v2902
      %v2904 = vpop.xlane.xlu0 %2903
      %v2905 = vsub.f32 %v2883, %v2898
      %v2906 = vsub.f32 %v2888, %v2901
      %v2907 = vsub.f32 %v2893, %v2904
      %v2908 = vmul.f32 %v2905, 1.442695
      %v2909 = vpow.pop %v2908
      %v2910 = vmul.f32 %v2906, 1.442695
      %v2911 = vpow.pop %v2910
      %v2912 = vmul.f32 %v2907, 1.442695
      %v2913 = vpow.pop %v2912
      %v2914 = vsel %vm887, %v2909, 0.0
      %2915 = vadd.xlane.f32.xlu0 %v2914
      %v2916 = vpop.xlane.xlu0 %2915
      %v2917 = vsel %vm887, %v2911, 0.0
      %2918 = vadd.xlane.f32.xlu0 %v2917
      %v2919 = vpop.xlane.xlu0 %2918
      %v2920 = vsel %vm894, %v2913, 0.0
      %2921 = vadd.xlane.f32.xlu0 %v2920
      %v2922 = vpop.xlane.xlu0 %2921
      %v2923 = vrcp.pop %v2916
      %v2924 = vrcp.pop %v2919
      %v2925 = vrcp.pop %v2922
      %v2926 = vmul.f32 %v2909, %v2923
      %v2927 = vmul.f32 %v2911, %v2924
      %v2928 = vmul.f32 %v2913, %v2925
      %2929 = vrot.lane.b32.xlu0 %v2304, 48
      %v2930 = vpop.permute.xlu0 %2929
      %2931 = vrot.lane.b32.xlu0 %v2309, 48
      %v2932 = vpop.permute.xlu0 %2931
      %2933 = vrot.lane.b32.xlu0 %v2314, 48
      %v2934 = vpop.permute.xlu0 %2933
      %v2938 = vsel %vm887, %v2926, 0
      %v2941 = vsel %vm887, %v2927, 0
      %v2944 = vsel %vm887, %v2928, 0
      %v2946 = vsel %vm939, %v2934, 0
      %2948 = vmatprep.subr.mxu0 0.0
      %2949 = vmatpush1.msra.mxu0 0.0
      %2950 = vmatprep.subr.mxu0 0.0
      %2951 = vmatpush1.msra.mxu0 0.0
      %2952 = vmatprep.subr.mxu0 0.0
      %2953 = vmatpush1.msra.mxu0 0.0
      %2954 = vmatprep.subr.mxu0 0.0
      %2955 = vmatpush1.msra.mxu0 0.0
      %2956 = vmatprep.subr.mxu0 0.0
      %2957 = vmatpush1.msra.mxu0 0.0
      %2958 = vmatprep.subr.mxu0 0.0
      %2959 = vmatpush1.msra.mxu0 0.0
      %2960 = vmatprep.subr.mxu0 0.0
      %2961 = vmatpush1.msra.mxu0 0.0
      %2962 = vmatprep.subr.mxu0 0.0
      %2963 = vmatpush1.msra.mxu0 0.0
      %2964 = vmatprep.subr.mxu0 0.0
      %2965 = vmatpush1.msra.mxu0 0.0
      %2966 = vmatprep.subr.mxu0 0.0
      %2967 = vmatpush1.msra.mxu0 0.0
      %2968 = vmatprep.subr.mxu0 0.0
      %2969 = vmatpush1.msra.mxu0 0.0
      %2970 = vmatprep.subr.mxu0 0.0
      %2971 = vmatpush1.msra.mxu0 0.0
      %2972 = vmatprep.subr.mxu0 0.0
      %2973 = vmatpush1.msra.mxu0 0.0
      %2974 = vmatprep.subr.mxu0 0.0
      %2975 = vmatpush1.msra.mxu0 %v2946
      %2976 = vmatprep.subr.mxu0 0.0
      %2977 = vmatpush1.msra.mxu0 %v2932
      %2978 = vmatprep.subr.mxu0 0.0
      %2979 = vmatpush1.msra.mxu0 %v2930
      %2980 = vmatprep.subr.mxu0 0.0
      %2981 = vmatpush2.msra.mxu0 0.0
      %2982 = vmatprep.subr.mxu0 0.0
      %2983 = vmatpush2.msra.mxu0 0.0
      %2984 = vmatprep.subr.mxu0 0.0
      %2985 = vmatpush2.msra.mxu0 0.0
      %2986 = vmatprep.subr.mxu0 0.0
      %2987 = vmatpush2.msra.mxu0 0.0
      %2988 = vmatprep.subr.mxu0 0.0
      %2989 = vmatpush2.msra.mxu0 0.0
      %2990 = vmatprep.subr.mxu0 0.0
      %2991 = vmatpush2.msra.mxu0 0.0
      %2992 = vmatprep.subr.mxu0 0.0
      %2993 = vmatpush2.msra.mxu0 0.0
      %2994 = vmatprep.subr.mxu0 0.0
      %2995 = vmatpush2.msra.mxu0 0.0
      %2996 = vmatprep.subr.mxu0 0.0
      %2997 = vmatpush2.msra.mxu0 0.0
      %2998 = vmatprep.subr.mxu0 0.0
      %2999 = vmatpush2.msra.mxu0 0.0
      %3000 = vmatprep.subr.mxu0 0.0
      %3001 = vmatpush2.msra.mxu0 0.0
      %3002 = vmatprep.subr.mxu0 0.0
      %3003 = vmatpush2.msra.mxu0 0.0
      %3004 = vmatprep.subr.mxu0 0.0
      %3005 = vmatpush2.msra.mxu0 0.0
      %3006 = vmatprep.subr.mxu0 0.0
      %3007 = vmatpush2.msra.mxu0 0.0
      %3008 = vmatprep.subr.mxu0 0.0
      %3009 = vmatpush2.msra.mxu0 0.0
      %3010 = vmatprep.subr.mxu0 0.0
      %3011 = vmatpush2.msra.mxu0 0.0
      %3012 = vmatprep.mubr.f32.mxu0 0.0
      %3013 = vmatmul.mubr.f32.gmra.mxu0 %v2938
      %v3014 = vpop.f32.mrf.mxu0
      %v3015 = vadd.f32 0.0, %v3014
      %v3016 = vpop.f32.mrf.mxu0
      %3017 = vmatprep.mubr.f32.mxu0 0.0
      %3018 = vmatmul.mubr.f32.gmra.mxu0 %v2941
      %v3019 = vpop.f32.mrf.mxu0
      %v3020 = vadd.f32 0.0, %v3019
      %v3021 = vpop.f32.mrf.mxu0
      %3022 = vmatprep.mubr.f32.mxu0 0.0
      %3023 = vmatmul.mubr.f32.gmra.mxu0 %v2944
      %v3024 = vpop.f32.mrf.mxu0
      %v3025 = vadd.f32 0.0, %v3024
      %v3026 = vpop.f32.mrf.mxu0
      %3027 = vdwg.mxu0
      %3028 = vrot.lane.b32.xlu0 %v2317, 104
      %v3029 = vpop.permute.xlu0 %3028
      %3030 = vrot.lane.b32.xlu0 %v2318, 104
      %v3031 = vpop.permute.xlu0 %3030
      %3032 = vrot.lane.b32.xlu0 %v2319, 104
      %v3033 = vpop.permute.xlu0 %3032
      %3034 = vrot.lane.b32.xlu0 %v2304, 72
      %v3035 = vpop.permute.xlu0 %3034
      %3036 = vrot.lane.b32.xlu0 %v2309, 72
      %v3037 = vpop.permute.xlu0 %3036
      %3038 = vrot.lane.b32.xlu0 %v2314, 72
      %v3039 = vpop.permute.xlu0 %3038
      %v3040 = vsel %vm791, %v3029, 0
      %v3042 = vsel %vm791, %v3031, 0
      %v3044 = vsel %vm791, %v3033, 0
      %v3046 = vsel %vm791, %v3035, 0
      %v3048 = vsel %vm791, %v3037, 0
      %v3050 = vsel %vm791, %v3039, 0
      %3052 = vmatprep.subr.mxu0 0.0
      %3053 = vmatpush1.xpose.msra.mxu0 0.0
      %3054 = vmatprep.subr.mxu0 0.0
      %3055 = vmatpush1.xpose.msra.mxu0 0.0
      %3056 = vmatprep.subr.mxu0 0.0
      %3057 = vmatpush1.xpose.msra.mxu0 0.0
      %3058 = vmatprep.subr.mxu0 0.0
      %3059 = vmatpush1.xpose.msra.mxu0 0.0
      %3060 = vmatprep.subr.mxu0 0.0
      %3061 = vmatpush1.xpose.msra.mxu0 0.0
      %3062 = vmatprep.subr.mxu0 0.0
      %3063 = vmatpush1.xpose.msra.mxu0 0.0
      %3064 = vmatprep.subr.mxu0 0.0
      %3065 = vmatpush1.xpose.msra.mxu0 0.0
      %3066 = vmatprep.subr.mxu0 0.0
      %3067 = vmatpush1.xpose.msra.mxu0 0.0
      %3068 = vmatprep.subr.mxu0 0.0
      %3069 = vmatpush1.xpose.msra.mxu0 0.0
      %3070 = vmatprep.subr.mxu0 0.0
      %3071 = vmatpush1.xpose.msra.mxu0 0.0
      %3072 = vmatprep.subr.mxu0 0.0
      %3073 = vmatpush1.xpose.msra.mxu0 0.0
      %3074 = vmatprep.subr.mxu0 0.0
      %3075 = vmatpush1.xpose.msra.mxu0 0.0
      %3076 = vmatprep.subr.mxu0 0.0
      %3077 = vmatpush1.xpose.msra.mxu0 0.0
      %3078 = vmatprep.subr.mxu0 0.0
      %3079 = vmatpush1.xpose.msra.mxu0 %v3050
      %3080 = vmatprep.subr.mxu0 0.0
      %3081 = vmatpush1.xpose.msra.mxu0 %v3048
      %3082 = vmatprep.subr.mxu0 0.0
      %3083 = vmatpush1.xpose.msra.mxu0 %v3046
      %3084 = vmatprep.subr.mxu0 0.0
      %3085 = vmatpush2.xpose.msra.mxu0 0.0
      %3086 = vmatprep.subr.mxu0 0.0
      %3087 = vmatpush2.xpose.msra.mxu0 0.0
      %3088 = vmatprep.subr.mxu0 0.0
      %3089 = vmatpush2.xpose.msra.mxu0 0.0
      %3090 = vmatprep.subr.mxu0 0.0
      %3091 = vmatpush2.xpose.msra.mxu0 0.0
      %3092 = vmatprep.subr.mxu0 0.0
      %3093 = vmatpush2.xpose.msra.mxu0 0.0
      %3094 = vmatprep.subr.mxu0 0.0
      %3095 = vmatpush2.xpose.msra.mxu0 0.0
      %3096 = vmatprep.subr.mxu0 0.0
      %3097 = vmatpush2.xpose.msra.mxu0 0.0
      %3098 = vmatprep.subr.mxu0 0.0
      %3099 = vmatpush2.xpose.msra.mxu0 0.0
      %3100 = vmatprep.subr.mxu0 0.0
      %3101 = vmatpush2.xpose.msra.mxu0 0.0
      %3102 = vmatprep.subr.mxu0 0.0
      %3103 = vmatpush2.xpose.msra.mxu0 0.0
      %3104 = vmatprep.subr.mxu0 0.0
      %3105 = vmatpush2.xpose.msra.mxu0 0.0
      %3106 = vmatprep.subr.mxu0 0.0
      %3107 = vmatpush2.xpose.msra.mxu0 0.0
      %3108 = vmatprep.subr.mxu0 0.0
      %3109 = vmatpush2.xpose.msra.mxu0 0.0
      %3110 = vmatprep.subr.mxu0 0.0
      %3111 = vmatpush2.xpose.msra.mxu0 0.0
      %3112 = vmatprep.subr.mxu0 0.0
      %3113 = vmatpush2.xpose.msra.mxu0 0.0
      %3114 = vmatprep.subr.mxu0 0.0
      %3115 = vmatpush2.xpose.msra.mxu0 0.0
      %3116 = vmatprep.mubr.f32.mxu0 0.0
      %3117 = vmatmul.mubr.f32.gmra.mxu0 %v3040
      %v3118 = vpop.f32.mrf.mxu0
      %v3119 = vadd.f32 0.0, %v3118
      %v3120 = vpop.f32.mrf.mxu0
      %3121 = vmatprep.mubr.f32.mxu0 0.0
      %3122 = vmatmul.mubr.f32.gmra.mxu0 %v3042
      %v3123 = vpop.f32.mrf.mxu0
      %v3124 = vadd.f32 0.0, %v3123
      %v3125 = vpop.f32.mrf.mxu0
      %3126 = vmatprep.mubr.f32.mxu0 0.0
      %3127 = vmatmul.mubr.f32.gmra.mxu0 %v3044
      %v3128 = vpop.f32.mrf.mxu0
      %v3129 = vadd.f32 0.0, %v3128
      %v3130 = vpop.f32.mrf.mxu0
      %3131 = vdwg.mxu0
      %v3132 = vsel %vm887, %v3119, -inf
      %3133 = vmax.xlane.f32.xlu0 %v3132
      %v3134 = vpop.xlane.xlu0 %3133
      %v3135 = vsel %vm887, %v3124, -inf
      %3136 = vmax.xlane.f32.xlu0 %v3135
      %v3137 = vpop.xlane.xlu0 %3136
      %v3138 = vsel %vm894, %v3129, -inf
      %3139 = vmax.xlane.f32.xlu0 %v3138
      %v3140 = vpop.xlane.xlu0 %3139
      %v3141 = vsub.f32 %v3119, %v3134
      %v3142 = vsub.f32 %v3124, %v3137
      %v3143 = vsub.f32 %v3129, %v3140
      %v3144 = vmul.f32 %v3141, 1.442695
      %v3145 = vpow.pop %v3144
      %v3146 = vmul.f32 %v3142, 1.442695
      %v3147 = vpow.pop %v3146
      %v3148 = vmul.f32 %v3143, 1.442695
      %v3149 = vpow.pop %v3148
      %v3150 = vsel %vm887, %v3145, 0.0
      %3151 = vadd.xlane.f32.xlu0 %v3150
      %v3152 = vpop.xlane.xlu0 %3151
      %v3153 = vsel %vm887, %v3147, 0.0
      %3154 = vadd.xlane.f32.xlu0 %v3153
      %v3155 = vpop.xlane.xlu0 %3154
      %v3156 = vsel %vm894, %v3149, 0.0
      %3157 = vadd.xlane.f32.xlu0 %v3156
      %v3158 = vpop.xlane.xlu0 %3157
      %v3159 = vrcp.pop %v3152
      %v3160 = vrcp.pop %v3155
      %v3161 = vrcp.pop %v3158
      %v3162 = vmul.f32 %v3145, %v3159
      %v3163 = vmul.f32 %v3147, %v3160
      %v3164 = vmul.f32 %v3149, %v3161
      %3165 = vrot.lane.b32.xlu0 %v2304, 40
      %v3166 = vpop.permute.xlu0 %3165
      %3167 = vrot.lane.b32.xlu0 %v2309, 40
      %v3168 = vpop.permute.xlu0 %3167
      %3169 = vrot.lane.b32.xlu0 %v2314, 40
      %v3170 = vpop.permute.xlu0 %3169
      %v3174 = vsel %vm887, %v3162, 0
      %v3177 = vsel %vm887, %v3163, 0
      %v3180 = vsel %vm887, %v3164, 0
      %v3182 = vsel %vm939, %v3170, 0
      %3184 = vmatprep.subr.mxu0 0.0
      %3185 = vmatpush1.msra.mxu0 0.0
      %3186 = vmatprep.subr.mxu0 0.0
      %3187 = vmatpush1.msra.mxu0 0.0
      %3188 = vmatprep.subr.mxu0 0.0
      %3189 = vmatpush1.msra.mxu0 0.0
      %3190 = vmatprep.subr.mxu0 0.0
      %3191 = vmatpush1.msra.mxu0 0.0
      %3192 = vmatprep.subr.mxu0 0.0
      %3193 = vmatpush1.msra.mxu0 0.0
      %3194 = vmatprep.subr.mxu0 0.0
      %3195 = vmatpush1.msra.mxu0 0.0
      %3196 = vmatprep.subr.mxu0 0.0
      %3197 = vmatpush1.msra.mxu0 0.0
      %3198 = vmatprep.subr.mxu0 0.0
      %3199 = vmatpush1.msra.mxu0 0.0
      %3200 = vmatprep.subr.mxu0 0.0
      %3201 = vmatpush1.msra.mxu0 0.0
      %3202 = vmatprep.subr.mxu0 0.0
      %3203 = vmatpush1.msra.mxu0 0.0
      %3204 = vmatprep.subr.mxu0 0.0
      %3205 = vmatpush1.msra.mxu0 0.0
      %3206 = vmatprep.subr.mxu0 0.0
      %3207 = vmatpush1.msra.mxu0 0.0
      %3208 = vmatprep.subr.mxu0 0.0
      %3209 = vmatpush1.msra.mxu0 0.0
      %3210 = vmatprep.subr.mxu0 0.0
      %3211 = vmatpush1.msra.mxu0 %v3182
      %3212 = vmatprep.subr.mxu0 0.0
      %3213 = vmatpush1.msra.mxu0 %v3168
      %3214 = vmatprep.subr.mxu0 0.0
      %3215 = vmatpush1.msra.mxu0 %v3166
      %3216 = vmatprep.subr.mxu0 0.0
      %3217 = vmatpush2.msra.mxu0 0.0
      %3218 = vmatprep.subr.mxu0 0.0
      %3219 = vmatpush2.msra.mxu0 0.0
      %3220 = vmatprep.subr.mxu0 0.0
      %3221 = vmatpush2.msra.mxu0 0.0
      %3222 = vmatprep.subr.mxu0 0.0
      %3223 = vmatpush2.msra.mxu0 0.0
      %3224 = vmatprep.subr.mxu0 0.0
      %3225 = vmatpush2.msra.mxu0 0.0
      %3226 = vmatprep.subr.mxu0 0.0
      %3227 = vmatpush2.msra.mxu0 0.0
      %3228 = vmatprep.subr.mxu0 0.0
      %3229 = vmatpush2.msra.mxu0 0.0
      %3230 = vmatprep.subr.mxu0 0.0
      %3231 = vmatpush2.msra.mxu0 0.0
      %3232 = vmatprep.subr.mxu0 0.0
      %3233 = vmatpush2.msra.mxu0 0.0
      %3234 = vmatprep.subr.mxu0 0.0
      %3235 = vmatpush2.msra.mxu0 0.0
      %3236 = vmatprep.subr.mxu0 0.0
      %3237 = vmatpush2.msra.mxu0 0.0
      %3238 = vmatprep.subr.mxu0 0.0
      %3239 = vmatpush2.msra.mxu0 0.0
      %3240 = vmatprep.subr.mxu0 0.0
      %3241 = vmatpush2.msra.mxu0 0.0
      %3242 = vmatprep.subr.mxu0 0.0
      %3243 = vmatpush2.msra.mxu0 0.0
      %3244 = vmatprep.subr.mxu0 0.0
      %3245 = vmatpush2.msra.mxu0 0.0
      %3246 = vmatprep.subr.mxu0 0.0
      %3247 = vmatpush2.msra.mxu0 0.0
      %3248 = vmatprep.mubr.f32.mxu0 0.0
      %3249 = vmatmul.mubr.f32.gmra.mxu0 %v3174
      %v3250 = vpop.f32.mrf.mxu0
      %v3251 = vadd.f32 0.0, %v3250
      %v3252 = vpop.f32.mrf.mxu0
      %3253 = vmatprep.mubr.f32.mxu0 0.0
      %3254 = vmatmul.mubr.f32.gmra.mxu0 %v3177
      %v3255 = vpop.f32.mrf.mxu0
      %v3256 = vadd.f32 0.0, %v3255
      %v3257 = vpop.f32.mrf.mxu0
      %3258 = vmatprep.mubr.f32.mxu0 0.0
      %3259 = vmatmul.mubr.f32.gmra.mxu0 %v3180
      %v3260 = vpop.f32.mrf.mxu0
      %v3261 = vadd.f32 0.0, %v3260
      %v3262 = vpop.f32.mrf.mxu0
      %3263 = vdwg.mxu0
      %3267 = vrot.lane.b32.xlu0 %v2779, 8
      %v3268 = vpop.permute.xlu0 %3267
      %3269 = vrot.lane.b32.xlu0 %v2784, 8
      %v3270 = vpop.permute.xlu0 %3269
      %3271 = vrot.lane.b32.xlu0 %v2789, 8
      %v3272 = vpop.permute.xlu0 %3271
      %3279 = vrot.lane.b32.xlu0 %v3015, 16
      %v3280 = vpop.permute.xlu0 %3279
      %3281 = vrot.lane.b32.xlu0 %v3020, 16
      %v3282 = vpop.permute.xlu0 %3281
      %3283 = vrot.lane.b32.xlu0 %v3025, 16
      %v3284 = vpop.permute.xlu0 %3283
      %3291 = vrot.lane.b32.xlu0 %v3251, 24
      %v3292 = vpop.permute.xlu0 %3291
      %3293 = vrot.lane.b32.xlu0 %v3256, 24
      %v3294 = vpop.permute.xlu0 %3293
      %3295 = vrot.lane.b32.xlu0 %v3261, 24
      %v3296 = vpop.permute.xlu0 %3295
      %v3300 = vsel %vm791, %v2543, %v3268
      %v3301 = vsel %vm791, %v2548, %v3270
      %v3302 = vsel %vm791, %v2553, %v3272
      %v3303 = vsel %vm1769, %v3300, %v3280
      %v3304 = vsel %vm1769, %v3301, %v3282
      %v3305 = vsel %vm1769, %v3302, %v3284
      %v3306 = vsel %vm1773, %v3303, %v3292
      %v3307 = vsel %vm1773, %v3304, %v3294
      %v3308 = vsel %vm1773, %v3305, %v3296
      %s3309 = scalar_lea.vmem %s6, 32
      %v3310 = vld [vmem:[%s3309] sm:$0xff]
      %v3311 = vld [vmem:[%s3309 + $0x8] sm:$0xff]
      %v3312 = vld [vmem:[%s3309 + $0x10] sm:$0xff]
      %v3313 = vld [vmem:[%s3309 + $0x18] sm:$0xff]
      %s3314 = scalar_lea.vmem %s7, 1
      %v3315 = vld [vmem:[%s3314] sm:$0x1]
      %v3317 = vlaneseq
      %v3318 = vshrl.u32 %v3317, 7
      %v3319 = vsub.s32 0, %v3318
      %v3320 = vrot.slane %v3315, %v3319
      %v3323 = vsel %vm626, %v3306, 0
      %v3326 = vsel %vm626, %v3307, 0
      %v3329 = vsel %vm626, %v3308, 0
      %3331 = vmatprep.subr.mxu0 0.0
      %3332 = vmatpush1.msra.mxu0 0.0
      %3333 = vmatprep.subr.mxu0 0.0
      %3334 = vmatpush1.msra.mxu0 0.0
      %3335 = vmatprep.subr.mxu0 0.0
      %3336 = vmatpush1.msra.mxu0 0.0
      %3337 = vmatprep.subr.mxu0 0.0
      %3338 = vmatpush1.msra.mxu0 0.0
      %3339 = vmatprep.subr.mxu0 0.0
      %3340 = vmatpush1.msra.mxu0 0.0
      %3341 = vmatprep.subr.mxu0 0.0
      %3342 = vmatpush1.msra.mxu0 0.0
      %3343 = vmatprep.subr.mxu0 0.0
      %3344 = vmatpush1.msra.mxu0 0.0
      %3345 = vmatprep.subr.mxu0 0.0
      %3346 = vmatpush1.msra.mxu0 0.0
      %3347 = vmatprep.subr.mxu0 0.0
      %3348 = vmatpush1.msra.mxu0 0.0
      %3349 = vmatprep.subr.mxu0 0.0
      %3350 = vmatpush1.msra.mxu0 0.0
      %3351 = vmatprep.subr.mxu0 0.0
      %3352 = vmatpush1.msra.mxu0 0.0
      %3353 = vmatprep.subr.mxu0 0.0
      %3354 = vmatpush1.msra.mxu0 0.0
      %3355 = vmatprep.subr.mxu0 0.0
      %3356 = vmatpush1.msra.mxu0 %v3313
      %3357 = vmatprep.subr.mxu0 0.0
      %3358 = vmatpush1.msra.mxu0 %v3312
      %3359 = vmatprep.subr.mxu0 0.0
      %3360 = vmatpush1.msra.mxu0 %v3311
      %3361 = vmatprep.subr.mxu0 0.0
      %3362 = vmatpush1.msra.mxu0 %v3310
      %3363 = vmatprep.subr.mxu0 0.0
      %3364 = vmatpush2.msra.mxu0 0.0
      %3365 = vmatprep.subr.mxu0 0.0
      %3366 = vmatpush2.msra.mxu0 0.0
      %3367 = vmatprep.subr.mxu0 0.0
      %3368 = vmatpush2.msra.mxu0 0.0
      %3369 = vmatprep.subr.mxu0 0.0
      %3370 = vmatpush2.msra.mxu0 0.0
      %3371 = vmatprep.subr.mxu0 0.0
      %3372 = vmatpush2.msra.mxu0 0.0
      %3373 = vmatprep.subr.mxu0 0.0
      %3374 = vmatpush2.msra.mxu0 0.0
      %3375 = vmatprep.subr.mxu0 0.0
      %3376 = vmatpush2.msra.mxu0 0.0
      %3377 = vmatprep.subr.mxu0 0.0
      %3378 = vmatpush2.msra.mxu0 0.0
      %3379 = vmatprep.subr.mxu0 0.0
      %3380 = vmatpush2.msra.mxu0 0.0
      %3381 = vmatprep.subr.mxu0 0.0
      %3382 = vmatpush2.msra.mxu0 0.0
      %3383 = vmatprep.subr.mxu0 0.0
      %3384 = vmatpush2.msra.mxu0 0.0
      %3385 = vmatprep.subr.mxu0 0.0
      %3386 = vmatpush2.msra.mxu0 0.0
      %3387 = vmatprep.subr.mxu0 0.0
      %3388 = vmatpush2.msra.mxu0 0.0
      %3389 = vmatprep.subr.mxu0 0.0
      %3390 = vmatpush2.msra.mxu0 0.0
      %3391 = vmatprep.subr.mxu0 0.0
      %3392 = vmatpush2.msra.mxu0 0.0
      %3393 = vmatprep.subr.mxu0 0.0
      %3394 = vmatpush2.msra.mxu0 0.0
      %3395 = vmatprep.mubr.f32.mxu0 0.0
      %3396 = vmatmul.mubr.f32.gmra.mxu0 %v3323
      %v3397 = vpop.f32.mrf.mxu0
      %v3398 = vadd.f32 %v3320, %v3397
      %v3399 = vpop.f32.mrf.mxu0
      %3400 = vmatprep.mubr.f32.mxu0 0.0
      %3401 = vmatmul.mubr.f32.gmra.mxu0 %v3326
      %v3402 = vpop.f32.mrf.mxu0
      %v3403 = vadd.f32 %v3320, %v3402
      %v3404 = vpop.f32.mrf.mxu0
      %3405 = vmatprep.mubr.f32.mxu0 0.0
      %3406 = vmatmul.mubr.f32.gmra.mxu0 %v3329
      %v3407 = vpop.f32.mrf.mxu0
      %v3408 = vadd.f32 %v3320, %v3407
      %v3409 = vpop.f32.mrf.mxu0
      %3410 = vdwg.mxu0
      %v3411 = vadd.f32 %v2159, %v3398
      %v3412 = vadd.f32 %v2160, %v3403
      %v3413 = vadd.f32 %v2161, %v3408
      %s3414 = scalar_lea.vmem %s8, 1
      %v3415 = vld [vmem:[%s3414] sm:$0x1]
      %s3416 = scalar_lea.vmem %s9, 1
      %v3417 = vld [vmem:[%s3416] sm:$0x1]
      %v3418 = vsel %vm626, %v3411, 0.0
      %3419 = vadd.xlane.f32.xlu0 %v3418
      %v3420 = vpop.xlane.xlu0 %3419
      %v3421 = vsel %vm626, %v3412, 0.0
      %3422 = vadd.xlane.f32.xlu0 %v3421
      %v3423 = vpop.xlane.xlu0 %3422
      %v3424 = vsel %vm633, %v3413, 0.0
      %3425 = vadd.xlane.f32.xlu0 %v3424
      %v3426 = vpop.xlane.xlu0 %3425
      %v3427 = vmul.f32 %v3420, %v637
      %v3428 = vmul.f32 %v3423, %v637
      %v3429 = vmul.f32 %v3426, %v637
      %v3430 = vsub.f32 %v3411, %v3427
      %v3431 = vsub.f32 %v3412, %v3428
      %v3432 = vsub.f32 %v3413, %v3429
      %v3433 = vmul.f32 %v3430, %v3430
      %v3434 = vmul.f32 %v3431, %v3431
      %v3435 = vmul.f32 %v3432, %v3432
      %v3436 = vsel %vm626, %v3433, 0.0
      %3437 = vadd.xlane.f32.xlu0 %v3436
      %v3438 = vpop.xlane.xlu0 %3437
      %v3439 = vsel %vm626, %v3434, 0.0
      %3440 = vadd.xlane.f32.xlu0 %v3439
      %v3441 = vpop.xlane.xlu0 %3440
      %v3442 = vsel %vm633, %v3435, 0.0
      %3443 = vadd.xlane.f32.xlu0 %v3442
      %v3444 = vpop.xlane.xlu0 %3443
      %v3445 = vmul.f32 %v3438, %v637
      %v3446 = vmul.f32 %v3441, %v637
      %v3447 = vmul.f32 %v3444, %v637
      %v3448 = vadd.f32 %v3445, 1e-05
      %v3449 = vadd.f32 %v3446, 1e-05
      %v3450 = vadd.f32 %v3447, 1e-05
      %v3451 = vrsqrt.pop %v3448
      %v3452 = vrsqrt.pop %v3449
      %v3453 = vrsqrt.pop %v3450
      %v3454 = vmul.f32 %v3430, %v3451
      %v3455 = vmul.f32 %v3431, %v3452
      %v3456 = vmul.f32 %v3432, %v3453
      %v3458 = vlaneseq
      %v3459 = vshrl.u32 %v3458, 7
      %v3460 = vsub.s32 0, %v3459
      %v3461 = vrot.slane %v3415, %v3460
      %v3463 = vmul.f32 %v3454, %v3461
      %v3464 = vmul.f32 %v3455, %v3461
      %v3465 = vmul.f32 %v3456, %v3461
      %v3467 = vlaneseq
      %v3468 = vshrl.u32 %v3467, 7
      %v3469 = vsub.s32 0, %v3468
      %v3470 = vrot.slane %v3417, %v3469
      %v3472 = vadd.f32 %v3463, %v3470
      %v3473 = vadd.f32 %v3464, %v3470
      %v3474 = vadd.f32 %v3465, %v3470
      %s3475 = scalar_lea.vmem %s10, 32
      %v3476 = vld [vmem:[%s3475] sm:$0xff]
      %v3477 = vld [vmem:[%s3475 + $0x8] sm:$0xff]
      %v3478 = vld [vmem:[%s3475 + $0x10] sm:$0xff]
      %v3479 = vld [vmem:[%s3475 + $0x18] sm:$0xff]
      %s3480 = scalar_lea.vmem %s11, 1
      %v3481 = vld [vmem:[%s3480] sm:$0x1]
      %v3483 = vlaneseq
      %v3484 = vshrl.u32 %v3483, 7
      %v3485 = vsub.s32 0, %v3484
      %v3486 = vrot.slane %v3481, %v3485
      %v3489 = vsel %vm626, %v3472, 0
      %v3492 = vsel %vm626, %v3473, 0
      %v3495 = vsel %vm626, %v3474, 0
      %3497 = vmatprep.subr.mxu0 0.0
      %3498 = vmatpush1.msra.mxu0 0.0
      %3499 = vmatprep.subr.mxu0 0.0
      %3500 = vmatpush1.msra.mxu0 0.0
      %3501 = vmatprep.subr.mxu0 0.0
      %3502 = vmatpush1.msra.mxu0 0.0
      %3503 = vmatprep.subr.mxu0 0.0
      %3504 = vmatpush1.msra.mxu0 0.0
      %3505 = vmatprep.subr.mxu0 0.0
      %3506 = vmatpush1.msra.mxu0 0.0
      %3507 = vmatprep.subr.mxu0 0.0
      %3508 = vmatpush1.msra.mxu0 0.0
      %3509 = vmatprep.subr.mxu0 0.0
      %3510 = vmatpush1.msra.mxu0 0.0
      %3511 = vmatprep.subr.mxu0 0.0
      %3512 = vmatpush1.msra.mxu0 0.0
      %3513 = vmatprep.subr.mxu0 0.0
      %3514 = vmatpush1.msra.mxu0 0.0
      %3515 = vmatprep.subr.mxu0 0.0
      %3516 = vmatpush1.msra.mxu0 0.0
      %3517 = vmatprep.subr.mxu0 0.0
      %3518 = vmatpush1.msra.mxu0 0.0
      %3519 = vmatprep.subr.mxu0 0.0
      %3520 = vmatpush1.msra.mxu0 0.0
      %3521 = vmatprep.subr.mxu0 0.0
      %3522 = vmatpush1.msra.mxu0 %v3479
      %3523 = vmatprep.subr.mxu0 0.0
      %3524 = vmatpush1.msra.mxu0 %v3478
      %3525 = vmatprep.subr.mxu0 0.0
      %3526 = vmatpush1.msra.mxu0 %v3477
      %3527 = vmatprep.subr.mxu0 0.0
      %3528 = vmatpush1.msra.mxu0 %v3476
      %3529 = vmatprep.subr.mxu0 0.0
      %3530 = vmatpush2.msra.mxu0 0.0
      %3531 = vmatprep.subr.mxu0 0.0
      %3532 = vmatpush2.msra.mxu0 0.0
      %3533 = vmatprep.subr.mxu0 0.0
      %3534 = vmatpush2.msra.mxu0 0.0
      %3535 = vmatprep.subr.mxu0 0.0
      %3536 = vmatpush2.msra.mxu0 0.0
      %3537 = vmatprep.subr.mxu0 0.0
      %3538 = vmatpush2.msra.mxu0 0.0
      %3539 = vmatprep.subr.mxu0 0.0
      %3540 = vmatpush2.msra.mxu0 0.0
      %3541 = vmatprep.subr.mxu0 0.0
      %3542 = vmatpush2.msra.mxu0 0.0
      %3543 = vmatprep.subr.mxu0 0.0
      %3544 = vmatpush2.msra.mxu0 0.0
      %3545 = vmatprep.subr.mxu0 0.0
      %3546 = vmatpush2.msra.mxu0 0.0
      %3547 = vmatprep.subr.mxu0 0.0
      %3548 = vmatpush2.msra.mxu0 0.0
      %3549 = vmatprep.subr.mxu0 0.0
      %3550 = vmatpush2.msra.mxu0 0.0
      %3551 = vmatprep.subr.mxu0 0.0
      %3552 = vmatpush2.msra.mxu0 0.0
      %3553 = vmatprep.subr.mxu0 0.0
      %3554 = vmatpush2.msra.mxu0 0.0
      %3555 = vmatprep.subr.mxu0 0.0
      %3556 = vmatpush2.msra.mxu0 0.0
      %3557 = vmatprep.subr.mxu0 0.0
      %3558 = vmatpush2.msra.mxu0 0.0
      %3559 = vmatprep.subr.mxu0 0.0
      %3560 = vmatpush2.msra.mxu0 0.0
      %3561 = vmatprep.mubr.f32.mxu0 0.0
      %3562 = vmatmul.mubr.f32.gmra.mxu0 %v3489
      %v3563 = vpop.f32.mrf.mxu0
      %v3564 = vadd.f32 %v3486, %v3563
      %v3565 = vpop.f32.mrf.mxu0
      %3566 = vmatprep.mubr.f32.mxu0 0.0
      %3567 = vmatmul.mubr.f32.gmra.mxu0 %v3492
      %v3568 = vpop.f32.mrf.mxu0
      %v3569 = vadd.f32 %v3486, %v3568
      %v3570 = vpop.f32.mrf.mxu0
      %3571 = vmatprep.mubr.f32.mxu0 0.0
      %3572 = vmatmul.mubr.f32.gmra.mxu0 %v3495
      %v3573 = vpop.f32.mrf.mxu0
      %v3574 = vadd.f32 %v3486, %v3573
      %v3575 = vpop.f32.mrf.mxu0
      %3576 = vdwg.mxu0
      %v3577 = vmul.f32 %v3564, 0.5
      %v3578 = vmul.f32 %v3569, 0.5
      %v3579 = vmul.f32 %v3574, 0.5
      %v3580 = vmul.f32 %v3564, 0.70710677
      %v3581 = vmul.f32 %v3569, 0.70710677
      %v3582 = vmul.f32 %v3574, 0.70710677
      %v3583 = verf.f32.pop %v3580
      %v3584 = verf.f32.pop %v3581
      %v3585 = verf.f32.pop %v3582
      %v3586 = vadd.f32 %v3583, 1.0
      %v3587 = vadd.f32 %v3584, 1.0
      %v3588 = vadd.f32 %v3585, 1.0
      %v3589 = vmul.f32 %v3577, %v3586
      %v3590 = vmul.f32 %v3578, %v3587
      %v3591 = vmul.f32 %v3579, %v3588
      %s3592 = scalar_lea.vmem %s12, 64
      %v3593 = vld [vmem:[%s3592] sm:$0xff]
      %v3594 = vld [vmem:[%s3592 + $0x8] sm:$0xff]
      %v3595 = vld [vmem:[%s3592 + $0x10] sm:$0xff]
      %v3596 = vld [vmem:[%s3592 + $0x18] sm:$0xff]
      %v3597 = vld [vmem:[%s3592 + $0x20] sm:$0xff]
      %v3598 = vld [vmem:[%s3592 + $0x28] sm:$0xff]
      %v3599 = vld [vmem:[%s3592 + $0x30] sm:$0xff]
      %v3600 = vld [vmem:[%s3592 + $0x38] sm:$0xff]
      %s3601 = scalar_lea.vmem %s13, 1
      %v3602 = vld [vmem:[%s3601] sm:$0x1]
      %v3604 = vlaneseq
      %v3605 = vshrl.u32 %v3604, 7
      %v3606 = vsub.s32 0, %v3605
      %v3607 = vrot.slane %v3602, %v3606
      %v3610 = vsel %vm2069, %v3589, 0
      %v3613 = vsel %vm2069, %v3590, 0
      %v3616 = vsel %vm2069, %v3591, 0
      %3618 = vmatprep.subr.mxu0 0.0
      %3619 = vmatpush1.msra.mxu0 0.0
      %3620 = vmatprep.subr.mxu0 0.0
      %3621 = vmatpush1.msra.mxu0 0.0
      %3622 = vmatprep.subr.mxu0 0.0
      %3623 = vmatpush1.msra.mxu0 0.0
      %3624 = vmatprep.subr.mxu0 0.0
      %3625 = vmatpush1.msra.mxu0 0.0
      %3626 = vmatprep.subr.mxu0 0.0
      %3627 = vmatpush1.msra.mxu0 0.0
      %3628 = vmatprep.subr.mxu0 0.0
      %3629 = vmatpush1.msra.mxu0 0.0
      %3630 = vmatprep.subr.mxu0 0.0
      %3631 = vmatpush1.msra.mxu0 0.0
      %3632 = vmatprep.subr.mxu0 0.0
      %3633 = vmatpush1.msra.mxu0 0.0
      %3634 = vmatprep.subr.mxu0 0.0
      %3635 = vmatpush1.msra.mxu0 %v3600
      %3636 = vmatprep.subr.mxu0 0.0
      %3637 = vmatpush1.msra.mxu0 %v3599
      %3638 = vmatprep.subr.mxu0 0.0
      %3639 = vmatpush1.msra.mxu0 %v3598
      %3640 = vmatprep.subr.mxu0 0.0
      %3641 = vmatpush1.msra.mxu0 %v3597
      %3642 = vmatprep.subr.mxu0 0.0
      %3643 = vmatpush1.msra.mxu0 %v3596
      %3644 = vmatprep.subr.mxu0 0.0
      %3645 = vmatpush1.msra.mxu0 %v3595
      %3646 = vmatprep.subr.mxu0 0.0
      %3647 = vmatpush1.msra.mxu0 %v3594
      %3648 = vmatprep.subr.mxu0 0.0
      %3649 = vmatpush1.msra.mxu0 %v3593
      %3650 = vmatprep.subr.mxu0 0.0
      %3651 = vmatpush2.msra.mxu0 0.0
      %3652 = vmatprep.subr.mxu0 0.0
      %3653 = vmatpush2.msra.mxu0 0.0
      %3654 = vmatprep.subr.mxu0 0.0
      %3655 = vmatpush2.msra.mxu0 0.0
      %3656 = vmatprep.subr.mxu0 0.0
      %3657 = vmatpush2.msra.mxu0 0.0
      %3658 = vmatprep.subr.mxu0 0.0
      %3659 = vmatpush2.msra.mxu0 0.0
      %3660 = vmatprep.subr.mxu0 0.0
      %3661 = vmatpush2.msra.mxu0 0.0
      %3662 = vmatprep.subr.mxu0 0.0
      %3663 = vmatpush2.msra.mxu0 0.0
      %3664 = vmatprep.subr.mxu0 0.0
      %3665 = vmatpush2.msra.mxu0 0.0
      %3666 = vmatprep.subr.mxu0 0.0
      %3667 = vmatpush2.msra.mxu0 0.0
      %3668 = vmatprep.subr.mxu0 0.0
      %3669 = vmatpush2.msra.mxu0 0.0
      %3670 = vmatprep.subr.mxu0 0.0
      %3671 = vmatpush2.msra.mxu0 0.0
      %3672 = vmatprep.subr.mxu0 0.0
      %3673 = vmatpush2.msra.mxu0 0.0
      %3674 = vmatprep.subr.mxu0 0.0
      %3675 = vmatpush2.msra.mxu0 0.0
      %3676 = vmatprep.subr.mxu0 0.0
      %3677 = vmatpush2.msra.mxu0 0.0
      %3678 = vmatprep.subr.mxu0 0.0
      %3679 = vmatpush2.msra.mxu0 0.0
      %3680 = vmatprep.subr.mxu0 0.0
      %3681 = vmatpush2.msra.mxu0 0.0
      %3682 = vmatprep.mubr.f32.mxu0 0.0
      %3683 = vmatmul.mubr.f32.gmra.mxu0 %v3610
      %v3684 = vpop.f32.mrf.mxu0
      %v3685 = vadd.f32 %v3607, %v3684
      %v3686 = vpop.f32.mrf.mxu0
      %3687 = vmatprep.mubr.f32.mxu0 0.0
      %3688 = vmatmul.mubr.f32.gmra.mxu0 %v3613
      %v3689 = vpop.f32.mrf.mxu0
      %v3690 = vadd.f32 %v3607, %v3689
      %v3691 = vpop.f32.mrf.mxu0
      %3692 = vmatprep.mubr.f32.mxu0 0.0
      %3693 = vmatmul.mubr.f32.gmra.mxu0 %v3616
      %v3694 = vpop.f32.mrf.mxu0
      %v3695 = vadd.f32 %v3607, %v3694
      %v3696 = vpop.f32.mrf.mxu0
      %3697 = vdwg.mxu0
      %v3698 = vadd.f32 %v3411, %v3685
      %v3699 = vadd.f32 %v3412, %v3690
      %v3700 = vadd.f32 %v3413, %v3695
      %v3701 = vld [vmem:[%s14] sm:$0xff]
      %v3702 = vld [vmem:[%s14 + $0x8] sm:$0xff]
      %v3703 = vld [vmem:[%s14 + $0x10] sm:$0xff]
      %v3704 = vld [vmem:[%s14 + $0x18] sm:$0xff]
      %v3705 = vld [vmem:[%s15] sm:$0x1]
      %v3707 = vlaneseq
      %v3708 = vshrl.u32 %v3707, 7
      %v3709 = vsub.s32 0, %v3708
      %v3710 = vrot.slane %v3705, %v3709
      %v3713 = vsel %vm626, %v3698, 0
      %v3716 = vsel %vm626, %v3699, 0
      %v3719 = vsel %vm626, %v3700, 0
      %3721 = vmatprep.subr.mxu0 0.0
      %3722 = vmatpush1.msra.mxu0 0.0
      %3723 = vmatprep.subr.mxu0 0.0
      %3724 = vmatpush1.msra.mxu0 0.0
      %3725 = vmatprep.subr.mxu0 0.0
      %3726 = vmatpush1.msra.mxu0 0.0
      %3727 = vmatprep.subr.mxu0 0.0
      %3728 = vmatpush1.msra.mxu0 0.0
      %3729 = vmatprep.subr.mxu0 0.0
      %3730 = vmatpush1.msra.mxu0 0.0
      %3731 = vmatprep.subr.mxu0 0.0
      %3732 = vmatpush1.msra.mxu0 0.0
      %3733 = vmatprep.subr.mxu0 0.0
      %3734 = vmatpush1.msra.mxu0 0.0
      %3735 = vmatprep.subr.mxu0 0.0
      %3736 = vmatpush1.msra.mxu0 0.0
      %3737 = vmatprep.subr.mxu0 0.0
      %3738 = vmatpush1.msra.mxu0 0.0
      %3739 = vmatprep.subr.mxu0 0.0
      %3740 = vmatpush1.msra.mxu0 0.0
      %3741 = vmatprep.subr.mxu0 0.0
      %3742 = vmatpush1.msra.mxu0 0.0
      %3743 = vmatprep.subr.mxu0 0.0
      %3744 = vmatpush1.msra.mxu0 0.0
      %3745 = vmatprep.subr.mxu0 0.0
      %3746 = vmatpush1.msra.mxu0 %v3704
      %3747 = vmatprep.subr.mxu0 0.0
      %3748 = vmatpush1.msra.mxu0 %v3703
      %3749 = vmatprep.subr.mxu0 0.0
      %3750 = vmatpush1.msra.mxu0 %v3702
      %3751 = vmatprep.subr.mxu0 0.0
      %3752 = vmatpush1.msra.mxu0 %v3701
      %3753 = vmatprep.subr.mxu0 0.0
      %3754 = vmatpush2.msra.mxu0 0.0
      %3755 = vmatprep.subr.mxu0 0.0
      %3756 = vmatpush2.msra.mxu0 0.0
      %3757 = vmatprep.subr.mxu0 0.0
      %3758 = vmatpush2.msra.mxu0 0.0
      %3759 = vmatprep.subr.mxu0 0.0
      %3760 = vmatpush2.msra.mxu0 0.0
      %3761 = vmatprep.subr.mxu0 0.0
      %3762 = vmatpush2.msra.mxu0 0.0
      %3763 = vmatprep.subr.mxu0 0.0
      %3764 = vmatpush2.msra.mxu0 0.0
      %3765 = vmatprep.subr.mxu0 0.0
      %3766 = vmatpush2.msra.mxu0 0.0
      %3767 = vmatprep.subr.mxu0 0.0
      %3768 = vmatpush2.msra.mxu0 0.0
      %3769 = vmatprep.subr.mxu0 0.0
      %3770 = vmatpush2.msra.mxu0 0.0
      %3771 = vmatprep.subr.mxu0 0.0
      %3772 = vmatpush2.msra.mxu0 0.0
      %3773 = vmatprep.subr.mxu0 0.0
      %3774 = vmatpush2.msra.mxu0 0.0
      %3775 = vmatprep.subr.mxu0 0.0
      %3776 = vmatpush2.msra.mxu0 0.0
      %3777 = vmatprep.subr.mxu0 0.0
      %3778 = vmatpush2.msra.mxu0 0.0
      %3779 = vmatprep.subr.mxu0 0.0
      %3780 = vmatpush2.msra.mxu0 0.0
      %3781 = vmatprep.subr.mxu0 0.0
      %3782 = vmatpush2.msra.mxu0 0.0
      %3783 = vmatprep.subr.mxu0 0.0
      %3784 = vmatpush2.msra.mxu0 0.0
      %3785 = vmatprep.mubr.f32.mxu0 0.0
      %3786 = vmatmul.mubr.f32.gmra.mxu0 %v3713
      %v3787 = vpop.f32.mrf.mxu0
      %v3788 = vadd.f32 %v3710, %v3787
      %v3789 = vpop.f32.mrf.mxu0
      %3790 = vmatprep.mubr.f32.mxu0 0.0
      %3791 = vmatmul.mubr.f32.gmra.mxu0 %v3716
      %v3792 = vpop.f32.mrf.mxu0
      %v3793 = vadd.f32 %v3710, %v3792
      %v3794 = vpop.f32.mrf.mxu0
      %3795 = vmatprep.mubr.f32.mxu0 0.0
      %3796 = vmatmul.mubr.f32.gmra.mxu0 %v3719
      %v3797 = vpop.f32.mrf.mxu0
      %v3798 = vadd.f32 %v3710, %v3797
      %v3799 = vpop.f32.mrf.mxu0
      %3800 = vdwg.mxu0
      %3801 = vst.msk [vmem:[%s521] sm:$0xff] %vm534, %v3788
      %3802 = vst.msk [vmem:[%s521 + $0x8] sm:$0xff] %vm534, %v3793
      %vm3803 = vcmask 385024
      %3804 = vst.msk [vmem:[%s521 + $0x10] sm:$0x1] %vm3803, %v3798
      %p3805 = scmp.lt.s32.totalorder %s27, 1
      %s3806 = scalar_select %p3805, %s27, 1
      %s3807 = smul.addr %s3806, 3
      %s3808 = smul.addr %s3807, 8
      %s3809 = scalar_lea.vmem %s16, %s3808
      // Predicated region
      $region85: #{_lambda_.3} parent=83 // pred_check
        %p3810 = pneg %p386
      $region86: #{_lambda_.3} parent=83 // pred_check_branch
        %3812 = sbr.rel (%p3810) target = $region88
      $region87: #{_lambda_.3} parent=83 // pred_region
        _
      $region88: #{_lambda_.3} parent=83 // pred_fallthru
        _
    $region84: #{_lambda_.3} parent=5 // pred_fallthru
      _
    %p3813 = scmp.le.s32.totalorder 2, %s22
    // Predicated region
    $region89: #{_lambda_.3} parent=5 // pred_check
      %p3814 = pneg %p3813
    $region90: #{_lambda_.3} parent=5 // pred_check_branch
      %3816 = sbr.rel (%p3814) target = $region92
    $region91: #{_lambda_.3} parent=5 // pred_region
      %s3817 = ssub.s32 %s22, 2
      // Predicated region
      $region93: #{_lambda_.3} parent=91 // pred_check
        %p3818 = pneg %p392
      $region94: #{_lambda_.3} parent=91 // pred_check_branch
        %3820 = sbr.rel (%p3818) target = $region96
      $region95: #{_lambda_.3} parent=91 // pred_region
        %p3821 = scmp.lt.s32.totalorder %s28, 1
        %s3822 = scalar_select %p3821, %s28, 1
        %s3823 = smul.addr %s3822, 3
        %s3824 = smul.addr %s3823, 8
        %s3825 = scalar_lea.vmem %s16, %s3824
      $region96: #{_lambda_.3} parent=91 // pred_fallthru
        _
    $region92: #{_lambda_.3} parent=5 // pred_fallthru
      _
  $region6: #{_lambda_.3} parent=0 // loop_footer
    %s26 = sadd.s32 1, %s22
  $region7: #{_lambda_.3} parent=0 // loop_footer_branch
    %21 = sbr.rel target = $region3
  $region8: #{_lambda_.3} parent=0 // loop_exit
    _

// kernel: _lambda_.4
$region0: #{_lambda_.4}
  #allocation0 [shape = 'u32[]', space=smem, size = 0x4, offset = 0x4, fixed_abs, tag = 'smem constant byte address 0x4 - core index']
  #allocation1 [shape = 'u32[144,128]{1,0:T(1,128)}', space=vmem, size = 0x12000, scoped, tag = 'internal scratch']
  %s0 = inlined_call_operand.vmem [shape: f32[2,18,18,3], index: 0, kind: input, shape index: {}]
  %s1 = inlined_call_operand.vmem [shape: f32[9,3,64], index: 1, kind: input, shape index: {}]
  %s2 = inlined_call_operand.vmem [shape: f32[1,64], index: 2, kind: input, shape index: {}]
  %s3 = inlined_call_operand.vmem [shape: f32[2,16,16,64], index: 3, kind: output, shape index: {}]
  %s4 = sld [smem:[#allocation0]]
  $region45: #{_lambda_.4} parent=0
    _
  %s6 = ssub.s32 1, %s4
  %s7 = scalar_select 0, %s6, %s4
  loop: start=0, step=1, limit=4
  $region2: #{_lambda_.4} parent=0 // loop_pre_header
    _
  $region3: #{_lambda_.4} parent=0 // loop_header
    %s9 = sphi 0, %s13
    %p10 = scmp.ge.s32.totalorder %s9, 4
    %s19 = sphi 0, %s21
    %s22 = sphi 0, %s19
    %s23 = sphi 0, %s22
    %s39 = sphi 0, %s23
    %s43 = sphi 0, %s43
    %s45 = sphi 0, %s43
    %s46 = sphi 0, %s45
    %s60 = sphi 0, %s46
    %s64 = sphi 0, %s64
    %s66 = sphi 0, %s64
    %s67 = sphi 0, %s66
    %s81 = sphi 0, %s67
    %s87 = sphi 0, %s89
    %s90 = sphi 0, %s87
    %s91 = sphi 0, %s90
    %s107 = sphi 0, %s91
  $region4: #{_lambda_.4} parent=0 // loop_header_branch
    %12 = sbr.rel (%p10) target = $region8
  $region5: #{_lambda_.4} parent=0 // loop_body
    %s14 = ssub.s32 %s9, 1
    %s15 = ssub.s32 %s9, 2
    %s16 = sadd.s32 %s9, 1
    %s17 = ssub.s32 %s9, %s16
    %p18 = scmp.eq.s32.totalorder %s17, 0
    %s20 = sadd.s32 %s19, 1
    %s21 = scalar_select %p18, %s19, %s20
    %p24 = pneg %p18
    %p25 = scmp.eq.s32.totalorder %s9, 1
    %p26 = por %p24, %p25
    %p27 = scmp.ne.s32.totalorder %s19, %s22
    %p28 = scmp.eq.s32.totalorder %s9, 0
    %p29 = por %p27, %p28
    %p30 = scmp.ne.s32.totalorder %s19, %s22
    %p31 = scmp.eq.s32.totalorder %s14, 1
    %p32 = por %p30, %p31
    %p33 = scmp.ne.s32.totalorder %s22, %s23
    %p34 = scmp.eq.s32.totalorder %s14, 0
    %p35 = por %p33, %p34
    %p36 = scmp.ne.s32.totalorder %s22, %s23
    %p37 = scmp.eq.s32.totalorder %s15, 1
    %p38 = por %p36, %p37
    %p40 = scmp.ne.s32.totalorder %s23, %s39
    %p41 = scmp.eq.s32.totalorder %s15, 0
    %p42 = por %p40, %p41
    %s44 = sadd.s32 %s43, 1
    %p47 = scmp.eq.s32.totalorder %s9, 1
    %p48 = scmp.ne.s32.totalorder %s43, %s45
    %p49 = scmp.eq.s32.totalorder %s9, 0
    %p50 = por %p48, %p49
    %p51 = scmp.ne.s32.totalorder %s43, %s45
    %p52 = scmp.eq.s32.totalorder %s14, 1
    %p53 = por %p51, %p52
    %p54 = scmp.ne.s32.totalorder %s45, %s46
    %p55 = scmp.eq.s32.totalorder %s14, 0
    %p56 = por %p54, %p55
    %p57 = scmp.ne.s32.totalorder %s45, %s46
    %p58 = scmp.eq.s32.totalorder %s15, 1
    %p59 = por %p57, %p58
    %p61 = scmp.ne.s32.totalorder %s46, %s60
    %p62 = scmp.eq.s32.totalorder %s15, 0
    %p63 = por %p61, %p62
    %s65 = sadd.s32 %s64, 1
    %p68 = scmp.eq.s32.totalorder %s9, 1
    %p69 = scmp.ne.s32.totalorder %s64, %s66
    %p70 = scmp.eq.s32.totalorder %s9, 0
    %p71 = por %p69, %p70
    %p72 = scmp.ne.s32.totalorder %s64, %s66
    %p73 = scmp.eq.s32.totalorder %s14, 1
    %p74 = por %p72, %p73
    %p75 = scmp.ne.s32.totalorder %s66, %s67
    %p76 = scmp.eq.s32.totalorder %s14, 0
    %p77 = por %p75, %p76
    %p78 = scmp.ne.s32.totalorder %s66, %s67
    %p79 = scmp.eq.s32.totalorder %s15, 1
    %p80 = por %p78, %p79
    %p82 = scmp.ne.s32.totalorder %s67, %s81
    %p83 = scmp.eq.s32.totalorder %s15, 0
    %p84 = por %p82, %p83
    %s85 = ssub.s32 %s9, %s16
    %p86 = scmp.eq.s32.totalorder %s85, 0
    %s88 = sadd.s32 %s87, 1
    %s89 = scalar_select %p86, %s87, %s88
    %p92 = pneg %p86
    %p93 = scmp.eq.s32.totalorder %s9, 1
    %p94 = por %p92, %p93
    %p95 = scmp.ne.s32.totalorder %s87, %s90
    %p96 = scmp.eq.s32.totalorder %s9, 0
    %p97 = por %p95, %p96
    %p98 = scmp.ne.s32.totalorder %s87, %s90
    %p99 = scmp.eq.s32.totalorder %s14, 1
    %p100 = por %p98, %p99
    %p101 = scmp.ne.s32.totalorder %s90, %s91
    %p102 = scmp.eq.s32.totalorder %s14, 0
    %p103 = por %p101, %p102
    %p104 = scmp.ne.s32.totalorder %s90, %s91
    %p105 = scmp.eq.s32.totalorder %s15, 1
    %p106 = por %p104, %p105
    %p108 = scmp.ne.s32.totalorder %s91, %s107
    %p109 = scmp.eq.s32.totalorder %s15, 0
    %p110 = por %p108, %p109
    %p111 = scmp.le.s32.totalorder 1, %s9
    %p112 = scmp.lt.s32.totalorder %s9, 3
    %p113 = pnand %p111, %p112
    %p114 = pneg %p113
    // Predicated region
    $region9: #{_lambda_.4} parent=5 // pred_check
      _
    $region10: #{_lambda_.4} parent=5 // pred_check_branch
      %116 = sbr.rel (%p113) target = $region12
    $region11: #{_lambda_.4} parent=5 // pred_region
      %s117 = ssub.s32 %s9, 1
      // Predicated region
      $region13: #{_lambda_.4} parent=11 // pred_check
        %p118 = pneg %p56
      $region14: #{_lambda_.4} parent=11 // pred_check_branch
        %120 = sbr.rel (%p118) target = $region16
      $region15: #{_lambda_.4} parent=11 // pred_region
        _
      $region16: #{_lambda_.4} parent=11 // pred_fallthru
        _
      // Predicated region
      $region17: #{_lambda_.4} parent=11 // pred_check
        %p121 = pneg %p77
      $region18: #{_lambda_.4} parent=11 // pred_check_branch
        %123 = sbr.rel (%p121) target = $region20
      $region19: #{_lambda_.4} parent=11 // pred_region
        _
      $region20: #{_lambda_.4} parent=11 // pred_fallthru
        _
    $region12: #{_lambda_.4} parent=5 // pred_fallthru
      _
    %p124 = scmp.lt.s32.totalorder %s9, 2
    // Predicated region
    $region21: #{_lambda_.4} parent=5 // pred_check
      %p125 = pneg %p124
    $region22: #{_lambda_.4} parent=5 // pred_check_branch
      %127 = sbr.rel (%p125) target = $region24
    $region23: #{_lambda_.4} parent=5 // pred_region
      // Predicated region
      $region25: #{_lambda_.4} parent=23 // pred_check
        %p128 = pneg %p29
      $region26: #{_lambda_.4} parent=23 // pred_check_branch
        %130 = sbr.rel (%p128) target = $region28
      $region27: #{_lambda_.4} parent=23 // pred_region
        %p131 = scmp.lt.s32.totalorder %s9, 1
        %s132 = scalar_select %p131, %s9, 1
        %s133 = smul.addr %s132, 54
        %s134 = smul.addr %s133, 8
        %s135 = scalar_lea.vmem %s0, %s134
      $region28: #{_lambda_.4} parent=23 // pred_fallthru
        _
    $region24: #{_lambda_.4} parent=5 // pred_fallthru
      _
    %p136 = scmp.le.s32.totalorder 1, %s9
    %p137 = scmp.lt.s32.totalorder %s9, 3
    %p138 = pnand %p136, %p137
    %p139 = pneg %p138
    // Predicated region
    $region29: #{_lambda_.4} parent=5 // pred_check
      _
    $region30: #{_lambda_.4} parent=5 // pred_check_branch
      %141 = sbr.rel (%p138) target = $region32
    $region31: #{_lambda_.4} parent=5 // pred_region
      %s142 = ssub.s32 %s9, 1
      %p143 = scmp.lt.s32.totalorder %s14, 1
      %s144 = scalar_select %p143, %s14, 1
      %s145 = smul.addr %s144, 54
      %s146 = smul.addr %s145, 8
      %s147 = scalar_lea.vmem %s0, %s146
      %p148 = pneg %p35
      %p149 = pneg %p32
      %p150 = pneg %p56
      %p151 = pneg %p53
      %p152 = pneg %p77
      %p153 = pneg %p74
      %p154 = pneg %p103
      %p155 = pneg %p100
      %p156 = scmp.lt.s32.totalorder %s14, 1
      %s157 = scalar_select %p156, %s14, 1
      %s158 = smul.addr %s157, 32
      %s159 = smul.addr %s158, 8
      %s160 = scalar_lea.vmem %s3, %s159
      %p161 = scmp.lt.s32.totalorder %s14, 1
      %s162 = scalar_select %p161, %s14, 1
      %s163 = smul.addr %s162, 54
      %s164 = smul.addr %s163, 8
      %s165 = scalar_lea.vmem %s0, %s164
      %p166 = scmp.lt.s32.totalorder %s14, 1
      %s167 = scalar_select %p166, %s14, 1
      %s168 = smul.addr %s167, 32
      %s169 = smul.addr %s168, 8
      %s170 = scalar_lea.vmem %s3, %s169
      %v171 = vld [vmem:[%s165] sm:$0xff]
      %v172 = vld [vmem:[%s165 + $0x8] sm:$0xff]
      %v173 = vld [vmem:[%s165 + $0x10] sm:$0x3]
      %v174 = vld [vmem:[%s165 + $0x18] sm:$0xff]
      %v175 = vld [vmem:[%s165 + $0x20] sm:$0xff]
      %v176 = vld [vmem:[%s165 + $0x28] sm:$0x3]
      %v177 = vld [vmem:[%s165 + $0x30] sm:$0xff]
      %v178 = vld [vmem:[%s165 + $0x38] sm:$0xff]
      %v179 = vld [vmem:[%s165 + $0x40] sm:$0x3]
      %v180 = vld [vmem:[%s165 + $0x48] sm:$0xff]
      %v181 = vld [vmem:[%s165 + $0x50] sm:$0xff]
      %v182 = vld [vmem:[%s165 + $0x58] sm:$0x3]
      %v183 = vld [vmem:[%s165 + $0x60] sm:$0xff]
      %v184 = vld [vmem:[%s165 + $0x68] sm:$0xff]
      %v185 = vld [vmem:[%s165 + $0x70] sm:$0x3]
      %v186 = vld [vmem:[%s165 + $0x78] sm:$0xff]
      %v187 = vld [vmem:[%s165 + $0x80] sm:$0xff]
      %v188 = vld [vmem:[%s165 + $0x88] sm:$0x3]
      %v189 = vld [vmem:[%s165 + $0x90] sm:$0xff]
      %v190 = vld [vmem:[%s165 + $0x98] sm:$0xff]
      %v191 = vld [vmem:[%s165 + $0xa0] sm:$0x3]
      %v192 = vld [vmem:[%s165 + $0xa8] sm:$0xff]
      %v193 = vld [vmem:[%s165 + $0xb0] sm:$0xff]
      %v194 = vld [vmem:[%s165 + $0xb8] sm:$0x3]
      %v195 = vld [vmem:[%s165 + $0xc0] sm:$0xff]
      %v196 = vld [vmem:[%s165 + $0xc8] sm:$0xff]
      %v197 = vld [vmem:[%s165 + $0xd0] sm:$0x3]
      %v198 = vld [vmem:[%s165 + $0xd8] sm:$0xff]
      %v199 = vld [vmem:[%s165 + $0xe0] sm:$0xff]
      %v200 = vld [vmem:[%s165 + $0xe8] sm:$0x3]
      %v201 = vld [vmem:[%s165 + $0xf0] sm:$0xff]
      %v202 = vld [vmem:[%s165 + $0xf8] sm:$0xff]
      %v203 = vld [vmem:[%s165 + $0x100] sm:$0x3]
      %v204 = vld [vmem:[%s165 + $0x108] sm:$0xff]
      %v205 = vld [vmem:[%s165 + $0x110] sm:$0xff]
      %v206 = vld [vmem:[%s165 + $0x118] sm:$0x3]
      %v207 = vld [vmem:[%s165 + $0x120] sm:$0xff]
      %v208 = vld [vmem:[%s165 + $0x128] sm:$0xff]
      %v209 = vld [vmem:[%s165 + $0x130] sm:$0x3]
      %v210 = vld [vmem:[%s165 + $0x138] sm:$0xff]
      %v211 = vld [vmem:[%s165 + $0x140] sm:$0xff]
      %v212 = vld [vmem:[%s165 + $0x148] sm:$0x3]
      %v213 = vld [vmem:[%s165 + $0x150] sm:$0xff]
      %v214 = vld [vmem:[%s165 + $0x158] sm:$0xff]
      %v215 = vld [vmem:[%s165 + $0x160] sm:$0x3]
      %v216 = vld [vmem:[%s165 + $0x168] sm:$0xff]
      %v217 = vld [vmem:[%s165 + $0x170] sm:$0xff]
      %v218 = vld [vmem:[%s165 + $0x178] sm:$0x3]
      %v219 = vld [vmem:[%s165 + $0x180] sm:$0xff]
      %v220 = vld [vmem:[%s165 + $0x188] sm:$0xff]
      %v221 = vld [vmem:[%s165 + $0x190] sm:$0x3]
      %v222 = vld [vmem:[%s165 + $0x198] sm:$0xff]
      %v223 = vld [vmem:[%s165 + $0x1a0] sm:$0xff]
      %v224 = vld [vmem:[%s165 + $0x1a8] sm:$0x3]
      %v225 = vld [vmem:[%s1] sm:$0x7]
      %vm274 = vcmask 1046528
      %v275 = vrot.slane %v171, 1
      %v276 = vrot.slane %v172, 1
      %v277 = vsel %vm274, %v275, %v276
      %v278 = vrot.slane %v173, 1
      %v279 = vsel %vm274, %v276, %v278
      %v280 = vrot.slane %v174, 1
      %v281 = vrot.slane %v175, 1
      %v282 = vsel %vm274, %v280, %v281
      %v283 = vrot.slane %v176, 1
      %v284 = vsel %vm274, %v281, %v283
      %v285 = vrot.slane %v177, 1
      %v286 = vrot.slane %v178, 1
      %v287 = vsel %vm274, %v285, %v286
      %v288 = vrot.slane %v179, 1
      %v289 = vsel %vm274, %v286, %v288
      %v290 = vrot.slane %v180, 1
      %v291 = vrot.slane %v181, 1
      %v292 = vsel %vm274, %v290, %v291
      %v293 = vrot.slane %v182, 1
      %v294 = vsel %vm274, %v291, %v293
      %v295 = vrot.slane %v183, 1
      %v296 = vrot.slane %v184, 1
      %v297 = vsel %vm274, %v295, %v296
      %v298 = vrot.slane %v185, 1
      %v299 = vsel %vm274, %v296, %v298
      %v300 = vrot.slane %v186, 1
      %v301 = vrot.slane %v187, 1
      %v302 = vsel %vm274, %v300, %v301
      %v303 = vrot.slane %v188, 1
      %v304 = vsel %vm274, %v301, %v303
      %v305 = vrot.slane %v189, 1
      %v306 = vrot.slane %v190, 1
      %v307 = vsel %vm274, %v305, %v306
      %v308 = vrot.slane %v191, 1
      %v309 = vsel %vm274, %v306, %v308
      %v310 = vrot.slane %v192, 1
      %v311 = vrot.slane %v193, 1
      %v312 = vsel %vm274, %v310, %v311
      %v313 = vrot.slane %v194, 1
      %v314 = vsel %vm274, %v311, %v313
      %v315 = vrot.slane %v195, 1
      %v316 = vrot.slane %v196, 1
      %v317 = vsel %vm274, %v315, %v316
      %v318 = vrot.slane %v197, 1
      %v319 = vsel %vm274, %v316, %v318
      %v320 = vrot.slane %v198, 1
      %v321 = vrot.slane %v199, 1
      %v322 = vsel %vm274, %v320, %v321
      %v323 = vrot.slane %v200, 1
      %v324 = vsel %vm274, %v321, %v323
      %v325 = vrot.slane %v201, 1
      %v326 = vrot.slane %v202, 1
      %v327 = vsel %vm274, %v325, %v326
      %v328 = vrot.slane %v203, 1
      %v329 = vsel %vm274, %v326, %v328
      %v330 = vrot.slane %v204, 1
      %v331 = vrot.slane %v205, 1
      %v332 = vsel %vm274, %v330, %v331
      %v333 = vrot.slane %v206, 1
      %v334 = vsel %vm274, %v331, %v333
      %v335 = vrot.slane %v207, 1
      %v336 = vrot.slane %v208, 1
      %v337 = vsel %vm274, %v335, %v336
      %v338 = vrot.slane %v209, 1
      %v339 = vsel %vm274, %v336, %v338
      %v340 = vrot.slane %v210, 1
      %v341 = vrot.slane %v211, 1
      %v342 = vsel %vm274, %v340, %v341
      %v343 = vrot.slane %v212, 1
      %v344 = vsel %vm274, %v341, %v343
      %v345 = vrot.slane %v213, 1
      %v346 = vrot.slane %v214, 1
      %v347 = vsel %vm274, %v345, %v346
      %v348 = vrot.slane %v215, 1
      %v349 = vsel %vm274, %v346, %v348
      %v350 = vrot.slane %v216, 1
      %v351 = vrot.slane %v217, 1
      %v352 = vsel %vm274, %v350, %v351
      %v353 = vrot.slane %v218, 1
      %v354 = vsel %vm274, %v351, %v353
      %s355 = scalar_lea.vmem %s1, 4
      %v356 = vld [vmem:[%s355] sm:$0x7]
      %vm357 = vcmask 23552
      %v358 = vsel %vm357, %v277, 0
      %v360 = vsel %vm357, %v279, 0
      %v362 = vsel %vm357, %v282, 0
      %v364 = vsel %vm357, %v284, 0
      %v366 = vsel %vm357, %v287, 0
      %v368 = vsel %vm357, %v289, 0
      %v370 = vsel %vm357, %v292, 0
      %v372 = vsel %vm357, %v294, 0
      %v374 = vsel %vm357, %v297, 0
      %v376 = vsel %vm357, %v299, 0
      %v378 = vsel %vm357, %v302, 0
      %v380 = vsel %vm357, %v304, 0
      %v382 = vsel %vm357, %v307, 0
      %v384 = vsel %vm357, %v309, 0
      %v386 = vsel %vm357, %v312, 0
      %v388 = vsel %vm357, %v314, 0
      %v390 = vsel %vm357, %v317, 0
      %v392 = vsel %vm357, %v319, 0
      %v394 = vsel %vm357, %v322, 0
      %v396 = vsel %vm357, %v324, 0
      %v398 = vsel %vm357, %v327, 0
      %v400 = vsel %vm357, %v329, 0
      %v402 = vsel %vm357, %v332, 0
      %v404 = vsel %vm357, %v334, 0
      %v406 = vsel %vm357, %v337, 0
      %v408 = vsel %vm357, %v339, 0
      %v410 = vsel %vm357, %v342, 0
      %v412 = vsel %vm357, %v344, 0
      %v414 = vsel %vm357, %v347, 0
      %v416 = vsel %vm357, %v349, 0
      %v418 = vsel %vm357, %v352, 0
      %v420 = vsel %vm357, %v354, 0
      %vm422 = vcmask 1042432
      %v424 = vsel %vm422, %v356, 0
      %426 = vmatprep.subr.mxu0 0.0
      %427 = vmatpush1.msra.mxu0 0.0
      %428 = vmatprep.subr.mxu0 0.0
      %429 = vmatpush1.msra.mxu0 0.0
      %430 = vmatprep.subr.mxu0 0.0
      %431 = vmatpush1.msra.mxu0 0.0
      %432 = vmatprep.subr.mxu0 0.0
      %433 = vmatpush1.msra.mxu0 0.0
      %434 = vmatprep.subr.mxu0 0.0
      %435 = vmatpush1.msra.mxu0 0.0
      %436 = vmatprep.subr.mxu0 0.0
      %437 = vmatpush1.msra.mxu0 0.0
      %438 = vmatprep.subr.mxu0 0.0
      %439 = vmatpush1.msra.mxu0 0.0
      %440 = vmatprep.subr.mxu0 0.0
      %441 = vmatpush1.msra.mxu0 0.0
      %442 = vmatprep.subr.mxu0 0.0
      %443 = vmatpush1.msra.mxu0 0.0
      %444 = vmatprep.subr.mxu0 0.0
      %445 = vmatpush1.msra.mxu0 0.0
      %446 = vmatprep.subr.mxu0 0.0
      %447 = vmatpush1.msra.mxu0 0.0
      %448 = vmatprep.subr.mxu0 0.0
      %449 = vmatpush1.msra.mxu0 0.0
      %450 = vmatprep.subr.mxu0 0.0
      %451 = vmatpush1.msra.mxu0 0.0
      %452 = vmatprep.subr.mxu0 0.0
      %453 = vmatpush1.msra.mxu0 0.0
      %454 = vmatprep.subr.mxu0 0.0
      %455 = vmatpush1.msra.mxu0 0.0
      %456 = vmatprep.subr.mxu0 0.0
      %457 = vmatpush1.msra.mxu0 %v424
      %458 = vmatprep.subr.mxu0 0.0
      %459 = vmatpush2.msra.mxu0 0.0
      %460 = vmatprep.subr.mxu0 0.0
      %461 = vmatpush2.msra.mxu0 0.0
      %462 = vmatprep.subr.mxu0 0.0
      %463 = vmatpush2.msra.mxu0 0.0
      %464 = vmatprep.subr.mxu0 0.0
      %465 = vmatpush2.msra.mxu0 0.0
      %466 = vmatprep.subr.mxu0 0.0
      %467 = vmatpush2.msra.mxu0 0.0
      %468 = vmatprep.subr.mxu0 0.0
      %469 = vmatpush2.msra.mxu0 0.0
      %470 = vmatprep.subr.mxu0 0.0
      %471 = vmatpush2.msra.mxu0 0.0
      %472 = vmatprep.subr.mxu0 0.0
      %473 = vmatpush2.msra.mxu0 0.0
      %474 = vmatprep.subr.mxu0 0.0
      %475 = vmatpush2.msra.mxu0 0.0
      %476 = vmatprep.subr.mxu0 0.0
      %477 = vmatpush2.msra.mxu0 0.0
      %478 = vmatprep.subr.mxu0 0.0
      %479 = vmatpush2.msra.mxu0 0.0
      %480 = vmatprep.subr.mxu0 0.0
      %481 = vmatpush2.msra.mxu0 0.0
      %482 = vmatprep.subr.mxu0 0.0
      %483 = vmatpush2.msra.mxu0 0.0
      %484 = vmatprep.subr.mxu0 0.0
      %485 = vmatpush2.msra.mxu0 0.0
      %486 = vmatprep.subr.mxu0 0.0
      %487 = vmatpush2.msra.mxu0 0.0
      %488 = vmatprep.subr.mxu0 0.0
      %489 = vmatpush2.msra.mxu0 0.0
      %490 = vmatprep.mubr.f32.mxu0 0.0
      %491 = vmatmul.mubr.f32.gmra.mxu0 %v358
      %v492 = vpop.f32.mrf.mxu0
      %v493 = vadd.f32 0.0, %v492
      %v494 = vpop.f32.mrf.mxu0
      %495 = vmatprep.mubr.f32.mxu0 0.0
      %496 = vmatmul.mubr.f32.gmra.mxu0 %v360
      %v497 = vpop.f32.mrf.mxu0
      %v498 = vadd.f32 0.0, %v497
      %v499 = vpop.f32.mrf.mxu0
      %500 = vmatprep.mubr.f32.mxu0 0.0
      %501 = vmatmul.mubr.f32.gmra.mxu0 %v362
      %v502 = vpop.f32.mrf.mxu0
      %v503 = vadd.f32 0.0, %v502
      %v504 = vpop.f32.mrf.mxu0
      %505 = vmatprep.mubr.f32.mxu0 0.0
      %506 = vmatmul.mubr.f32.gmra.mxu0 %v364
      %v507 = vpop.f32.mrf.mxu0
      %v508 = vadd.f32 0.0, %v507
      %v509 = vpop.f32.mrf.mxu0
      %510 = vmatprep.mubr.f32.mxu0 0.0
      %511 = vmatmul.mubr.f32.gmra.mxu0 %v366
      %v512 = vpop.f32.mrf.mxu0
      %v513 = vadd.f32 0.0, %v512
      %v514 = vpop.f32.mrf.mxu0
      %515 = vmatprep.mubr.f32.mxu0 0.0
      %516 = vmatmul.mubr.f32.gmra.mxu0 %v368
      %v517 = vpop.f32.mrf.mxu0
      %v518 = vadd.f32 0.0, %v517
      %v519 = vpop.f32.mrf.mxu0
      %520 = vmatprep.mubr.f32.mxu0 0.0
      %521 = vmatmul.mubr.f32.gmra.mxu0 %v370
      %v522 = vpop.f32.mrf.mxu0
      %v523 = vadd.f32 0.0, %v522
      %v524 = vpop.f32.mrf.mxu0
      %525 = vmatprep.mubr.f32.mxu0 0.0
      %526 = vmatmul.mubr.f32.gmra.mxu0 %v372
      %v527 = vpop.f32.mrf.mxu0
      %v528 = vadd.f32 0.0, %v527
      %v529 = vpop.f32.mrf.mxu0
      %530 = vmatprep.mubr.f32.mxu0 0.0
      %531 = vmatmul.mubr.f32.gmra.mxu0 %v374
      %v532 = vpop.f32.mrf.mxu0
      %v533 = vadd.f32 0.0, %v532
      %v534 = vpop.f32.mrf.mxu0
      %535 = vmatprep.mubr.f32.mxu0 0.0
      %536 = vmatmul.mubr.f32.gmra.mxu0 %v376
      %v537 = vpop.f32.mrf.mxu0
      %v538 = vadd.f32 0.0, %v537
      %v539 = vpop.f32.mrf.mxu0
      %540 = vmatprep.mubr.f32.mxu0 0.0
      %541 = vmatmul.mubr.f32.gmra.mxu0 %v378
      %v542 = vpop.f32.mrf.mxu0
      %v543 = vadd.f32 0.0, %v542
      %v544 = vpop.f32.mrf.mxu0
      %545 = vmatprep.mubr.f32.mxu0 0.0
      %546 = vmatmul.mubr.f32.gmra.mxu0 %v380
      %v547 = vpop.f32.mrf.mxu0
      %v548 = vadd.f32 0.0, %v547
      %v549 = vpop.f32.mrf.mxu0
      %550 = vmatprep.mubr.f32.mxu0 0.0
      %551 = vmatmul.mubr.f32.gmra.mxu0 %v382
      %v552 = vpop.f32.mrf.mxu0
      %v553 = vadd.f32 0.0, %v552
      %v554 = vpop.f32.mrf.mxu0
      %555 = vmatprep.mubr.f32.mxu0 0.0
      %556 = vmatmul.mubr.f32.gmra.mxu0 %v384
      %v557 = vpop.f32.mrf.mxu0
      %v558 = vadd.f32 0.0, %v557
      %v559 = vpop.f32.mrf.mxu0
      %560 = vmatprep.mubr.f32.mxu0 0.0
      %561 = vmatmul.mubr.f32.gmra.mxu0 %v386
      %v562 = vpop.f32.mrf.mxu0
      %v563 = vadd.f32 0.0, %v562
      %v564 = vpop.f32.mrf.mxu0
      %565 = vmatprep.mubr.f32.mxu0 0.0
      %566 = vmatmul.mubr.f32.gmra.mxu0 %v388
      %v567 = vpop.f32.mrf.mxu0
      %v568 = vadd.f32 0.0, %v567
      %v569 = vpop.f32.mrf.mxu0
      %570 = vmatprep.mubr.f32.mxu0 0.0
      %571 = vmatmul.mubr.f32.gmra.mxu0 %v390
      %v572 = vpop.f32.mrf.mxu0
      %v573 = vadd.f32 0.0, %v572
      %v574 = vpop.f32.mrf.mxu0
      %575 = vmatprep.mubr.f32.mxu0 0.0
      %576 = vmatmul.mubr.f32.gmra.mxu0 %v392
      %v577 = vpop.f32.mrf.mxu0
      %v578 = vadd.f32 0.0, %v577
      %v579 = vpop.f32.mrf.mxu0
      %580 = vmatprep.mubr.f32.mxu0 0.0
      %581 = vmatmul.mubr.f32.gmra.mxu0 %v394
      %v582 = vpop.f32.mrf.mxu0
      %v583 = vadd.f32 0.0, %v582
      %v584 = vpop.f32.mrf.mxu0
      %585 = vmatprep.mubr.f32.mxu0 0.0
      %586 = vmatmul.mubr.f32.gmra.mxu0 %v396
      %v587 = vpop.f32.mrf.mxu0
      %v588 = vadd.f32 0.0, %v587
      %v589 = vpop.f32.mrf.mxu0
      %590 = vmatprep.mubr.f32.mxu0 0.0
      %591 = vmatmul.mubr.f32.gmra.mxu0 %v398
      %v592 = vpop.f32.mrf.mxu0
      %v593 = vadd.f32 0.0, %v592
      %v594 = vpop.f32.mrf.mxu0
      %595 = vmatprep.mubr.f32.mxu0 0.0
      %596 = vmatmul.mubr.f32.gmra.mxu0 %v400
      %v597 = vpop.f32.mrf.mxu0
      %v598 = vadd.f32 0.0, %v597
      %v599 = vpop.f32.mrf.mxu0
      %600 = vmatprep.mubr.f32.mxu0 0.0
      %601 = vmatmul.mubr.f32.gmra.mxu0 %v402
      %v602 = vpop.f32.mrf.mxu0
      %v603 = vadd.f32 0.0, %v602
      %v604 = vpop.f32.mrf.mxu0
      %605 = vmatprep.mubr.f32.mxu0 0.0
      %606 = vmatmul.mubr.f32.gmra.mxu0 %v404
      %v607 = vpop.f32.mrf.mxu0
      %v608 = vadd.f32 0.0, %v607
      %v609 = vpop.f32.mrf.mxu0
      %610 = vmatprep.mubr.f32.mxu0 0.0
      %611 = vmatmul.mubr.f32.gmra.mxu0 %v406
      %v612 = vpop.f32.mrf.mxu0
      %v613 = vadd.f32 0.0, %v612
      %v614 = vpop.f32.mrf.mxu0
      %615 = vmatprep.mubr.f32.mxu0 0.0
      %616 = vmatmul.mubr.f32.gmra.mxu0 %v408
      %v617 = vpop.f32.mrf.mxu0
      %v618 = vadd.f32 0.0, %v617
      %v619 = vpop.f32.mrf.mxu0
      %620 = vmatprep.mubr.f32.mxu0 0.0
      %621 = vmatmul.mubr.f32.gmra.mxu0 %v410
      %v622 = vpop.f32.mrf.mxu0
      %v623 = vadd.f32 0.0, %v622
      %v624 = vpop.f32.mrf.mxu0
      %625 = vmatprep.mubr.f32.mxu0 0.0
      %626 = vmatmul.mubr.f32.gmra.mxu0 %v412
      %v627 = vpop.f32.mrf.mxu0
      %v628 = vadd.f32 0.0, %v627
      %v629 = vpop.f32.mrf.mxu0
      %630 = vmatprep.mubr.f32.mxu0 0.0
      %631 = vmatmul.mubr.f32.gmra.mxu0 %v414
      %v632 = vpop.f32.mrf.mxu0
      %v633 = vadd.f32 0.0, %v632
      %v634 = vpop.f32.mrf.mxu0
      %635 = vmatprep.mubr.f32.mxu0 0.0
      %636 = vmatmul.mubr.f32.gmra.mxu0 %v416
      %v637 = vpop.f32.mrf.mxu0
      %v638 = vadd.f32 0.0, %v637
      %v639 = vpop.f32.mrf.mxu0
      %640 = vmatprep.mubr.f32.mxu0 0.0
      %641 = vmatmul.mubr.f32.gmra.mxu0 %v418
      %v642 = vpop.f32.mrf.mxu0
      %v643 = vadd.f32 0.0, %v642
      %v644 = vpop.f32.mrf.mxu0
      %645 = vmatprep.mubr.f32.mxu0 0.0
      %646 = vmatmul.mubr.f32.gmra.mxu0 %v420
      %v647 = vpop.f32.mrf.mxu0
      %v648 = vadd.f32 0.0, %v647
      %v649 = vpop.f32.mrf.mxu0
      %650 = vdwg.mxu0
      %v651 = vsel %vm357, %v171, 0
      %v653 = vsel %vm357, %v172, 0
      %v655 = vsel %vm357, %v174, 0
      %v657 = vsel %vm357, %v175, 0
      %v659 = vsel %vm357, %v177, 0
      %v661 = vsel %vm357, %v178, 0
      %v663 = vsel %vm357, %v180, 0
      %v665 = vsel %vm357, %v181, 0
      %v667 = vsel %vm357, %v183, 0
      %v669 = vsel %vm357, %v184, 0
      %v671 = vsel %vm357, %v186, 0
      %v673 = vsel %vm357, %v187, 0
      %v675 = vsel %vm357, %v189, 0
      %v677 = vsel %vm357, %v190, 0
      %v679 = vsel %vm357, %v192, 0
      %v681 = vsel %vm357, %v193, 0
      %v683 = vsel %vm357, %v195, 0
      %v685 = vsel %vm357, %v196, 0
      %v687 = vsel %vm357, %v198, 0
      %v689 = vsel %vm357, %v199, 0
      %v691 = vsel %vm357, %v201, 0
      %v693 = vsel %vm357, %v202, 0
      %v695 = vsel %vm357, %v204, 0
      %v697 = vsel %vm357, %v205, 0
      %v699 = vsel %vm357, %v207, 0
      %v701 = vsel %vm357, %v208, 0
      %v703 = vsel %vm357, %v210, 0
      %v705 = vsel %vm357, %v211, 0
      %v707 = vsel %vm357, %v213, 0
      %v709 = vsel %vm357, %v214, 0
      %v711 = vsel %vm357, %v216, 0
      %v713 = vsel %vm357, %v217, 0
      %v716 = vsel %vm422, %v225, 0
      %718 = vmatprep.subr.mxu0 0.0
      %719 = vmatpush1.msra.mxu0 0.0
      %720 = vmatprep.subr.mxu0 0.0
      %721 = vmatpush1.msra.mxu0 0.0
      %722 = vmatprep.subr.mxu0 0.0
      %723 = vmatpush1.msra.mxu0 0.0
      %724 = vmatprep.subr.mxu0 0.0
      %725 = vmatpush1.msra.mxu0 0.0
      %726 = vmatprep.subr.mxu0 0.0
      %727 = vmatpush1.msra.mxu0 0.0
      %728 = vmatprep.subr.mxu0 0.0
      %729 = vmatpush1.msra.mxu0 0.0
      %730 = vmatprep.subr.mxu0 0.0
      %731 = vmatpush1.msra.mxu0 0.0
      %732 = vmatprep.subr.mxu0 0.0
      %733 = vmatpush1.msra.mxu0 0.0
      %734 = vmatprep.subr.mxu0 0.0
      %735 = vmatpush1.msra.mxu0 0.0
      %736 = vmatprep.subr.mxu0 0.0
      %737 = vmatpush1.msra.mxu0 0.0
      %738 = vmatprep.subr.mxu0 0.0
      %739 = vmatpush1.msra.mxu0 0.0
      %740 = vmatprep.subr.mxu0 0.0
      %741 = vmatpush1.msra.mxu0 0.0
      %742 = vmatprep.subr.mxu0 0.0
      %743 = vmatpush1.msra.mxu0 0.0
      %744 = vmatprep.subr.mxu0 0.0
      %745 = vmatpush1.msra.mxu0 0.0
      %746 = vmatprep.subr.mxu0 0.0
      %747 = vmatpush1.msra.mxu0 0.0
      %748 = vmatprep.subr.mxu0 0.0
      %749 = vmatpush1.msra.mxu0 %v716
      %750 = vmatprep.subr.mxu0 0.0
      %751 = vmatpush2.msra.mxu0 0.0
      %752 = vmatprep.subr.mxu0 0.0
      %753 = vmatpush2.msra.mxu0 0.0
      %754 = vmatprep.subr.mxu0 0.0
      %755 = vmatpush2.msra.mxu0 0.0
      %756 = vmatprep.subr.mxu0 0.0
      %757 = vmatpush2.msra.mxu0 0.0
      %758 = vmatprep.subr.mxu0 0.0
      %759 = vmatpush2.msra.mxu0 0.0
      %760 = vmatprep.subr.mxu0 0.0
      %761 = vmatpush2.msra.mxu0 0.0
      %762 = vmatprep.subr.mxu0 0.0
      %763 = vmatpush2.msra.mxu0 0.0
      %764 = vmatprep.subr.mxu0 0.0
      %765 = vmatpush2.msra.mxu0 0.0
      %766 = vmatprep.subr.mxu0 0.0
      %767 = vmatpush2.msra.mxu0 0.0
      %768 = vmatprep.subr.mxu0 0.0
      %769 = vmatpush2.msra.mxu0 0.0
      %770 = vmatprep.subr.mxu0 0.0
      %771 = vmatpush2.msra.mxu0 0.0
      %772 = vmatprep.subr.mxu0 0.0
      %773 = vmatpush2.msra.mxu0 0.0
      %774 = vmatprep.subr.mxu0 0.0
      %775 = vmatpush2.msra.mxu0 0.0
      %776 = vmatprep.subr.mxu0 0.0
      %777 = vmatpush2.msra.mxu0 0.0
      %778 = vmatprep.subr.mxu0 0.0
      %779 = vmatpush2.msra.mxu0 0.0
      %780 = vmatprep.subr.mxu0 0.0
      %781 = vmatpush2.msra.mxu0 0.0
      %782 = vmatprep.mubr.f32.mxu0 0.0
      %783 = vmatmul.mubr.f32.gmra.mxu0 %v651
      %v784 = vpop.f32.mrf.mxu0
      %v785 = vadd.f32 %v493, %v784
      %v786 = vpop.f32.mrf.mxu0
      %787 = vmatprep.mubr.f32.mxu0 0.0
      %788 = vmatmul.mubr.f32.gmra.mxu0 %v653
      %v789 = vpop.f32.mrf.mxu0
      %v790 = vadd.f32 %v498, %v789
      %v791 = vpop.f32.mrf.mxu0
      %792 = vmatprep.mubr.f32.mxu0 0.0
      %793 = vmatmul.mubr.f32.gmra.mxu0 %v655
      %v794 = vpop.f32.mrf.mxu0
      %v795 = vadd.f32 %v503, %v794
      %v796 = vpop.f32.mrf.mxu0
      %797 = vmatprep.mubr.f32.mxu0 0.0
      %798 = vmatmul.mubr.f32.gmra.mxu0 %v657
      %v799 = vpop.f32.mrf.mxu0
      %v800 = vadd.f32 %v508, %v799
      %v801 = vpop.f32.mrf.mxu0
      %802 = vmatprep.mubr.f32.mxu0 0.0
      %803 = vmatmul.mubr.f32.gmra.mxu0 %v659
      %v804 = vpop.f32.mrf.mxu0
      %v805 = vadd.f32 %v513, %v804
      %v806 = vpop.f32.mrf.mxu0
      %807 = vmatprep.mubr.f32.mxu0 0.0
      %808 = vmatmul.mubr.f32.gmra.mxu0 %v661
      %v809 = vpop.f32.mrf.mxu0
      %v810 = vadd.f32 %v518, %v809
      %v811 = vpop.f32.mrf.mxu0
      %812 = vmatprep.mubr.f32.mxu0 0.0
      %813 = vmatmul.mubr.f32.gmra.mxu0 %v663
      %v814 = vpop.f32.mrf.mxu0
      %v815 = vadd.f32 %v523, %v814
      %v816 = vpop.f32.mrf.mxu0
      %817 = vmatprep.mubr.f32.mxu0 0.0
      %818 = vmatmul.mubr.f32.gmra.mxu0 %v665
      %v819 = vpop.f32.mrf.mxu0
      %v820 = vadd.f32 %v528, %v819
      %v821 = vpop.f32.mrf.mxu0
      %822 = vmatprep.mubr.f32.mxu0 0.0
      %823 = vmatmul.mubr.f32.gmra.mxu0 %v667
      %v824 = vpop.f32.mrf.mxu0
      %v825 = vadd.f32 %v533, %v824
      %v826 = vpop.f32.mrf.mxu0
      %827 = vmatprep.mubr.f32.mxu0 0.0
      %828 = vmatmul.mubr.f32.gmra.mxu0 %v669
      %v829 = vpop.f32.mrf.mxu0
      %v830 = vadd.f32 %v538, %v829
      %v831 = vpop.f32.mrf.mxu0
      %832 = vmatprep.mubr.f32.mxu0 0.0
      %833 = vmatmul.mubr.f32.gmra.mxu0 %v671
      %v834 = vpop.f32.mrf.mxu0
      %v835 = vadd.f32 %v543, %v834
      %v836 = vpop.f32.mrf.mxu0
      %837 = vmatprep.mubr.f32.mxu0 0.0
      %838 = vmatmul.mubr.f32.gmra.mxu0 %v673
      %v839 = vpop.f32.mrf.mxu0
      %v840 = vadd.f32 %v548, %v839
      %v841 = vpop.f32.mrf.mxu0
      %842 = vmatprep.mubr.f32.mxu0 0.0
      %843 = vmatmul.mubr.f32.gmra.mxu0 %v675
      %v844 = vpop.f32.mrf.mxu0
      %v845 = vadd.f32 %v553, %v844
      %v846 = vpop.f32.mrf.mxu0
      %847 = vmatprep.mubr.f32.mxu0 0.0
      %848 = vmatmul.mubr.f32.gmra.mxu0 %v677
      %v849 = vpop.f32.mrf.mxu0
      %v850 = vadd.f32 %v558, %v849
      %v851 = vpop.f32.mrf.mxu0
      %852 = vmatprep.mubr.f32.mxu0 0.0
      %853 = vmatmul.mubr.f32.gmra.mxu0 %v679
      %v854 = vpop.f32.mrf.mxu0
      %v855 = vadd.f32 %v563, %v854
      %v856 = vpop.f32.mrf.mxu0
      %857 = vmatprep.mubr.f32.mxu0 0.0
      %858 = vmatmul.mubr.f32.gmra.mxu0 %v681
      %v859 = vpop.f32.mrf.mxu0
      %v860 = vadd.f32 %v568, %v859
      %v861 = vpop.f32.mrf.mxu0
      %862 = vmatprep.mubr.f32.mxu0 0.0
      %863 = vmatmul.mubr.f32.gmra.mxu0 %v683
      %v864 = vpop.f32.mrf.mxu0
      %v865 = vadd.f32 %v573, %v864
      %v866 = vpop.f32.mrf.mxu0
      %867 = vmatprep.mubr.f32.mxu0 0.0
      %868 = vmatmul.mubr.f32.gmra.mxu0 %v685
      %v869 = vpop.f32.mrf.mxu0
      %v870 = vadd.f32 %v578, %v869
      %v871 = vpop.f32.mrf.mxu0
      %872 = vmatprep.mubr.f32.mxu0 0.0
      %873 = vmatmul.mubr.f32.gmra.mxu0 %v687
      %v874 = vpop.f32.mrf.mxu0
      %v875 = vadd.f32 %v583, %v874
      %v876 = vpop.f32.mrf.mxu0
      %877 = vmatprep.mubr.f32.mxu0 0.0
      %878 = vmatmul.mubr.f32.gmra.mxu0 %v689
      %v879 = vpop.f32.mrf.mxu0
      %v880 = vadd.f32 %v588, %v879
      %v881 = vpop.f32.mrf.mxu0
      %882 = vmatprep.mubr.f32.mxu0 0.0
      %883 = vmatmul.mubr.f32.gmra.mxu0 %v691
      %v884 = vpop.f32.mrf.mxu0
      %v885 = vadd.f32 %v593, %v884
      %v886 = vpop.f32.mrf.mxu0
      %887 = vmatprep.mubr.f32.mxu0 0.0
      %888 = vmatmul.mubr.f32.gmra.mxu0 %v693
      %v889 = vpop.f32.mrf.mxu0
      %v890 = vadd.f32 %v598, %v889
      %v891 = vpop.f32.mrf.mxu0
      %892 = vmatprep.mubr.f32.mxu0 0.0
      %893 = vmatmul.mubr.f32.gmra.mxu0 %v695
      %v894 = vpop.f32.mrf.mxu0
      %v895 = vadd.f32 %v603, %v894
      %v896 = vpop.f32.mrf.mxu0
      %897 = vmatprep.mubr.f32.mxu0 0.0
      %898 = vmatmul.mubr.f32.gmra.mxu0 %v697
      %v899 = vpop.f32.mrf.mxu0
      %v900 = vadd.f32 %v608, %v899
      %v901 = vpop.f32.mrf.mxu0
      %902 = vmatprep.mubr.f32.mxu0 0.0
      %903 = vmatmul.mubr.f32.gmra.mxu0 %v699
      %v904 = vpop.f32.mrf.mxu0
      %v905 = vadd.f32 %v613, %v904
      %v906 = vpop.f32.mrf.mxu0
      %907 = vmatprep.mubr.f32.mxu0 0.0
      %908 = vmatmul.mubr.f32.gmra.mxu0 %v701
      %v909 = vpop.f32.mrf.mxu0
      %v910 = vadd.f32 %v618, %v909
      %v911 = vpop.f32.mrf.mxu0
      %912 = vmatprep.mubr.f32.mxu0 0.0
      %913 = vmatmul.mubr.f32.gmra.mxu0 %v703
      %v914 = vpop.f32.mrf.mxu0
      %v915 = vadd.f32 %v623, %v914
      %v916 = vpop.f32.mrf.mxu0
      %917 = vmatprep.mubr.f32.mxu0 0.0
      %918 = vmatmul.mubr.f32.gmra.mxu0 %v705
      %v919 = vpop.f32.mrf.mxu0
      %v920 = vadd.f32 %v628, %v919
      %v921 = vpop.f32.mrf.mxu0
      %922 = vmatprep.mubr.f32.mxu0 0.0
      %923 = vmatmul.mubr.f32.gmra.mxu0 %v707
      %v924 = vpop.f32.mrf.mxu0
      %v925 = vadd.f32 %v633, %v924
      %v926 = vpop.f32.mrf.mxu0
      %927 = vmatprep.mubr.f32.mxu0 0.0
      %928 = vmatmul.mubr.f32.gmra.mxu0 %v709
      %v929 = vpop.f32.mrf.mxu0
      %v930 = vadd.f32 %v638, %v929
      %v931 = vpop.f32.mrf.mxu0
      %932 = vmatprep.mubr.f32.mxu0 0.0
      %933 = vmatmul.mubr.f32.gmra.mxu0 %v711
      %v934 = vpop.f32.mrf.mxu0
      %v935 = vadd.f32 %v643, %v934
      %v936 = vpop.f32.mrf.mxu0
      %937 = vmatprep.mubr.f32.mxu0 0.0
      %938 = vmatmul.mubr.f32.gmra.mxu0 %v713
      %v939 = vpop.f32.mrf.mxu0
      %v940 = vadd.f32 %v648, %v939
      %v941 = vpop.f32.mrf.mxu0
      %942 = vdwg.mxu0
      %vm943 = vcmask 1045504
      %v944 = vrot.slane %v171, 2
      %v945 = vrot.slane %v172, 2
      %v946 = vsel %vm943, %v944, %v945
      %v947 = vrot.slane %v173, 2
      %v948 = vsel %vm943, %v945, %v947
      %v949 = vrot.slane %v174, 2
      %v950 = vrot.slane %v175, 2
      %v951 = vsel %vm943, %v949, %v950
      %v952 = vrot.slane %v176, 2
      %v953 = vsel %vm943, %v950, %v952
      %v954 = vrot.slane %v177, 2
      %v955 = vrot.slane %v178, 2
      %v956 = vsel %vm943, %v954, %v955
      %v957 = vrot.slane %v179, 2
      %v958 = vsel %vm943, %v955, %v957
      %v959 = vrot.slane %v180, 2
      %v960 = vrot.slane %v181, 2
      %v961 = vsel %vm943, %v959, %v960
      %v962 = vrot.slane %v182, 2
      %v963 = vsel %vm943, %v960, %v962
      %v964 = vrot.slane %v183, 2
      %v965 = vrot.slane %v184, 2
      %v966 = vsel %vm943, %v964, %v965
      %v967 = vrot.slane %v185, 2
      %v968 = vsel %vm943, %v965, %v967
      %v969 = vrot.slane %v186, 2
      %v970 = vrot.slane %v187, 2
      %v971 = vsel %vm943, %v969, %v970
      %v972 = vrot.slane %v188, 2
      %v973 = vsel %vm943, %v970, %v972
      %v974 = vrot.slane %v189, 2
      %v975 = vrot.slane %v190, 2
      %v976 = vsel %vm943, %v974, %v975
      %v977 = vrot.slane %v191, 2
      %v978 = vsel %vm943, %v975, %v977
      %v979 = vrot.slane %v192, 2
      %v980 = vrot.slane %v193, 2
      %v981 = vsel %vm943, %v979, %v980
      %v982 = vrot.slane %v194, 2
      %v983 = vsel %vm943, %v980, %v982
      %v984 = vrot.slane %v195, 2
      %v985 = vrot.slane %v196, 2
      %v986 = vsel %vm943, %v984, %v985
      %v987 = vrot.slane %v197, 2
      %v988 = vsel %vm943, %v985, %v987
      %v989 = vrot.slane %v198, 2
      %v990 = vrot.slane %v199, 2
      %v991 = vsel %vm943, %v989, %v990
      %v992 = vrot.slane %v200, 2
      %v993 = vsel %vm943, %v990, %v992
      %v994 = vrot.slane %v201, 2
      %v995 = vrot.slane %v202, 2
      %v996 = vsel %vm943, %v994, %v995
      %v997 = vrot.slane %v203, 2
      %v998 = vsel %vm943, %v995, %v997
      %v999 = vrot.slane %v204, 2
      %v1000 = vrot.slane %v205, 2
      %v1001 = vsel %vm943, %v999, %v1000
      %v1002 = vrot.slane %v206, 2
      %v1003 = vsel %vm943, %v1000, %v1002
      %v1004 = vrot.slane %v207, 2
      %v1005 = vrot.slane %v208, 2
      %v1006 = vsel %vm943, %v1004, %v1005
      %v1007 = vrot.slane %v209, 2
      %v1008 = vsel %vm943, %v1005, %v1007
      %v1009 = vrot.slane %v210, 2
      %v1010 = vrot.slane %v211, 2
      %v1011 = vsel %vm943, %v1009, %v1010
      %v1012 = vrot.slane %v212, 2
      %v1013 = vsel %vm943, %v1010, %v1012
      %v1014 = vrot.slane %v213, 2
      %v1015 = vrot.slane %v214, 2
      %v1016 = vsel %vm943, %v1014, %v1015
      %v1017 = vrot.slane %v215, 2
      %v1018 = vsel %vm943, %v1015, %v1017
      %v1019 = vrot.slane %v216, 2
      %v1020 = vrot.slane %v217, 2
      %v1021 = vsel %vm943, %v1019, %v1020
      %v1022 = vrot.slane %v218, 2
      %v1023 = vsel %vm943, %v1020, %v1022
      %s1024 = scalar_lea.vmem %s1, 8
      %v1025 = vld [vmem:[%s1024] sm:$0x7]
      %v1026 = vsel %vm357, %v946, 0
      %v1028 = vsel %vm357, %v948, 0
      %v1030 = vsel %vm357, %v951, 0
      %v1032 = vsel %vm357, %v953, 0
      %v1034 = vsel %vm357, %v956, 0
      %v1036 = vsel %vm357, %v958, 0
      %v1038 = vsel %vm357, %v961, 0
      %v1040 = vsel %vm357, %v963, 0
      %v1042 = vsel %vm357, %v966, 0
      %v1044 = vsel %vm357, %v968, 0
      %v1046 = vsel %vm357, %v971, 0
      %v1048 = vsel %vm357, %v973, 0
      %v1050 = vsel %vm357, %v976, 0
      %v1052 = vsel %vm357, %v978, 0
      %v1054 = vsel %vm357, %v981, 0
      %v1056 = vsel %vm357, %v983, 0
      %v1058 = vsel %vm357, %v986, 0
      %v1060 = vsel %vm357, %v988, 0
      %v1062 = vsel %vm357, %v991, 0
      %v1064 = vsel %vm357, %v993, 0
      %v1066 = vsel %vm357, %v996, 0
      %v1068 = vsel %vm357, %v998, 0
      %v1070 = vsel %vm357, %v1001, 0
      %v1072 = vsel %vm357, %v1003, 0
      %v1074 = vsel %vm357, %v1006, 0
      %v1076 = vsel %vm357, %v1008, 0
      %v1078 = vsel %vm357, %v1011, 0
      %v1080 = vsel %vm357, %v1013, 0
      %v1082 = vsel %vm357, %v1016, 0
      %v1084 = vsel %vm357, %v1018, 0
      %v1086 = vsel %vm357, %v1021, 0
      %v1088 = vsel %vm357, %v1023, 0
      %v1091 = vsel %vm422, %v1025, 0
      %1093 = vmatprep.subr.mxu0 0.0
      %1094 = vmatpush1.msra.mxu0 0.0
      %1095 = vmatprep.subr.mxu0 0.0
      %1096 = vmatpush1.msra.mxu0 0.0
      %1097 = vmatprep.subr.mxu0 0.0
      %1098 = vmatpush1.msra.mxu0 0.0
      %1099 = vmatprep.subr.mxu0 0.0
      %1100 = vmatpush1.msra.mxu0 0.0
      %1101 = vmatprep.subr.mxu0 0.0
      %1102 = vmatpush1.msra.mxu0 0.0
      %1103 = vmatprep.subr.mxu0 0.0
      %1104 = vmatpush1.msra.mxu0 0.0
      %1105 = vmatprep.subr.mxu0 0.0
      %1106 = vmatpush1.msra.mxu0 0.0
      %1107 = vmatprep.subr.mxu0 0.0
      %1108 = vmatpush1.msra.mxu0 0.0
      %1109 = vmatprep.subr.mxu0 0.0
      %1110 = vmatpush1.msra.mxu0 0.0
      %1111 = vmatprep.subr.mxu0 0.0
      %1112 = vmatpush1.msra.mxu0 0.0
      %1113 = vmatprep.subr.mxu0 0.0
      %1114 = vmatpush1.msra.mxu0 0.0
      %1115 = vmatprep.subr.mxu0 0.0
      %1116 = vmatpush1.msra.mxu0 0.0
      %1117 = vmatprep.subr.mxu0 0.0
      %1118 = vmatpush1.msra.mxu0 0.0
      %1119 = vmatprep.subr.mxu0 0.0
      %1120 = vmatpush1.msra.mxu0 0.0
      %1121 = vmatprep.subr.mxu0 0.0
      %1122 = vmatpush1.msra.mxu0 0.0
      %1123 = vmatprep.subr.mxu0 0.0
      %1124 = vmatpush1.msra.mxu0 %v1091
      %1125 = vmatprep.subr.mxu0 0.0
      %1126 = vmatpush2.msra.mxu0 0.0
      %1127 = vmatprep.subr.mxu0 0.0
      %1128 = vmatpush2.msra.mxu0 0.0
      %1129 = vmatprep.subr.mxu0 0.0
      %1130 = vmatpush2.msra.mxu0 0.0
      %1131 = vmatprep.subr.mxu0 0.0
      %1132 = vmatpush2.msra.mxu0 0.0
      %1133 = vmatprep.subr.mxu0 0.0
      %1134 = vmatpush2.msra.mxu0 0.0
      %1135 = vmatprep.subr.mxu0 0.0
      %1136 = vmatpush2.msra.mxu0 0.0
      %1137 = vmatprep.subr.mxu0 0.0
      %1138 = vmatpush2.msra.mxu0 0.0
      %1139 = vmatprep.subr.mxu0 0.0
      %1140 = vmatpush2.msra.mxu0 0.0
      %1141 = vmatprep.subr.mxu0 0.0
      %1142 = vmatpush2.msra.mxu0 0.0
      %1143 = vmatprep.subr.mxu0 0.0
      %1144 = vmatpush2.msra.mxu0 0.0
      %1145 = vmatprep.subr.mxu0 0.0
      %1146 = vmatpush2.msra.mxu0 0.0
      %1147 = vmatprep.subr.mxu0 0.0
      %1148 = vmatpush2.msra.mxu0 0.0
      %1149 = vmatprep.subr.mxu0 0.0
      %1150 = vmatpush2.msra.mxu0 0.0
      %1151 = vmatprep.subr.mxu0 0.0
      %1152 = vmatpush2.msra.mxu0 0.0
      %1153 = vmatprep.subr.mxu0 0.0
      %1154 = vmatpush2.msra.mxu0 0.0
      %1155 = vmatprep.subr.mxu0 0.0
      %1156 = vmatpush2.msra.mxu0 0.0
      %1157 = vmatprep.mubr.f32.mxu0 0.0
      %1158 = vmatmul.mubr.f32.gmra.mxu0 %v1026
      %v1159 = vpop.f32.mrf.mxu0
      %v1160 = vadd.f32 0.0, %v1159
      %v1161 = vpop.f32.mrf.mxu0
      %1162 = vmatprep.mubr.f32.mxu0 0.0
      %1163 = vmatmul.mubr.f32.gmra.mxu0 %v1028
      %v1164 = vpop.f32.mrf.mxu0
      %v1165 = vadd.f32 0.0, %v1164
      %v1166 = vpop.f32.mrf.mxu0
      %1167 = vmatprep.mubr.f32.mxu0 0.0
      %1168 = vmatmul.mubr.f32.gmra.mxu0 %v1030
      %v1169 = vpop.f32.mrf.mxu0
      %v1170 = vadd.f32 0.0, %v1169
      %v1171 = vpop.f32.mrf.mxu0
      %1172 = vmatprep.mubr.f32.mxu0 0.0
      %1173 = vmatmul.mubr.f32.gmra.mxu0 %v1032
      %v1174 = vpop.f32.mrf.mxu0
      %v1175 = vadd.f32 0.0, %v1174
      %v1176 = vpop.f32.mrf.mxu0
      %1177 = vmatprep.mubr.f32.mxu0 0.0
      %1178 = vmatmul.mubr.f32.gmra.mxu0 %v1034
      %v1179 = vpop.f32.mrf.mxu0
      %v1180 = vadd.f32 0.0, %v1179
      %v1181 = vpop.f32.mrf.mxu0
      %1182 = vmatprep.mubr.f32.mxu0 0.0
      %1183 = vmatmul.mubr.f32.gmra.mxu0 %v1036
      %v1184 = vpop.f32.mrf.mxu0
      %v1185 = vadd.f32 0.0, %v1184
      %v1186 = vpop.f32.mrf.mxu0
      %1187 = vmatprep.mubr.f32.mxu0 0.0
      %1188 = vmatmul.mubr.f32.gmra.mxu0 %v1038
      %v1189 = vpop.f32.mrf.mxu0
      %v1190 = vadd.f32 0.0, %v1189
      %v1191 = vpop.f32.mrf.mxu0
      %1192 = vmatprep.mubr.f32.mxu0 0.0
      %1193 = vmatmul.mubr.f32.gmra.mxu0 %v1040
      %v1194 = vpop.f32.mrf.mxu0
      %v1195 = vadd.f32 0.0, %v1194
      %v1196 = vpop.f32.mrf.mxu0
      %1197 = vmatprep.mubr.f32.mxu0 0.0
      %1198 = vmatmul.mubr.f32.gmra.mxu0 %v1042
      %v1199 = vpop.f32.mrf.mxu0
      %v1200 = vadd.f32 0.0, %v1199
      %v1201 = vpop.f32.mrf.mxu0
      %1202 = vmatprep.mubr.f32.mxu0 0.0
      %1203 = vmatmul.mubr.f32.gmra.mxu0 %v1044
      %v1204 = vpop.f32.mrf.mxu0
      %v1205 = vadd.f32 0.0, %v1204
      %v1206 = vpop.f32.mrf.mxu0
      %1207 = vmatprep.mubr.f32.mxu0 0.0
      %1208 = vmatmul.mubr.f32.gmra.mxu0 %v1046
      %v1209 = vpop.f32.mrf.mxu0
      %v1210 = vadd.f32 0.0, %v1209
      %v1211 = vpop.f32.mrf.mxu0
      %1212 = vmatprep.mubr.f32.mxu0 0.0
      %1213 = vmatmul.mubr.f32.gmra.mxu0 %v1048
      %v1214 = vpop.f32.mrf.mxu0
      %v1215 = vadd.f32 0.0, %v1214
      %v1216 = vpop.f32.mrf.mxu0
      %1217 = vmatprep.mubr.f32.mxu0 0.0
      %1218 = vmatmul.mubr.f32.gmra.mxu0 %v1050
      %v1219 = vpop.f32.mrf.mxu0
      %v1220 = vadd.f32 0.0, %v1219
      %v1221 = vpop.f32.mrf.mxu0
      %1222 = vmatprep.mubr.f32.mxu0 0.0
      %1223 = vmatmul.mubr.f32.gmra.mxu0 %v1052
      %v1224 = vpop.f32.mrf.mxu0
      %v1225 = vadd.f32 0.0, %v1224
      %v1226 = vpop.f32.mrf.mxu0
      %1227 = vmatprep.mubr.f32.mxu0 0.0
      %1228 = vmatmul.mubr.f32.gmra.mxu0 %v1054
      %v1229 = vpop.f32.mrf.mxu0
      %v1230 = vadd.f32 0.0, %v1229
      %v1231 = vpop.f32.mrf.mxu0
      %1232 = vmatprep.mubr.f32.mxu0 0.0
      %1233 = vmatmul.mubr.f32.gmra.mxu0 %v1056
      %v1234 = vpop.f32.mrf.mxu0
      %v1235 = vadd.f32 0.0, %v1234
      %v1236 = vpop.f32.mrf.mxu0
      %1237 = vmatprep.mubr.f32.mxu0 0.0
      %1238 = vmatmul.mubr.f32.gmra.mxu0 %v1058
      %v1239 = vpop.f32.mrf.mxu0
      %v1240 = vadd.f32 0.0, %v1239
      %v1241 = vpop.f32.mrf.mxu0
      %1242 = vmatprep.mubr.f32.mxu0 0.0
      %1243 = vmatmul.mubr.f32.gmra.mxu0 %v1060
      %v1244 = vpop.f32.mrf.mxu0
      %v1245 = vadd.f32 0.0, %v1244
      %v1246 = vpop.f32.mrf.mxu0
      %1247 = vmatprep.mubr.f32.mxu0 0.0
      %1248 = vmatmul.mubr.f32.gmra.mxu0 %v1062
      %v1249 = vpop.f32.mrf.mxu0
      %v1250 = vadd.f32 0.0, %v1249
      %v1251 = vpop.f32.mrf.mxu0
      %1252 = vmatprep.mubr.f32.mxu0 0.0
      %1253 = vmatmul.mubr.f32.gmra.mxu0 %v1064
      %v1254 = vpop.f32.mrf.mxu0
      %v1255 = vadd.f32 0.0, %v1254
      %v1256 = vpop.f32.mrf.mxu0
      %1257 = vmatprep.mubr.f32.mxu0 0.0
      %1258 = vmatmul.mubr.f32.gmra.mxu0 %v1066
      %v1259 = vpop.f32.mrf.mxu0
      %v1260 = vadd.f32 0.0, %v1259
      %v1261 = vpop.f32.mrf.mxu0
      %1262 = vmatprep.mubr.f32.mxu0 0.0
      %1263 = vmatmul.mubr.f32.gmra.mxu0 %v1068
      %v1264 = vpop.f32.mrf.mxu0
      %v1265 = vadd.f32 0.0, %v1264
      %v1266 = vpop.f32.mrf.mxu0
      %1267 = vmatprep.mubr.f32.mxu0 0.0
      %1268 = vmatmul.mubr.f32.gmra.mxu0 %v1070
      %v1269 = vpop.f32.mrf.mxu0
      %v1270 = vadd.f32 0.0, %v1269
      %v1271 = vpop.f32.mrf.mxu0
      %1272 = vmatprep.mubr.f32.mxu0 0.0
      %1273 = vmatmul.mubr.f32.gmra.mxu0 %v1072
      %v1274 = vpop.f32.mrf.mxu0
      %v1275 = vadd.f32 0.0, %v1274
      %v1276 = vpop.f32.mrf.mxu0
      %1277 = vmatprep.mubr.f32.mxu0 0.0
      %1278 = vmatmul.mubr.f32.gmra.mxu0 %v1074
      %v1279 = vpop.f32.mrf.mxu0
      %v1280 = vadd.f32 0.0, %v1279
      %v1281 = vpop.f32.mrf.mxu0
      %1282 = vmatprep.mubr.f32.mxu0 0.0
      %1283 = vmatmul.mubr.f32.gmra.mxu0 %v1076
      %v1284 = vpop.f32.mrf.mxu0
      %v1285 = vadd.f32 0.0, %v1284
      %v1286 = vpop.f32.mrf.mxu0
      %1287 = vmatprep.mubr.f32.mxu0 0.0
      %1288 = vmatmul.mubr.f32.gmra.mxu0 %v1078
      %v1289 = vpop.f32.mrf.mxu0
      %v1290 = vadd.f32 0.0, %v1289
      %v1291 = vpop.f32.mrf.mxu0
      %1292 = vmatprep.mubr.f32.mxu0 0.0
      %1293 = vmatmul.mubr.f32.gmra.mxu0 %v1080
      %v1294 = vpop.f32.mrf.mxu0
      %v1295 = vadd.f32 0.0, %v1294
      %v1296 = vpop.f32.mrf.mxu0
      %1297 = vmatprep.mubr.f32.mxu0 0.0
      %1298 = vmatmul.mubr.f32.gmra.mxu0 %v1082
      %v1299 = vpop.f32.mrf.mxu0
      %v1300 = vadd.f32 0.0, %v1299
      %v1301 = vpop.f32.mrf.mxu0
      %1302 = vmatprep.mubr.f32.mxu0 0.0
      %1303 = vmatmul.mubr.f32.gmra.mxu0 %v1084
      %v1304 = vpop.f32.mrf.mxu0
      %v1305 = vadd.f32 0.0, %v1304
      %v1306 = vpop.f32.mrf.mxu0
      %1307 = vmatprep.mubr.f32.mxu0 0.0
      %1308 = vmatmul.mubr.f32.gmra.mxu0 %v1086
      %v1309 = vpop.f32.mrf.mxu0
      %v1310 = vadd.f32 0.0, %v1309
      %v1311 = vpop.f32.mrf.mxu0
      %1312 = vmatprep.mubr.f32.mxu0 0.0
      %1313 = vmatmul.mubr.f32.gmra.mxu0 %v1088
      %v1314 = vpop.f32.mrf.mxu0
      %v1315 = vadd.f32 0.0, %v1314
      %v1316 = vpop.f32.mrf.mxu0
      %1317 = vdwg.mxu0
      %v1318 = vadd.f32 %v785, %v1160
      %v1319 = vadd.f32 %v790, %v1165
      %v1320 = vadd.f32 %v795, %v1170
      %v1321 = vadd.f32 %v800, %v1175
      %v1322 = vadd.f32 %v805, %v1180
      %v1323 = vadd.f32 %v810, %v1185
      %v1324 = vadd.f32 %v815, %v1190
      %v1325 = vadd.f32 %v820, %v1195
      %v1326 = vadd.f32 %v825, %v1200
      %v1327 = vadd.f32 %v830, %v1205
      %v1328 = vadd.f32 %v835, %v1210
      %v1329 = vadd.f32 %v840, %v1215
      %v1330 = vadd.f32 %v845, %v1220
      %v1331 = vadd.f32 %v850, %v1225
      %v1332 = vadd.f32 %v855, %v1230
      %v1333 = vadd.f32 %v860, %v1235
      %v1334 = vadd.f32 %v865, %v1240
      %v1335 = vadd.f32 %v870, %v1245
      %v1336 = vadd.f32 %v875, %v1250
      %v1337 = vadd.f32 %v880, %v1255
      %v1338 = vadd.f32 %v885, %v1260
      %v1339 = vadd.f32 %v890, %v1265
      %v1340 = vadd.f32 %v895, %v1270
      %v1341 = vadd.f32 %v900, %v1275
      %v1342 = vadd.f32 %v905, %v1280
      %v1343 = vadd.f32 %v910, %v1285
      %v1344 = vadd.f32 %v915, %v1290
      %v1345 = vadd.f32 %v920, %v1295
      %v1346 = vadd.f32 %v925, %v1300
      %v1347 = vadd.f32 %v930, %v1305
      %v1348 = vadd.f32 %v935, %v1310
      %v1349 = vadd.f32 %v940, %v1315
      %s1350 = scalar_lea.vmem %s1, 12
      %v1351 = vld [vmem:[%s1350] sm:$0x7]
      %v1353 = vsel %vm357, %v219, 0
      %v1356 = vsel %vm357, %v220, 0
      %v1359 = vsel %vm422, %v1351, 0
      %1361 = vmatprep.subr.mxu0 0.0
      %1362 = vmatpush1.msra.mxu0 0.0
      %1363 = vmatprep.subr.mxu0 0.0
      %1364 = vmatpush1.msra.mxu0 0.0
      %1365 = vmatprep.subr.mxu0 0.0
      %1366 = vmatpush1.msra.mxu0 0.0
      %1367 = vmatprep.subr.mxu0 0.0
      %1368 = vmatpush1.msra.mxu0 0.0
      %1369 = vmatprep.subr.mxu0 0.0
      %1370 = vmatpush1.msra.mxu0 0.0
      %1371 = vmatprep.subr.mxu0 0.0
      %1372 = vmatpush1.msra.mxu0 0.0
      %1373 = vmatprep.subr.mxu0 0.0
      %1374 = vmatpush1.msra.mxu0 0.0
      %1375 = vmatprep.subr.mxu0 0.0
      %1376 = vmatpush1.msra.mxu0 0.0
      %1377 = vmatprep.subr.mxu0 0.0
      %1378 = vmatpush1.msra.mxu0 0.0
      %1379 = vmatprep.subr.mxu0 0.0
      %1380 = vmatpush1.msra.mxu0 0.0
      %1381 = vmatprep.subr.mxu0 0.0
      %1382 = vmatpush1.msra.mxu0 0.0
      %1383 = vmatprep.subr.mxu0 0.0
      %1384 = vmatpush1.msra.mxu0 0.0
      %1385 = vmatprep.subr.mxu0 0.0
      %1386 = vmatpush1.msra.mxu0 0.0
      %1387 = vmatprep.subr.mxu0 0.0
      %1388 = vmatpush1.msra.mxu0 0.0
      %1389 = vmatprep.subr.mxu0 0.0
      %1390 = vmatpush1.msra.mxu0 0.0
      %1391 = vmatprep.subr.mxu0 0.0
      %1392 = vmatpush1.msra.mxu0 %v1359
      %1393 = vmatprep.subr.mxu0 0.0
      %1394 = vmatpush2.msra.mxu0 0.0
      %1395 = vmatprep.subr.mxu0 0.0
      %1396 = vmatpush2.msra.mxu0 0.0
      %1397 = vmatprep.subr.mxu0 0.0
      %1398 = vmatpush2.msra.mxu0 0.0
      %1399 = vmatprep.subr.mxu0 0.0
      %1400 = vmatpush2.msra.mxu0 0.0
      %1401 = vmatprep.subr.mxu0 0.0
      %1402 = vmatpush2.msra.mxu0 0.0
      %1403 = vmatprep.subr.mxu0 0.0
      %1404 = vmatpush2.msra.mxu0 0.0
      %1405 = vmatprep.subr.mxu0 0.0
      %1406 = vmatpush2.msra.mxu0 0.0
      %1407 = vmatprep.subr.mxu0 0.0
      %1408 = vmatpush2.msra.mxu0 0.0
      %1409 = vmatprep.subr.mxu0 0.0
      %1410 = vmatpush2.msra.mxu0 0.0
      %1411 = vmatprep.subr.mxu0 0.0
      %1412 = vmatpush2.msra.mxu0 0.0
      %1413 = vmatprep.subr.mxu0 0.0
      %1414 = vmatpush2.msra.mxu0 0.0
      %1415 = vmatprep.subr.mxu0 0.0
      %1416 = vmatpush2.msra.mxu0 0.0
      %1417 = vmatprep.subr.mxu0 0.0
      %1418 = vmatpush2.msra.mxu0 0.0
      %1419 = vmatprep.subr.mxu0 0.0
      %1420 = vmatpush2.msra.mxu0 0.0
      %1421 = vmatprep.subr.mxu0 0.0
      %1422 = vmatpush2.msra.mxu0 0.0
      %1423 = vmatprep.subr.mxu0 0.0
      %1424 = vmatpush2.msra.mxu0 0.0
      %1425 = vmatprep.mubr.f32.mxu0 0.0
      %1426 = vmatmul.mubr.f32.gmra.mxu0 %v655
      %v1427 = vpop.f32.mrf.mxu0
      %v1428 = vadd.f32 0.0, %v1427
      %v1429 = vpop.f32.mrf.mxu0
      %1430 = vmatprep.mubr.f32.mxu0 0.0
      %1431 = vmatmul.mubr.f32.gmra.mxu0 %v657
      %v1432 = vpop.f32.mrf.mxu0
      %v1433 = vadd.f32 0.0, %v1432
      %v1434 = vpop.f32.mrf.mxu0
      %1435 = vmatprep.mubr.f32.mxu0 0.0
      %1436 = vmatmul.mubr.f32.gmra.mxu0 %v659
      %v1437 = vpop.f32.mrf.mxu0
      %v1438 = vadd.f32 0.0, %v1437
      %v1439 = vpop.f32.mrf.mxu0
      %1440 = vmatprep.mubr.f32.mxu0 0.0
      %1441 = vmatmul.mubr.f32.gmra.mxu0 %v661
      %v1442 = vpop.f32.mrf.mxu0
      %v1443 = vadd.f32 0.0, %v1442
      %v1444 = vpop.f32.mrf.mxu0
      %1445 = vmatprep.mubr.f32.mxu0 0.0
      %1446 = vmatmul.mubr.f32.gmra.mxu0 %v663
      %v1447 = vpop.f32.mrf.mxu0
      %v1448 = vadd.f32 0.0, %v1447
      %v1449 = vpop.f32.mrf.mxu0
      %1450 = vmatprep.mubr.f32.mxu0 0.0
      %1451 = vmatmul.mubr.f32.gmra.mxu0 %v665
      %v1452 = vpop.f32.mrf.mxu0
      %v1453 = vadd.f32 0.0, %v1452
      %v1454 = vpop.f32.mrf.mxu0
      %1455 = vmatprep.mubr.f32.mxu0 0.0
      %1456 = vmatmul.mubr.f32.gmra.mxu0 %v667
      %v1457 = vpop.f32.mrf.mxu0
      %v1458 = vadd.f32 0.0, %v1457
      %v1459 = vpop.f32.mrf.mxu0
      %1460 = vmatprep.mubr.f32.mxu0 0.0
      %1461 = vmatmul.mubr.f32.gmra.mxu0 %v669
      %v1462 = vpop.f32.mrf.mxu0
      %v1463 = vadd.f32 0.0, %v1462
      %v1464 = vpop.f32.mrf.mxu0
      %1465 = vmatprep.mubr.f32.mxu0 0.0
      %1466 = vmatmul.mubr.f32.gmra.mxu0 %v671
      %v1467 = vpop.f32.mrf.mxu0
      %v1468 = vadd.f32 0.0, %v1467
      %v1469 = vpop.f32.mrf.mxu0
      %1470 = vmatprep.mubr.f32.mxu0 0.0
      %1471 = vmatmul.mubr.f32.gmra.mxu0 %v673
      %v1472 = vpop.f32.mrf.mxu0
      %v1473 = vadd.f32 0.0, %v1472
      %v1474 = vpop.f32.mrf.mxu0
      %1475 = vmatprep.mubr.f32.mxu0 0.0
      %1476 = vmatmul.mubr.f32.gmra.mxu0 %v675
      %v1477 = vpop.f32.mrf.mxu0
      %v1478 = vadd.f32 0.0, %v1477
      %v1479 = vpop.f32.mrf.mxu0
      %1480 = vmatprep.mubr.f32.mxu0 0.0
      %1481 = vmatmul.mubr.f32.gmra.mxu0 %v677
      %v1482 = vpop.f32.mrf.mxu0
      %v1483 = vadd.f32 0.0, %v1482
      %v1484 = vpop.f32.mrf.mxu0
      %1485 = vmatprep.mubr.f32.mxu0 0.0
      %1486 = vmatmul.mubr.f32.gmra.mxu0 %v679
      %v1487 = vpop.f32.mrf.mxu0
      %v1488 = vadd.f32 0.0, %v1487
      %v1489 = vpop.f32.mrf.mxu0
      %1490 = vmatprep.mubr.f32.mxu0 0.0
      %1491 = vmatmul.mubr.f32.gmra.mxu0 %v681
      %v1492 = vpop.f32.mrf.mxu0
      %v1493 = vadd.f32 0.0, %v1492
      %v1494 = vpop.f32.mrf.mxu0
      %1495 = vmatprep.mubr.f32.mxu0 0.0
      %1496 = vmatmul.mubr.f32.gmra.mxu0 %v683
      %v1497 = vpop.f32.mrf.mxu0
      %v1498 = vadd.f32 0.0, %v1497
      %v1499 = vpop.f32.mrf.mxu0
      %1500 = vmatprep.mubr.f32.mxu0 0.0
      %1501 = vmatmul.mubr.f32.gmra.mxu0 %v685
      %v1502 = vpop.f32.mrf.mxu0
      %v1503 = vadd.f32 0.0, %v1502
      %v1504 = vpop.f32.mrf.mxu0
      %1505 = vmatprep.mubr.f32.mxu0 0.0
      %1506 = vmatmul.mubr.f32.gmra.mxu0 %v687
      %v1507 = vpop.f32.mrf.mxu0
      %v1508 = vadd.f32 0.0, %v1507
      %v1509 = vpop.f32.mrf.mxu0
      %1510 = vmatprep.mubr.f32.mxu0 0.0
      %1511 = vmatmul.mubr.f32.gmra.mxu0 %v689
      %v1512 = vpop.f32.mrf.mxu0
      %v1513 = vadd.f32 0.0, %v1512
      %v1514 = vpop.f32.mrf.mxu0
      %1515 = vmatprep.mubr.f32.mxu0 0.0
      %1516 = vmatmul.mubr.f32.gmra.mxu0 %v691
      %v1517 = vpop.f32.mrf.mxu0
      %v1518 = vadd.f32 0.0, %v1517
      %v1519 = vpop.f32.mrf.mxu0
      %1520 = vmatprep.mubr.f32.mxu0 0.0
      %1521 = vmatmul.mubr.f32.gmra.mxu0 %v693
      %v1522 = vpop.f32.mrf.mxu0
      %v1523 = vadd.f32 0.0, %v1522
      %v1524 = vpop.f32.mrf.mxu0
      %1525 = vmatprep.mubr.f32.mxu0 0.0
      %1526 = vmatmul.mubr.f32.gmra.mxu0 %v695
      %v1527 = vpop.f32.mrf.mxu0
      %v1528 = vadd.f32 0.0, %v1527
      %v1529 = vpop.f32.mrf.mxu0
      %1530 = vmatprep.mubr.f32.mxu0 0.0
      %1531 = vmatmul.mubr.f32.gmra.mxu0 %v697
      %v1532 = vpop.f32.mrf.mxu0
      %v1533 = vadd.f32 0.0, %v1532
      %v1534 = vpop.f32.mrf.mxu0
      %1535 = vmatprep.mubr.f32.mxu0 0.0
      %1536 = vmatmul.mubr.f32.gmra.mxu0 %v699
      %v1537 = vpop.f32.mrf.mxu0
      %v1538 = vadd.f32 0.0, %v1537
      %v1539 = vpop.f32.mrf.mxu0
      %1540 = vmatprep.mubr.f32.mxu0 0.0
      %1541 = vmatmul.mubr.f32.gmra.mxu0 %v701
      %v1542 = vpop.f32.mrf.mxu0
      %v1543 = vadd.f32 0.0, %v1542
      %v1544 = vpop.f32.mrf.mxu0
      %1545 = vmatprep.mubr.f32.mxu0 0.0
      %1546 = vmatmul.mubr.f32.gmra.mxu0 %v703
      %v1547 = vpop.f32.mrf.mxu0
      %v1548 = vadd.f32 0.0, %v1547
      %v1549 = vpop.f32.mrf.mxu0
      %1550 = vmatprep.mubr.f32.mxu0 0.0
      %1551 = vmatmul.mubr.f32.gmra.mxu0 %v705
      %v1552 = vpop.f32.mrf.mxu0
      %v1553 = vadd.f32 0.0, %v1552
      %v1554 = vpop.f32.mrf.mxu0
      %1555 = vmatprep.mubr.f32.mxu0 0.0
      %1556 = vmatmul.mubr.f32.gmra.mxu0 %v707
      %v1557 = vpop.f32.mrf.mxu0
      %v1558 = vadd.f32 0.0, %v1557
      %v1559 = vpop.f32.mrf.mxu0
      %1560 = vmatprep.mubr.f32.mxu0 0.0
      %1561 = vmatmul.mubr.f32.gmra.mxu0 %v709
      %v1562 = vpop.f32.mrf.mxu0
      %v1563 = vadd.f32 0.0, %v1562
      %v1564 = vpop.f32.mrf.mxu0
      %1565 = vmatprep.mubr.f32.mxu0 0.0
      %1566 = vmatmul.mubr.f32.gmra.mxu0 %v711
      %v1567 = vpop.f32.mrf.mxu0
      %v1568 = vadd.f32 0.0, %v1567
      %v1569 = vpop.f32.mrf.mxu0
      %1570 = vmatprep.mubr.f32.mxu0 0.0
      %1571 = vmatmul.mubr.f32.gmra.mxu0 %v713
      %v1572 = vpop.f32.mrf.mxu0
      %v1573 = vadd.f32 0.0, %v1572
      %v1574 = vpop.f32.mrf.mxu0
      %1575 = vmatprep.mubr.f32.mxu0 0.0
      %1576 = vmatmul.mubr.f32.gmra.mxu0 %v1353
      %v1577 = vpop.f32.mrf.mxu0
      %v1578 = vadd.f32 0.0, %v1577
      %v1579 = vpop.f32.mrf.mxu0
      %1580 = vmatprep.mubr.f32.mxu0 0.0
      %1581 = vmatmul.mubr.f32.gmra.mxu0 %v1356
      %v1582 = vpop.f32.mrf.mxu0
      %v1583 = vadd.f32 0.0, %v1582
      %v1584 = vpop.f32.mrf.mxu0
      %1585 = vdwg.mxu0
      %v1586 = vadd.f32 %v1318, %v1428
      %v1587 = vadd.f32 %v1319, %v1433
      %v1588 = vadd.f32 %v1320, %v1438
      %v1589 = vadd.f32 %v1321, %v1443
      %v1590 = vadd.f32 %v1322, %v1448
      %v1591 = vadd.f32 %v1323, %v1453
      %v1592 = vadd.f32 %v1324, %v1458
      %v1593 = vadd.f32 %v1325, %v1463
      %v1594 = vadd.f32 %v1326, %v1468
      %v1595 = vadd.f32 %v1327, %v1473
      %v1596 = vadd.f32 %v1328, %v1478
      %v1597 = vadd.f32 %v1329, %v1483
      %v1598 = vadd.f32 %v1330, %v1488
      %v1599 = vadd.f32 %v1331, %v1493
      %v1600 = vadd.f32 %v1332, %v1498
      %v1601 = vadd.f32 %v1333, %v1503
      %v1602 = vadd.f32 %v1334, %v1508
      %v1603 = vadd.f32 %v1335, %v1513
      %v1604 = vadd.f32 %v1336, %v1518
      %v1605 = vadd.f32 %v1337, %v1523
      %v1606 = vadd.f32 %v1338, %v1528
      %v1607 = vadd.f32 %v1339, %v1533
      %v1608 = vadd.f32 %v1340, %v1538
      %v1609 = vadd.f32 %v1341, %v1543
      %v1610 = vadd.f32 %v1342, %v1548
      %v1611 = vadd.f32 %v1343, %v1553
      %v1612 = vadd.f32 %v1344, %v1558
      %v1613 = vadd.f32 %v1345, %v1563
      %v1614 = vadd.f32 %v1346, %v1568
      %v1615 = vadd.f32 %v1347, %v1573
      %v1616 = vadd.f32 %v1348, %v1578
      %v1617 = vadd.f32 %v1349, %v1583
      %v1619 = vrot.slane %v219, 1
      %v1620 = vrot.slane %v220, 1
      %v1621 = vsel %vm274, %v1619, %v1620
      %v1622 = vrot.slane %v221, 1
      %v1623 = vsel %vm274, %v1620, %v1622
      %s1624 = scalar_lea.vmem %s1, 16
      %v1625 = vld [vmem:[%s1624] sm:$0x7]
      %v1626 = vsel %vm357, %v1621, 0
      %v1628 = vsel %vm357, %v1623, 0
      %v1631 = vsel %vm422, %v1625, 0
      %1633 = vmatprep.subr.mxu0 0.0
      %1634 = vmatpush1.msra.mxu0 0.0
      %1635 = vmatprep.subr.mxu0 0.0
      %1636 = vmatpush1.msra.mxu0 0.0
      %1637 = vmatprep.subr.mxu0 0.0
      %1638 = vmatpush1.msra.mxu0 0.0
      %1639 = vmatprep.subr.mxu0 0.0
      %1640 = vmatpush1.msra.mxu0 0.0
      %1641 = vmatprep.subr.mxu0 0.0
      %1642 = vmatpush1.msra.mxu0 0.0
      %1643 = vmatprep.subr.mxu0 0.0
      %1644 = vmatpush1.msra.mxu0 0.0
      %1645 = vmatprep.subr.mxu0 0.0
      %1646 = vmatpush1.msra.mxu0 0.0
      %1647 = vmatprep.subr.mxu0 0.0
      %1648 = vmatpush1.msra.mxu0 0.0
      %1649 = vmatprep.subr.mxu0 0.0
      %1650 = vmatpush1.msra.mxu0 0.0
      %1651 = vmatprep.subr.mxu0 0.0
      %1652 = vmatpush1.msra.mxu0 0.0
      %1653 = vmatprep.subr.mxu0 0.0
      %1654 = vmatpush1.msra.mxu0 0.0
      %1655 = vmatprep.subr.mxu0 0.0
      %1656 = vmatpush1.msra.mxu0 0.0
      %1657 = vmatprep.subr.mxu0 0.0
      %1658 = vmatpush1.msra.mxu0 0.0
      %1659 = vmatprep.subr.mxu0 0.0
      %1660 = vmatpush1.msra.mxu0 0.0
      %1661 = vmatprep.subr.mxu0 0.0
      %1662 = vmatpush1.msra.mxu0 0.0
      %1663 = vmatprep.subr.mxu0 0.0
      %1664 = vmatpush1.msra.mxu0 %v1631
      %1665 = vmatprep.subr.mxu0 0.0
      %1666 = vmatpush2.msra.mxu0 0.0
      %1667 = vmatprep.subr.mxu0 0.0
      %1668 = vmatpush2.msra.mxu0 0.0
      %1669 = vmatprep.subr.mxu0 0.0
      %1670 = vmatpush2.msra.mxu0 0.0
      %1671 = vmatprep.subr.mxu0 0.0
      %1672 = vmatpush2.msra.mxu0 0.0
      %1673 = vmatprep.subr.mxu0 0.0
      %1674 = vmatpush2.msra.mxu0 0.0
      %1675 = vmatprep.subr.mxu0 0.0
      %1676 = vmatpush2.msra.mxu0 0.0
      %1677 = vmatprep.subr.mxu0 0.0
      %1678 = vmatpush2.msra.mxu0 0.0
      %1679 = vmatprep.subr.mxu0 0.0
      %1680 = vmatpush2.msra.mxu0 0.0
      %1681 = vmatprep.subr.mxu0 0.0
      %1682 = vmatpush2.msra.mxu0 0.0
      %1683 = vmatprep.subr.mxu0 0.0
      %1684 = vmatpush2.msra.mxu0 0.0
      %1685 = vmatprep.subr.mxu0 0.0
      %1686 = vmatpush2.msra.mxu0 0.0
      %1687 = vmatprep.subr.mxu0 0.0
      %1688 = vmatpush2.msra.mxu0 0.0
      %1689 = vmatprep.subr.mxu0 0.0
      %1690 = vmatpush2.msra.mxu0 0.0
      %1691 = vmatprep.subr.mxu0 0.0
      %1692 = vmatpush2.msra.mxu0 0.0
      %1693 = vmatprep.subr.mxu0 0.0
      %1694 = vmatpush2.msra.mxu0 0.0
      %1695 = vmatprep.subr.mxu0 0.0
      %1696 = vmatpush2.msra.mxu0 0.0
      %1697 = vmatprep.mubr.f32.mxu0 0.0
      %1698 = vmatmul.mubr.f32.gmra.mxu0 %v362
      %v1699 = vpop.f32.mrf.mxu0
      %v1700 = vadd.f32 0.0, %v1699
      %v1701 = vpop.f32.mrf.mxu0
      %1702 = vmatprep.mubr.f32.mxu0 0.0
      %1703 = vmatmul.mubr.f32.gmra.mxu0 %v364
      %v1704 = vpop.f32.mrf.mxu0
      %v1705 = vadd.f32 0.0, %v1704
      %v1706 = vpop.f32.mrf.mxu0
      %1707 = vmatprep.mubr.f32.mxu0 0.0
      %1708 = vmatmul.mubr.f32.gmra.mxu0 %v366
      %v1709 = vpop.f32.mrf.mxu0
      %v1710 = vadd.f32 0.0, %v1709
      %v1711 = vpop.f32.mrf.mxu0
      %1712 = vmatprep.mubr.f32.mxu0 0.0
      %1713 = vmatmul.mubr.f32.gmra.mxu0 %v368
      %v1714 = vpop.f32.mrf.mxu0
      %v1715 = vadd.f32 0.0, %v1714
      %v1716 = vpop.f32.mrf.mxu0
      %1717 = vmatprep.mubr.f32.mxu0 0.0
      %1718 = vmatmul.mubr.f32.gmra.mxu0 %v370
      %v1719 = vpop.f32.mrf.mxu0
      %v1720 = vadd.f32 0.0, %v1719
      %v1721 = vpop.f32.mrf.mxu0
      %1722 = vmatprep.mubr.f32.mxu0 0.0
      %1723 = vmatmul.mubr.f32.gmra.mxu0 %v372
      %v1724 = vpop.f32.mrf.mxu0
      %v1725 = vadd.f32 0.0, %v1724
      %v1726 = vpop.f32.mrf.mxu0
      %1727 = vmatprep.mubr.f32.mxu0 0.0
      %1728 = vmatmul.mubr.f32.gmra.mxu0 %v374
      %v1729 = vpop.f32.mrf.mxu0
      %v1730 = vadd.f32 0.0, %v1729
      %v1731 = vpop.f32.mrf.mxu0
      %1732 = vmatprep.mubr.f32.mxu0 0.0
      %1733 = vmatmul.mubr.f32.gmra.mxu0 %v376
      %v1734 = vpop.f32.mrf.mxu0
      %v1735 = vadd.f32 0.0, %v1734
      %v1736 = vpop.f32.mrf.mxu0
      %1737 = vmatprep.mubr.f32.mxu0 0.0
      %1738 = vmatmul.mubr.f32.gmra.mxu0 %v378
      %v1739 = vpop.f32.mrf.mxu0
      %v1740 = vadd.f32 0.0, %v1739
      %v1741 = vpop.f32.mrf.mxu0
      %1742 = vmatprep.mubr.f32.mxu0 0.0
      %1743 = vmatmul.mubr.f32.gmra.mxu0 %v380
      %v1744 = vpop.f32.mrf.mxu0
      %v1745 = vadd.f32 0.0, %v1744
      %v1746 = vpop.f32.mrf.mxu0
      %1747 = vmatprep.mubr.f32.mxu0 0.0
      %1748 = vmatmul.mubr.f32.gmra.mxu0 %v382
      %v1749 = vpop.f32.mrf.mxu0
      %v1750 = vadd.f32 0.0, %v1749
      %v1751 = vpop.f32.mrf.mxu0
      %1752 = vmatprep.mubr.f32.mxu0 0.0
      %1753 = vmatmul.mubr.f32.gmra.mxu0 %v384
      %v1754 = vpop.f32.mrf.mxu0
      %v1755 = vadd.f32 0.0, %v1754
      %v1756 = vpop.f32.mrf.mxu0
      %1757 = vmatprep.mubr.f32.mxu0 0.0
      %1758 = vmatmul.mubr.f32.gmra.mxu0 %v386
      %v1759 = vpop.f32.mrf.mxu0
      %v1760 = vadd.f32 0.0, %v1759
      %v1761 = vpop.f32.mrf.mxu0
      %1762 = vmatprep.mubr.f32.mxu0 0.0
      %1763 = vmatmul.mubr.f32.gmra.mxu0 %v388
      %v1764 = vpop.f32.mrf.mxu0
      %v1765 = vadd.f32 0.0, %v1764
      %v1766 = vpop.f32.mrf.mxu0
      %1767 = vmatprep.mubr.f32.mxu0 0.0
      %1768 = vmatmul.mubr.f32.gmra.mxu0 %v390
      %v1769 = vpop.f32.mrf.mxu0
      %v1770 = vadd.f32 0.0, %v1769
      %v1771 = vpop.f32.mrf.mxu0
      %1772 = vmatprep.mubr.f32.mxu0 0.0
      %1773 = vmatmul.mubr.f32.gmra.mxu0 %v392
      %v1774 = vpop.f32.mrf.mxu0
      %v1775 = vadd.f32 0.0, %v1774
      %v1776 = vpop.f32.mrf.mxu0
      %1777 = vmatprep.mubr.f32.mxu0 0.0
      %1778 = vmatmul.mubr.f32.gmra.mxu0 %v394
      %v1779 = vpop.f32.mrf.mxu0
      %v1780 = vadd.f32 0.0, %v1779
      %v1781 = vpop.f32.mrf.mxu0
      %1782 = vmatprep.mubr.f32.mxu0 0.0
      %1783 = vmatmul.mubr.f32.gmra.mxu0 %v396
      %v1784 = vpop.f32.mrf.mxu0
      %v1785 = vadd.f32 0.0, %v1784
      %v1786 = vpop.f32.mrf.mxu0
      %1787 = vmatprep.mubr.f32.mxu0 0.0
      %1788 = vmatmul.mubr.f32.gmra.mxu0 %v398
      %v1789 = vpop.f32.mrf.mxu0
      %v1790 = vadd.f32 0.0, %v1789
      %v1791 = vpop.f32.mrf.mxu0
      %1792 = vmatprep.mubr.f32.mxu0 0.0
      %1793 = vmatmul.mubr.f32.gmra.mxu0 %v400
      %v1794 = vpop.f32.mrf.mxu0
      %v1795 = vadd.f32 0.0, %v1794
      %v1796 = vpop.f32.mrf.mxu0
      %1797 = vmatprep.mubr.f32.mxu0 0.0
      %1798 = vmatmul.mubr.f32.gmra.mxu0 %v402
      %v1799 = vpop.f32.mrf.mxu0
      %v1800 = vadd.f32 0.0, %v1799
      %v1801 = vpop.f32.mrf.mxu0
      %1802 = vmatprep.mubr.f32.mxu0 0.0
      %1803 = vmatmul.mubr.f32.gmra.mxu0 %v404
      %v1804 = vpop.f32.mrf.mxu0
      %v1805 = vadd.f32 0.0, %v1804
      %v1806 = vpop.f32.mrf.mxu0
      %1807 = vmatprep.mubr.f32.mxu0 0.0
      %1808 = vmatmul.mubr.f32.gmra.mxu0 %v406
      %v1809 = vpop.f32.mrf.mxu0
      %v1810 = vadd.f32 0.0, %v1809
      %v1811 = vpop.f32.mrf.mxu0
      %1812 = vmatprep.mubr.f32.mxu0 0.0
      %1813 = vmatmul.mubr.f32.gmra.mxu0 %v408
      %v1814 = vpop.f32.mrf.mxu0
      %v1815 = vadd.f32 0.0, %v1814
      %v1816 = vpop.f32.mrf.mxu0
      %1817 = vmatprep.mubr.f32.mxu0 0.0
      %1818 = vmatmul.mubr.f32.gmra.mxu0 %v410
      %v1819 = vpop.f32.mrf.mxu0
      %v1820 = vadd.f32 0.0, %v1819
      %v1821 = vpop.f32.mrf.mxu0
      %1822 = vmatprep.mubr.f32.mxu0 0.0
      %1823 = vmatmul.mubr.f32.gmra.mxu0 %v412
      %v1824 = vpop.f32.mrf.mxu0
      %v1825 = vadd.f32 0.0, %v1824
      %v1826 = vpop.f32.mrf.mxu0
      %1827 = vmatprep.mubr.f32.mxu0 0.0
      %1828 = vmatmul.mubr.f32.gmra.mxu0 %v414
      %v1829 = vpop.f32.mrf.mxu0
      %v1830 = vadd.f32 0.0, %v1829
      %v1831 = vpop.f32.mrf.mxu0
      %1832 = vmatprep.mubr.f32.mxu0 0.0
      %1833 = vmatmul.mubr.f32.gmra.mxu0 %v416
      %v1834 = vpop.f32.mrf.mxu0
      %v1835 = vadd.f32 0.0, %v1834
      %v1836 = vpop.f32.mrf.mxu0
      %1837 = vmatprep.mubr.f32.mxu0 0.0
      %1838 = vmatmul.mubr.f32.gmra.mxu0 %v418
      %v1839 = vpop.f32.mrf.mxu0
      %v1840 = vadd.f32 0.0, %v1839
      %v1841 = vpop.f32.mrf.mxu0
      %1842 = vmatprep.mubr.f32.mxu0 0.0
      %1843 = vmatmul.mubr.f32.gmra.mxu0 %v420
      %v1844 = vpop.f32.mrf.mxu0
      %v1845 = vadd.f32 0.0, %v1844
      %v1846 = vpop.f32.mrf.mxu0
      %1847 = vmatprep.mubr.f32.mxu0 0.0
      %1848 = vmatmul.mubr.f32.gmra.mxu0 %v1626
      %v1849 = vpop.f32.mrf.mxu0
      %v1850 = vadd.f32 0.0, %v1849
      %v1851 = vpop.f32.mrf.mxu0
      %1852 = vmatprep.mubr.f32.mxu0 0.0
      %1853 = vmatmul.mubr.f32.gmra.mxu0 %v1628
      %v1854 = vpop.f32.mrf.mxu0
      %v1855 = vadd.f32 0.0, %v1854
      %v1856 = vpop.f32.mrf.mxu0
      %1857 = vdwg.mxu0
      %v1858 = vadd.f32 %v1586, %v1700
      %v1859 = vadd.f32 %v1587, %v1705
      %v1860 = vadd.f32 %v1588, %v1710
      %v1861 = vadd.f32 %v1589, %v1715
      %v1862 = vadd.f32 %v1590, %v1720
      %v1863 = vadd.f32 %v1591, %v1725
      %v1864 = vadd.f32 %v1592, %v1730
      %v1865 = vadd.f32 %v1593, %v1735
      %v1866 = vadd.f32 %v1594, %v1740
      %v1867 = vadd.f32 %v1595, %v1745
      %v1868 = vadd.f32 %v1596, %v1750
      %v1869 = vadd.f32 %v1597, %v1755
      %v1870 = vadd.f32 %v1598, %v1760
      %v1871 = vadd.f32 %v1599, %v1765
      %v1872 = vadd.f32 %v1600, %v1770
      %v1873 = vadd.f32 %v1601, %v1775
      %v1874 = vadd.f32 %v1602, %v1780
      %v1875 = vadd.f32 %v1603, %v1785
      %v1876 = vadd.f32 %v1604, %v1790
      %v1877 = vadd.f32 %v1605, %v1795
      %v1878 = vadd.f32 %v1606, %v1800
      %v1879 = vadd.f32 %v1607, %v1805
      %v1880 = vadd.f32 %v1608, %v1810
      %v1881 = vadd.f32 %v1609, %v1815
      %v1882 = vadd.f32 %v1610, %v1820
      %v1883 = vadd.f32 %v1611, %v1825
      %v1884 = vadd.f32 %v1612, %v1830
      %v1885 = vadd.f32 %v1613, %v1835
      %v1886 = vadd.f32 %v1614, %v1840
      %v1887 = vadd.f32 %v1615, %v1845
      %v1888 = vadd.f32 %v1616, %v1850
      %v1889 = vadd.f32 %v1617, %v1855
      %v1890 = vrot.slane %v219, 2
      %v1891 = vrot.slane %v220, 2
      %v1892 = vsel %vm943, %v1890, %v1891
      %v1893 = vrot.slane %v221, 2
      %v1894 = vsel %vm943, %v1891, %v1893
      %s1895 = scalar_lea.vmem %s1, 20
      %v1896 = vld [vmem:[%s1895] sm:$0x7]
      %v1897 = vsel %vm357, %v1892, 0
      %v1899 = vsel %vm357, %v1894, 0
      %v1902 = vsel %vm422, %v1896, 0
      %1904 = vmatprep.subr.mxu0 0.0
      %1905 = vmatpush1.msra.mxu0 0.0
      %1906 = vmatprep.subr.mxu0 0.0
      %1907 = vmatpush1.msra.mxu0 0.0
      %1908 = vmatprep.subr.mxu0 0.0
      %1909 = vmatpush1.msra.mxu0 0.0
      %1910 = vmatprep.subr.mxu0 0.0
      %1911 = vmatpush1.msra.mxu0 0.0
      %1912 = vmatprep.subr.mxu0 0.0
      %1913 = vmatpush1.msra.mxu0 0.0
      %1914 = vmatprep.subr.mxu0 0.0
      %1915 = vmatpush1.msra.mxu0 0.0
      %1916 = vmatprep.subr.mxu0 0.0
      %1917 = vmatpush1.msra.mxu0 0.0
      %1918 = vmatprep.subr.mxu0 0.0
      %1919 = vmatpush1.msra.mxu0 0.0
      %1920 = vmatprep.subr.mxu0 0.0
      %1921 = vmatpush1.msra.mxu0 0.0
      %1922 = vmatprep.subr.mxu0 0.0
      %1923 = vmatpush1.msra.mxu0 0.0
      %1924 = vmatprep.subr.mxu0 0.0
      %1925 = vmatpush1.msra.mxu0 0.0
      %1926 = vmatprep.subr.mxu0 0.0
      %1927 = vmatpush1.msra.mxu0 0.0
      %1928 = vmatprep.subr.mxu0 0.0
      %1929 = vmatpush1.msra.mxu0 0.0
      %1930 = vmatprep.subr.mxu0 0.0
      %1931 = vmatpush1.msra.mxu0 0.0
      %1932 = vmatprep.subr.mxu0 0.0
      %1933 = vmatpush1.msra.mxu0 0.0
      %1934 = vmatprep.subr.mxu0 0.0
      %1935 = vmatpush1.msra.mxu0 %v1902
      %1936 = vmatprep.subr.mxu0 0.0
      %1937 = vmatpush2.msra.mxu0 0.0
      %1938 = vmatprep.subr.mxu0 0.0
      %1939 = vmatpush2.msra.mxu0 0.0
      %1940 = vmatprep.subr.mxu0 0.0
      %1941 = vmatpush2.msra.mxu0 0.0
      %1942 = vmatprep.subr.mxu0 0.0
      %1943 = vmatpush2.msra.mxu0 0.0
      %1944 = vmatprep.subr.mxu0 0.0
      %1945 = vmatpush2.msra.mxu0 0.0
      %1946 = vmatprep.subr.mxu0 0.0
      %1947 = vmatpush2.msra.mxu0 0.0
      %1948 = vmatprep.subr.mxu0 0.0
      %1949 = vmatpush2.msra.mxu0 0.0
      %1950 = vmatprep.subr.mxu0 0.0
      %1951 = vmatpush2.msra.mxu0 0.0
      %1952 = vmatprep.subr.mxu0 0.0
      %1953 = vmatpush2.msra.mxu0 0.0
      %1954 = vmatprep.subr.mxu0 0.0
      %1955 = vmatpush2.msra.mxu0 0.0
      %1956 = vmatprep.subr.mxu0 0.0
      %1957 = vmatpush2.msra.mxu0 0.0
      %1958 = vmatprep.subr.mxu0 0.0
      %1959 = vmatpush2.msra.mxu0 0.0
      %1960 = vmatprep.subr.mxu0 0.0
      %1961 = vmatpush2.msra.mxu0 0.0
      %1962 = vmatprep.subr.mxu0 0.0
      %1963 = vmatpush2.msra.mxu0 0.0
      %1964 = vmatprep.subr.mxu0 0.0
      %1965 = vmatpush2.msra.mxu0 0.0
      %1966 = vmatprep.subr.mxu0 0.0
      %1967 = vmatpush2.msra.mxu0 0.0
      %1968 = vmatprep.mubr.f32.mxu0 0.0
      %1969 = vmatmul.mubr.f32.gmra.mxu0 %v1030
      %v1970 = vpop.f32.mrf.mxu0
      %v1971 = vadd.f32 0.0, %v1970
      %v1972 = vpop.f32.mrf.mxu0
      %1973 = vmatprep.mubr.f32.mxu0 0.0
      %1974 = vmatmul.mubr.f32.gmra.mxu0 %v1032
      %v1975 = vpop.f32.mrf.mxu0
      %v1976 = vadd.f32 0.0, %v1975
      %v1977 = vpop.f32.mrf.mxu0
      %1978 = vmatprep.mubr.f32.mxu0 0.0
      %1979 = vmatmul.mubr.f32.gmra.mxu0 %v1034
      %v1980 = vpop.f32.mrf.mxu0
      %v1981 = vadd.f32 0.0, %v1980
      %v1982 = vpop.f32.mrf.mxu0
      %1983 = vmatprep.mubr.f32.mxu0 0.0
      %1984 = vmatmul.mubr.f32.gmra.mxu0 %v1036
      %v1985 = vpop.f32.mrf.mxu0
      %v1986 = vadd.f32 0.0, %v1985
      %v1987 = vpop.f32.mrf.mxu0
      %1988 = vmatprep.mubr.f32.mxu0 0.0
      %1989 = vmatmul.mubr.f32.gmra.mxu0 %v1038
      %v1990 = vpop.f32.mrf.mxu0
      %v1991 = vadd.f32 0.0, %v1990
      %v1992 = vpop.f32.mrf.mxu0
      %1993 = vmatprep.mubr.f32.mxu0 0.0
      %1994 = vmatmul.mubr.f32.gmra.mxu0 %v1040
      %v1995 = vpop.f32.mrf.mxu0
      %v1996 = vadd.f32 0.0, %v1995
      %v1997 = vpop.f32.mrf.mxu0
      %1998 = vmatprep.mubr.f32.mxu0 0.0
      %1999 = vmatmul.mubr.f32.gmra.mxu0 %v1042
      %v2000 = vpop.f32.mrf.mxu0
      %v2001 = vadd.f32 0.0, %v2000
      %v2002 = vpop.f32.mrf.mxu0
      %2003 = vmatprep.mubr.f32.mxu0 0.0
      %2004 = vmatmul.mubr.f32.gmra.mxu0 %v1044
      %v2005 = vpop.f32.mrf.mxu0
      %v2006 = vadd.f32 0.0, %v2005
      %v2007 = vpop.f32.mrf.mxu0
      %2008 = vmatprep.mubr.f32.mxu0 0.0
      %2009 = vmatmul.mubr.f32.gmra.mxu0 %v1046
      %v2010 = vpop.f32.mrf.mxu0
      %v2011 = vadd.f32 0.0, %v2010
      %v2012 = vpop.f32.mrf.mxu0
      %2013 = vmatprep.mubr.f32.mxu0 0.0
      %2014 = vmatmul.mubr.f32.gmra.mxu0 %v1048
      %v2015 = vpop.f32.mrf.mxu0
      %v2016 = vadd.f32 0.0, %v2015
      %v2017 = vpop.f32.mrf.mxu0
      %2018 = vmatprep.mubr.f32.mxu0 0.0
      %2019 = vmatmul.mubr.f32.gmra.mxu0 %v1050
      %v2020 = vpop.f32.mrf.mxu0
      %v2021 = vadd.f32 0.0, %v2020
      %v2022 = vpop.f32.mrf.mxu0
      %2023 = vmatprep.mubr.f32.mxu0 0.0
      %2024 = vmatmul.mubr.f32.gmra.mxu0 %v1052
      %v2025 = vpop.f32.mrf.mxu0
      %v2026 = vadd.f32 0.0, %v2025
      %v2027 = vpop.f32.mrf.mxu0
      %2028 = vmatprep.mubr.f32.mxu0 0.0
      %2029 = vmatmul.mubr.f32.gmra.mxu0 %v1054
      %v2030 = vpop.f32.mrf.mxu0
      %v2031 = vadd.f32 0.0, %v2030
      %v2032 = vpop.f32.mrf.mxu0
      %2033 = vmatprep.mubr.f32.mxu0 0.0
      %2034 = vmatmul.mubr.f32.gmra.mxu0 %v1056
      %v2035 = vpop.f32.mrf.mxu0
      %v2036 = vadd.f32 0.0, %v2035
      %v2037 = vpop.f32.mrf.mxu0
      %2038 = vmatprep.mubr.f32.mxu0 0.0
      %2039 = vmatmul.mubr.f32.gmra.mxu0 %v1058
      %v2040 = vpop.f32.mrf.mxu0
      %v2041 = vadd.f32 0.0, %v2040
      %v2042 = vpop.f32.mrf.mxu0
      %2043 = vmatprep.mubr.f32.mxu0 0.0
      %2044 = vmatmul.mubr.f32.gmra.mxu0 %v1060
      %v2045 = vpop.f32.mrf.mxu0
      %v2046 = vadd.f32 0.0, %v2045
      %v2047 = vpop.f32.mrf.mxu0
      %2048 = vmatprep.mubr.f32.mxu0 0.0
      %2049 = vmatmul.mubr.f32.gmra.mxu0 %v1062
      %v2050 = vpop.f32.mrf.mxu0
      %v2051 = vadd.f32 0.0, %v2050
      %v2052 = vpop.f32.mrf.mxu0
      %2053 = vmatprep.mubr.f32.mxu0 0.0
      %2054 = vmatmul.mubr.f32.gmra.mxu0 %v1064
      %v2055 = vpop.f32.mrf.mxu0
      %v2056 = vadd.f32 0.0, %v2055
      %v2057 = vpop.f32.mrf.mxu0
      %2058 = vmatprep.mubr.f32.mxu0 0.0
      %2059 = vmatmul.mubr.f32.gmra.mxu0 %v1066
      %v2060 = vpop.f32.mrf.mxu0
      %v2061 = vadd.f32 0.0, %v2060
      %v2062 = vpop.f32.mrf.mxu0
      %2063 = vmatprep.mubr.f32.mxu0 0.0
      %2064 = vmatmul.mubr.f32.gmra.mxu0 %v1068
      %v2065 = vpop.f32.mrf.mxu0
      %v2066 = vadd.f32 0.0, %v2065
      %v2067 = vpop.f32.mrf.mxu0
      %2068 = vmatprep.mubr.f32.mxu0 0.0
      %2069 = vmatmul.mubr.f32.gmra.mxu0 %v1070
      %v2070 = vpop.f32.mrf.mxu0
      %v2071 = vadd.f32 0.0, %v2070
      %v2072 = vpop.f32.mrf.mxu0
      %2073 = vmatprep.mubr.f32.mxu0 0.0
      %2074 = vmatmul.mubr.f32.gmra.mxu0 %v1072
      %v2075 = vpop.f32.mrf.mxu0
      %v2076 = vadd.f32 0.0, %v2075
      %v2077 = vpop.f32.mrf.mxu0
      %2078 = vmatprep.mubr.f32.mxu0 0.0
      %2079 = vmatmul.mubr.f32.gmra.mxu0 %v1074
      %v2080 = vpop.f32.mrf.mxu0
      %v2081 = vadd.f32 0.0, %v2080
      %v2082 = vpop.f32.mrf.mxu0
      %2083 = vmatprep.mubr.f32.mxu0 0.0
      %2084 = vmatmul.mubr.f32.gmra.mxu0 %v1076
      %v2085 = vpop.f32.mrf.mxu0
      %v2086 = vadd.f32 0.0, %v2085
      %v2087 = vpop.f32.mrf.mxu0
      %2088 = vmatprep.mubr.f32.mxu0 0.0
      %2089 = vmatmul.mubr.f32.gmra.mxu0 %v1078
      %v2090 = vpop.f32.mrf.mxu0
      %v2091 = vadd.f32 0.0, %v2090
      %v2092 = vpop.f32.mrf.mxu0
      %2093 = vmatprep.mubr.f32.mxu0 0.0
      %2094 = vmatmul.mubr.f32.gmra.mxu0 %v1080
      %v2095 = vpop.f32.mrf.mxu0
      %v2096 = vadd.f32 0.0, %v2095
      %v2097 = vpop.f32.mrf.mxu0
      %2098 = vmatprep.mubr.f32.mxu0 0.0
      %2099 = vmatmul.mubr.f32.gmra.mxu0 %v1082
      %v2100 = vpop.f32.mrf.mxu0
      %v2101 = vadd.f32 0.0, %v2100
      %v2102 = vpop.f32.mrf.mxu0
      %2103 = vmatprep.mubr.f32.mxu0 0.0
      %2104 = vmatmul.mubr.f32.gmra.mxu0 %v1084
      %v2105 = vpop.f32.mrf.mxu0
      %v2106 = vadd.f32 0.0, %v2105
      %v2107 = vpop.f32.mrf.mxu0
      %2108 = vmatprep.mubr.f32.mxu0 0.0
      %2109 = vmatmul.mubr.f32.gmra.mxu0 %v1086
      %v2110 = vpop.f32.mrf.mxu0
      %v2111 = vadd.f32 0.0, %v2110
      %v2112 = vpop.f32.mrf.mxu0
      %2113 = vmatprep.mubr.f32.mxu0 0.0
      %2114 = vmatmul.mubr.f32.gmra.mxu0 %v1088
      %v2115 = vpop.f32.mrf.mxu0
      %v2116 = vadd.f32 0.0, %v2115
      %v2117 = vpop.f32.mrf.mxu0
      %2118 = vmatprep.mubr.f32.mxu0 0.0
      %2119 = vmatmul.mubr.f32.gmra.mxu0 %v1897
      %v2120 = vpop.f32.mrf.mxu0
      %v2121 = vadd.f32 0.0, %v2120
      %v2122 = vpop.f32.mrf.mxu0
      %2123 = vmatprep.mubr.f32.mxu0 0.0
      %2124 = vmatmul.mubr.f32.gmra.mxu0 %v1899
      %v2125 = vpop.f32.mrf.mxu0
      %v2126 = vadd.f32 0.0, %v2125
      %v2127 = vpop.f32.mrf.mxu0
      %2128 = vdwg.mxu0
      %v2129 = vadd.f32 %v1858, %v1971
      %v2130 = vadd.f32 %v1859, %v1976
      %v2131 = vadd.f32 %v1860, %v1981
      %v2132 = vadd.f32 %v1861, %v1986
      %v2133 = vadd.f32 %v1862, %v1991
      %v2134 = vadd.f32 %v1863, %v1996
      %v2135 = vadd.f32 %v1864, %v2001
      %v2136 = vadd.f32 %v1865, %v2006
      %v2137 = vadd.f32 %v1866, %v2011
      %v2138 = vadd.f32 %v1867, %v2016
      %v2139 = vadd.f32 %v1868, %v2021
      %v2140 = vadd.f32 %v1869, %v2026
      %v2141 = vadd.f32 %v1870, %v2031
      %v2142 = vadd.f32 %v1871, %v2036
      %v2143 = vadd.f32 %v1872, %v2041
      %v2144 = vadd.f32 %v1873, %v2046
      %v2145 = vadd.f32 %v1874, %v2051
      %v2146 = vadd.f32 %v1875, %v2056
      %v2147 = vadd.f32 %v1876, %v2061
      %v2148 = vadd.f32 %v1877, %v2066
      %v2149 = vadd.f32 %v1878, %v2071
      %v2150 = vadd.f32 %v1879, %v2076
      %v2151 = vadd.f32 %v1880, %v2081
      %v2152 = vadd.f32 %v1881, %v2086
      %v2153 = vadd.f32 %v1882, %v2091
      %v2154 = vadd.f32 %v1883, %v2096
      %v2155 = vadd.f32 %v1884, %v2101
      %v2156 = vadd.f32 %v1885, %v2106
      %v2157 = vadd.f32 %v1886, %v2111
      %v2158 = vadd.f32 %v1887, %v2116
      %v2159 = vadd.f32 %v1888, %v2121
      %v2160 = vadd.f32 %v1889, %v2126
      %s2161 = scalar_lea.vmem %s1, 24
      %v2162 = vld [vmem:[%s2161] sm:$0x7]
      %v2164 = vsel %vm357, %v222, 0
      %v2167 = vsel %vm357, %v223, 0
      %v2170 = vsel %vm422, %v2162, 0
      %2172 = vmatprep.subr.mxu0 0.0
      %2173 = vmatpush1.msra.mxu0 0.0
      %2174 = vmatprep.subr.mxu0 0.0
      %2175 = vmatpush1.msra.mxu0 0.0
      %2176 = vmatprep.subr.mxu0 0.0
      %2177 = vmatpush1.msra.mxu0 0.0
      %2178 = vmatprep.subr.mxu0 0.0
      %2179 = vmatpush1.msra.mxu0 0.0
      %2180 = vmatprep.subr.mxu0 0.0
      %2181 = vmatpush1.msra.mxu0 0.0
      %2182 = vmatprep.subr.mxu0 0.0
      %2183 = vmatpush1.msra.mxu0 0.0
      %2184 = vmatprep.subr.mxu0 0.0
      %2185 = vmatpush1.msra.mxu0 0.0
      %2186 = vmatprep.subr.mxu0 0.0
      %2187 = vmatpush1.msra.mxu0 0.0
      %2188 = vmatprep.subr.mxu0 0.0
      %2189 = vmatpush1.msra.mxu0 0.0
      %2190 = vmatprep.subr.mxu0 0.0
      %2191 = vmatpush1.msra.mxu0 0.0
      %2192 = vmatprep.subr.mxu0 0.0
      %2193 = vmatpush1.msra.mxu0 0.0
      %2194 = vmatprep.subr.mxu0 0.0
      %2195 = vmatpush1.msra.mxu0 0.0
      %2196 = vmatprep.subr.mxu0 0.0
      %2197 = vmatpush1.msra.mxu0 0.0
      %2198 = vmatprep.subr.mxu0 0.0
      %2199 = vmatpush1.msra.mxu0 0.0
      %2200 = vmatprep.subr.mxu0 0.0
      %2201 = vmatpush1.msra.mxu0 0.0
      %2202 = vmatprep.subr.mxu0 0.0
      %2203 = vmatpush1.msra.mxu0 %v2170
      %2204 = vmatprep.subr.mxu0 0.0
      %2205 = vmatpush2.msra.mxu0 0.0
      %2206 = vmatprep.subr.mxu0 0.0
      %2207 = vmatpush2.msra.mxu0 0.0
      %2208 = vmatprep.subr.mxu0 0.0
      %2209 = vmatpush2.msra.mxu0 0.0
      %2210 = vmatprep.subr.mxu0 0.0
      %2211 = vmatpush2.msra.mxu0 0.0
      %2212 = vmatprep.subr.mxu0 0.0
      %2213 = vmatpush2.msra.mxu0 0.0
      %2214 = vmatprep.subr.mxu0 0.0
      %2215 = vmatpush2.msra.mxu0 0.0
      %2216 = vmatprep.subr.mxu0 0.0
      %2217 = vmatpush2.msra.mxu0 0.0
      %2218 = vmatprep.subr.mxu0 0.0
      %2219 = vmatpush2.msra.mxu0 0.0
      %2220 = vmatprep.subr.mxu0 0.0
      %2221 = vmatpush2.msra.mxu0 0.0
      %2222 = vmatprep.subr.mxu0 0.0
      %2223 = vmatpush2.msra.mxu0 0.0
      %2224 = vmatprep.subr.mxu0 0.0
      %2225 = vmatpush2.msra.mxu0 0.0
      %2226 = vmatprep.subr.mxu0 0.0
      %2227 = vmatpush2.msra.mxu0 0.0
      %2228 = vmatprep.subr.mxu0 0.0
      %2229 = vmatpush2.msra.mxu0 0.0
      %2230 = vmatprep.subr.mxu0 0.0
      %2231 = vmatpush2.msra.mxu0 0.0
      %2232 = vmatprep.subr.mxu0 0.0
      %2233 = vmatpush2.msra.mxu0 0.0
      %2234 = vmatprep.subr.mxu0 0.0
      %2235 = vmatpush2.msra.mxu0 0.0
      %2236 = vmatprep.mubr.f32.mxu0 0.0
      %2237 = vmatmul.mubr.f32.gmra.mxu0 %v659
      %v2238 = vpop.f32.mrf.mxu0
      %v2239 = vadd.f32 0.0, %v2238
      %v2240 = vpop.f32.mrf.mxu0
      %2241 = vmatprep.mubr.f32.mxu0 0.0
      %2242 = vmatmul.mubr.f32.gmra.mxu0 %v661
      %v2243 = vpop.f32.mrf.mxu0
      %v2244 = vadd.f32 0.0, %v2243
      %v2245 = vpop.f32.mrf.mxu0
      %2246 = vmatprep.mubr.f32.mxu0 0.0
      %2247 = vmatmul.mubr.f32.gmra.mxu0 %v663
      %v2248 = vpop.f32.mrf.mxu0
      %v2249 = vadd.f32 0.0, %v2248
      %v2250 = vpop.f32.mrf.mxu0
      %2251 = vmatprep.mubr.f32.mxu0 0.0
      %2252 = vmatmul.mubr.f32.gmra.mxu0 %v665
      %v2253 = vpop.f32.mrf.mxu0
      %v2254 = vadd.f32 0.0, %v2253
      %v2255 = vpop.f32.mrf.mxu0
      %2256 = vmatprep.mubr.f32.mxu0 0.0
      %2257 = vmatmul.mubr.f32.gmra.mxu0 %v667
      %v2258 = vpop.f32.mrf.mxu0
      %v2259 = vadd.f32 0.0, %v2258
      %v2260 = vpop.f32.mrf.mxu0
      %2261 = vmatprep.mubr.f32.mxu0 0.0
      %2262 = vmatmul.mubr.f32.gmra.mxu0 %v669
      %v2263 = vpop.f32.mrf.mxu0
      %v2264 = vadd.f32 0.0, %v2263
      %v2265 = vpop.f32.mrf.mxu0
      %2266 = vmatprep.mubr.f32.mxu0 0.0
      %2267 = vmatmul.mubr.f32.gmra.mxu0 %v671
      %v2268 = vpop.f32.mrf.mxu0
      %v2269 = vadd.f32 0.0, %v2268
      %v2270 = vpop.f32.mrf.mxu0
      %2271 = vmatprep.mubr.f32.mxu0 0.0
      %2272 = vmatmul.mubr.f32.gmra.mxu0 %v673
      %v2273 = vpop.f32.mrf.mxu0
      %v2274 = vadd.f32 0.0, %v2273
      %v2275 = vpop.f32.mrf.mxu0
      %2276 = vmatprep.mubr.f32.mxu0 0.0
      %2277 = vmatmul.mubr.f32.gmra.mxu0 %v675
      %v2278 = vpop.f32.mrf.mxu0
      %v2279 = vadd.f32 0.0, %v2278
      %v2280 = vpop.f32.mrf.mxu0
      %2281 = vmatprep.mubr.f32.mxu0 0.0
      %2282 = vmatmul.mubr.f32.gmra.mxu0 %v677
      %v2283 = vpop.f32.mrf.mxu0
      %v2284 = vadd.f32 0.0, %v2283
      %v2285 = vpop.f32.mrf.mxu0
      %2286 = vmatprep.mubr.f32.mxu0 0.0
      %2287 = vmatmul.mubr.f32.gmra.mxu0 %v679
      %v2288 = vpop.f32.mrf.mxu0
      %v2289 = vadd.f32 0.0, %v2288
      %v2290 = vpop.f32.mrf.mxu0
      %2291 = vmatprep.mubr.f32.mxu0 0.0
      %2292 = vmatmul.mubr.f32.gmra.mxu0 %v681
      %v2293 = vpop.f32.mrf.mxu0
      %v2294 = vadd.f32 0.0, %v2293
      %v2295 = vpop.f32.mrf.mxu0
      %2296 = vmatprep.mubr.f32.mxu0 0.0
      %2297 = vmatmul.mubr.f32.gmra.mxu0 %v683
      %v2298 = vpop.f32.mrf.mxu0
      %v2299 = vadd.f32 0.0, %v2298
      %v2300 = vpop.f32.mrf.mxu0
      %2301 = vmatprep.mubr.f32.mxu0 0.0
      %2302 = vmatmul.mubr.f32.gmra.mxu0 %v685
      %v2303 = vpop.f32.mrf.mxu0
      %v2304 = vadd.f32 0.0, %v2303
      %v2305 = vpop.f32.mrf.mxu0
      %2306 = vmatprep.mubr.f32.mxu0 0.0
      %2307 = vmatmul.mubr.f32.gmra.mxu0 %v687
      %v2308 = vpop.f32.mrf.mxu0
      %v2309 = vadd.f32 0.0, %v2308
      %v2310 = vpop.f32.mrf.mxu0
      %2311 = vmatprep.mubr.f32.mxu0 0.0
      %2312 = vmatmul.mubr.f32.gmra.mxu0 %v689
      %v2313 = vpop.f32.mrf.mxu0
      %v2314 = vadd.f32 0.0, %v2313
      %v2315 = vpop.f32.mrf.mxu0
      %2316 = vmatprep.mubr.f32.mxu0 0.0
      %2317 = vmatmul.mubr.f32.gmra.mxu0 %v691
      %v2318 = vpop.f32.mrf.mxu0
      %v2319 = vadd.f32 0.0, %v2318
      %v2320 = vpop.f32.mrf.mxu0
      %2321 = vmatprep.mubr.f32.mxu0 0.0
      %2322 = vmatmul.mubr.f32.gmra.mxu0 %v693
      %v2323 = vpop.f32.mrf.mxu0
      %v2324 = vadd.f32 0.0, %v2323
      %v2325 = vpop.f32.mrf.mxu0
      %2326 = vmatprep.mubr.f32.mxu0 0.0
      %2327 = vmatmul.mubr.f32.gmra.mxu0 %v695
      %v2328 = vpop.f32.mrf.mxu0
      %v2329 = vadd.f32 0.0, %v2328
      %v2330 = vpop.f32.mrf.mxu0
      %2331 = vmatprep.mubr.f32.mxu0 0.0
      %2332 = vmatmul.mubr.f32.gmra.mxu0 %v697
      %v2333 = vpop.f32.mrf.mxu0
      %v2334 = vadd.f32 0.0, %v2333
      %v2335 = vpop.f32.mrf.mxu0
      %2336 = vmatprep.mubr.f32.mxu0 0.0
      %2337 = vmatmul.mubr.f32.gmra.mxu0 %v699
      %v2338 = vpop.f32.mrf.mxu0
      %v2339 = vadd.f32 0.0, %v2338
      %v2340 = vpop.f32.mrf.mxu0
      %2341 = vmatprep.mubr.f32.mxu0 0.0
      %2342 = vmatmul.mubr.f32.gmra.mxu0 %v701
      %v2343 = vpop.f32.mrf.mxu0
      %v2344 = vadd.f32 0.0, %v2343
      %v2345 = vpop.f32.mrf.mxu0
      %2346 = vmatprep.mubr.f32.mxu0 0.0
      %2347 = vmatmul.mubr.f32.gmra.mxu0 %v703
      %v2348 = vpop.f32.mrf.mxu0
      %v2349 = vadd.f32 0.0, %v2348
      %v2350 = vpop.f32.mrf.mxu0
      %2351 = vmatprep.mubr.f32.mxu0 0.0
      %2352 = vmatmul.mubr.f32.gmra.mxu0 %v705
      %v2353 = vpop.f32.mrf.mxu0
      %v2354 = vadd.f32 0.0, %v2353
      %v2355 = vpop.f32.mrf.mxu0
      %2356 = vmatprep.mubr.f32.mxu0 0.0
      %2357 = vmatmul.mubr.f32.gmra.mxu0 %v707
      %v2358 = vpop.f32.mrf.mxu0
      %v2359 = vadd.f32 0.0, %v2358
      %v2360 = vpop.f32.mrf.mxu0
      %2361 = vmatprep.mubr.f32.mxu0 0.0
      %2362 = vmatmul.mubr.f32.gmra.mxu0 %v709
      %v2363 = vpop.f32.mrf.mxu0
      %v2364 = vadd.f32 0.0, %v2363
      %v2365 = vpop.f32.mrf.mxu0
      %2366 = vmatprep.mubr.f32.mxu0 0.0
      %2367 = vmatmul.mubr.f32.gmra.mxu0 %v711
      %v2368 = vpop.f32.mrf.mxu0
      %v2369 = vadd.f32 0.0, %v2368
      %v2370 = vpop.f32.mrf.mxu0
      %2371 = vmatprep.mubr.f32.mxu0 0.0
      %2372 = vmatmul.mubr.f32.gmra.mxu0 %v713
      %v2373 = vpop.f32.mrf.mxu0
      %v2374 = vadd.f32 0.0, %v2373
      %v2375 = vpop.f32.mrf.mxu0
      %2376 = vmatprep.mubr.f32.mxu0 0.0
      %2377 = vmatmul.mubr.f32.gmra.mxu0 %v1353
      %v2378 = vpop.f32.mrf.mxu0
      %v2379 = vadd.f32 0.0, %v2378
      %v2380 = vpop.f32.mrf.mxu0
      %2381 = vmatprep.mubr.f32.mxu0 0.0
      %2382 = vmatmul.mubr.f32.gmra.mxu0 %v1356
      %v2383 = vpop.f32.mrf.mxu0
      %v2384 = vadd.f32 0.0, %v2383
      %v2385 = vpop.f32.mrf.mxu0
      %2386 = vmatprep.mubr.f32.mxu0 0.0
      %2387 = vmatmul.mubr.f32.gmra.mxu0 %v2164
      %v2388 = vpop.f32.mrf.mxu0
      %v2389 = vadd.f32 0.0, %v2388
      %v2390 = vpop.f32.mrf.mxu0
      %2391 = vmatprep.mubr.f32.mxu0 0.0
      %2392 = vmatmul.mubr.f32.gmra.mxu0 %v2167
      %v2393 = vpop.f32.mrf.mxu0
      %v2394 = vadd.f32 0.0, %v2393
      %v2395 = vpop.f32.mrf.mxu0
      %2396 = vdwg.mxu0
      %v2397 = vadd.f32 %v2129, %v2239
      %v2398 = vadd.f32 %v2130, %v2244
      %v2399 = vadd.f32 %v2131, %v2249
      %v2400 = vadd.f32 %v2132, %v2254
      %v2401 = vadd.f32 %v2133, %v2259
      %v2402 = vadd.f32 %v2134, %v2264
      %v2403 = vadd.f32 %v2135, %v2269
      %v2404 = vadd.f32 %v2136, %v2274
      %v2405 = vadd.f32 %v2137, %v2279
      %v2406 = vadd.f32 %v2138, %v2284
      %v2407 = vadd.f32 %v2139, %v2289
      %v2408 = vadd.f32 %v2140, %v2294
      %v2409 = vadd.f32 %v2141, %v2299
      %v2410 = vadd.f32 %v2142, %v2304
      %v2411 = vadd.f32 %v2143, %v2309
      %v2412 = vadd.f32 %v2144, %v2314
      %v2413 = vadd.f32 %v2145, %v2319
      %v2414 = vadd.f32 %v2146, %v2324
      %v2415 = vadd.f32 %v2147, %v2329
      %v2416 = vadd.f32 %v2148, %v2334
      %v2417 = vadd.f32 %v2149, %v2339
      %v2418 = vadd.f32 %v2150, %v2344
      %v2419 = vadd.f32 %v2151, %v2349
      %v2420 = vadd.f32 %v2152, %v2354
      %v2421 = vadd.f32 %v2153, %v2359
      %v2422 = vadd.f32 %v2154, %v2364
      %v2423 = vadd.f32 %v2155, %v2369
      %v2424 = vadd.f32 %v2156, %v2374
      %v2425 = vadd.f32 %v2157, %v2379
      %v2426 = vadd.f32 %v2158, %v2384
      %v2427 = vadd.f32 %v2159, %v2389
      %v2428 = vadd.f32 %v2160, %v2394
      %v2430 = vrot.slane %v222, 1
      %v2431 = vrot.slane %v223, 1
      %v2432 = vsel %vm274, %v2430, %v2431
      %v2433 = vrot.slane %v224, 1
      %v2434 = vsel %vm274, %v2431, %v2433
      %s2435 = scalar_lea.vmem %s1, 28
      %v2436 = vld [vmem:[%s2435] sm:$0x7]
      %v2437 = vsel %vm357, %v2432, 0
      %v2439 = vsel %vm357, %v2434, 0
      %v2442 = vsel %vm422, %v2436, 0
      %2444 = vmatprep.subr.mxu0 0.0
      %2445 = vmatpush1.msra.mxu0 0.0
      %2446 = vmatprep.subr.mxu0 0.0
      %2447 = vmatpush1.msra.mxu0 0.0
      %2448 = vmatprep.subr.mxu0 0.0
      %2449 = vmatpush1.msra.mxu0 0.0
      %2450 = vmatprep.subr.mxu0 0.0
      %2451 = vmatpush1.msra.mxu0 0.0
      %2452 = vmatprep.subr.mxu0 0.0
      %2453 = vmatpush1.msra.mxu0 0.0
      %2454 = vmatprep.subr.mxu0 0.0
      %2455 = vmatpush1.msra.mxu0 0.0
      %2456 = vmatprep.subr.mxu0 0.0
      %2457 = vmatpush1.msra.mxu0 0.0
      %2458 = vmatprep.subr.mxu0 0.0
      %2459 = vmatpush1.msra.mxu0 0.0
      %2460 = vmatprep.subr.mxu0 0.0
      %2461 = vmatpush1.msra.mxu0 0.0
      %2462 = vmatprep.subr.mxu0 0.0
      %2463 = vmatpush1.msra.mxu0 0.0
      %2464 = vmatprep.subr.mxu0 0.0
      %2465 = vmatpush1.msra.mxu0 0.0
      %2466 = vmatprep.subr.mxu0 0.0
      %2467 = vmatpush1.msra.mxu0 0.0
      %2468 = vmatprep.subr.mxu0 0.0
      %2469 = vmatpush1.msra.mxu0 0.0
      %2470 = vmatprep.subr.mxu0 0.0
      %2471 = vmatpush1.msra.mxu0 0.0
      %2472 = vmatprep.subr.mxu0 0.0
      %2473 = vmatpush1.msra.mxu0 0.0
      %2474 = vmatprep.subr.mxu0 0.0
      %2475 = vmatpush1.msra.mxu0 %v2442
      %2476 = vmatprep.subr.mxu0 0.0
      %2477 = vmatpush2.msra.mxu0 0.0
      %2478 = vmatprep.subr.mxu0 0.0
      %2479 = vmatpush2.msra.mxu0 0.0
      %2480 = vmatprep.subr.mxu0 0.0
      %2481 = vmatpush2.msra.mxu0 0.0
      %2482 = vmatprep.subr.mxu0 0.0
      %2483 = vmatpush2.msra.mxu0 0.0
      %2484 = vmatprep.subr.mxu0 0.0
      %2485 = vmatpush2.msra.mxu0 0.0
      %2486 = vmatprep.subr.mxu0 0.0
      %2487 = vmatpush2.msra.mxu0 0.0
      %2488 = vmatprep.subr.mxu0 0.0
      %2489 = vmatpush2.msra.mxu0 0.0
      %2490 = vmatprep.subr.mxu0 0.0
      %2491 = vmatpush2.msra.mxu0 0.0
      %2492 = vmatprep.subr.mxu0 0.0
      %2493 = vmatpush2.msra.mxu0 0.0
      %2494 = vmatprep.subr.mxu0 0.0
      %2495 = vmatpush2.msra.mxu0 0.0
      %2496 = vmatprep.subr.mxu0 0.0
      %2497 = vmatpush2.msra.mxu0 0.0
      %2498 = vmatprep.subr.mxu0 0.0
      %2499 = vmatpush2.msra.mxu0 0.0
      %2500 = vmatprep.subr.mxu0 0.0
      %2501 = vmatpush2.msra.mxu0 0.0
      %2502 = vmatprep.subr.mxu0 0.0
      %2503 = vmatpush2.msra.mxu0 0.0
      %2504 = vmatprep.subr.mxu0 0.0
      %2505 = vmatpush2.msra.mxu0 0.0
      %2506 = vmatprep.subr.mxu0 0.0
      %2507 = vmatpush2.msra.mxu0 0.0
      %2508 = vmatprep.mubr.f32.mxu0 0.0
      %2509 = vmatmul.mubr.f32.gmra.mxu0 %v366
      %v2510 = vpop.f32.mrf.mxu0
      %v2511 = vadd.f32 0.0, %v2510
      %v2512 = vpop.f32.mrf.mxu0
      %2513 = vmatprep.mubr.f32.mxu0 0.0
      %2514 = vmatmul.mubr.f32.gmra.mxu0 %v368
      %v2515 = vpop.f32.mrf.mxu0
      %v2516 = vadd.f32 0.0, %v2515
      %v2517 = vpop.f32.mrf.mxu0
      %2518 = vmatprep.mubr.f32.mxu0 0.0
      %2519 = vmatmul.mubr.f32.gmra.mxu0 %v370
      %v2520 = vpop.f32.mrf.mxu0
      %v2521 = vadd.f32 0.0, %v2520
      %v2522 = vpop.f32.mrf.mxu0
      %2523 = vmatprep.mubr.f32.mxu0 0.0
      %2524 = vmatmul.mubr.f32.gmra.mxu0 %v372
      %v2525 = vpop.f32.mrf.mxu0
      %v2526 = vadd.f32 0.0, %v2525
      %v2527 = vpop.f32.mrf.mxu0
      %2528 = vmatprep.mubr.f32.mxu0 0.0
      %2529 = vmatmul.mubr.f32.gmra.mxu0 %v374
      %v2530 = vpop.f32.mrf.mxu0
      %v2531 = vadd.f32 0.0, %v2530
      %v2532 = vpop.f32.mrf.mxu0
      %2533 = vmatprep.mubr.f32.mxu0 0.0
      %2534 = vmatmul.mubr.f32.gmra.mxu0 %v376
      %v2535 = vpop.f32.mrf.mxu0
      %v2536 = vadd.f32 0.0, %v2535
      %v2537 = vpop.f32.mrf.mxu0
      %2538 = vmatprep.mubr.f32.mxu0 0.0
      %2539 = vmatmul.mubr.f32.gmra.mxu0 %v378
      %v2540 = vpop.f32.mrf.mxu0
      %v2541 = vadd.f32 0.0, %v2540
      %v2542 = vpop.f32.mrf.mxu0
      %2543 = vmatprep.mubr.f32.mxu0 0.0
      %2544 = vmatmul.mubr.f32.gmra.mxu0 %v380
      %v2545 = vpop.f32.mrf.mxu0
      %v2546 = vadd.f32 0.0, %v2545
      %v2547 = vpop.f32.mrf.mxu0
      %2548 = vmatprep.mubr.f32.mxu0 0.0
      %2549 = vmatmul.mubr.f32.gmra.mxu0 %v382
      %v2550 = vpop.f32.mrf.mxu0
      %v2551 = vadd.f32 0.0, %v2550
      %v2552 = vpop.f32.mrf.mxu0
      %2553 = vmatprep.mubr.f32.mxu0 0.0
      %2554 = vmatmul.mubr.f32.gmra.mxu0 %v384
      %v2555 = vpop.f32.mrf.mxu0
      %v2556 = vadd.f32 0.0, %v2555
      %v2557 = vpop.f32.mrf.mxu0
      %2558 = vmatprep.mubr.f32.mxu0 0.0
      %2559 = vmatmul.mubr.f32.gmra.mxu0 %v386
      %v2560 = vpop.f32.mrf.mxu0
      %v2561 = vadd.f32 0.0, %v2560
      %v2562 = vpop.f32.mrf.mxu0
      %2563 = vmatprep.mubr.f32.mxu0 0.0
      %2564 = vmatmul.mubr.f32.gmra.mxu0 %v388
      %v2565 = vpop.f32.mrf.mxu0
      %v2566 = vadd.f32 0.0, %v2565
      %v2567 = vpop.f32.mrf.mxu0
      %2568 = vmatprep.mubr.f32.mxu0 0.0
      %2569 = vmatmul.mubr.f32.gmra.mxu0 %v390
      %v2570 = vpop.f32.mrf.mxu0
      %v2571 = vadd.f32 0.0, %v2570
      %v2572 = vpop.f32.mrf.mxu0
      %2573 = vmatprep.mubr.f32.mxu0 0.0
      %2574 = vmatmul.mubr.f32.gmra.mxu0 %v392
      %v2575 = vpop.f32.mrf.mxu0
      %v2576 = vadd.f32 0.0, %v2575
      %v2577 = vpop.f32.mrf.mxu0
      %2578 = vmatprep.mubr.f32.mxu0 0.0
      %2579 = vmatmul.mubr.f32.gmra.mxu0 %v394
      %v2580 = vpop.f32.mrf.mxu0
      %v2581 = vadd.f32 0.0, %v2580
      %v2582 = vpop.f32.mrf.mxu0
      %2583 = vmatprep.mubr.f32.mxu0 0.0
      %2584 = vmatmul.mubr.f32.gmra.mxu0 %v396
      %v2585 = vpop.f32.mrf.mxu0
      %v2586 = vadd.f32 0.0, %v2585
      %v2587 = vpop.f32.mrf.mxu0
      %2588 = vmatprep.mubr.f32.mxu0 0.0
      %2589 = vmatmul.mubr.f32.gmra.mxu0 %v398
      %v2590 = vpop.f32.mrf.mxu0
      %v2591 = vadd.f32 0.0, %v2590
      %v2592 = vpop.f32.mrf.mxu0
      %2593 = vmatprep.mubr.f32.mxu0 0.0
      %2594 = vmatmul.mubr.f32.gmra.mxu0 %v400
      %v2595 = vpop.f32.mrf.mxu0
      %v2596 = vadd.f32 0.0, %v2595
      %v2597 = vpop.f32.mrf.mxu0
      %2598 = vmatprep.mubr.f32.mxu0 0.0
      %2599 = vmatmul.mubr.f32.gmra.mxu0 %v402
      %v2600 = vpop.f32.mrf.mxu0
      %v2601 = vadd.f32 0.0, %v2600
      %v2602 = vpop.f32.mrf.mxu0
      %2603 = vmatprep.mubr.f32.mxu0 0.0
      %2604 = vmatmul.mubr.f32.gmra.mxu0 %v404
      %v2605 = vpop.f32.mrf.mxu0
      %v2606 = vadd.f32 0.0, %v2605
      %v2607 = vpop.f32.mrf.mxu0
      %2608 = vmatprep.mubr.f32.mxu0 0.0
      %2609 = vmatmul.mubr.f32.gmra.mxu0 %v406
      %v2610 = vpop.f32.mrf.mxu0
      %v2611 = vadd.f32 0.0, %v2610
      %v2612 = vpop.f32.mrf.mxu0
      %2613 = vmatprep.mubr.f32.mxu0 0.0
      %2614 = vmatmul.mubr.f32.gmra.mxu0 %v408
      %v2615 = vpop.f32.mrf.mxu0
      %v2616 = vadd.f32 0.0, %v2615
      %v2617 = vpop.f32.mrf.mxu0
      %2618 = vmatprep.mubr.f32.mxu0 0.0
      %2619 = vmatmul.mubr.f32.gmra.mxu0 %v410
      %v2620 = vpop.f32.mrf.mxu0
      %v2621 = vadd.f32 0.0, %v2620
      %v2622 = vpop.f32.mrf.mxu0
      %2623 = vmatprep.mubr.f32.mxu0 0.0
      %2624 = vmatmul.mubr.f32.gmra.mxu0 %v412
      %v2625 = vpop.f32.mrf.mxu0
      %v2626 = vadd.f32 0.0, %v2625
      %v2627 = vpop.f32.mrf.mxu0
      %2628 = vmatprep.mubr.f32.mxu0 0.0
      %2629 = vmatmul.mubr.f32.gmra.mxu0 %v414
      %v2630 = vpop.f32.mrf.mxu0
      %v2631 = vadd.f32 0.0, %v2630
      %v2632 = vpop.f32.mrf.mxu0
      %2633 = vmatprep.mubr.f32.mxu0 0.0
      %2634 = vmatmul.mubr.f32.gmra.mxu0 %v416
      %v2635 = vpop.f32.mrf.mxu0
      %v2636 = vadd.f32 0.0, %v2635
      %v2637 = vpop.f32.mrf.mxu0
      %2638 = vmatprep.mubr.f32.mxu0 0.0
      %2639 = vmatmul.mubr.f32.gmra.mxu0 %v418
      %v2640 = vpop.f32.mrf.mxu0
      %v2641 = vadd.f32 0.0, %v2640
      %v2642 = vpop.f32.mrf.mxu0
      %2643 = vmatprep.mubr.f32.mxu0 0.0
      %2644 = vmatmul.mubr.f32.gmra.mxu0 %v420
      %v2645 = vpop.f32.mrf.mxu0
      %v2646 = vadd.f32 0.0, %v2645
      %v2647 = vpop.f32.mrf.mxu0
      %2648 = vmatprep.mubr.f32.mxu0 0.0
      %2649 = vmatmul.mubr.f32.gmra.mxu0 %v1626
      %v2650 = vpop.f32.mrf.mxu0
      %v2651 = vadd.f32 0.0, %v2650
      %v2652 = vpop.f32.mrf.mxu0
      %2653 = vmatprep.mubr.f32.mxu0 0.0
      %2654 = vmatmul.mubr.f32.gmra.mxu0 %v1628
      %v2655 = vpop.f32.mrf.mxu0
      %v2656 = vadd.f32 0.0, %v2655
      %v2657 = vpop.f32.mrf.mxu0
      %2658 = vmatprep.mubr.f32.mxu0 0.0
      %2659 = vmatmul.mubr.f32.gmra.mxu0 %v2437
      %v2660 = vpop.f32.mrf.mxu0
      %v2661 = vadd.f32 0.0, %v2660
      %v2662 = vpop.f32.mrf.mxu0
      %2663 = vmatprep.mubr.f32.mxu0 0.0
      %2664 = vmatmul.mubr.f32.gmra.mxu0 %v2439
      %v2665 = vpop.f32.mrf.mxu0
      %v2666 = vadd.f32 0.0, %v2665
      %v2667 = vpop.f32.mrf.mxu0
      %2668 = vdwg.mxu0
      %v2669 = vadd.f32 %v2397, %v2511
      %v2670 = vadd.f32 %v2398, %v2516
      %v2671 = vadd.f32 %v2399, %v2521
      %v2672 = vadd.f32 %v2400, %v2526
      %v2673 = vadd.f32 %v2401, %v2531
      %v2674 = vadd.f32 %v2402, %v2536
      %v2675 = vadd.f32 %v2403, %v2541
      %v2676 = vadd.f32 %v2404, %v2546
      %v2677 = vadd.f32 %v2405, %v2551
      %v2678 = vadd.f32 %v2406, %v2556
      %v2679 = vadd.f32 %v2407, %v2561
      %v2680 = vadd.f32 %v2408, %v2566
      %v2681 = vadd.f32 %v2409, %v2571
      %v2682 = vadd.f32 %v2410, %v2576
      %v2683 = vadd.f32 %v2411, %v2581
      %v2684 = vadd.f32 %v2412, %v2586
      %v2685 = vadd.f32 %v2413, %v2591
      %v2686 = vadd.f32 %v2414, %v2596
      %v2687 = vadd.f32 %v2415, %v2601
      %v2688 = vadd.f32 %v2416, %v2606
      %v2689 = vadd.f32 %v2417, %v2611
      %v2690 = vadd.f32 %v2418, %v2616
      %v2691 = vadd.f32 %v2419, %v2621
      %v2692 = vadd.f32 %v2420, %v2626
      %v2693 = vadd.f32 %v2421, %v2631
      %v2694 = vadd.f32 %v2422, %v2636
      %v2695 = vadd.f32 %v2423, %v2641
      %v2696 = vadd.f32 %v2424, %v2646
      %v2697 = vadd.f32 %v2425, %v2651
      %v2698 = vadd.f32 %v2426, %v2656
      %v2699 = vadd.f32 %v2427, %v2661
      %v2700 = vadd.f32 %v2428, %v2666
      %v2701 = vrot.slane %v222, 2
      %v2702 = vrot.slane %v223, 2
      %v2703 = vsel %vm943, %v2701, %v2702
      %v2704 = vrot.slane %v224, 2
      %v2705 = vsel %vm943, %v2702, %v2704
      %s2706 = scalar_lea.vmem %s1, 32
      %v2707 = vld [vmem:[%s2706] sm:$0x7]
      %v2708 = vsel %vm357, %v2703, 0
      %v2710 = vsel %vm357, %v2705, 0
      %v2713 = vsel %vm422, %v2707, 0
      %2715 = vmatprep.subr.mxu0 0.0
      %2716 = vmatpush1.msra.mxu0 0.0
      %2717 = vmatprep.subr.mxu0 0.0
      %2718 = vmatpush1.msra.mxu0 0.0
      %2719 = vmatprep.subr.mxu0 0.0
      %2720 = vmatpush1.msra.mxu0 0.0
      %2721 = vmatprep.subr.mxu0 0.0
      %2722 = vmatpush1.msra.mxu0 0.0
      %2723 = vmatprep.subr.mxu0 0.0
      %2724 = vmatpush1.msra.mxu0 0.0
      %2725 = vmatprep.subr.mxu0 0.0
      %2726 = vmatpush1.msra.mxu0 0.0
      %2727 = vmatprep.subr.mxu0 0.0
      %2728 = vmatpush1.msra.mxu0 0.0
      %2729 = vmatprep.subr.mxu0 0.0
      %2730 = vmatpush1.msra.mxu0 0.0
      %2731 = vmatprep.subr.mxu0 0.0
      %2732 = vmatpush1.msra.mxu0 0.0
      %2733 = vmatprep.subr.mxu0 0.0
      %2734 = vmatpush1.msra.mxu0 0.0
      %2735 = vmatprep.subr.mxu0 0.0
      %2736 = vmatpush1.msra.mxu0 0.0
      %2737 = vmatprep.subr.mxu0 0.0
      %2738 = vmatpush1.msra.mxu0 0.0
      %2739 = vmatprep.subr.mxu0 0.0
      %2740 = vmatpush1.msra.mxu0 0.0
      %2741 = vmatprep.subr.mxu0 0.0
      %2742 = vmatpush1.msra.mxu0 0.0
      %2743 = vmatprep.subr.mxu0 0.0
      %2744 = vmatpush1.msra.mxu0 0.0
      %2745 = vmatprep.subr.mxu0 0.0
      %2746 = vmatpush1.msra.mxu0 %v2713
      %2747 = vmatprep.subr.mxu0 0.0
      %2748 = vmatpush2.msra.mxu0 0.0
      %2749 = vmatprep.subr.mxu0 0.0
      %2750 = vmatpush2.msra.mxu0 0.0
      %2751 = vmatprep.subr.mxu0 0.0
      %2752 = vmatpush2.msra.mxu0 0.0
      %2753 = vmatprep.subr.mxu0 0.0
      %2754 = vmatpush2.msra.mxu0 0.0
      %2755 = vmatprep.subr.mxu0 0.0
      %2756 = vmatpush2.msra.mxu0 0.0
      %2757 = vmatprep.subr.mxu0 0.0
      %2758 = vmatpush2.msra.mxu0 0.0
      %2759 = vmatprep.subr.mxu0 0.0
      %2760 = vmatpush2.msra.mxu0 0.0
      %2761 = vmatprep.subr.mxu0 0.0
      %2762 = vmatpush2.msra.mxu0 0.0
      %2763 = vmatprep.subr.mxu0 0.0
      %2764 = vmatpush2.msra.mxu0 0.0
      %2765 = vmatprep.subr.mxu0 0.0
      %2766 = vmatpush2.msra.mxu0 0.0
      %2767 = vmatprep.subr.mxu0 0.0
      %2768 = vmatpush2.msra.mxu0 0.0
      %2769 = vmatprep.subr.mxu0 0.0
      %2770 = vmatpush2.msra.mxu0 0.0
      %2771 = vmatprep.subr.mxu0 0.0
      %2772 = vmatpush2.msra.mxu0 0.0
      %2773 = vmatprep.subr.mxu0 0.0
      %2774 = vmatpush2.msra.mxu0 0.0
      %2775 = vmatprep.subr.mxu0 0.0
      %2776 = vmatpush2.msra.mxu0 0.0
      %2777 = vmatprep.subr.mxu0 0.0
      %2778 = vmatpush2.msra.mxu0 0.0
      %2779 = vmatprep.mubr.f32.mxu0 0.0
      %2780 = vmatmul.mubr.f32.gmra.mxu0 %v1034
      %v2781 = vpop.f32.mrf.mxu0
      %v2782 = vadd.f32 0.0, %v2781
      %v2783 = vpop.f32.mrf.mxu0
      %2784 = vmatprep.mubr.f32.mxu0 0.0
      %2785 = vmatmul.mubr.f32.gmra.mxu0 %v1036
      %v2786 = vpop.f32.mrf.mxu0
      %v2787 = vadd.f32 0.0, %v2786
      %v2788 = vpop.f32.mrf.mxu0
      %2789 = vmatprep.mubr.f32.mxu0 0.0
      %2790 = vmatmul.mubr.f32.gmra.mxu0 %v1038
      %v2791 = vpop.f32.mrf.mxu0
      %v2792 = vadd.f32 0.0, %v2791
      %v2793 = vpop.f32.mrf.mxu0
      %2794 = vmatprep.mubr.f32.mxu0 0.0
      %2795 = vmatmul.mubr.f32.gmra.mxu0 %v1040
      %v2796 = vpop.f32.mrf.mxu0
      %v2797 = vadd.f32 0.0, %v2796
      %v2798 = vpop.f32.mrf.mxu0
      %2799 = vmatprep.mubr.f32.mxu0 0.0
      %2800 = vmatmul.mubr.f32.gmra.mxu0 %v1042
      %v2801 = vpop.f32.mrf.mxu0
      %v2802 = vadd.f32 0.0, %v2801
      %v2803 = vpop.f32.mrf.mxu0
      %2804 = vmatprep.mubr.f32.mxu0 0.0
      %2805 = vmatmul.mubr.f32.gmra.mxu0 %v1044
      %v2806 = vpop.f32.mrf.mxu0
      %v2807 = vadd.f32 0.0, %v2806
      %v2808 = vpop.f32.mrf.mxu0
      %2809 = vmatprep.mubr.f32.mxu0 0.0
      %2810 = vmatmul.mubr.f32.gmra.mxu0 %v1046
      %v2811 = vpop.f32.mrf.mxu0
      %v2812 = vadd.f32 0.0, %v2811
      %v2813 = vpop.f32.mrf.mxu0
      %2814 = vmatprep.mubr.f32.mxu0 0.0
      %2815 = vmatmul.mubr.f32.gmra.mxu0 %v1048
      %v2816 = vpop.f32.mrf.mxu0
      %v2817 = vadd.f32 0.0, %v2816
      %v2818 = vpop.f32.mrf.mxu0
      %2819 = vmatprep.mubr.f32.mxu0 0.0
      %2820 = vmatmul.mubr.f32.gmra.mxu0 %v1050
      %v2821 = vpop.f32.mrf.mxu0
      %v2822 = vadd.f32 0.0, %v2821
      %v2823 = vpop.f32.mrf.mxu0
      %2824 = vmatprep.mubr.f32.mxu0 0.0
      %2825 = vmatmul.mubr.f32.gmra.mxu0 %v1052
      %v2826 = vpop.f32.mrf.mxu0
      %v2827 = vadd.f32 0.0, %v2826
      %v2828 = vpop.f32.mrf.mxu0
      %2829 = vmatprep.mubr.f32.mxu0 0.0
      %2830 = vmatmul.mubr.f32.gmra.mxu0 %v1054
      %v2831 = vpop.f32.mrf.mxu0
      %v2832 = vadd.f32 0.0, %v2831
      %v2833 = vpop.f32.mrf.mxu0
      %2834 = vmatprep.mubr.f32.mxu0 0.0
      %2835 = vmatmul.mubr.f32.gmra.mxu0 %v1056
      %v2836 = vpop.f32.mrf.mxu0
      %v2837 = vadd.f32 0.0, %v2836
      %v2838 = vpop.f32.mrf.mxu0
      %2839 = vmatprep.mubr.f32.mxu0 0.0
      %2840 = vmatmul.mubr.f32.gmra.mxu0 %v1058
      %v2841 = vpop.f32.mrf.mxu0
      %v2842 = vadd.f32 0.0, %v2841
      %v2843 = vpop.f32.mrf.mxu0
      %2844 = vmatprep.mubr.f32.mxu0 0.0
      %2845 = vmatmul.mubr.f32.gmra.mxu0 %v1060
      %v2846 = vpop.f32.mrf.mxu0
      %v2847 = vadd.f32 0.0, %v2846
      %v2848 = vpop.f32.mrf.mxu0
      %2849 = vmatprep.mubr.f32.mxu0 0.0
      %2850 = vmatmul.mubr.f32.gmra.mxu0 %v1062
      %v2851 = vpop.f32.mrf.mxu0
      %v2852 = vadd.f32 0.0, %v2851
      %v2853 = vpop.f32.mrf.mxu0
      %2854 = vmatprep.mubr.f32.mxu0 0.0
      %2855 = vmatmul.mubr.f32.gmra.mxu0 %v1064
      %v2856 = vpop.f32.mrf.mxu0
      %v2857 = vadd.f32 0.0, %v2856
      %v2858 = vpop.f32.mrf.mxu0
      %2859 = vmatprep.mubr.f32.mxu0 0.0
      %2860 = vmatmul.mubr.f32.gmra.mxu0 %v1066
      %v2861 = vpop.f32.mrf.mxu0
      %v2862 = vadd.f32 0.0, %v2861
      %v2863 = vpop.f32.mrf.mxu0
      %2864 = vmatprep.mubr.f32.mxu0 0.0
      %2865 = vmatmul.mubr.f32.gmra.mxu0 %v1068
      %v2866 = vpop.f32.mrf.mxu0
      %v2867 = vadd.f32 0.0, %v2866
      %v2868 = vpop.f32.mrf.mxu0
      %2869 = vmatprep.mubr.f32.mxu0 0.0
      %2870 = vmatmul.mubr.f32.gmra.mxu0 %v1070
      %v2871 = vpop.f32.mrf.mxu0
      %v2872 = vadd.f32 0.0, %v2871
      %v2873 = vpop.f32.mrf.mxu0
      %2874 = vmatprep.mubr.f32.mxu0 0.0
      %2875 = vmatmul.mubr.f32.gmra.mxu0 %v1072
      %v2876 = vpop.f32.mrf.mxu0
      %v2877 = vadd.f32 0.0, %v2876
      %v2878 = vpop.f32.mrf.mxu0
      %2879 = vmatprep.mubr.f32.mxu0 0.0
      %2880 = vmatmul.mubr.f32.gmra.mxu0 %v1074
      %v2881 = vpop.f32.mrf.mxu0
      %v2882 = vadd.f32 0.0, %v2881
      %v2883 = vpop.f32.mrf.mxu0
      %2884 = vmatprep.mubr.f32.mxu0 0.0
      %2885 = vmatmul.mubr.f32.gmra.mxu0 %v1076
      %v2886 = vpop.f32.mrf.mxu0
      %v2887 = vadd.f32 0.0, %v2886
      %v2888 = vpop.f32.mrf.mxu0
      %2889 = vmatprep.mubr.f32.mxu0 0.0
      %2890 = vmatmul.mubr.f32.gmra.mxu0 %v1078
      %v2891 = vpop.f32.mrf.mxu0
      %v2892 = vadd.f32 0.0, %v2891
      %v2893 = vpop.f32.mrf.mxu0
      %2894 = vmatprep.mubr.f32.mxu0 0.0
      %2895 = vmatmul.mubr.f32.gmra.mxu0 %v1080
      %v2896 = vpop.f32.mrf.mxu0
      %v2897 = vadd.f32 0.0, %v2896
      %v2898 = vpop.f32.mrf.mxu0
      %2899 = vmatprep.mubr.f32.mxu0 0.0
      %2900 = vmatmul.mubr.f32.gmra.mxu0 %v1082
      %v2901 = vpop.f32.mrf.mxu0
      %v2902 = vadd.f32 0.0, %v2901
      %v2903 = vpop.f32.mrf.mxu0
      %2904 = vmatprep.mubr.f32.mxu0 0.0
      %2905 = vmatmul.mubr.f32.gmra.mxu0 %v1084
      %v2906 = vpop.f32.mrf.mxu0
      %v2907 = vadd.f32 0.0, %v2906
      %v2908 = vpop.f32.mrf.mxu0
      %2909 = vmatprep.mubr.f32.mxu0 0.0
      %2910 = vmatmul.mubr.f32.gmra.mxu0 %v1086
      %v2911 = vpop.f32.mrf.mxu0
      %v2912 = vadd.f32 0.0, %v2911
      %v2913 = vpop.f32.mrf.mxu0
      %2914 = vmatprep.mubr.f32.mxu0 0.0
      %2915 = vmatmul.mubr.f32.gmra.mxu0 %v1088
      %v2916 = vpop.f32.mrf.mxu0
      %v2917 = vadd.f32 0.0, %v2916
      %v2918 = vpop.f32.mrf.mxu0
      %2919 = vmatprep.mubr.f32.mxu0 0.0
      %2920 = vmatmul.mubr.f32.gmra.mxu0 %v1897
      %v2921 = vpop.f32.mrf.mxu0
      %v2922 = vadd.f32 0.0, %v2921
      %v2923 = vpop.f32.mrf.mxu0
      %2924 = vmatprep.mubr.f32.mxu0 0.0
      %2925 = vmatmul.mubr.f32.gmra.mxu0 %v1899
      %v2926 = vpop.f32.mrf.mxu0
      %v2927 = vadd.f32 0.0, %v2926
      %v2928 = vpop.f32.mrf.mxu0
      %2929 = vmatprep.mubr.f32.mxu0 0.0
      %2930 = vmatmul.mubr.f32.gmra.mxu0 %v2708
      %v2931 = vpop.f32.mrf.mxu0
      %v2932 = vadd.f32 0.0, %v2931
      %v2933 = vpop.f32.mrf.mxu0
      %2934 = vmatprep.mubr.f32.mxu0 0.0
      %2935 = vmatmul.mubr.f32.gmra.mxu0 %v2710
      %v2936 = vpop.f32.mrf.mxu0
      %v2937 = vadd.f32 0.0, %v2936
      %v2938 = vpop.f32.mrf.mxu0
      %2939 = vdwg.mxu0
      %v2940 = vadd.f32 %v2669, %v2782
      %v2941 = vadd.f32 %v2670, %v2787
      %v2942 = vadd.f32 %v2671, %v2792
      %v2943 = vadd.f32 %v2672, %v2797
      %v2944 = vadd.f32 %v2673, %v2802
      %v2945 = vadd.f32 %v2674, %v2807
      %v2946 = vadd.f32 %v2675, %v2812
      %v2947 = vadd.f32 %v2676, %v2817
      %v2948 = vadd.f32 %v2677, %v2822
      %v2949 = vadd.f32 %v2678, %v2827
      %v2950 = vadd.f32 %v2679, %v2832
      %v2951 = vadd.f32 %v2680, %v2837
      %v2952 = vadd.f32 %v2681, %v2842
      %v2953 = vadd.f32 %v2682, %v2847
      %v2954 = vadd.f32 %v2683, %v2852
      %v2955 = vadd.f32 %v2684, %v2857
      %v2956 = vadd.f32 %v2685, %v2862
      %v2957 = vadd.f32 %v2686, %v2867
      %v2958 = vadd.f32 %v2687, %v2872
      %v2959 = vadd.f32 %v2688, %v2877
      %v2960 = vadd.f32 %v2689, %v2882
      %v2961 = vadd.f32 %v2690, %v2887
      %v2962 = vadd.f32 %v2691, %v2892
      %v2963 = vadd.f32 %v2692, %v2897
      %v2964 = vadd.f32 %v2693, %v2902
      %v2965 = vadd.f32 %v2694, %v2907
      %v2966 = vadd.f32 %v2695, %v2912
      %v2967 = vadd.f32 %v2696, %v2917
      %v2968 = vadd.f32 %v2697, %v2922
      %v2969 = vadd.f32 %v2698, %v2927
      %v2970 = vadd.f32 %v2699, %v2932
      %v2971 = vadd.f32 %v2700, %v2937
      %v2972 = vld [vmem:[%s2] sm:$0x1]
      %v2974 = vlaneseq
      %v2975 = vshrl.u32 %v2974, 7
      %v2976 = vsub.s32 0, %v2975
      %v2977 = vrot.slane %v2972, %v2976
      %v2979 = vadd.f32 %v2940, %v2977
      %v2980 = vadd.f32 %v2941, %v2977
      %v2981 = vadd.f32 %v2942, %v2977
      %v2982 = vadd.f32 %v2943, %v2977
      %v2983 = vadd.f32 %v2944, %v2977
      %v2984 = vadd.f32 %v2945, %v2977
      %v2985 = vadd.f32 %v2946, %v2977
      %v2986 = vadd.f32 %v2947, %v2977
      %v2987 = vadd.f32 %v2948, %v2977
      %v2988 = vadd.f32 %v2949, %v2977
      %v2989 = vadd.f32 %v2950, %v2977
      %v2990 = vadd.f32 %v2951, %v2977
      %v2991 = vadd.f32 %v2952, %v2977
      %v2992 = vadd.f32 %v2953, %v2977
      %v2993 = vadd.f32 %v2954, %v2977
      %v2994 = vadd.f32 %v2955, %v2977
      %v2995 = vadd.f32 %v2956, %v2977
      %v2996 = vadd.f32 %v2957, %v2977
      %v2997 = vadd.f32 %v2958, %v2977
      %v2998 = vadd.f32 %v2959, %v2977
      %v2999 = vadd.f32 %v2960, %v2977
      %v3000 = vadd.f32 %v2961, %v2977
      %v3001 = vadd.f32 %v2962, %v2977
      %v3002 = vadd.f32 %v2963, %v2977
      %v3003 = vadd.f32 %v2964, %v2977
      %v3004 = vadd.f32 %v2965, %v2977
      %v3005 = vadd.f32 %v2966, %v2977
      %v3006 = vadd.f32 %v2967, %v2977
      %v3007 = vadd.f32 %v2968, %v2977
      %v3008 = vadd.f32 %v2969, %v2977
      %v3009 = vadd.f32 %v2970, %v2977
      %v3010 = vadd.f32 %v2971, %v2977
      %v3011 = vmax.f32 %v2979, 0.0
      %v3012 = vmax.f32 %v2980, 0.0
      %v3013 = vmax.f32 %v2981, 0.0
      %v3014 = vmax.f32 %v2982, 0.0
      %v3015 = vmax.f32 %v2983, 0.0
      %v3016 = vmax.f32 %v2984, 0.0
      %v3017 = vmax.f32 %v2985, 0.0
      %v3018 = vmax.f32 %v2986, 0.0
      %v3019 = vmax.f32 %v2987, 0.0
      %v3020 = vmax.f32 %v2988, 0.0
      %v3021 = vmax.f32 %v2989, 0.0
      %v3022 = vmax.f32 %v2990, 0.0
      %v3023 = vmax.f32 %v2991, 0.0
      %v3024 = vmax.f32 %v2992, 0.0
      %v3025 = vmax.f32 %v2993, 0.0
      %v3026 = vmax.f32 %v2994, 0.0
      %v3027 = vmax.f32 %v2995, 0.0
      %v3028 = vmax.f32 %v2996, 0.0
      %v3029 = vmax.f32 %v2997, 0.0
      %v3030 = vmax.f32 %v2998, 0.0
      %v3031 = vmax.f32 %v2999, 0.0
      %v3032 = vmax.f32 %v3000, 0.0
      %v3033 = vmax.f32 %v3001, 0.0
      %v3034 = vmax.f32 %v3002, 0.0
      %v3035 = vmax.f32 %v3003, 0.0
      %v3036 = vmax.f32 %v3004, 0.0
      %v3037 = vmax.f32 %v3005, 0.0
      %v3038 = vmax.f32 %v3006, 0.0
      %v3039 = vmax.f32 %v3007, 0.0
      %v3040 = vmax.f32 %v3008, 0.0
      %v3041 = vmax.f32 %v3009, 0.0
      %v3042 = vmax.f32 %v3010, 0.0
      %vm3043 = vcmask 523264
      %3044 = vst.msk [vmem:[%s170] sm:$0xff] %vm3043, %v3011
      %3045 = vst.msk [vmem:[%s170 + $0x8] sm:$0xff] %vm3043, %v3012
      %3046 = vst.msk [vmem:[%s170 + $0x10] sm:$0xff] %vm3043, %v3013
      %3047 = vst.msk [vmem:[%s170 + $0x18] sm:$0xff] %vm3043, %v3014
      %3048 = vst.msk [vmem:[%s170 + $0x20] sm:$0xff] %vm3043, %v3015
      %3049 = vst.msk [vmem:[%s170 + $0x28] sm:$0xff] %vm3043, %v3016
      %3050 = vst.msk [vmem:[%s170 + $0x30] sm:$0xff] %vm3043, %v3017
      %3051 = vst.msk [vmem:[%s170 + $0x38] sm:$0xff] %vm3043, %v3018
      %3052 = vst.msk [vmem:[%s170 + $0x40] sm:$0xff] %vm3043, %v3019
      %3053 = vst.msk [vmem:[%s170 + $0x48] sm:$0xff] %vm3043, %v3020
      %3054 = vst.msk [vmem:[%s170 + $0x50] sm:$0xff] %vm3043, %v3021
      %3055 = vst.msk [vmem:[%s170 + $0x58] sm:$0xff] %vm3043, %v3022
      %3056 = vst.msk [vmem:[%s170 + $0x60] sm:$0xff] %vm3043, %v3023
      %3057 = vst.msk [vmem:[%s170 + $0x68] sm:$0xff] %vm3043, %v3024
      %3058 = vst.msk [vmem:[%s170 + $0x70] sm:$0xff] %vm3043, %v3025
      %3059 = vst.msk [vmem:[%s170 + $0x78] sm:$0xff] %vm3043, %v3026
      %3060 = vst.msk [vmem:[%s170 + $0x80] sm:$0xff] %vm3043, %v3027
      %3061 = vst.msk [vmem:[%s170 + $0x88] sm:$0xff] %vm3043, %v3028
      %3062 = vst.msk [vmem:[%s170 + $0x90] sm:$0xff] %vm3043, %v3029
      %3063 = vst.msk [vmem:[%s170 + $0x98] sm:$0xff] %vm3043, %v3030
      %3064 = vst.msk [vmem:[%s170 + $0xa0] sm:$0xff] %vm3043, %v3031
      %3065 = vst.msk [vmem:[%s170 + $0xa8] sm:$0xff] %vm3043, %v3032
      %3066 = vst.msk [vmem:[%s170 + $0xb0] sm:$0xff] %vm3043, %v3033
      %3067 = vst.msk [vmem:[%s170 + $0xb8] sm:$0xff] %vm3043, %v3034
      %3068 = vst.msk [vmem:[%s170 + $0xc0] sm:$0xff] %vm3043, %v3035
      %3069 = vst.msk [vmem:[%s170 + $0xc8] sm:$0xff] %vm3043, %v3036
      %3070 = vst.msk [vmem:[%s170 + $0xd0] sm:$0xff] %vm3043, %v3037
      %3071 = vst.msk [vmem:[%s170 + $0xd8] sm:$0xff] %vm3043, %v3038
      %3072 = vst.msk [vmem:[%s170 + $0xe0] sm:$0xff] %vm3043, %v3039
      %3073 = vst.msk [vmem:[%s170 + $0xe8] sm:$0xff] %vm3043, %v3040
      %3074 = vst.msk [vmem:[%s170 + $0xf0] sm:$0xff] %vm3043, %v3041
      %3075 = vst.msk [vmem:[%s170 + $0xf8] sm:$0xff] %vm3043, %v3042
      %p3076 = scmp.lt.s32.totalorder %s14, 1
      %s3077 = scalar_select %p3076, %s14, 1
      %s3078 = smul.addr %s3077, 32
      %s3079 = smul.addr %s3078, 8
      %s3080 = scalar_lea.vmem %s3, %s3079
      // Predicated region
      $region33: #{_lambda_.4} parent=31 // pred_check
        %p3081 = pneg %p100
      $region34: #{_lambda_.4} parent=31 // pred_check_branch
        %3083 = sbr.rel (%p3081) target = $region36
      $region35: #{_lambda_.4} parent=31 // pred_region
        _
      $region36: #{_lambda_.4} parent=31 // pred_fallthru
        _
    $region32: #{_lambda_.4} parent=5 // pred_fallthru
      _
    %p3084 = scmp.le.s32.totalorder 2, %s9
    // Predicated region
    $region37: #{_lambda_.4} parent=5 // pred_check
      %p3085 = pneg %p3084
    $region38: #{_lambda_.4} parent=5 // pred_check_branch
      %3087 = sbr.rel (%p3085) target = $region40
    $region39: #{_lambda_.4} parent=5 // pred_region
      %s3088 = ssub.s32 %s9, 2
      // Predicated region
      $region41: #{_lambda_.4} parent=39 // pred_check
        %p3089 = pneg %p106
      $region42: #{_lambda_.4} parent=39 // pred_check_branch
        %3091 = sbr.rel (%p3089) target = $region44
      $region43: #{_lambda_.4} parent=39 // pred_region
        %p3092 = scmp.lt.s32.totalorder %s15, 1
        %s3093 = scalar_select %p3092, %s15, 1
        %s3094 = smul.addr %s3093, 32
        %s3095 = smul.addr %s3094, 8
        %s3096 = scalar_lea.vmem %s3, %s3095
      $region44: #{_lambda_.4} parent=39 // pred_fallthru
        _
    $region40: #{_lambda_.4} parent=5 // pred_fallthru
      _
  $region6: #{_lambda_.4} parent=0 // loop_footer
    %s13 = sadd.s32 1, %s9
  $region7: #{_lambda_.4} parent=0 // loop_footer_branch
    %8 = sbr.rel target = $region3
  $region8: #{_lambda_.4} parent=0 // loop_exit
    _

// kernel: _lambda_.5
$region0: #{_lambda_.5}
  #allocation0 [shape = 'u32[]', space=smem, size = 0x4, offset = 0x4, fixed_abs, tag = 'smem constant byte address 0x4 - core index']
  #allocation1 [shape = 'u32[144,128]{1,0:T(1,128)}', space=vmem, size = 0x12000, scoped, tag = 'internal scratch']
  %s0 = inlined_call_operand.vmem [shape: f32[2,18,18,64], index: 0, kind: input, shape index: {}]
  %s1 = inlined_call_operand.vmem [shape: f32[9,64,32], index: 1, kind: input, shape index: {}]
  %s2 = inlined_call_operand.vmem [shape: f32[1,32], index: 2, kind: input, shape index: {}]
  %s3 = inlined_call_operand.vmem [shape: f32[32,3], index: 3, kind: input, shape index: {}]
  %s4 = inlined_call_operand.vmem [shape: f32[1,3], index: 4, kind: input, shape index: {}]
  %s5 = inlined_call_operand.vmem [shape: f32[2,16,16,3], index: 5, kind: output, shape index: {}]
  %s6 = sld [smem:[#allocation0]]
  $region53: #{_lambda_.5} parent=0
    _
  %s8 = ssub.s32 1, %s6
  %s9 = scalar_select 0, %s8, %s6
  loop: start=0, step=1, limit=4
  $region2: #{_lambda_.5} parent=0 // loop_pre_header
    _
  $region3: #{_lambda_.5} parent=0 // loop_header
    %s11 = sphi 0, %s15
    %p12 = scmp.ge.s32.totalorder %s11, 4
    %s21 = sphi 0, %s23
    %s24 = sphi 0, %s21
    %s25 = sphi 0, %s24
    %s41 = sphi 0, %s25
    %s45 = sphi 0, %s45
    %s47 = sphi 0, %s45
    %s48 = sphi 0, %s47
    %s62 = sphi 0, %s48
    %s66 = sphi 0, %s66
    %s68 = sphi 0, %s66
    %s69 = sphi 0, %s68
    %s83 = sphi 0, %s69
    %s87 = sphi 0, %s87
    %s89 = sphi 0, %s87
    %s90 = sphi 0, %s89
    %s104 = sphi 0, %s90
    %s108 = sphi 0, %s108
    %s110 = sphi 0, %s108
    %s111 = sphi 0, %s110
    %s125 = sphi 0, %s111
    %s131 = sphi 0, %s133
    %s134 = sphi 0, %s131
    %s135 = sphi 0, %s134
    %s151 = sphi 0, %s135
  $region4: #{_lambda_.5} parent=0 // loop_header_branch
    %14 = sbr.rel (%p12) target = $region8
  $region5: #{_lambda_.5} parent=0 // loop_body
    %s16 = ssub.s32 %s11, 1
    %s17 = ssub.s32 %s11, 2
    %s18 = sadd.s32 %s11, 1
    %s19 = ssub.s32 %s11, %s18
    %p20 = scmp.eq.s32.totalorder %s19, 0
    %s22 = sadd.s32 %s21, 1
    %s23 = scalar_select %p20, %s21, %s22
    %p26 = pneg %p20
    %p27 = scmp.eq.s32.totalorder %s11, 1
    %p28 = por %p26, %p27
    %p29 = scmp.ne.s32.totalorder %s21, %s24
    %p30 = scmp.eq.s32.totalorder %s11, 0
    %p31 = por %p29, %p30
    %p32 = scmp.ne.s32.totalorder %s21, %s24
    %p33 = scmp.eq.s32.totalorder %s16, 1
    %p34 = por %p32, %p33
    %p35 = scmp.ne.s32.totalorder %s24, %s25
    %p36 = scmp.eq.s32.totalorder %s16, 0
    %p37 = por %p35, %p36
    %p38 = scmp.ne.s32.totalorder %s24, %s25
    %p39 = scmp.eq.s32.totalorder %s17, 1
    %p40 = por %p38, %p39
    %p42 = scmp.ne.s32.totalorder %s25, %s41
    %p43 = scmp.eq.s32.totalorder %s17, 0
    %p44 = por %p42, %p43
    %s46 = sadd.s32 %s45, 1
    %p49 = scmp.eq.s32.totalorder %s11, 1
    %p50 = scmp.ne.s32.totalorder %s45, %s47
    %p51 = scmp.eq.s32.totalorder %s11, 0
    %p52 = por %p50, %p51
    %p53 = scmp.ne.s32.totalorder %s45, %s47
    %p54 = scmp.eq.s32.totalorder %s16, 1
    %p55 = por %p53, %p54
    %p56 = scmp.ne.s32.totalorder %s47, %s48
    %p57 = scmp.eq.s32.totalorder %s16, 0
    %p58 = por %p56, %p57
    %p59 = scmp.ne.s32.totalorder %s47, %s48
    %p60 = scmp.eq.s32.totalorder %s17, 1
    %p61 = por %p59, %p60
    %p63 = scmp.ne.s32.totalorder %s48, %s62
    %p64 = scmp.eq.s32.totalorder %s17, 0
    %p65 = por %p63, %p64
    %s67 = sadd.s32 %s66, 1
    %p70 = scmp.eq.s32.totalorder %s11, 1
    %p71 = scmp.ne.s32.totalorder %s66, %s68
    %p72 = scmp.eq.s32.totalorder %s11, 0
    %p73 = por %p71, %p72
    %p74 = scmp.ne.s32.totalorder %s66, %s68
    %p75 = scmp.eq.s32.totalorder %s16, 1
    %p76 = por %p74, %p75
    %p77 = scmp.ne.s32.totalorder %s68, %s69
    %p78 = scmp.eq.s32.totalorder %s16, 0
    %p79 = por %p77, %p78
    %p80 = scmp.ne.s32.totalorder %s68, %s69
    %p81 = scmp.eq.s32.totalorder %s17, 1
    %p82 = por %p80, %p81
    %p84 = scmp.ne.s32.totalorder %s69, %s83
    %p85 = scmp.eq.s32.totalorder %s17, 0
    %p86 = por %p84, %p85
    %s88 = sadd.s32 %s87, 1
    %p91 = scmp.eq.s32.totalorder %s11, 1
    %p92 = scmp.ne.s32.totalorder %s87, %s89
    %p93 = scmp.eq.s32.totalorder %s11, 0
    %p94 = por %p92, %p93
    %p95 = scmp.ne.s32.totalorder %s87, %s89
    %p96 = scmp.eq.s32.totalorder %s16, 1
    %p97 = por %p95, %p96
    %p98 = scmp.ne.s32.totalorder %s89, %s90
    %p99 = scmp.eq.s32.totalorder %s16, 0
    %p100 = por %p98, %p99
    %p101 = scmp.ne.s32.totalorder %s89, %s90
    %p102 = scmp.eq.s32.totalorder %s17, 1
    %p103 = por %p101, %p102
    %p105 = scmp.ne.s32.totalorder %s90, %s104
    %p106 = scmp.eq.s32.totalorder %s17, 0
    %p107 = por %p105, %p106
    %s109 = sadd.s32 %s108, 1
    %p112 = scmp.eq.s32.totalorder %s11, 1
    %p113 = scmp.ne.s32.totalorder %s108, %s110
    %p114 = scmp.eq.s32.totalorder %s11, 0
    %p115 = por %p113, %p114
    %p116 = scmp.ne.s32.totalorder %s108, %s110
    %p117 = scmp.eq.s32.totalorder %s16, 1
    %p118 = por %p116, %p117
    %p119 = scmp.ne.s32.totalorder %s110, %s111
    %p120 = scmp.eq.s32.totalorder %s16, 0
    %p121 = por %p119, %p120
    %p122 = scmp.ne.s32.totalorder %s110, %s111
    %p123 = scmp.eq.s32.totalorder %s17, 1
    %p124 = por %p122, %p123
    %p126 = scmp.ne.s32.totalorder %s111, %s125
    %p127 = scmp.eq.s32.totalorder %s17, 0
    %p128 = por %p126, %p127
    %s129 = ssub.s32 %s11, %s18
    %p130 = scmp.eq.s32.totalorder %s129, 0
    %s132 = sadd.s32 %s131, 1
    %s133 = scalar_select %p130, %s131, %s132
    %p136 = pneg %p130
    %p137 = scmp.eq.s32.totalorder %s11, 1
    %p138 = por %p136, %p137
    %p139 = scmp.ne.s32.totalorder %s131, %s134
    %p140 = scmp.eq.s32.totalorder %s11, 0
    %p141 = por %p139, %p140
    %p142 = scmp.ne.s32.totalorder %s131, %s134
    %p143 = scmp.eq.s32.totalorder %s16, 1
    %p144 = por %p142, %p143
    %p145 = scmp.ne.s32.totalorder %s134, %s135
    %p146 = scmp.eq.s32.totalorder %s16, 0
    %p147 = por %p145, %p146
    %p148 = scmp.ne.s32.totalorder %s134, %s135
    %p149 = scmp.eq.s32.totalorder %s17, 1
    %p150 = por %p148, %p149
    %p152 = scmp.ne.s32.totalorder %s135, %s151
    %p153 = scmp.eq.s32.totalorder %s17, 0
    %p154 = por %p152, %p153
    %p155 = scmp.le.s32.totalorder 1, %s11
    %p156 = scmp.lt.s32.totalorder %s11, 3
    %p157 = pnand %p155, %p156
    %p158 = pneg %p157
    // Predicated region
    $region9: #{_lambda_.5} parent=5 // pred_check
      _
    $region10: #{_lambda_.5} parent=5 // pred_check_branch
      %160 = sbr.rel (%p157) target = $region12
    $region11: #{_lambda_.5} parent=5 // pred_region
      %s161 = ssub.s32 %s11, 1
      // Predicated region
      $region13: #{_lambda_.5} parent=11 // pred_check
        %p162 = pneg %p58
      $region14: #{_lambda_.5} parent=11 // pred_check_branch
        %164 = sbr.rel (%p162) target = $region16
      $region15: #{_lambda_.5} parent=11 // pred_region
        _
      $region16: #{_lambda_.5} parent=11 // pred_fallthru
        _
      // Predicated region
      $region17: #{_lambda_.5} parent=11 // pred_check
        %p165 = pneg %p79
      $region18: #{_lambda_.5} parent=11 // pred_check_branch
        %167 = sbr.rel (%p165) target = $region20
      $region19: #{_lambda_.5} parent=11 // pred_region
        _
      $region20: #{_lambda_.5} parent=11 // pred_fallthru
        _
      // Predicated region
      $region21: #{_lambda_.5} parent=11 // pred_check
        %p168 = pneg %p100
      $region22: #{_lambda_.5} parent=11 // pred_check_branch
        %170 = sbr.rel (%p168) target = $region24
      $region23: #{_lambda_.5} parent=11 // pred_region
        _
      $region24: #{_lambda_.5} parent=11 // pred_fallthru
        _
      // Predicated region
      $region25: #{_lambda_.5} parent=11 // pred_check
        %p171 = pneg %p121
      $region26: #{_lambda_.5} parent=11 // pred_check_branch
        %173 = sbr.rel (%p171) target = $region28
      $region27: #{_lambda_.5} parent=11 // pred_region
        _
      $region28: #{_lambda_.5} parent=11 // pred_fallthru
        _
    $region12: #{_lambda_.5} parent=5 // pred_fallthru
      _
    %p174 = scmp.lt.s32.totalorder %s11, 2
    // Predicated region
    $region29: #{_lambda_.5} parent=5 // pred_check
      %p175 = pneg %p174
    $region30: #{_lambda_.5} parent=5 // pred_check_branch
      %177 = sbr.rel (%p175) target = $region32
    $region31: #{_lambda_.5} parent=5 // pred_region
      // Predicated region
      $region33: #{_lambda_.5} parent=31 // pred_check
        %p178 = pneg %p31
      $region34: #{_lambda_.5} parent=31 // pred_check_branch
        %180 = sbr.rel (%p178) target = $region36
      $region35: #{_lambda_.5} parent=31 // pred_region
        %p181 = scmp.lt.s32.totalorder %s11, 1
        %s182 = scalar_select %p181, %s11, 1
        %s183 = smul.addr %s182, 54
        %s184 = smul.addr %s183, 8
        %s185 = scalar_lea.vmem %s0, %s184
      $region36: #{_lambda_.5} parent=31 // pred_fallthru
        _
    $region32: #{_lambda_.5} parent=5 // pred_fallthru
      _
    %p186 = scmp.le.s32.totalorder 1, %s11
    %p187 = scmp.lt.s32.totalorder %s11, 3
    %p188 = pnand %p186, %p187
    %p189 = pneg %p188
    // Predicated region
    $region37: #{_lambda_.5} parent=5 // pred_check
      _
    $region38: #{_lambda_.5} parent=5 // pred_check_branch
      %191 = sbr.rel (%p188) target = $region40
    $region39: #{_lambda_.5} parent=5 // pred_region
      %s192 = ssub.s32 %s11, 1
      %p193 = scmp.lt.s32.totalorder %s16, 1
      %s194 = scalar_select %p193, %s16, 1
      %s195 = smul.addr %s194, 54
      %s196 = smul.addr %s195, 8
      %s197 = scalar_lea.vmem %s0, %s196
      %p198 = pneg %p37
      %p199 = pneg %p34
      %p200 = pneg %p58
      %p201 = pneg %p55
      %p202 = pneg %p79
      %p203 = pneg %p76
      %p204 = pneg %p100
      %p205 = pneg %p97
      %p206 = pneg %p121
      %p207 = pneg %p118
      %p208 = pneg %p147
      %p209 = pneg %p144
      %p210 = scmp.lt.s32.totalorder %s16, 1
      %s211 = scalar_select %p210, %s16, 1
      %s212 = smul.addr %s211, 32
      %s213 = smul.addr %s212, 8
      %s214 = scalar_lea.vmem %s5, %s213
      %p215 = scmp.lt.s32.totalorder %s16, 1
      %s216 = scalar_select %p215, %s16, 1
      %s217 = smul.addr %s216, 54
      %s218 = smul.addr %s217, 8
      %s219 = scalar_lea.vmem %s0, %s218
      %p220 = scmp.lt.s32.totalorder %s16, 1
      %s221 = scalar_select %p220, %s16, 1
      %s222 = smul.addr %s221, 32
      %s223 = smul.addr %s222, 8
      %s224 = scalar_lea.vmem %s5, %s223
      %v225 = vld [vmem:[%s219] sm:$0xff]
      %v226 = vld [vmem:[%s219 + $0x8] sm:$0xff]
      %v227 = vld [vmem:[%s219 + $0x10] sm:$0x3]
      %v228 = vld [vmem:[%s219 + $0x18] sm:$0xff]
      %v229 = vld [vmem:[%s219 + $0x20] sm:$0xff]
      %v230 = vld [vmem:[%s219 + $0x28] sm:$0x3]
      %v231 = vld [vmem:[%s219 + $0x30] sm:$0xff]
      %v232 = vld [vmem:[%s219 + $0x38] sm:$0xff]
      %v233 = vld [vmem:[%s219 + $0x40] sm:$0x3]
      %v234 = vld [vmem:[%s219 + $0x48] sm:$0xff]
      %v235 = vld [vmem:[%s219 + $0x50] sm:$0xff]
      %v236 = vld [vmem:[%s219 + $0x58] sm:$0x3]
      %v237 = vld [vmem:[%s219 + $0x60] sm:$0xff]
      %v238 = vld [vmem:[%s219 + $0x68] sm:$0xff]
      %v239 = vld [vmem:[%s219 + $0x70] sm:$0x3]
      %v240 = vld [vmem:[%s219 + $0x78] sm:$0xff]
      %v241 = vld [vmem:[%s219 + $0x80] sm:$0xff]
      %v242 = vld [vmem:[%s219 + $0x88] sm:$0x3]
      %v243 = vld [vmem:[%s219 + $0x90] sm:$0xff]
      %v244 = vld [vmem:[%s219 + $0x98] sm:$0xff]
      %v245 = vld [vmem:[%s219 + $0xa0] sm:$0x3]
      %v246 = vld [vmem:[%s219 + $0xa8] sm:$0xff]
      %v247 = vld [vmem:[%s219 + $0xb0] sm:$0xff]
      %v248 = vld [vmem:[%s219 + $0xb8] sm:$0x3]
      %v249 = vld [vmem:[%s219 + $0xc0] sm:$0xff]
      %v250 = vld [vmem:[%s219 + $0xc8] sm:$0xff]
      %v251 = vld [vmem:[%s219 + $0xd0] sm:$0x3]
      %v252 = vld [vmem:[%s219 + $0xd8] sm:$0xff]
      %v253 = vld [vmem:[%s219 + $0xe0] sm:$0xff]
      %v254 = vld [vmem:[%s219 + $0xe8] sm:$0x3]
      %v255 = vld [vmem:[%s219 + $0xf0] sm:$0xff]
      %v256 = vld [vmem:[%s219 + $0xf8] sm:$0xff]
      %v257 = vld [vmem:[%s219 + $0x100] sm:$0x3]
      %v258 = vld [vmem:[%s219 + $0x108] sm:$0xff]
      %v259 = vld [vmem:[%s219 + $0x110] sm:$0xff]
      %v260 = vld [vmem:[%s219 + $0x118] sm:$0x3]
      %v261 = vld [vmem:[%s219 + $0x120] sm:$0xff]
      %v262 = vld [vmem:[%s219 + $0x128] sm:$0xff]
      %v263 = vld [vmem:[%s219 + $0x130] sm:$0x3]
      %v264 = vld [vmem:[%s219 + $0x138] sm:$0xff]
      %v265 = vld [vmem:[%s219 + $0x140] sm:$0xff]
      %v266 = vld [vmem:[%s219 + $0x148] sm:$0x3]
      %v267 = vld [vmem:[%s219 + $0x150] sm:$0xff]
      %v268 = vld [vmem:[%s219 + $0x158] sm:$0xff]
      %v269 = vld [vmem:[%s219 + $0x160] sm:$0x3]
      %v270 = vld [vmem:[%s219 + $0x168] sm:$0xff]
      %v271 = vld [vmem:[%s219 + $0x170] sm:$0xff]
      %v272 = vld [vmem:[%s219 + $0x178] sm:$0x3]
      %v273 = vld [vmem:[%s219 + $0x180] sm:$0xff]
      %v274 = vld [vmem:[%s219 + $0x188] sm:$0xff]
      %v275 = vld [vmem:[%s219 + $0x190] sm:$0x3]
      %v276 = vld [vmem:[%s219 + $0x198] sm:$0xff]
      %v277 = vld [vmem:[%s219 + $0x1a0] sm:$0xff]
      %v278 = vld [vmem:[%s219 + $0x1a8] sm:$0x3]
      %v279 = vld [vmem:[%s1] sm:$0xff]
      %v280 = vld [vmem:[%s1 + $0x8] sm:$0xff]
      %v281 = vld [vmem:[%s1 + $0x10] sm:$0xff]
      %v282 = vld [vmem:[%s1 + $0x18] sm:$0xff]
      %v283 = vld [vmem:[%s1 + $0x20] sm:$0xff]
      %v284 = vld [vmem:[%s1 + $0x28] sm:$0xff]
      %v285 = vld [vmem:[%s1 + $0x30] sm:$0xff]
      %v286 = vld [vmem:[%s1 + $0x38] sm:$0xff]
      %vm335 = vcmask 1046528
      %v336 = vrot.slane %v225, 1
      %v337 = vrot.slane %v226, 1
      %v338 = vsel %vm335, %v336, %v337
      %v339 = vrot.slane %v227, 1
      %v340 = vsel %vm335, %v337, %v339
      %v341 = vrot.slane %v228, 1
      %v342 = vrot.slane %v229, 1
      %v343 = vsel %vm335, %v341, %v342
      %v344 = vrot.slane %v230, 1
      %v345 = vsel %vm335, %v342, %v344
      %v346 = vrot.slane %v231, 1
      %v347 = vrot.slane %v232, 1
      %v348 = vsel %vm335, %v346, %v347
      %v349 = vrot.slane %v233, 1
      %v350 = vsel %vm335, %v347, %v349
      %v351 = vrot.slane %v234, 1
      %v352 = vrot.slane %v235, 1
      %v353 = vsel %vm335, %v351, %v352
      %v354 = vrot.slane %v236, 1
      %v355 = vsel %vm335, %v352, %v354
      %v356 = vrot.slane %v237, 1
      %v357 = vrot.slane %v238, 1
      %v358 = vsel %vm335, %v356, %v357
      %v359 = vrot.slane %v239, 1
      %v360 = vsel %vm335, %v357, %v359
      %v361 = vrot.slane %v240, 1
      %v362 = vrot.slane %v241, 1
      %v363 = vsel %vm335, %v361, %v362
      %v364 = vrot.slane %v242, 1
      %v365 = vsel %vm335, %v362, %v364
      %v366 = vrot.slane %v243, 1
      %v367 = vrot.slane %v244, 1
      %v368 = vsel %vm335, %v366, %v367
      %v369 = vrot.slane %v245, 1
      %v370 = vsel %vm335, %v367, %v369
      %v371 = vrot.slane %v246, 1
      %v372 = vrot.slane %v247, 1
      %v373 = vsel %vm335, %v371, %v372
      %v374 = vrot.slane %v248, 1
      %v375 = vsel %vm335, %v372, %v374
      %v376 = vrot.slane %v249, 1
      %v377 = vrot.slane %v250, 1
      %v378 = vsel %vm335, %v376, %v377
      %v379 = vrot.slane %v251, 1
      %v380 = vsel %vm335, %v377, %v379
      %v381 = vrot.slane %v252, 1
      %v382 = vrot.slane %v253, 1
      %v383 = vsel %vm335, %v381, %v382
      %v384 = vrot.slane %v254, 1
      %v385 = vsel %vm335, %v382, %v384
      %v386 = vrot.slane %v255, 1
      %v387 = vrot.slane %v256, 1
      %v388 = vsel %vm335, %v386, %v387
      %v389 = vrot.slane %v257, 1
      %v390 = vsel %vm335, %v387, %v389
      %v391 = vrot.slane %v258, 1
      %v392 = vrot.slane %v259, 1
      %v393 = vsel %vm335, %v391, %v392
      %v394 = vrot.slane %v260, 1
      %v395 = vsel %vm335, %v392, %v394
      %v396 = vrot.slane %v261, 1
      %v397 = vrot.slane %v262, 1
      %v398 = vsel %vm335, %v396, %v397
      %v399 = vrot.slane %v263, 1
      %v400 = vsel %vm335, %v397, %v399
      %v401 = vrot.slane %v264, 1
      %v402 = vrot.slane %v265, 1
      %v403 = vsel %vm335, %v401, %v402
      %v404 = vrot.slane %v266, 1
      %v405 = vsel %vm335, %v402, %v404
      %v406 = vrot.slane %v267, 1
      %v407 = vrot.slane %v268, 1
      %v408 = vsel %vm335, %v406, %v407
      %v409 = vrot.slane %v269, 1
      %v410 = vsel %vm335, %v407, %v409
      %v411 = vrot.slane %v270, 1
      %v412 = vrot.slane %v271, 1
      %v413 = vsel %vm335, %v411, %v412
      %v414 = vrot.slane %v272, 1
      %v415 = vsel %vm335, %v412, %v414
      %s416 = scalar_lea.vmem %s1, 64
      %v417 = vld [vmem:[%s416] sm:$0xff]
      %v418 = vld [vmem:[%s416 + $0x8] sm:$0xff]
      %v419 = vld [vmem:[%s416 + $0x10] sm:$0xff]
      %v420 = vld [vmem:[%s416 + $0x18] sm:$0xff]
      %v421 = vld [vmem:[%s416 + $0x20] sm:$0xff]
      %v422 = vld [vmem:[%s416 + $0x28] sm:$0xff]
      %v423 = vld [vmem:[%s416 + $0x30] sm:$0xff]
      %v424 = vld [vmem:[%s416 + $0x38] sm:$0xff]
      %vm425 = vcmask 523264
      %v426 = vsel %vm425, %v338, 0
      %v428 = vsel %vm425, %v340, 0
      %v430 = vsel %vm425, %v343, 0
      %v432 = vsel %vm425, %v345, 0
      %v434 = vsel %vm425, %v348, 0
      %v436 = vsel %vm425, %v350, 0
      %v438 = vsel %vm425, %v353, 0
      %v440 = vsel %vm425, %v355, 0
      %v442 = vsel %vm425, %v358, 0
      %v444 = vsel %vm425, %v360, 0
      %v446 = vsel %vm425, %v363, 0
      %v448 = vsel %vm425, %v365, 0
      %v450 = vsel %vm425, %v368, 0
      %v452 = vsel %vm425, %v370, 0
      %v454 = vsel %vm425, %v373, 0
      %v456 = vsel %vm425, %v375, 0
      %v458 = vsel %vm425, %v378, 0
      %v460 = vsel %vm425, %v380, 0
      %v462 = vsel %vm425, %v383, 0
      %v464 = vsel %vm425, %v385, 0
      %v466 = vsel %vm425, %v388, 0
      %v468 = vsel %vm425, %v390, 0
      %v470 = vsel %vm425, %v393, 0
      %v472 = vsel %vm425, %v395, 0
      %v474 = vsel %vm425, %v398, 0
      %v476 = vsel %vm425, %v400, 0
      %v478 = vsel %vm425, %v403, 0
      %v480 = vsel %vm425, %v405, 0
      %v482 = vsel %vm425, %v408, 0
      %v484 = vsel %vm425, %v410, 0
      %v486 = vsel %vm425, %v413, 0
      %v488 = vsel %vm425, %v415, 0
      %490 = vmatprep.subr.mxu0 0.0
      %491 = vmatpush1.msra.mxu0 0.0
      %492 = vmatprep.subr.mxu0 0.0
      %493 = vmatpush1.msra.mxu0 0.0
      %494 = vmatprep.subr.mxu0 0.0
      %495 = vmatpush1.msra.mxu0 0.0
      %496 = vmatprep.subr.mxu0 0.0
      %497 = vmatpush1.msra.mxu0 0.0
      %498 = vmatprep.subr.mxu0 0.0
      %499 = vmatpush1.msra.mxu0 0.0
      %500 = vmatprep.subr.mxu0 0.0
      %501 = vmatpush1.msra.mxu0 0.0
      %502 = vmatprep.subr.mxu0 0.0
      %503 = vmatpush1.msra.mxu0 0.0
      %504 = vmatprep.subr.mxu0 0.0
      %505 = vmatpush1.msra.mxu0 0.0
      %506 = vmatprep.subr.mxu0 0.0
      %507 = vmatpush1.msra.mxu0 %v424
      %508 = vmatprep.subr.mxu0 0.0
      %509 = vmatpush1.msra.mxu0 %v423
      %510 = vmatprep.subr.mxu0 0.0
      %511 = vmatpush1.msra.mxu0 %v422
      %512 = vmatprep.subr.mxu0 0.0
      %513 = vmatpush1.msra.mxu0 %v421
      %514 = vmatprep.subr.mxu0 0.0
      %515 = vmatpush1.msra.mxu0 %v420
      %516 = vmatprep.subr.mxu0 0.0
      %517 = vmatpush1.msra.mxu0 %v419
      %518 = vmatprep.subr.mxu0 0.0
      %519 = vmatpush1.msra.mxu0 %v418
      %520 = vmatprep.subr.mxu0 0.0
      %521 = vmatpush1.msra.mxu0 %v417
      %522 = vmatprep.subr.mxu0 0.0
      %523 = vmatpush2.msra.mxu0 0.0
      %524 = vmatprep.subr.mxu0 0.0
      %525 = vmatpush2.msra.mxu0 0.0
      %526 = vmatprep.subr.mxu0 0.0
      %527 = vmatpush2.msra.mxu0 0.0
      %528 = vmatprep.subr.mxu0 0.0
      %529 = vmatpush2.msra.mxu0 0.0
      %530 = vmatprep.subr.mxu0 0.0
      %531 = vmatpush2.msra.mxu0 0.0
      %532 = vmatprep.subr.mxu0 0.0
      %533 = vmatpush2.msra.mxu0 0.0
      %534 = vmatprep.subr.mxu0 0.0
      %535 = vmatpush2.msra.mxu0 0.0
      %536 = vmatprep.subr.mxu0 0.0
      %537 = vmatpush2.msra.mxu0 0.0
      %538 = vmatprep.subr.mxu0 0.0
      %539 = vmatpush2.msra.mxu0 0.0
      %540 = vmatprep.subr.mxu0 0.0
      %541 = vmatpush2.msra.mxu0 0.0
      %542 = vmatprep.subr.mxu0 0.0
      %543 = vmatpush2.msra.mxu0 0.0
      %544 = vmatprep.subr.mxu0 0.0
      %545 = vmatpush2.msra.mxu0 0.0
      %546 = vmatprep.subr.mxu0 0.0
      %547 = vmatpush2.msra.mxu0 0.0
      %548 = vmatprep.subr.mxu0 0.0
      %549 = vmatpush2.msra.mxu0 0.0
      %550 = vmatprep.subr.mxu0 0.0
      %551 = vmatpush2.msra.mxu0 0.0
      %552 = vmatprep.subr.mxu0 0.0
      %553 = vmatpush2.msra.mxu0 0.0
      %554 = vmatprep.mubr.f32.mxu0 0.0
      %555 = vmatmul.mubr.f32.gmra.mxu0 %v426
      %v556 = vpop.f32.mrf.mxu0
      %v557 = vadd.f32 0.0, %v556
      %v558 = vpop.f32.mrf.mxu0
      %559 = vmatprep.mubr.f32.mxu0 0.0
      %560 = vmatmul.mubr.f32.gmra.mxu0 %v428
      %v561 = vpop.f32.mrf.mxu0
      %v562 = vadd.f32 0.0, %v561
      %v563 = vpop.f32.mrf.mxu0
      %564 = vmatprep.mubr.f32.mxu0 0.0
      %565 = vmatmul.mubr.f32.gmra.mxu0 %v430
      %v566 = vpop.f32.mrf.mxu0
      %v567 = vadd.f32 0.0, %v566
      %v568 = vpop.f32.mrf.mxu0
      %569 = vmatprep.mubr.f32.mxu0 0.0
      %570 = vmatmul.mubr.f32.gmra.mxu0 %v432
      %v571 = vpop.f32.mrf.mxu0
      %v572 = vadd.f32 0.0, %v571
      %v573 = vpop.f32.mrf.mxu0
      %574 = vmatprep.mubr.f32.mxu0 0.0
      %575 = vmatmul.mubr.f32.gmra.mxu0 %v434
      %v576 = vpop.f32.mrf.mxu0
      %v577 = vadd.f32 0.0, %v576
      %v578 = vpop.f32.mrf.mxu0
      %579 = vmatprep.mubr.f32.mxu0 0.0
      %580 = vmatmul.mubr.f32.gmra.mxu0 %v436
      %v581 = vpop.f32.mrf.mxu0
      %v582 = vadd.f32 0.0, %v581
      %v583 = vpop.f32.mrf.mxu0
      %584 = vmatprep.mubr.f32.mxu0 0.0
      %585 = vmatmul.mubr.f32.gmra.mxu0 %v438
      %v586 = vpop.f32.mrf.mxu0
      %v587 = vadd.f32 0.0, %v586
      %v588 = vpop.f32.mrf.mxu0
      %589 = vmatprep.mubr.f32.mxu0 0.0
      %590 = vmatmul.mubr.f32.gmra.mxu0 %v440
      %v591 = vpop.f32.mrf.mxu0
      %v592 = vadd.f32 0.0, %v591
      %v593 = vpop.f32.mrf.mxu0
      %594 = vmatprep.mubr.f32.mxu0 0.0
      %595 = vmatmul.mubr.f32.gmra.mxu0 %v442
      %v596 = vpop.f32.mrf.mxu0
      %v597 = vadd.f32 0.0, %v596
      %v598 = vpop.f32.mrf.mxu0
      %599 = vmatprep.mubr.f32.mxu0 0.0
      %600 = vmatmul.mubr.f32.gmra.mxu0 %v444
      %v601 = vpop.f32.mrf.mxu0
      %v602 = vadd.f32 0.0, %v601
      %v603 = vpop.f32.mrf.mxu0
      %604 = vmatprep.mubr.f32.mxu0 0.0
      %605 = vmatmul.mubr.f32.gmra.mxu0 %v446
      %v606 = vpop.f32.mrf.mxu0
      %v607 = vadd.f32 0.0, %v606
      %v608 = vpop.f32.mrf.mxu0
      %609 = vmatprep.mubr.f32.mxu0 0.0
      %610 = vmatmul.mubr.f32.gmra.mxu0 %v448
      %v611 = vpop.f32.mrf.mxu0
      %v612 = vadd.f32 0.0, %v611
      %v613 = vpop.f32.mrf.mxu0
      %614 = vmatprep.mubr.f32.mxu0 0.0
      %615 = vmatmul.mubr.f32.gmra.mxu0 %v450
      %v616 = vpop.f32.mrf.mxu0
      %v617 = vadd.f32 0.0, %v616
      %v618 = vpop.f32.mrf.mxu0
      %619 = vmatprep.mubr.f32.mxu0 0.0
      %620 = vmatmul.mubr.f32.gmra.mxu0 %v452
      %v621 = vpop.f32.mrf.mxu0
      %v622 = vadd.f32 0.0, %v621
      %v623 = vpop.f32.mrf.mxu0
      %624 = vmatprep.mubr.f32.mxu0 0.0
      %625 = vmatmul.mubr.f32.gmra.mxu0 %v454
      %v626 = vpop.f32.mrf.mxu0
      %v627 = vadd.f32 0.0, %v626
      %v628 = vpop.f32.mrf.mxu0
      %629 = vmatprep.mubr.f32.mxu0 0.0
      %630 = vmatmul.mubr.f32.gmra.mxu0 %v456
      %v631 = vpop.f32.mrf.mxu0
      %v632 = vadd.f32 0.0, %v631
      %v633 = vpop.f32.mrf.mxu0
      %634 = vmatprep.mubr.f32.mxu0 0.0
      %635 = vmatmul.mubr.f32.gmra.mxu0 %v458
      %v636 = vpop.f32.mrf.mxu0
      %v637 = vadd.f32 0.0, %v636
      %v638 = vpop.f32.mrf.mxu0
      %639 = vmatprep.mubr.f32.mxu0 0.0
      %640 = vmatmul.mubr.f32.gmra.mxu0 %v460
      %v641 = vpop.f32.mrf.mxu0
      %v642 = vadd.f32 0.0, %v641
      %v643 = vpop.f32.mrf.mxu0
      %644 = vmatprep.mubr.f32.mxu0 0.0
      %645 = vmatmul.mubr.f32.gmra.mxu0 %v462
      %v646 = vpop.f32.mrf.mxu0
      %v647 = vadd.f32 0.0, %v646
      %v648 = vpop.f32.mrf.mxu0
      %649 = vmatprep.mubr.f32.mxu0 0.0
      %650 = vmatmul.mubr.f32.gmra.mxu0 %v464
      %v651 = vpop.f32.mrf.mxu0
      %v652 = vadd.f32 0.0, %v651
      %v653 = vpop.f32.mrf.mxu0
      %654 = vmatprep.mubr.f32.mxu0 0.0
      %655 = vmatmul.mubr.f32.gmra.mxu0 %v466
      %v656 = vpop.f32.mrf.mxu0
      %v657 = vadd.f32 0.0, %v656
      %v658 = vpop.f32.mrf.mxu0
      %659 = vmatprep.mubr.f32.mxu0 0.0
      %660 = vmatmul.mubr.f32.gmra.mxu0 %v468
      %v661 = vpop.f32.mrf.mxu0
      %v662 = vadd.f32 0.0, %v661
      %v663 = vpop.f32.mrf.mxu0
      %664 = vmatprep.mubr.f32.mxu0 0.0
      %665 = vmatmul.mubr.f32.gmra.mxu0 %v470
      %v666 = vpop.f32.mrf.mxu0
      %v667 = vadd.f32 0.0, %v666
      %v668 = vpop.f32.mrf.mxu0
      %669 = vmatprep.mubr.f32.mxu0 0.0
      %670 = vmatmul.mubr.f32.gmra.mxu0 %v472
      %v671 = vpop.f32.mrf.mxu0
      %v672 = vadd.f32 0.0, %v671
      %v673 = vpop.f32.mrf.mxu0
      %674 = vmatprep.mubr.f32.mxu0 0.0
      %675 = vmatmul.mubr.f32.gmra.mxu0 %v474
      %v676 = vpop.f32.mrf.mxu0
      %v677 = vadd.f32 0.0, %v676
      %v678 = vpop.f32.mrf.mxu0
      %679 = vmatprep.mubr.f32.mxu0 0.0
      %680 = vmatmul.mubr.f32.gmra.mxu0 %v476
      %v681 = vpop.f32.mrf.mxu0
      %v682 = vadd.f32 0.0, %v681
      %v683 = vpop.f32.mrf.mxu0
      %684 = vmatprep.mubr.f32.mxu0 0.0
      %685 = vmatmul.mubr.f32.gmra.mxu0 %v478
      %v686 = vpop.f32.mrf.mxu0
      %v687 = vadd.f32 0.0, %v686
      %v688 = vpop.f32.mrf.mxu0
      %689 = vmatprep.mubr.f32.mxu0 0.0
      %690 = vmatmul.mubr.f32.gmra.mxu0 %v480
      %v691 = vpop.f32.mrf.mxu0
      %v692 = vadd.f32 0.0, %v691
      %v693 = vpop.f32.mrf.mxu0
      %694 = vmatprep.mubr.f32.mxu0 0.0
      %695 = vmatmul.mubr.f32.gmra.mxu0 %v482
      %v696 = vpop.f32.mrf.mxu0
      %v697 = vadd.f32 0.0, %v696
      %v698 = vpop.f32.mrf.mxu0
      %699 = vmatprep.mubr.f32.mxu0 0.0
      %700 = vmatmul.mubr.f32.gmra.mxu0 %v484
      %v701 = vpop.f32.mrf.mxu0
      %v702 = vadd.f32 0.0, %v701
      %v703 = vpop.f32.mrf.mxu0
      %704 = vmatprep.mubr.f32.mxu0 0.0
      %705 = vmatmul.mubr.f32.gmra.mxu0 %v486
      %v706 = vpop.f32.mrf.mxu0
      %v707 = vadd.f32 0.0, %v706
      %v708 = vpop.f32.mrf.mxu0
      %709 = vmatprep.mubr.f32.mxu0 0.0
      %710 = vmatmul.mubr.f32.gmra.mxu0 %v488
      %v711 = vpop.f32.mrf.mxu0
      %v712 = vadd.f32 0.0, %v711
      %v713 = vpop.f32.mrf.mxu0
      %714 = vdwg.mxu0
      %v715 = vsel %vm425, %v225, 0
      %v717 = vsel %vm425, %v226, 0
      %v719 = vsel %vm425, %v228, 0
      %v721 = vsel %vm425, %v229, 0
      %v723 = vsel %vm425, %v231, 0
      %v725 = vsel %vm425, %v232, 0
      %v727 = vsel %vm425, %v234, 0
      %v729 = vsel %vm425, %v235, 0
      %v731 = vsel %vm425, %v237, 0
      %v733 = vsel %vm425, %v238, 0
      %v735 = vsel %vm425, %v240, 0
      %v737 = vsel %vm425, %v241, 0
      %v739 = vsel %vm425, %v243, 0
      %v741 = vsel %vm425, %v244, 0
      %v743 = vsel %vm425, %v246, 0
      %v745 = vsel %vm425, %v247, 0
      %v747 = vsel %vm425, %v249, 0
      %v749 = vsel %vm425, %v250, 0
      %v751 = vsel %vm425, %v252, 0
      %v753 = vsel %vm425, %v253, 0
      %v755 = vsel %vm425, %v255, 0
      %v757 = vsel %vm425, %v256, 0
      %v759 = vsel %vm425, %v258, 0
      %v761 = vsel %vm425, %v259, 0
      %v763 = vsel %vm425, %v261, 0
      %v765 = vsel %vm425, %v262, 0
      %v767 = vsel %vm425, %v264, 0
      %v769 = vsel %vm425, %v265, 0
      %v771 = vsel %vm425, %v267, 0
      %v773 = vsel %vm425, %v268, 0
      %v775 = vsel %vm425, %v270, 0
      %v777 = vsel %vm425, %v271, 0
      %779 = vmatprep.subr.mxu0 0.0
      %780 = vmatpush1.msra.mxu0 0.0
      %781 = vmatprep.subr.mxu0 0.0
      %782 = vmatpush1.msra.mxu0 0.0
      %783 = vmatprep.subr.mxu0 0.0
      %784 = vmatpush1.msra.mxu0 0.0
      %785 = vmatprep.subr.mxu0 0.0
      %786 = vmatpush1.msra.mxu0 0.0
      %787 = vmatprep.subr.mxu0 0.0
      %788 = vmatpush1.msra.mxu0 0.0
      %789 = vmatprep.subr.mxu0 0.0
      %790 = vmatpush1.msra.mxu0 0.0
      %791 = vmatprep.subr.mxu0 0.0
      %792 = vmatpush1.msra.mxu0 0.0
      %793 = vmatprep.subr.mxu0 0.0
      %794 = vmatpush1.msra.mxu0 0.0
      %795 = vmatprep.subr.mxu0 0.0
      %796 = vmatpush1.msra.mxu0 %v286
      %797 = vmatprep.subr.mxu0 0.0
      %798 = vmatpush1.msra.mxu0 %v285
      %799 = vmatprep.subr.mxu0 0.0
      %800 = vmatpush1.msra.mxu0 %v284
      %801 = vmatprep.subr.mxu0 0.0
      %802 = vmatpush1.msra.mxu0 %v283
      %803 = vmatprep.subr.mxu0 0.0
      %804 = vmatpush1.msra.mxu0 %v282
      %805 = vmatprep.subr.mxu0 0.0
      %806 = vmatpush1.msra.mxu0 %v281
      %807 = vmatprep.subr.mxu0 0.0
      %808 = vmatpush1.msra.mxu0 %v280
      %809 = vmatprep.subr.mxu0 0.0
      %810 = vmatpush1.msra.mxu0 %v279
      %811 = vmatprep.subr.mxu0 0.0
      %812 = vmatpush2.msra.mxu0 0.0
      %813 = vmatprep.subr.mxu0 0.0
      %814 = vmatpush2.msra.mxu0 0.0
      %815 = vmatprep.subr.mxu0 0.0
      %816 = vmatpush2.msra.mxu0 0.0
      %817 = vmatprep.subr.mxu0 0.0
      %818 = vmatpush2.msra.mxu0 0.0
      %819 = vmatprep.subr.mxu0 0.0
      %820 = vmatpush2.msra.mxu0 0.0
      %821 = vmatprep.subr.mxu0 0.0
      %822 = vmatpush2.msra.mxu0 0.0
      %823 = vmatprep.subr.mxu0 0.0
      %824 = vmatpush2.msra.mxu0 0.0
      %825 = vmatprep.subr.mxu0 0.0
      %826 = vmatpush2.msra.mxu0 0.0
      %827 = vmatprep.subr.mxu0 0.0
      %828 = vmatpush2.msra.mxu0 0.0
      %829 = vmatprep.subr.mxu0 0.0
      %830 = vmatpush2.msra.mxu0 0.0
      %831 = vmatprep.subr.mxu0 0.0
      %832 = vmatpush2.msra.mxu0 0.0
      %833 = vmatprep.subr.mxu0 0.0
      %834 = vmatpush2.msra.mxu0 0.0
      %835 = vmatprep.subr.mxu0 0.0
      %836 = vmatpush2.msra.mxu0 0.0
      %837 = vmatprep.subr.mxu0 0.0
      %838 = vmatpush2.msra.mxu0 0.0
      %839 = vmatprep.subr.mxu0 0.0
      %840 = vmatpush2.msra.mxu0 0.0
      %841 = vmatprep.subr.mxu0 0.0
      %842 = vmatpush2.msra.mxu0 0.0
      %843 = vmatprep.mubr.f32.mxu0 0.0
      %844 = vmatmul.mubr.f32.gmra.mxu0 %v715
      %v845 = vpop.f32.mrf.mxu0
      %v846 = vadd.f32 %v557, %v845
      %v847 = vpop.f32.mrf.mxu0
      %848 = vmatprep.mubr.f32.mxu0 0.0
      %849 = vmatmul.mubr.f32.gmra.mxu0 %v717
      %v850 = vpop.f32.mrf.mxu0
      %v851 = vadd.f32 %v562, %v850
      %v852 = vpop.f32.mrf.mxu0
      %853 = vmatprep.mubr.f32.mxu0 0.0
      %854 = vmatmul.mubr.f32.gmra.mxu0 %v719
      %v855 = vpop.f32.mrf.mxu0
      %v856 = vadd.f32 %v567, %v855
      %v857 = vpop.f32.mrf.mxu0
      %858 = vmatprep.mubr.f32.mxu0 0.0
      %859 = vmatmul.mubr.f32.gmra.mxu0 %v721
      %v860 = vpop.f32.mrf.mxu0
      %v861 = vadd.f32 %v572, %v860
      %v862 = vpop.f32.mrf.mxu0
      %863 = vmatprep.mubr.f32.mxu0 0.0
      %864 = vmatmul.mubr.f32.gmra.mxu0 %v723
      %v865 = vpop.f32.mrf.mxu0
      %v866 = vadd.f32 %v577, %v865
      %v867 = vpop.f32.mrf.mxu0
      %868 = vmatprep.mubr.f32.mxu0 0.0
      %869 = vmatmul.mubr.f32.gmra.mxu0 %v725
      %v870 = vpop.f32.mrf.mxu0
      %v871 = vadd.f32 %v582, %v870
      %v872 = vpop.f32.mrf.mxu0
      %873 = vmatprep.mubr.f32.mxu0 0.0
      %874 = vmatmul.mubr.f32.gmra.mxu0 %v727
      %v875 = vpop.f32.mrf.mxu0
      %v876 = vadd.f32 %v587, %v875
      %v877 = vpop.f32.mrf.mxu0
      %878 = vmatprep.mubr.f32.mxu0 0.0
      %879 = vmatmul.mubr.f32.gmra.mxu0 %v729
      %v880 = vpop.f32.mrf.mxu0
      %v881 = vadd.f32 %v592, %v880
      %v882 = vpop.f32.mrf.mxu0
      %883 = vmatprep.mubr.f32.mxu0 0.0
      %884 = vmatmul.mubr.f32.gmra.mxu0 %v731
      %v885 = vpop.f32.mrf.mxu0
      %v886 = vadd.f32 %v597, %v885
      %v887 = vpop.f32.mrf.mxu0
      %888 = vmatprep.mubr.f32.mxu0 0.0
      %889 = vmatmul.mubr.f32.gmra.mxu0 %v733
      %v890 = vpop.f32.mrf.mxu0
      %v891 = vadd.f32 %v602, %v890
      %v892 = vpop.f32.mrf.mxu0
      %893 = vmatprep.mubr.f32.mxu0 0.0
      %894 = vmatmul.mubr.f32.gmra.mxu0 %v735
      %v895 = vpop.f32.mrf.mxu0
      %v896 = vadd.f32 %v607, %v895
      %v897 = vpop.f32.mrf.mxu0
      %898 = vmatprep.mubr.f32.mxu0 0.0
      %899 = vmatmul.mubr.f32.gmra.mxu0 %v737
      %v900 = vpop.f32.mrf.mxu0
      %v901 = vadd.f32 %v612, %v900
      %v902 = vpop.f32.mrf.mxu0
      %903 = vmatprep.mubr.f32.mxu0 0.0
      %904 = vmatmul.mubr.f32.gmra.mxu0 %v739
      %v905 = vpop.f32.mrf.mxu0
      %v906 = vadd.f32 %v617, %v905
      %v907 = vpop.f32.mrf.mxu0
      %908 = vmatprep.mubr.f32.mxu0 0.0
      %909 = vmatmul.mubr.f32.gmra.mxu0 %v741
      %v910 = vpop.f32.mrf.mxu0
      %v911 = vadd.f32 %v622, %v910
      %v912 = vpop.f32.mrf.mxu0
      %913 = vmatprep.mubr.f32.mxu0 0.0
      %914 = vmatmul.mubr.f32.gmra.mxu0 %v743
      %v915 = vpop.f32.mrf.mxu0
      %v916 = vadd.f32 %v627, %v915
      %v917 = vpop.f32.mrf.mxu0
      %918 = vmatprep.mubr.f32.mxu0 0.0
      %919 = vmatmul.mubr.f32.gmra.mxu0 %v745
      %v920 = vpop.f32.mrf.mxu0
      %v921 = vadd.f32 %v632, %v920
      %v922 = vpop.f32.mrf.mxu0
      %923 = vmatprep.mubr.f32.mxu0 0.0
      %924 = vmatmul.mubr.f32.gmra.mxu0 %v747
      %v925 = vpop.f32.mrf.mxu0
      %v926 = vadd.f32 %v637, %v925
      %v927 = vpop.f32.mrf.mxu0
      %928 = vmatprep.mubr.f32.mxu0 0.0
      %929 = vmatmul.mubr.f32.gmra.mxu0 %v749
      %v930 = vpop.f32.mrf.mxu0
      %v931 = vadd.f32 %v642, %v930
      %v932 = vpop.f32.mrf.mxu0
      %933 = vmatprep.mubr.f32.mxu0 0.0
      %934 = vmatmul.mubr.f32.gmra.mxu0 %v751
      %v935 = vpop.f32.mrf.mxu0
      %v936 = vadd.f32 %v647, %v935
      %v937 = vpop.f32.mrf.mxu0
      %938 = vmatprep.mubr.f32.mxu0 0.0
      %939 = vmatmul.mubr.f32.gmra.mxu0 %v753
      %v940 = vpop.f32.mrf.mxu0
      %v941 = vadd.f32 %v652, %v940
      %v942 = vpop.f32.mrf.mxu0
      %943 = vmatprep.mubr.f32.mxu0 0.0
      %944 = vmatmul.mubr.f32.gmra.mxu0 %v755
      %v945 = vpop.f32.mrf.mxu0
      %v946 = vadd.f32 %v657, %v945
      %v947 = vpop.f32.mrf.mxu0
      %948 = vmatprep.mubr.f32.mxu0 0.0
      %949 = vmatmul.mubr.f32.gmra.mxu0 %v757
      %v950 = vpop.f32.mrf.mxu0
      %v951 = vadd.f32 %v662, %v950
      %v952 = vpop.f32.mrf.mxu0
      %953 = vmatprep.mubr.f32.mxu0 0.0
      %954 = vmatmul.mubr.f32.gmra.mxu0 %v759
      %v955 = vpop.f32.mrf.mxu0
      %v956 = vadd.f32 %v667, %v955
      %v957 = vpop.f32.mrf.mxu0
      %958 = vmatprep.mubr.f32.mxu0 0.0
      %959 = vmatmul.mubr.f32.gmra.mxu0 %v761
      %v960 = vpop.f32.mrf.mxu0
      %v961 = vadd.f32 %v672, %v960
      %v962 = vpop.f32.mrf.mxu0
      %963 = vmatprep.mubr.f32.mxu0 0.0
      %964 = vmatmul.mubr.f32.gmra.mxu0 %v763
      %v965 = vpop.f32.mrf.mxu0
      %v966 = vadd.f32 %v677, %v965
      %v967 = vpop.f32.mrf.mxu0
      %968 = vmatprep.mubr.f32.mxu0 0.0
      %969 = vmatmul.mubr.f32.gmra.mxu0 %v765
      %v970 = vpop.f32.mrf.mxu0
      %v971 = vadd.f32 %v682, %v970
      %v972 = vpop.f32.mrf.mxu0
      %973 = vmatprep.mubr.f32.mxu0 0.0
      %974 = vmatmul.mubr.f32.gmra.mxu0 %v767
      %v975 = vpop.f32.mrf.mxu0
      %v976 = vadd.f32 %v687, %v975
      %v977 = vpop.f32.mrf.mxu0
      %978 = vmatprep.mubr.f32.mxu0 0.0
      %979 = vmatmul.mubr.f32.gmra.mxu0 %v769
      %v980 = vpop.f32.mrf.mxu0
      %v981 = vadd.f32 %v692, %v980
      %v982 = vpop.f32.mrf.mxu0
      %983 = vmatprep.mubr.f32.mxu0 0.0
      %984 = vmatmul.mubr.f32.gmra.mxu0 %v771
      %v985 = vpop.f32.mrf.mxu0
      %v986 = vadd.f32 %v697, %v985
      %v987 = vpop.f32.mrf.mxu0
      %988 = vmatprep.mubr.f32.mxu0 0.0
      %989 = vmatmul.mubr.f32.gmra.mxu0 %v773
      %v990 = vpop.f32.mrf.mxu0
      %v991 = vadd.f32 %v702, %v990
      %v992 = vpop.f32.mrf.mxu0
      %993 = vmatprep.mubr.f32.mxu0 0.0
      %994 = vmatmul.mubr.f32.gmra.mxu0 %v775
      %v995 = vpop.f32.mrf.mxu0
      %v996 = vadd.f32 %v707, %v995
      %v997 = vpop.f32.mrf.mxu0
      %998 = vmatprep.mubr.f32.mxu0 0.0
      %999 = vmatmul.mubr.f32.gmra.mxu0 %v777
      %v1000 = vpop.f32.mrf.mxu0
      %v1001 = vadd.f32 %v712, %v1000
      %v1002 = vpop.f32.mrf.mxu0
      %1003 = vdwg.mxu0
      %vm1004 = vcmask 1045504
      %v1005 = vrot.slane %v225, 2
      %v1006 = vrot.slane %v226, 2
      %v1007 = vsel %vm1004, %v1005, %v1006
      %v1008 = vrot.slane %v227, 2
      %v1009 = vsel %vm1004, %v1006, %v1008
      %v1010 = vrot.slane %v228, 2
      %v1011 = vrot.slane %v229, 2
      %v1012 = vsel %vm1004, %v1010, %v1011
      %v1013 = vrot.slane %v230, 2
      %v1014 = vsel %vm1004, %v1011, %v1013
      %v1015 = vrot.slane %v231, 2
      %v1016 = vrot.slane %v232, 2
      %v1017 = vsel %vm1004, %v1015, %v1016
      %v1018 = vrot.slane %v233, 2
      %v1019 = vsel %vm1004, %v1016, %v1018
      %v1020 = vrot.slane %v234, 2
      %v1021 = vrot.slane %v235, 2
      %v1022 = vsel %vm1004, %v1020, %v1021
      %v1023 = vrot.slane %v236, 2
      %v1024 = vsel %vm1004, %v1021, %v1023
      %v1025 = vrot.slane %v237, 2
      %v1026 = vrot.slane %v238, 2
      %v1027 = vsel %vm1004, %v1025, %v1026
      %v1028 = vrot.slane %v239, 2
      %v1029 = vsel %vm1004, %v1026, %v1028
      %v1030 = vrot.slane %v240, 2
      %v1031 = vrot.slane %v241, 2
      %v1032 = vsel %vm1004, %v1030, %v1031
      %v1033 = vrot.slane %v242, 2
      %v1034 = vsel %vm1004, %v1031, %v1033
      %v1035 = vrot.slane %v243, 2
      %v1036 = vrot.slane %v244, 2
      %v1037 = vsel %vm1004, %v1035, %v1036
      %v1038 = vrot.slane %v245, 2
      %v1039 = vsel %vm1004, %v1036, %v1038
      %v1040 = vrot.slane %v246, 2
      %v1041 = vrot.slane %v247, 2
      %v1042 = vsel %vm1004, %v1040, %v1041
      %v1043 = vrot.slane %v248, 2
      %v1044 = vsel %vm1004, %v1041, %v1043
      %v1045 = vrot.slane %v249, 2
      %v1046 = vrot.slane %v250, 2
      %v1047 = vsel %vm1004, %v1045, %v1046
      %v1048 = vrot.slane %v251, 2
      %v1049 = vsel %vm1004, %v1046, %v1048
      %v1050 = vrot.slane %v252, 2
      %v1051 = vrot.slane %v253, 2
      %v1052 = vsel %vm1004, %v1050, %v1051
      %v1053 = vrot.slane %v254, 2
      %v1054 = vsel %vm1004, %v1051, %v1053
      %v1055 = vrot.slane %v255, 2
      %v1056 = vrot.slane %v256, 2
      %v1057 = vsel %vm1004, %v1055, %v1056
      %v1058 = vrot.slane %v257, 2
      %v1059 = vsel %vm1004, %v1056, %v1058
      %v1060 = vrot.slane %v258, 2
      %v1061 = vrot.slane %v259, 2
      %v1062 = vsel %vm1004, %v1060, %v1061
      %v1063 = vrot.slane %v260, 2
      %v1064 = vsel %vm1004, %v1061, %v1063
      %v1065 = vrot.slane %v261, 2
      %v1066 = vrot.slane %v262, 2
      %v1067 = vsel %vm1004, %v1065, %v1066
      %v1068 = vrot.slane %v263, 2
      %v1069 = vsel %vm1004, %v1066, %v1068
      %v1070 = vrot.slane %v264, 2
      %v1071 = vrot.slane %v265, 2
      %v1072 = vsel %vm1004, %v1070, %v1071
      %v1073 = vrot.slane %v266, 2
      %v1074 = vsel %vm1004, %v1071, %v1073
      %v1075 = vrot.slane %v267, 2
      %v1076 = vrot.slane %v268, 2
      %v1077 = vsel %vm1004, %v1075, %v1076
      %v1078 = vrot.slane %v269, 2
      %v1079 = vsel %vm1004, %v1076, %v1078
      %v1080 = vrot.slane %v270, 2
      %v1081 = vrot.slane %v271, 2
      %v1082 = vsel %vm1004, %v1080, %v1081
      %v1083 = vrot.slane %v272, 2
      %v1084 = vsel %vm1004, %v1081, %v1083
      %s1085 = scalar_lea.vmem %s1, 128
      %v1086 = vld [vmem:[%s1085] sm:$0xff]
      %v1087 = vld [vmem:[%s1085 + $0x8] sm:$0xff]
      %v1088 = vld [vmem:[%s1085 + $0x10] sm:$0xff]
      %v1089 = vld [vmem:[%s1085 + $0x18] sm:$0xff]
      %v1090 = vld [vmem:[%s1085 + $0x20] sm:$0xff]
      %v1091 = vld [vmem:[%s1085 + $0x28] sm:$0xff]
      %v1092 = vld [vmem:[%s1085 + $0x30] sm:$0xff]
      %v1093 = vld [vmem:[%s1085 + $0x38] sm:$0xff]
      %v1094 = vsel %vm425, %v1007, 0
      %v1096 = vsel %vm425, %v1009, 0
      %v1098 = vsel %vm425, %v1012, 0
      %v1100 = vsel %vm425, %v1014, 0
      %v1102 = vsel %vm425, %v1017, 0
      %v1104 = vsel %vm425, %v1019, 0
      %v1106 = vsel %vm425, %v1022, 0
      %v1108 = vsel %vm425, %v1024, 0
      %v1110 = vsel %vm425, %v1027, 0
      %v1112 = vsel %vm425, %v1029, 0
      %v1114 = vsel %vm425, %v1032, 0
      %v1116 = vsel %vm425, %v1034, 0
      %v1118 = vsel %vm425, %v1037, 0
      %v1120 = vsel %vm425, %v1039, 0
      %v1122 = vsel %vm425, %v1042, 0
      %v1124 = vsel %vm425, %v1044, 0
      %v1126 = vsel %vm425, %v1047, 0
      %v1128 = vsel %vm425, %v1049, 0
      %v1130 = vsel %vm425, %v1052, 0
      %v1132 = vsel %vm425, %v1054, 0
      %v1134 = vsel %vm425, %v1057, 0
      %v1136 = vsel %vm425, %v1059, 0
      %v1138 = vsel %vm425, %v1062, 0
      %v1140 = vsel %vm425, %v1064, 0
      %v1142 = vsel %vm425, %v1067, 0
      %v1144 = vsel %vm425, %v1069, 0
      %v1146 = vsel %vm425, %v1072, 0
      %v1148 = vsel %vm425, %v1074, 0
      %v1150 = vsel %vm425, %v1077, 0
      %v1152 = vsel %vm425, %v1079, 0
      %v1154 = vsel %vm425, %v1082, 0
      %v1156 = vsel %vm425, %v1084, 0
      %1158 = vmatprep.subr.mxu0 0.0
      %1159 = vmatpush1.msra.mxu0 0.0
      %1160 = vmatprep.subr.mxu0 0.0
      %1161 = vmatpush1.msra.mxu0 0.0
      %1162 = vmatprep.subr.mxu0 0.0
      %1163 = vmatpush1.msra.mxu0 0.0
      %1164 = vmatprep.subr.mxu0 0.0
      %1165 = vmatpush1.msra.mxu0 0.0
      %1166 = vmatprep.subr.mxu0 0.0
      %1167 = vmatpush1.msra.mxu0 0.0
      %1168 = vmatprep.subr.mxu0 0.0
      %1169 = vmatpush1.msra.mxu0 0.0
      %1170 = vmatprep.subr.mxu0 0.0
      %1171 = vmatpush1.msra.mxu0 0.0
      %1172 = vmatprep.subr.mxu0 0.0
      %1173 = vmatpush1.msra.mxu0 0.0
      %1174 = vmatprep.subr.mxu0 0.0
      %1175 = vmatpush1.msra.mxu0 %v1093
      %1176 = vmatprep.subr.mxu0 0.0
      %1177 = vmatpush1.msra.mxu0 %v1092
      %1178 = vmatprep.subr.mxu0 0.0
      %1179 = vmatpush1.msra.mxu0 %v1091
      %1180 = vmatprep.subr.mxu0 0.0
      %1181 = vmatpush1.msra.mxu0 %v1090
      %1182 = vmatprep.subr.mxu0 0.0
      %1183 = vmatpush1.msra.mxu0 %v1089
      %1184 = vmatprep.subr.mxu0 0.0
      %1185 = vmatpush1.msra.mxu0 %v1088
      %1186 = vmatprep.subr.mxu0 0.0
      %1187 = vmatpush1.msra.mxu0 %v1087
      %1188 = vmatprep.subr.mxu0 0.0
      %1189 = vmatpush1.msra.mxu0 %v1086
      %1190 = vmatprep.subr.mxu0 0.0
      %1191 = vmatpush2.msra.mxu0 0.0
      %1192 = vmatprep.subr.mxu0 0.0
      %1193 = vmatpush2.msra.mxu0 0.0
      %1194 = vmatprep.subr.mxu0 0.0
      %1195 = vmatpush2.msra.mxu0 0.0
      %1196 = vmatprep.subr.mxu0 0.0
      %1197 = vmatpush2.msra.mxu0 0.0
      %1198 = vmatprep.subr.mxu0 0.0
      %1199 = vmatpush2.msra.mxu0 0.0
      %1200 = vmatprep.subr.mxu0 0.0
      %1201 = vmatpush2.msra.mxu0 0.0
      %1202 = vmatprep.subr.mxu0 0.0
      %1203 = vmatpush2.msra.mxu0 0.0
      %1204 = vmatprep.subr.mxu0 0.0
      %1205 = vmatpush2.msra.mxu0 0.0
      %1206 = vmatprep.subr.mxu0 0.0
      %1207 = vmatpush2.msra.mxu0 0.0
      %1208 = vmatprep.subr.mxu0 0.0
      %1209 = vmatpush2.msra.mxu0 0.0
      %1210 = vmatprep.subr.mxu0 0.0
      %1211 = vmatpush2.msra.mxu0 0.0
      %1212 = vmatprep.subr.mxu0 0.0
      %1213 = vmatpush2.msra.mxu0 0.0
      %1214 = vmatprep.subr.mxu0 0.0
      %1215 = vmatpush2.msra.mxu0 0.0
      %1216 = vmatprep.subr.mxu0 0.0
      %1217 = vmatpush2.msra.mxu0 0.0
      %1218 = vmatprep.subr.mxu0 0.0
      %1219 = vmatpush2.msra.mxu0 0.0
      %1220 = vmatprep.subr.mxu0 0.0
      %1221 = vmatpush2.msra.mxu0 0.0
      %1222 = vmatprep.mubr.f32.mxu0 0.0
      %1223 = vmatmul.mubr.f32.gmra.mxu0 %v1094
      %v1224 = vpop.f32.mrf.mxu0
      %v1225 = vadd.f32 0.0, %v1224
      %v1226 = vpop.f32.mrf.mxu0
      %1227 = vmatprep.mubr.f32.mxu0 0.0
      %1228 = vmatmul.mubr.f32.gmra.mxu0 %v1096
      %v1229 = vpop.f32.mrf.mxu0
      %v1230 = vadd.f32 0.0, %v1229
      %v1231 = vpop.f32.mrf.mxu0
      %1232 = vmatprep.mubr.f32.mxu0 0.0
      %1233 = vmatmul.mubr.f32.gmra.mxu0 %v1098
      %v1234 = vpop.f32.mrf.mxu0
      %v1235 = vadd.f32 0.0, %v1234
      %v1236 = vpop.f32.mrf.mxu0
      %1237 = vmatprep.mubr.f32.mxu0 0.0
      %1238 = vmatmul.mubr.f32.gmra.mxu0 %v1100
      %v1239 = vpop.f32.mrf.mxu0
      %v1240 = vadd.f32 0.0, %v1239
      %v1241 = vpop.f32.mrf.mxu0
      %1242 = vmatprep.mubr.f32.mxu0 0.0
      %1243 = vmatmul.mubr.f32.gmra.mxu0 %v1102
      %v1244 = vpop.f32.mrf.mxu0
      %v1245 = vadd.f32 0.0, %v1244
      %v1246 = vpop.f32.mrf.mxu0
      %1247 = vmatprep.mubr.f32.mxu0 0.0
      %1248 = vmatmul.mubr.f32.gmra.mxu0 %v1104
      %v1249 = vpop.f32.mrf.mxu0
      %v1250 = vadd.f32 0.0, %v1249
      %v1251 = vpop.f32.mrf.mxu0
      %1252 = vmatprep.mubr.f32.mxu0 0.0
      %1253 = vmatmul.mubr.f32.gmra.mxu0 %v1106
      %v1254 = vpop.f32.mrf.mxu0
      %v1255 = vadd.f32 0.0, %v1254
      %v1256 = vpop.f32.mrf.mxu0
      %1257 = vmatprep.mubr.f32.mxu0 0.0
      %1258 = vmatmul.mubr.f32.gmra.mxu0 %v1108
      %v1259 = vpop.f32.mrf.mxu0
      %v1260 = vadd.f32 0.0, %v1259
      %v1261 = vpop.f32.mrf.mxu0
      %1262 = vmatprep.mubr.f32.mxu0 0.0
      %1263 = vmatmul.mubr.f32.gmra.mxu0 %v1110
      %v1264 = vpop.f32.mrf.mxu0
      %v1265 = vadd.f32 0.0, %v1264
      %v1266 = vpop.f32.mrf.mxu0
      %1267 = vmatprep.mubr.f32.mxu0 0.0
      %1268 = vmatmul.mubr.f32.gmra.mxu0 %v1112
      %v1269 = vpop.f32.mrf.mxu0
      %v1270 = vadd.f32 0.0, %v1269
      %v1271 = vpop.f32.mrf.mxu0
      %1272 = vmatprep.mubr.f32.mxu0 0.0
      %1273 = vmatmul.mubr.f32.gmra.mxu0 %v1114
      %v1274 = vpop.f32.mrf.mxu0
      %v1275 = vadd.f32 0.0, %v1274
      %v1276 = vpop.f32.mrf.mxu0
      %1277 = vmatprep.mubr.f32.mxu0 0.0
      %1278 = vmatmul.mubr.f32.gmra.mxu0 %v1116
      %v1279 = vpop.f32.mrf.mxu0
      %v1280 = vadd.f32 0.0, %v1279
      %v1281 = vpop.f32.mrf.mxu0
      %1282 = vmatprep.mubr.f32.mxu0 0.0
      %1283 = vmatmul.mubr.f32.gmra.mxu0 %v1118
      %v1284 = vpop.f32.mrf.mxu0
      %v1285 = vadd.f32 0.0, %v1284
      %v1286 = vpop.f32.mrf.mxu0
      %1287 = vmatprep.mubr.f32.mxu0 0.0
      %1288 = vmatmul.mubr.f32.gmra.mxu0 %v1120
      %v1289 = vpop.f32.mrf.mxu0
      %v1290 = vadd.f32 0.0, %v1289
      %v1291 = vpop.f32.mrf.mxu0
      %1292 = vmatprep.mubr.f32.mxu0 0.0
      %1293 = vmatmul.mubr.f32.gmra.mxu0 %v1122
      %v1294 = vpop.f32.mrf.mxu0
      %v1295 = vadd.f32 0.0, %v1294
      %v1296 = vpop.f32.mrf.mxu0
      %1297 = vmatprep.mubr.f32.mxu0 0.0
      %1298 = vmatmul.mubr.f32.gmra.mxu0 %v1124
      %v1299 = vpop.f32.mrf.mxu0
      %v1300 = vadd.f32 0.0, %v1299
      %v1301 = vpop.f32.mrf.mxu0
      %1302 = vmatprep.mubr.f32.mxu0 0.0
      %1303 = vmatmul.mubr.f32.gmra.mxu0 %v1126
      %v1304 = vpop.f32.mrf.mxu0
      %v1305 = vadd.f32 0.0, %v1304
      %v1306 = vpop.f32.mrf.mxu0
      %1307 = vmatprep.mubr.f32.mxu0 0.0
      %1308 = vmatmul.mubr.f32.gmra.mxu0 %v1128
      %v1309 = vpop.f32.mrf.mxu0
      %v1310 = vadd.f32 0.0, %v1309
      %v1311 = vpop.f32.mrf.mxu0
      %1312 = vmatprep.mubr.f32.mxu0 0.0
      %1313 = vmatmul.mubr.f32.gmra.mxu0 %v1130
      %v1314 = vpop.f32.mrf.mxu0
      %v1315 = vadd.f32 0.0, %v1314
      %v1316 = vpop.f32.mrf.mxu0
      %1317 = vmatprep.mubr.f32.mxu0 0.0
      %1318 = vmatmul.mubr.f32.gmra.mxu0 %v1132
      %v1319 = vpop.f32.mrf.mxu0
      %v1320 = vadd.f32 0.0, %v1319
      %v1321 = vpop.f32.mrf.mxu0
      %1322 = vmatprep.mubr.f32.mxu0 0.0
      %1323 = vmatmul.mubr.f32.gmra.mxu0 %v1134
      %v1324 = vpop.f32.mrf.mxu0
      %v1325 = vadd.f32 0.0, %v1324
      %v1326 = vpop.f32.mrf.mxu0
      %1327 = vmatprep.mubr.f32.mxu0 0.0
      %1328 = vmatmul.mubr.f32.gmra.mxu0 %v1136
      %v1329 = vpop.f32.mrf.mxu0
      %v1330 = vadd.f32 0.0, %v1329
      %v1331 = vpop.f32.mrf.mxu0
      %1332 = vmatprep.mubr.f32.mxu0 0.0
      %1333 = vmatmul.mubr.f32.gmra.mxu0 %v1138
      %v1334 = vpop.f32.mrf.mxu0
      %v1335 = vadd.f32 0.0, %v1334
      %v1336 = vpop.f32.mrf.mxu0
      %1337 = vmatprep.mubr.f32.mxu0 0.0
      %1338 = vmatmul.mubr.f32.gmra.mxu0 %v1140
      %v1339 = vpop.f32.mrf.mxu0
      %v1340 = vadd.f32 0.0, %v1339
      %v1341 = vpop.f32.mrf.mxu0
      %1342 = vmatprep.mubr.f32.mxu0 0.0
      %1343 = vmatmul.mubr.f32.gmra.mxu0 %v1142
      %v1344 = vpop.f32.mrf.mxu0
      %v1345 = vadd.f32 0.0, %v1344
      %v1346 = vpop.f32.mrf.mxu0
      %1347 = vmatprep.mubr.f32.mxu0 0.0
      %1348 = vmatmul.mubr.f32.gmra.mxu0 %v1144
      %v1349 = vpop.f32.mrf.mxu0
      %v1350 = vadd.f32 0.0, %v1349
      %v1351 = vpop.f32.mrf.mxu0
      %1352 = vmatprep.mubr.f32.mxu0 0.0
      %1353 = vmatmul.mubr.f32.gmra.mxu0 %v1146
      %v1354 = vpop.f32.mrf.mxu0
      %v1355 = vadd.f32 0.0, %v1354
      %v1356 = vpop.f32.mrf.mxu0
      %1357 = vmatprep.mubr.f32.mxu0 0.0
      %1358 = vmatmul.mubr.f32.gmra.mxu0 %v1148
      %v1359 = vpop.f32.mrf.mxu0
      %v1360 = vadd.f32 0.0, %v1359
      %v1361 = vpop.f32.mrf.mxu0
      %1362 = vmatprep.mubr.f32.mxu0 0.0
      %1363 = vmatmul.mubr.f32.gmra.mxu0 %v1150
      %v1364 = vpop.f32.mrf.mxu0
      %v1365 = vadd.f32 0.0, %v1364
      %v1366 = vpop.f32.mrf.mxu0
      %1367 = vmatprep.mubr.f32.mxu0 0.0
      %1368 = vmatmul.mubr.f32.gmra.mxu0 %v1152
      %v1369 = vpop.f32.mrf.mxu0
      %v1370 = vadd.f32 0.0, %v1369
      %v1371 = vpop.f32.mrf.mxu0
      %1372 = vmatprep.mubr.f32.mxu0 0.0
      %1373 = vmatmul.mubr.f32.gmra.mxu0 %v1154
      %v1374 = vpop.f32.mrf.mxu0
      %v1375 = vadd.f32 0.0, %v1374
      %v1376 = vpop.f32.mrf.mxu0
      %1377 = vmatprep.mubr.f32.mxu0 0.0
      %1378 = vmatmul.mubr.f32.gmra.mxu0 %v1156
      %v1379 = vpop.f32.mrf.mxu0
      %v1380 = vadd.f32 0.0, %v1379
      %v1381 = vpop.f32.mrf.mxu0
      %1382 = vdwg.mxu0
      %v1383 = vadd.f32 %v846, %v1225
      %v1384 = vadd.f32 %v851, %v1230
      %v1385 = vadd.f32 %v856, %v1235
      %v1386 = vadd.f32 %v861, %v1240
      %v1387 = vadd.f32 %v866, %v1245
      %v1388 = vadd.f32 %v871, %v1250
      %v1389 = vadd.f32 %v876, %v1255
      %v1390 = vadd.f32 %v881, %v1260
      %v1391 = vadd.f32 %v886, %v1265
      %v1392 = vadd.f32 %v891, %v1270
      %v1393 = vadd.f32 %v896, %v1275
      %v1394 = vadd.f32 %v901, %v1280
      %v1395 = vadd.f32 %v906, %v1285
      %v1396 = vadd.f32 %v911, %v1290
      %v1397 = vadd.f32 %v916, %v1295
      %v1398 = vadd.f32 %v921, %v1300
      %v1399 = vadd.f32 %v926, %v1305
      %v1400 = vadd.f32 %v931, %v1310
      %v1401 = vadd.f32 %v936, %v1315
      %v1402 = vadd.f32 %v941, %v1320
      %v1403 = vadd.f32 %v946, %v1325
      %v1404 = vadd.f32 %v951, %v1330
      %v1405 = vadd.f32 %v956, %v1335
      %v1406 = vadd.f32 %v961, %v1340
      %v1407 = vadd.f32 %v966, %v1345
      %v1408 = vadd.f32 %v971, %v1350
      %v1409 = vadd.f32 %v976, %v1355
      %v1410 = vadd.f32 %v981, %v1360
      %v1411 = vadd.f32 %v986, %v1365
      %v1412 = vadd.f32 %v991, %v1370
      %v1413 = vadd.f32 %v996, %v1375
      %v1414 = vadd.f32 %v1001, %v1380
      %s1415 = scalar_lea.vmem %s1, 192
      %v1416 = vld [vmem:[%s1415] sm:$0xff]
      %v1417 = vld [vmem:[%s1415 + $0x8] sm:$0xff]
      %v1418 = vld [vmem:[%s1415 + $0x10] sm:$0xff]
      %v1419 = vld [vmem:[%s1415 + $0x18] sm:$0xff]
      %v1420 = vld [vmem:[%s1415 + $0x20] sm:$0xff]
      %v1421 = vld [vmem:[%s1415 + $0x28] sm:$0xff]
      %v1422 = vld [vmem:[%s1415 + $0x30] sm:$0xff]
      %v1423 = vld [vmem:[%s1415 + $0x38] sm:$0xff]
      %v1425 = vsel %vm425, %v273, 0
      %v1428 = vsel %vm425, %v274, 0
      %1430 = vmatprep.subr.mxu0 0.0
      %1431 = vmatpush1.msra.mxu0 0.0
      %1432 = vmatprep.subr.mxu0 0.0
      %1433 = vmatpush1.msra.mxu0 0.0
      %1434 = vmatprep.subr.mxu0 0.0
      %1435 = vmatpush1.msra.mxu0 0.0
      %1436 = vmatprep.subr.mxu0 0.0
      %1437 = vmatpush1.msra.mxu0 0.0
      %1438 = vmatprep.subr.mxu0 0.0
      %1439 = vmatpush1.msra.mxu0 0.0
      %1440 = vmatprep.subr.mxu0 0.0
      %1441 = vmatpush1.msra.mxu0 0.0
      %1442 = vmatprep.subr.mxu0 0.0
      %1443 = vmatpush1.msra.mxu0 0.0
      %1444 = vmatprep.subr.mxu0 0.0
      %1445 = vmatpush1.msra.mxu0 0.0
      %1446 = vmatprep.subr.mxu0 0.0
      %1447 = vmatpush1.msra.mxu0 %v1423
      %1448 = vmatprep.subr.mxu0 0.0
      %1449 = vmatpush1.msra.mxu0 %v1422
      %1450 = vmatprep.subr.mxu0 0.0
      %1451 = vmatpush1.msra.mxu0 %v1421
      %1452 = vmatprep.subr.mxu0 0.0
      %1453 = vmatpush1.msra.mxu0 %v1420
      %1454 = vmatprep.subr.mxu0 0.0
      %1455 = vmatpush1.msra.mxu0 %v1419
      %1456 = vmatprep.subr.mxu0 0.0
      %1457 = vmatpush1.msra.mxu0 %v1418
      %1458 = vmatprep.subr.mxu0 0.0
      %1459 = vmatpush1.msra.mxu0 %v1417
      %1460 = vmatprep.subr.mxu0 0.0
      %1461 = vmatpush1.msra.mxu0 %v1416
      %1462 = vmatprep.subr.mxu0 0.0
      %1463 = vmatpush2.msra.mxu0 0.0
      %1464 = vmatprep.subr.mxu0 0.0
      %1465 = vmatpush2.msra.mxu0 0.0
      %1466 = vmatprep.subr.mxu0 0.0
      %1467 = vmatpush2.msra.mxu0 0.0
      %1468 = vmatprep.subr.mxu0 0.0
      %1469 = vmatpush2.msra.mxu0 0.0
      %1470 = vmatprep.subr.mxu0 0.0
      %1471 = vmatpush2.msra.mxu0 0.0
      %1472 = vmatprep.subr.mxu0 0.0
      %1473 = vmatpush2.msra.mxu0 0.0
      %1474 = vmatprep.subr.mxu0 0.0
      %1475 = vmatpush2.msra.mxu0 0.0
      %1476 = vmatprep.subr.mxu0 0.0
      %1477 = vmatpush2.msra.mxu0 0.0
      %1478 = vmatprep.subr.mxu0 0.0
      %1479 = vmatpush2.msra.mxu0 0.0
      %1480 = vmatprep.subr.mxu0 0.0
      %1481 = vmatpush2.msra.mxu0 0.0
      %1482 = vmatprep.subr.mxu0 0.0
      %1483 = vmatpush2.msra.mxu0 0.0
      %1484 = vmatprep.subr.mxu0 0.0
      %1485 = vmatpush2.msra.mxu0 0.0
      %1486 = vmatprep.subr.mxu0 0.0
      %1487 = vmatpush2.msra.mxu0 0.0
      %1488 = vmatprep.subr.mxu0 0.0
      %1489 = vmatpush2.msra.mxu0 0.0
      %1490 = vmatprep.subr.mxu0 0.0
      %1491 = vmatpush2.msra.mxu0 0.0
      %1492 = vmatprep.subr.mxu0 0.0
      %1493 = vmatpush2.msra.mxu0 0.0
      %1494 = vmatprep.mubr.f32.mxu0 0.0
      %1495 = vmatmul.mubr.f32.gmra.mxu0 %v719
      %v1496 = vpop.f32.mrf.mxu0
      %v1497 = vadd.f32 0.0, %v1496
      %v1498 = vpop.f32.mrf.mxu0
      %1499 = vmatprep.mubr.f32.mxu0 0.0
      %1500 = vmatmul.mubr.f32.gmra.mxu0 %v721
      %v1501 = vpop.f32.mrf.mxu0
      %v1502 = vadd.f32 0.0, %v1501
      %v1503 = vpop.f32.mrf.mxu0
      %1504 = vmatprep.mubr.f32.mxu0 0.0
      %1505 = vmatmul.mubr.f32.gmra.mxu0 %v723
      %v1506 = vpop.f32.mrf.mxu0
      %v1507 = vadd.f32 0.0, %v1506
      %v1508 = vpop.f32.mrf.mxu0
      %1509 = vmatprep.mubr.f32.mxu0 0.0
      %1510 = vmatmul.mubr.f32.gmra.mxu0 %v725
      %v1511 = vpop.f32.mrf.mxu0
      %v1512 = vadd.f32 0.0, %v1511
      %v1513 = vpop.f32.mrf.mxu0
      %1514 = vmatprep.mubr.f32.mxu0 0.0
      %1515 = vmatmul.mubr.f32.gmra.mxu0 %v727
      %v1516 = vpop.f32.mrf.mxu0
      %v1517 = vadd.f32 0.0, %v1516
      %v1518 = vpop.f32.mrf.mxu0
      %1519 = vmatprep.mubr.f32.mxu0 0.0
      %1520 = vmatmul.mubr.f32.gmra.mxu0 %v729
      %v1521 = vpop.f32.mrf.mxu0
      %v1522 = vadd.f32 0.0, %v1521
      %v1523 = vpop.f32.mrf.mxu0
      %1524 = vmatprep.mubr.f32.mxu0 0.0
      %1525 = vmatmul.mubr.f32.gmra.mxu0 %v731
      %v1526 = vpop.f32.mrf.mxu0
      %v1527 = vadd.f32 0.0, %v1526
      %v1528 = vpop.f32.mrf.mxu0
      %1529 = vmatprep.mubr.f32.mxu0 0.0
      %1530 = vmatmul.mubr.f32.gmra.mxu0 %v733
      %v1531 = vpop.f32.mrf.mxu0
      %v1532 = vadd.f32 0.0, %v1531
      %v1533 = vpop.f32.mrf.mxu0
      %1534 = vmatprep.mubr.f32.mxu0 0.0
      %1535 = vmatmul.mubr.f32.gmra.mxu0 %v735
      %v1536 = vpop.f32.mrf.mxu0
      %v1537 = vadd.f32 0.0, %v1536
      %v1538 = vpop.f32.mrf.mxu0
      %1539 = vmatprep.mubr.f32.mxu0 0.0
      %1540 = vmatmul.mubr.f32.gmra.mxu0 %v737
      %v1541 = vpop.f32.mrf.mxu0
      %v1542 = vadd.f32 0.0, %v1541
      %v1543 = vpop.f32.mrf.mxu0
      %1544 = vmatprep.mubr.f32.mxu0 0.0
      %1545 = vmatmul.mubr.f32.gmra.mxu0 %v739
      %v1546 = vpop.f32.mrf.mxu0
      %v1547 = vadd.f32 0.0, %v1546
      %v1548 = vpop.f32.mrf.mxu0
      %1549 = vmatprep.mubr.f32.mxu0 0.0
      %1550 = vmatmul.mubr.f32.gmra.mxu0 %v741
      %v1551 = vpop.f32.mrf.mxu0
      %v1552 = vadd.f32 0.0, %v1551
      %v1553 = vpop.f32.mrf.mxu0
      %1554 = vmatprep.mubr.f32.mxu0 0.0
      %1555 = vmatmul.mubr.f32.gmra.mxu0 %v743
      %v1556 = vpop.f32.mrf.mxu0
      %v1557 = vadd.f32 0.0, %v1556
      %v1558 = vpop.f32.mrf.mxu0
      %1559 = vmatprep.mubr.f32.mxu0 0.0
      %1560 = vmatmul.mubr.f32.gmra.mxu0 %v745
      %v1561 = vpop.f32.mrf.mxu0
      %v1562 = vadd.f32 0.0, %v1561
      %v1563 = vpop.f32.mrf.mxu0
      %1564 = vmatprep.mubr.f32.mxu0 0.0
      %1565 = vmatmul.mubr.f32.gmra.mxu0 %v747
      %v1566 = vpop.f32.mrf.mxu0
      %v1567 = vadd.f32 0.0, %v1566
      %v1568 = vpop.f32.mrf.mxu0
      %1569 = vmatprep.mubr.f32.mxu0 0.0
      %1570 = vmatmul.mubr.f32.gmra.mxu0 %v749
      %v1571 = vpop.f32.mrf.mxu0
      %v1572 = vadd.f32 0.0, %v1571
      %v1573 = vpop.f32.mrf.mxu0
      %1574 = vmatprep.mubr.f32.mxu0 0.0
      %1575 = vmatmul.mubr.f32.gmra.mxu0 %v751
      %v1576 = vpop.f32.mrf.mxu0
      %v1577 = vadd.f32 0.0, %v1576
      %v1578 = vpop.f32.mrf.mxu0
      %1579 = vmatprep.mubr.f32.mxu0 0.0
      %1580 = vmatmul.mubr.f32.gmra.mxu0 %v753
      %v1581 = vpop.f32.mrf.mxu0
      %v1582 = vadd.f32 0.0, %v1581
      %v1583 = vpop.f32.mrf.mxu0
      %1584 = vmatprep.mubr.f32.mxu0 0.0
      %1585 = vmatmul.mubr.f32.gmra.mxu0 %v755
      %v1586 = vpop.f32.mrf.mxu0
      %v1587 = vadd.f32 0.0, %v1586
      %v1588 = vpop.f32.mrf.mxu0
      %1589 = vmatprep.mubr.f32.mxu0 0.0
      %1590 = vmatmul.mubr.f32.gmra.mxu0 %v757
      %v1591 = vpop.f32.mrf.mxu0
      %v1592 = vadd.f32 0.0, %v1591
      %v1593 = vpop.f32.mrf.mxu0
      %1594 = vmatprep.mubr.f32.mxu0 0.0
      %1595 = vmatmul.mubr.f32.gmra.mxu0 %v759
      %v1596 = vpop.f32.mrf.mxu0
      %v1597 = vadd.f32 0.0, %v1596
      %v1598 = vpop.f32.mrf.mxu0
      %1599 = vmatprep.mubr.f32.mxu0 0.0
      %1600 = vmatmul.mubr.f32.gmra.mxu0 %v761
      %v1601 = vpop.f32.mrf.mxu0
      %v1602 = vadd.f32 0.0, %v1601
      %v1603 = vpop.f32.mrf.mxu0
      %1604 = vmatprep.mubr.f32.mxu0 0.0
      %1605 = vmatmul.mubr.f32.gmra.mxu0 %v763
      %v1606 = vpop.f32.mrf.mxu0
      %v1607 = vadd.f32 0.0, %v1606
      %v1608 = vpop.f32.mrf.mxu0
      %1609 = vmatprep.mubr.f32.mxu0 0.0
      %1610 = vmatmul.mubr.f32.gmra.mxu0 %v765
      %v1611 = vpop.f32.mrf.mxu0
      %v1612 = vadd.f32 0.0, %v1611
      %v1613 = vpop.f32.mrf.mxu0
      %1614 = vmatprep.mubr.f32.mxu0 0.0
      %1615 = vmatmul.mubr.f32.gmra.mxu0 %v767
      %v1616 = vpop.f32.mrf.mxu0
      %v1617 = vadd.f32 0.0, %v1616
      %v1618 = vpop.f32.mrf.mxu0
      %1619 = vmatprep.mubr.f32.mxu0 0.0
      %1620 = vmatmul.mubr.f32.gmra.mxu0 %v769
      %v1621 = vpop.f32.mrf.mxu0
      %v1622 = vadd.f32 0.0, %v1621
      %v1623 = vpop.f32.mrf.mxu0
      %1624 = vmatprep.mubr.f32.mxu0 0.0
      %1625 = vmatmul.mubr.f32.gmra.mxu0 %v771
      %v1626 = vpop.f32.mrf.mxu0
      %v1627 = vadd.f32 0.0, %v1626
      %v1628 = vpop.f32.mrf.mxu0
      %1629 = vmatprep.mubr.f32.mxu0 0.0
      %1630 = vmatmul.mubr.f32.gmra.mxu0 %v773
      %v1631 = vpop.f32.mrf.mxu0
      %v1632 = vadd.f32 0.0, %v1631
      %v1633 = vpop.f32.mrf.mxu0
      %1634 = vmatprep.mubr.f32.mxu0 0.0
      %1635 = vmatmul.mubr.f32.gmra.mxu0 %v775
      %v1636 = vpop.f32.mrf.mxu0
      %v1637 = vadd.f32 0.0, %v1636
      %v1638 = vpop.f32.mrf.mxu0
      %1639 = vmatprep.mubr.f32.mxu0 0.0
      %1640 = vmatmul.mubr.f32.gmra.mxu0 %v777
      %v1641 = vpop.f32.mrf.mxu0
      %v1642 = vadd.f32 0.0, %v1641
      %v1643 = vpop.f32.mrf.mxu0
      %1644 = vmatprep.mubr.f32.mxu0 0.0
      %1645 = vmatmul.mubr.f32.gmra.mxu0 %v1425
      %v1646 = vpop.f32.mrf.mxu0
      %v1647 = vadd.f32 0.0, %v1646
      %v1648 = vpop.f32.mrf.mxu0
      %1649 = vmatprep.mubr.f32.mxu0 0.0
      %1650 = vmatmul.mubr.f32.gmra.mxu0 %v1428
      %v1651 = vpop.f32.mrf.mxu0
      %v1652 = vadd.f32 0.0, %v1651
      %v1653 = vpop.f32.mrf.mxu0
      %1654 = vdwg.mxu0
      %v1655 = vadd.f32 %v1383, %v1497
      %v1656 = vadd.f32 %v1384, %v1502
      %v1657 = vadd.f32 %v1385, %v1507
      %v1658 = vadd.f32 %v1386, %v1512
      %v1659 = vadd.f32 %v1387, %v1517
      %v1660 = vadd.f32 %v1388, %v1522
      %v1661 = vadd.f32 %v1389, %v1527
      %v1662 = vadd.f32 %v1390, %v1532
      %v1663 = vadd.f32 %v1391, %v1537
      %v1664 = vadd.f32 %v1392, %v1542
      %v1665 = vadd.f32 %v1393, %v1547
      %v1666 = vadd.f32 %v1394, %v1552
      %v1667 = vadd.f32 %v1395, %v1557
      %v1668 = vadd.f32 %v1396, %v1562
      %v1669 = vadd.f32 %v1397, %v1567
      %v1670 = vadd.f32 %v1398, %v1572
      %v1671 = vadd.f32 %v1399, %v1577
      %v1672 = vadd.f32 %v1400, %v1582
      %v1673 = vadd.f32 %v1401, %v1587
      %v1674 = vadd.f32 %v1402, %v1592
      %v1675 = vadd.f32 %v1403, %v1597
      %v1676 = vadd.f32 %v1404, %v1602
      %v1677 = vadd.f32 %v1405, %v1607
      %v1678 = vadd.f32 %v1406, %v1612
      %v1679 = vadd.f32 %v1407, %v1617
      %v1680 = vadd.f32 %v1408, %v1622
      %v1681 = vadd.f32 %v1409, %v1627
      %v1682 = vadd.f32 %v1410, %v1632
      %v1683 = vadd.f32 %v1411, %v1637
      %v1684 = vadd.f32 %v1412, %v1642
      %v1685 = vadd.f32 %v1413, %v1647
      %v1686 = vadd.f32 %v1414, %v1652
      %v1688 = vrot.slane %v273, 1
      %v1689 = vrot.slane %v274, 1
      %v1690 = vsel %vm335, %v1688, %v1689
      %v1691 = vrot.slane %v275, 1
      %v1692 = vsel %vm335, %v1689, %v1691
      %s1693 = scalar_lea.vmem %s1, 256
      %v1694 = vld [vmem:[%s1693] sm:$0xff]
      %v1695 = vld [vmem:[%s1693 + $0x8] sm:$0xff]
      %v1696 = vld [vmem:[%s1693 + $0x10] sm:$0xff]
      %v1697 = vld [vmem:[%s1693 + $0x18] sm:$0xff]
      %v1698 = vld [vmem:[%s1693 + $0x20] sm:$0xff]
      %v1699 = vld [vmem:[%s1693 + $0x28] sm:$0xff]
      %v1700 = vld [vmem:[%s1693 + $0x30] sm:$0xff]
      %v1701 = vld [vmem:[%s1693 + $0x38] sm:$0xff]
      %v1702 = vsel %vm425, %v1690, 0
      %v1704 = vsel %vm425, %v1692, 0
      %1706 = vmatprep.subr.mxu0 0.0
      %1707 = vmatpush1.msra.mxu0 0.0
      %1708 = vmatprep.subr.mxu0 0.0
      %1709 = vmatpush1.msra.mxu0 0.0
      %1710 = vmatprep.subr.mxu0 0.0
      %1711 = vmatpush1.msra.mxu0 0.0
      %1712 = vmatprep.subr.mxu0 0.0
      %1713 = vmatpush1.msra.mxu0 0.0
      %1714 = vmatprep.subr.mxu0 0.0
      %1715 = vmatpush1.msra.mxu0 0.0
      %1716 = vmatprep.subr.mxu0 0.0
      %1717 = vmatpush1.msra.mxu0 0.0
      %1718 = vmatprep.subr.mxu0 0.0
      %1719 = vmatpush1.msra.mxu0 0.0
      %1720 = vmatprep.subr.mxu0 0.0
      %1721 = vmatpush1.msra.mxu0 0.0
      %1722 = vmatprep.subr.mxu0 0.0
      %1723 = vmatpush1.msra.mxu0 %v1701
      %1724 = vmatprep.subr.mxu0 0.0
      %1725 = vmatpush1.msra.mxu0 %v1700
      %1726 = vmatprep.subr.mxu0 0.0
      %1727 = vmatpush1.msra.mxu0 %v1699
      %1728 = vmatprep.subr.mxu0 0.0
      %1729 = vmatpush1.msra.mxu0 %v1698
      %1730 = vmatprep.subr.mxu0 0.0
      %1731 = vmatpush1.msra.mxu0 %v1697
      %1732 = vmatprep.subr.mxu0 0.0
      %1733 = vmatpush1.msra.mxu0 %v1696
      %1734 = vmatprep.subr.mxu0 0.0
      %1735 = vmatpush1.msra.mxu0 %v1695
      %1736 = vmatprep.subr.mxu0 0.0
      %1737 = vmatpush1.msra.mxu0 %v1694
      %1738 = vmatprep.subr.mxu0 0.0
      %1739 = vmatpush2.msra.mxu0 0.0
      %1740 = vmatprep.subr.mxu0 0.0
      %1741 = vmatpush2.msra.mxu0 0.0
      %1742 = vmatprep.subr.mxu0 0.0
      %1743 = vmatpush2.msra.mxu0 0.0
      %1744 = vmatprep.subr.mxu0 0.0
      %1745 = vmatpush2.msra.mxu0 0.0
      %1746 = vmatprep.subr.mxu0 0.0
      %1747 = vmatpush2.msra.mxu0 0.0
      %1748 = vmatprep.subr.mxu0 0.0
      %1749 = vmatpush2.msra.mxu0 0.0
      %1750 = vmatprep.subr.mxu0 0.0
      %1751 = vmatpush2.msra.mxu0 0.0
      %1752 = vmatprep.subr.mxu0 0.0
      %1753 = vmatpush2.msra.mxu0 0.0
      %1754 = vmatprep.subr.mxu0 0.0
      %1755 = vmatpush2.msra.mxu0 0.0
      %1756 = vmatprep.subr.mxu0 0.0
      %1757 = vmatpush2.msra.mxu0 0.0
      %1758 = vmatprep.subr.mxu0 0.0
      %1759 = vmatpush2.msra.mxu0 0.0
      %1760 = vmatprep.subr.mxu0 0.0
      %1761 = vmatpush2.msra.mxu0 0.0
      %1762 = vmatprep.subr.mxu0 0.0
      %1763 = vmatpush2.msra.mxu0 0.0
      %1764 = vmatprep.subr.mxu0 0.0
      %1765 = vmatpush2.msra.mxu0 0.0
      %1766 = vmatprep.subr.mxu0 0.0
      %1767 = vmatpush2.msra.mxu0 0.0
      %1768 = vmatprep.subr.mxu0 0.0
      %1769 = vmatpush2.msra.mxu0 0.0
      %1770 = vmatprep.mubr.f32.mxu0 0.0
      %1771 = vmatmul.mubr.f32.gmra.mxu0 %v430
      %v1772 = vpop.f32.mrf.mxu0
      %v1773 = vadd.f32 0.0, %v1772
      %v1774 = vpop.f32.mrf.mxu0
      %1775 = vmatprep.mubr.f32.mxu0 0.0
      %1776 = vmatmul.mubr.f32.gmra.mxu0 %v432
      %v1777 = vpop.f32.mrf.mxu0
      %v1778 = vadd.f32 0.0, %v1777
      %v1779 = vpop.f32.mrf.mxu0
      %1780 = vmatprep.mubr.f32.mxu0 0.0
      %1781 = vmatmul.mubr.f32.gmra.mxu0 %v434
      %v1782 = vpop.f32.mrf.mxu0
      %v1783 = vadd.f32 0.0, %v1782
      %v1784 = vpop.f32.mrf.mxu0
      %1785 = vmatprep.mubr.f32.mxu0 0.0
      %1786 = vmatmul.mubr.f32.gmra.mxu0 %v436
      %v1787 = vpop.f32.mrf.mxu0
      %v1788 = vadd.f32 0.0, %v1787
      %v1789 = vpop.f32.mrf.mxu0
      %1790 = vmatprep.mubr.f32.mxu0 0.0
      %1791 = vmatmul.mubr.f32.gmra.mxu0 %v438
      %v1792 = vpop.f32.mrf.mxu0
      %v1793 = vadd.f32 0.0, %v1792
      %v1794 = vpop.f32.mrf.mxu0
      %1795 = vmatprep.mubr.f32.mxu0 0.0
      %1796 = vmatmul.mubr.f32.gmra.mxu0 %v440
      %v1797 = vpop.f32.mrf.mxu0
      %v1798 = vadd.f32 0.0, %v1797
      %v1799 = vpop.f32.mrf.mxu0
      %1800 = vmatprep.mubr.f32.mxu0 0.0
      %1801 = vmatmul.mubr.f32.gmra.mxu0 %v442
      %v1802 = vpop.f32.mrf.mxu0
      %v1803 = vadd.f32 0.0, %v1802
      %v1804 = vpop.f32.mrf.mxu0
      %1805 = vmatprep.mubr.f32.mxu0 0.0
      %1806 = vmatmul.mubr.f32.gmra.mxu0 %v444
      %v1807 = vpop.f32.mrf.mxu0
      %v1808 = vadd.f32 0.0, %v1807
      %v1809 = vpop.f32.mrf.mxu0
      %1810 = vmatprep.mubr.f32.mxu0 0.0
      %1811 = vmatmul.mubr.f32.gmra.mxu0 %v446
      %v1812 = vpop.f32.mrf.mxu0
      %v1813 = vadd.f32 0.0, %v1812
      %v1814 = vpop.f32.mrf.mxu0
      %1815 = vmatprep.mubr.f32.mxu0 0.0
      %1816 = vmatmul.mubr.f32.gmra.mxu0 %v448
      %v1817 = vpop.f32.mrf.mxu0
      %v1818 = vadd.f32 0.0, %v1817
      %v1819 = vpop.f32.mrf.mxu0
      %1820 = vmatprep.mubr.f32.mxu0 0.0
      %1821 = vmatmul.mubr.f32.gmra.mxu0 %v450
      %v1822 = vpop.f32.mrf.mxu0
      %v1823 = vadd.f32 0.0, %v1822
      %v1824 = vpop.f32.mrf.mxu0
      %1825 = vmatprep.mubr.f32.mxu0 0.0
      %1826 = vmatmul.mubr.f32.gmra.mxu0 %v452
      %v1827 = vpop.f32.mrf.mxu0
      %v1828 = vadd.f32 0.0, %v1827
      %v1829 = vpop.f32.mrf.mxu0
      %1830 = vmatprep.mubr.f32.mxu0 0.0
      %1831 = vmatmul.mubr.f32.gmra.mxu0 %v454
      %v1832 = vpop.f32.mrf.mxu0
      %v1833 = vadd.f32 0.0, %v1832
      %v1834 = vpop.f32.mrf.mxu0
      %1835 = vmatprep.mubr.f32.mxu0 0.0
      %1836 = vmatmul.mubr.f32.gmra.mxu0 %v456
      %v1837 = vpop.f32.mrf.mxu0
      %v1838 = vadd.f32 0.0, %v1837
      %v1839 = vpop.f32.mrf.mxu0
      %1840 = vmatprep.mubr.f32.mxu0 0.0
      %1841 = vmatmul.mubr.f32.gmra.mxu0 %v458
      %v1842 = vpop.f32.mrf.mxu0
      %v1843 = vadd.f32 0.0, %v1842
      %v1844 = vpop.f32.mrf.mxu0
      %1845 = vmatprep.mubr.f32.mxu0 0.0
      %1846 = vmatmul.mubr.f32.gmra.mxu0 %v460
      %v1847 = vpop.f32.mrf.mxu0
      %v1848 = vadd.f32 0.0, %v1847
      %v1849 = vpop.f32.mrf.mxu0
      %1850 = vmatprep.mubr.f32.mxu0 0.0
      %1851 = vmatmul.mubr.f32.gmra.mxu0 %v462
      %v1852 = vpop.f32.mrf.mxu0
      %v1853 = vadd.f32 0.0, %v1852
      %v1854 = vpop.f32.mrf.mxu0
      %1855 = vmatprep.mubr.f32.mxu0 0.0
      %1856 = vmatmul.mubr.f32.gmra.mxu0 %v464
      %v1857 = vpop.f32.mrf.mxu0
      %v1858 = vadd.f32 0.0, %v1857
      %v1859 = vpop.f32.mrf.mxu0
      %1860 = vmatprep.mubr.f32.mxu0 0.0
      %1861 = vmatmul.mubr.f32.gmra.mxu0 %v466
      %v1862 = vpop.f32.mrf.mxu0
      %v1863 = vadd.f32 0.0, %v1862
      %v1864 = vpop.f32.mrf.mxu0
      %1865 = vmatprep.mubr.f32.mxu0 0.0
      %1866 = vmatmul.mubr.f32.gmra.mxu0 %v468
      %v1867 = vpop.f32.mrf.mxu0
      %v1868 = vadd.f32 0.0, %v1867
      %v1869 = vpop.f32.mrf.mxu0
      %1870 = vmatprep.mubr.f32.mxu0 0.0
      %1871 = vmatmul.mubr.f32.gmra.mxu0 %v470
      %v1872 = vpop.f32.mrf.mxu0
      %v1873 = vadd.f32 0.0, %v1872
      %v1874 = vpop.f32.mrf.mxu0
      %1875 = vmatprep.mubr.f32.mxu0 0.0
      %1876 = vmatmul.mubr.f32.gmra.mxu0 %v472
      %v1877 = vpop.f32.mrf.mxu0
      %v1878 = vadd.f32 0.0, %v1877
      %v1879 = vpop.f32.mrf.mxu0
      %1880 = vmatprep.mubr.f32.mxu0 0.0
      %1881 = vmatmul.mubr.f32.gmra.mxu0 %v474
      %v1882 = vpop.f32.mrf.mxu0
      %v1883 = vadd.f32 0.0, %v1882
      %v1884 = vpop.f32.mrf.mxu0
      %1885 = vmatprep.mubr.f32.mxu0 0.0
      %1886 = vmatmul.mubr.f32.gmra.mxu0 %v476
      %v1887 = vpop.f32.mrf.mxu0
      %v1888 = vadd.f32 0.0, %v1887
      %v1889 = vpop.f32.mrf.mxu0
      %1890 = vmatprep.mubr.f32.mxu0 0.0
      %1891 = vmatmul.mubr.f32.gmra.mxu0 %v478
      %v1892 = vpop.f32.mrf.mxu0
      %v1893 = vadd.f32 0.0, %v1892
      %v1894 = vpop.f32.mrf.mxu0
      %1895 = vmatprep.mubr.f32.mxu0 0.0
      %1896 = vmatmul.mubr.f32.gmra.mxu0 %v480
      %v1897 = vpop.f32.mrf.mxu0
      %v1898 = vadd.f32 0.0, %v1897
      %v1899 = vpop.f32.mrf.mxu0
      %1900 = vmatprep.mubr.f32.mxu0 0.0
      %1901 = vmatmul.mubr.f32.gmra.mxu0 %v482
      %v1902 = vpop.f32.mrf.mxu0
      %v1903 = vadd.f32 0.0, %v1902
      %v1904 = vpop.f32.mrf.mxu0
      %1905 = vmatprep.mubr.f32.mxu0 0.0
      %1906 = vmatmul.mubr.f32.gmra.mxu0 %v484
      %v1907 = vpop.f32.mrf.mxu0
      %v1908 = vadd.f32 0.0, %v1907
      %v1909 = vpop.f32.mrf.mxu0
      %1910 = vmatprep.mubr.f32.mxu0 0.0
      %1911 = vmatmul.mubr.f32.gmra.mxu0 %v486
      %v1912 = vpop.f32.mrf.mxu0
      %v1913 = vadd.f32 0.0, %v1912
      %v1914 = vpop.f32.mrf.mxu0
      %1915 = vmatprep.mubr.f32.mxu0 0.0
      %1916 = vmatmul.mubr.f32.gmra.mxu0 %v488
      %v1917 = vpop.f32.mrf.mxu0
      %v1918 = vadd.f32 0.0, %v1917
      %v1919 = vpop.f32.mrf.mxu0
      %1920 = vmatprep.mubr.f32.mxu0 0.0
      %1921 = vmatmul.mubr.f32.gmra.mxu0 %v1702
      %v1922 = vpop.f32.mrf.mxu0
      %v1923 = vadd.f32 0.0, %v1922
      %v1924 = vpop.f32.mrf.mxu0
      %1925 = vmatprep.mubr.f32.mxu0 0.0
      %1926 = vmatmul.mubr.f32.gmra.mxu0 %v1704
      %v1927 = vpop.f32.mrf.mxu0
      %v1928 = vadd.f32 0.0, %v1927
      %v1929 = vpop.f32.mrf.mxu0
      %1930 = vdwg.mxu0
      %v1931 = vadd.f32 %v1655, %v1773
      %v1932 = vadd.f32 %v1656, %v1778
      %v1933 = vadd.f32 %v1657, %v1783
      %v1934 = vadd.f32 %v1658, %v1788
      %v1935 = vadd.f32 %v1659, %v1793
      %v1936 = vadd.f32 %v1660, %v1798
      %v1937 = vadd.f32 %v1661, %v1803
      %v1938 = vadd.f32 %v1662, %v1808
      %v1939 = vadd.f32 %v1663, %v1813
      %v1940 = vadd.f32 %v1664, %v1818
      %v1941 = vadd.f32 %v1665, %v1823
      %v1942 = vadd.f32 %v1666, %v1828
      %v1943 = vadd.f32 %v1667, %v1833
      %v1944 = vadd.f32 %v1668, %v1838
      %v1945 = vadd.f32 %v1669, %v1843
      %v1946 = vadd.f32 %v1670, %v1848
      %v1947 = vadd.f32 %v1671, %v1853
      %v1948 = vadd.f32 %v1672, %v1858
      %v1949 = vadd.f32 %v1673, %v1863
      %v1950 = vadd.f32 %v1674, %v1868
      %v1951 = vadd.f32 %v1675, %v1873
      %v1952 = vadd.f32 %v1676, %v1878
      %v1953 = vadd.f32 %v1677, %v1883
      %v1954 = vadd.f32 %v1678, %v1888
      %v1955 = vadd.f32 %v1679, %v1893
      %v1956 = vadd.f32 %v1680, %v1898
      %v1957 = vadd.f32 %v1681, %v1903
      %v1958 = vadd.f32 %v1682, %v1908
      %v1959 = vadd.f32 %v1683, %v1913
      %v1960 = vadd.f32 %v1684, %v1918
      %v1961 = vadd.f32 %v1685, %v1923
      %v1962 = vadd.f32 %v1686, %v1928
      %v1963 = vrot.slane %v273, 2
      %v1964 = vrot.slane %v274, 2
      %v1965 = vsel %vm1004, %v1963, %v1964
      %v1966 = vrot.slane %v275, 2
      %v1967 = vsel %vm1004, %v1964, %v1966
      %s1968 = scalar_lea.vmem %s1, 320
      %v1969 = vld [vmem:[%s1968] sm:$0xff]
      %v1970 = vld [vmem:[%s1968 + $0x8] sm:$0xff]
      %v1971 = vld [vmem:[%s1968 + $0x10] sm:$0xff]
      %v1972 = vld [vmem:[%s1968 + $0x18] sm:$0xff]
      %v1973 = vld [vmem:[%s1968 + $0x20] sm:$0xff]
      %v1974 = vld [vmem:[%s1968 + $0x28] sm:$0xff]
      %v1975 = vld [vmem:[%s1968 + $0x30] sm:$0xff]
      %v1976 = vld [vmem:[%s1968 + $0x38] sm:$0xff]
      %v1977 = vsel %vm425, %v1965, 0
      %v1979 = vsel %vm425, %v1967, 0
      %1981 = vmatprep.subr.mxu0 0.0
      %1982 = vmatpush1.msra.mxu0 0.0
      %1983 = vmatprep.subr.mxu0 0.0
      %1984 = vmatpush1.msra.mxu0 0.0
      %1985 = vmatprep.subr.mxu0 0.0
      %1986 = vmatpush1.msra.mxu0 0.0
      %1987 = vmatprep.subr.mxu0 0.0
      %1988 = vmatpush1.msra.mxu0 0.0
      %1989 = vmatprep.subr.mxu0 0.0
      %1990 = vmatpush1.msra.mxu0 0.0
      %1991 = vmatprep.subr.mxu0 0.0
      %1992 = vmatpush1.msra.mxu0 0.0
      %1993 = vmatprep.subr.mxu0 0.0
      %1994 = vmatpush1.msra.mxu0 0.0
      %1995 = vmatprep.subr.mxu0 0.0
      %1996 = vmatpush1.msra.mxu0 0.0
      %1997 = vmatprep.subr.mxu0 0.0
      %1998 = vmatpush1.msra.mxu0 %v1976
      %1999 = vmatprep.subr.mxu0 0.0
      %2000 = vmatpush1.msra.mxu0 %v1975
      %2001 = vmatprep.subr.mxu0 0.0
      %2002 = vmatpush1.msra.mxu0 %v1974
      %2003 = vmatprep.subr.mxu0 0.0
      %2004 = vmatpush1.msra.mxu0 %v1973
      %2005 = vmatprep.subr.mxu0 0.0
      %2006 = vmatpush1.msra.mxu0 %v1972
      %2007 = vmatprep.subr.mxu0 0.0
      %2008 = vmatpush1.msra.mxu0 %v1971
      %2009 = vmatprep.subr.mxu0 0.0
      %2010 = vmatpush1.msra.mxu0 %v1970
      %2011 = vmatprep.subr.mxu0 0.0
      %2012 = vmatpush1.msra.mxu0 %v1969
      %2013 = vmatprep.subr.mxu0 0.0
      %2014 = vmatpush2.msra.mxu0 0.0
      %2015 = vmatprep.subr.mxu0 0.0
      %2016 = vmatpush2.msra.mxu0 0.0
      %2017 = vmatprep.subr.mxu0 0.0
      %2018 = vmatpush2.msra.mxu0 0.0
      %2019 = vmatprep.subr.mxu0 0.0
      %2020 = vmatpush2.msra.mxu0 0.0
      %2021 = vmatprep.subr.mxu0 0.0
      %2022 = vmatpush2.msra.mxu0 0.0
      %2023 = vmatprep.subr.mxu0 0.0
      %2024 = vmatpush2.msra.mxu0 0.0
      %2025 = vmatprep.subr.mxu0 0.0
      %2026 = vmatpush2.msra.mxu0 0.0
      %2027 = vmatprep.subr.mxu0 0.0
      %2028 = vmatpush2.msra.mxu0 0.0
      %2029 = vmatprep.subr.mxu0 0.0
      %2030 = vmatpush2.msra.mxu0 0.0
      %2031 = vmatprep.subr.mxu0 0.0
      %2032 = vmatpush2.msra.mxu0 0.0
      %2033 = vmatprep.subr.mxu0 0.0
      %2034 = vmatpush2.msra.mxu0 0.0
      %2035 = vmatprep.subr.mxu0 0.0
      %2036 = vmatpush2.msra.mxu0 0.0
      %2037 = vmatprep.subr.mxu0 0.0
      %2038 = vmatpush2.msra.mxu0 0.0
      %2039 = vmatprep.subr.mxu0 0.0
      %2040 = vmatpush2.msra.mxu0 0.0
      %2041 = vmatprep.subr.mxu0 0.0
      %2042 = vmatpush2.msra.mxu0 0.0
      %2043 = vmatprep.subr.mxu0 0.0
      %2044 = vmatpush2.msra.mxu0 0.0
      %2045 = vmatprep.mubr.f32.mxu0 0.0
      %2046 = vmatmul.mubr.f32.gmra.mxu0 %v1098
      %v2047 = vpop.f32.mrf.mxu0
      %v2048 = vadd.f32 0.0, %v2047
      %v2049 = vpop.f32.mrf.mxu0
      %2050 = vmatprep.mubr.f32.mxu0 0.0
      %2051 = vmatmul.mubr.f32.gmra.mxu0 %v1100
      %v2052 = vpop.f32.mrf.mxu0
      %v2053 = vadd.f32 0.0, %v2052
      %v2054 = vpop.f32.mrf.mxu0
      %2055 = vmatprep.mubr.f32.mxu0 0.0
      %2056 = vmatmul.mubr.f32.gmra.mxu0 %v1102
      %v2057 = vpop.f32.mrf.mxu0
      %v2058 = vadd.f32 0.0, %v2057
      %v2059 = vpop.f32.mrf.mxu0
      %2060 = vmatprep.mubr.f32.mxu0 0.0
      %2061 = vmatmul.mubr.f32.gmra.mxu0 %v1104
      %v2062 = vpop.f32.mrf.mxu0
      %v2063 = vadd.f32 0.0, %v2062
      %v2064 = vpop.f32.mrf.mxu0
      %2065 = vmatprep.mubr.f32.mxu0 0.0
      %2066 = vmatmul.mubr.f32.gmra.mxu0 %v1106
      %v2067 = vpop.f32.mrf.mxu0
      %v2068 = vadd.f32 0.0, %v2067
      %v2069 = vpop.f32.mrf.mxu0
      %2070 = vmatprep.mubr.f32.mxu0 0.0
      %2071 = vmatmul.mubr.f32.gmra.mxu0 %v1108
      %v2072 = vpop.f32.mrf.mxu0
      %v2073 = vadd.f32 0.0, %v2072
      %v2074 = vpop.f32.mrf.mxu0
      %2075 = vmatprep.mubr.f32.mxu0 0.0
      %2076 = vmatmul.mubr.f32.gmra.mxu0 %v1110
      %v2077 = vpop.f32.mrf.mxu0
      %v2078 = vadd.f32 0.0, %v2077
      %v2079 = vpop.f32.mrf.mxu0
      %2080 = vmatprep.mubr.f32.mxu0 0.0
      %2081 = vmatmul.mubr.f32.gmra.mxu0 %v1112
      %v2082 = vpop.f32.mrf.mxu0
      %v2083 = vadd.f32 0.0, %v2082
      %v2084 = vpop.f32.mrf.mxu0
      %2085 = vmatprep.mubr.f32.mxu0 0.0
      %2086 = vmatmul.mubr.f32.gmra.mxu0 %v1114
      %v2087 = vpop.f32.mrf.mxu0
      %v2088 = vadd.f32 0.0, %v2087
      %v2089 = vpop.f32.mrf.mxu0
      %2090 = vmatprep.mubr.f32.mxu0 0.0
      %2091 = vmatmul.mubr.f32.gmra.mxu0 %v1116
      %v2092 = vpop.f32.mrf.mxu0
      %v2093 = vadd.f32 0.0, %v2092
      %v2094 = vpop.f32.mrf.mxu0
      %2095 = vmatprep.mubr.f32.mxu0 0.0
      %2096 = vmatmul.mubr.f32.gmra.mxu0 %v1118
      %v2097 = vpop.f32.mrf.mxu0
      %v2098 = vadd.f32 0.0, %v2097
      %v2099 = vpop.f32.mrf.mxu0
      %2100 = vmatprep.mubr.f32.mxu0 0.0
      %2101 = vmatmul.mubr.f32.gmra.mxu0 %v1120
      %v2102 = vpop.f32.mrf.mxu0
      %v2103 = vadd.f32 0.0, %v2102
      %v2104 = vpop.f32.mrf.mxu0
      %2105 = vmatprep.mubr.f32.mxu0 0.0
      %2106 = vmatmul.mubr.f32.gmra.mxu0 %v1122
      %v2107 = vpop.f32.mrf.mxu0
      %v2108 = vadd.f32 0.0, %v2107
      %v2109 = vpop.f32.mrf.mxu0
      %2110 = vmatprep.mubr.f32.mxu0 0.0
      %2111 = vmatmul.mubr.f32.gmra.mxu0 %v1124
      %v2112 = vpop.f32.mrf.mxu0
      %v2113 = vadd.f32 0.0, %v2112
      %v2114 = vpop.f32.mrf.mxu0
      %2115 = vmatprep.mubr.f32.mxu0 0.0
      %2116 = vmatmul.mubr.f32.gmra.mxu0 %v1126
      %v2117 = vpop.f32.mrf.mxu0
      %v2118 = vadd.f32 0.0, %v2117
      %v2119 = vpop.f32.mrf.mxu0
      %2120 = vmatprep.mubr.f32.mxu0 0.0
      %2121 = vmatmul.mubr.f32.gmra.mxu0 %v1128
      %v2122 = vpop.f32.mrf.mxu0
      %v2123 = vadd.f32 0.0, %v2122
      %v2124 = vpop.f32.mrf.mxu0
      %2125 = vmatprep.mubr.f32.mxu0 0.0
      %2126 = vmatmul.mubr.f32.gmra.mxu0 %v1130
      %v2127 = vpop.f32.mrf.mxu0
      %v2128 = vadd.f32 0.0, %v2127
      %v2129 = vpop.f32.mrf.mxu0
      %2130 = vmatprep.mubr.f32.mxu0 0.0
      %2131 = vmatmul.mubr.f32.gmra.mxu0 %v1132
      %v2132 = vpop.f32.mrf.mxu0
      %v2133 = vadd.f32 0.0, %v2132
      %v2134 = vpop.f32.mrf.mxu0
      %2135 = vmatprep.mubr.f32.mxu0 0.0
      %2136 = vmatmul.mubr.f32.gmra.mxu0 %v1134
      %v2137 = vpop.f32.mrf.mxu0
      %v2138 = vadd.f32 0.0, %v2137
      %v2139 = vpop.f32.mrf.mxu0
      %2140 = vmatprep.mubr.f32.mxu0 0.0
      %2141 = vmatmul.mubr.f32.gmra.mxu0 %v1136
      %v2142 = vpop.f32.mrf.mxu0
      %v2143 = vadd.f32 0.0, %v2142
      %v2144 = vpop.f32.mrf.mxu0
      %2145 = vmatprep.mubr.f32.mxu0 0.0
      %2146 = vmatmul.mubr.f32.gmra.mxu0 %v1138
      %v2147 = vpop.f32.mrf.mxu0
      %v2148 = vadd.f32 0.0, %v2147
      %v2149 = vpop.f32.mrf.mxu0
      %2150 = vmatprep.mubr.f32.mxu0 0.0
      %2151 = vmatmul.mubr.f32.gmra.mxu0 %v1140
      %v2152 = vpop.f32.mrf.mxu0
      %v2153 = vadd.f32 0.0, %v2152
      %v2154 = vpop.f32.mrf.mxu0
      %2155 = vmatprep.mubr.f32.mxu0 0.0
      %2156 = vmatmul.mubr.f32.gmra.mxu0 %v1142
      %v2157 = vpop.f32.mrf.mxu0
      %v2158 = vadd.f32 0.0, %v2157
      %v2159 = vpop.f32.mrf.mxu0
      %2160 = vmatprep.mubr.f32.mxu0 0.0
      %2161 = vmatmul.mubr.f32.gmra.mxu0 %v1144
      %v2162 = vpop.f32.mrf.mxu0
      %v2163 = vadd.f32 0.0, %v2162
      %v2164 = vpop.f32.mrf.mxu0
      %2165 = vmatprep.mubr.f32.mxu0 0.0
      %2166 = vmatmul.mubr.f32.gmra.mxu0 %v1146
      %v2167 = vpop.f32.mrf.mxu0
      %v2168 = vadd.f32 0.0, %v2167
      %v2169 = vpop.f32.mrf.mxu0
      %2170 = vmatprep.mubr.f32.mxu0 0.0
      %2171 = vmatmul.mubr.f32.gmra.mxu0 %v1148
      %v2172 = vpop.f32.mrf.mxu0
      %v2173 = vadd.f32 0.0, %v2172
      %v2174 = vpop.f32.mrf.mxu0
      %2175 = vmatprep.mubr.f32.mxu0 0.0
      %2176 = vmatmul.mubr.f32.gmra.mxu0 %v1150
      %v2177 = vpop.f32.mrf.mxu0
      %v2178 = vadd.f32 0.0, %v2177
      %v2179 = vpop.f32.mrf.mxu0
      %2180 = vmatprep.mubr.f32.mxu0 0.0
      %2181 = vmatmul.mubr.f32.gmra.mxu0 %v1152
      %v2182 = vpop.f32.mrf.mxu0
      %v2183 = vadd.f32 0.0, %v2182
      %v2184 = vpop.f32.mrf.mxu0
      %2185 = vmatprep.mubr.f32.mxu0 0.0
      %2186 = vmatmul.mubr.f32.gmra.mxu0 %v1154
      %v2187 = vpop.f32.mrf.mxu0
      %v2188 = vadd.f32 0.0, %v2187
      %v2189 = vpop.f32.mrf.mxu0
      %2190 = vmatprep.mubr.f32.mxu0 0.0
      %2191 = vmatmul.mubr.f32.gmra.mxu0 %v1156
      %v2192 = vpop.f32.mrf.mxu0
      %v2193 = vadd.f32 0.0, %v2192
      %v2194 = vpop.f32.mrf.mxu0
      %2195 = vmatprep.mubr.f32.mxu0 0.0
      %2196 = vmatmul.mubr.f32.gmra.mxu0 %v1977
      %v2197 = vpop.f32.mrf.mxu0
      %v2198 = vadd.f32 0.0, %v2197
      %v2199 = vpop.f32.mrf.mxu0
      %2200 = vmatprep.mubr.f32.mxu0 0.0
      %2201 = vmatmul.mubr.f32.gmra.mxu0 %v1979
      %v2202 = vpop.f32.mrf.mxu0
      %v2203 = vadd.f32 0.0, %v2202
      %v2204 = vpop.f32.mrf.mxu0
      %2205 = vdwg.mxu0
      %v2206 = vadd.f32 %v1931, %v2048
      %v2207 = vadd.f32 %v1932, %v2053
      %v2208 = vadd.f32 %v1933, %v2058
      %v2209 = vadd.f32 %v1934, %v2063
      %v2210 = vadd.f32 %v1935, %v2068
      %v2211 = vadd.f32 %v1936, %v2073
      %v2212 = vadd.f32 %v1937, %v2078
      %v2213 = vadd.f32 %v1938, %v2083
      %v2214 = vadd.f32 %v1939, %v2088
      %v2215 = vadd.f32 %v1940, %v2093
      %v2216 = vadd.f32 %v1941, %v2098
      %v2217 = vadd.f32 %v1942, %v2103
      %v2218 = vadd.f32 %v1943, %v2108
      %v2219 = vadd.f32 %v1944, %v2113
      %v2220 = vadd.f32 %v1945, %v2118
      %v2221 = vadd.f32 %v1946, %v2123
      %v2222 = vadd.f32 %v1947, %v2128
      %v2223 = vadd.f32 %v1948, %v2133
      %v2224 = vadd.f32 %v1949, %v2138
      %v2225 = vadd.f32 %v1950, %v2143
      %v2226 = vadd.f32 %v1951, %v2148
      %v2227 = vadd.f32 %v1952, %v2153
      %v2228 = vadd.f32 %v1953, %v2158
      %v2229 = vadd.f32 %v1954, %v2163
      %v2230 = vadd.f32 %v1955, %v2168
      %v2231 = vadd.f32 %v1956, %v2173
      %v2232 = vadd.f32 %v1957, %v2178
      %v2233 = vadd.f32 %v1958, %v2183
      %v2234 = vadd.f32 %v1959, %v2188
      %v2235 = vadd.f32 %v1960, %v2193
      %v2236 = vadd.f32 %v1961, %v2198
      %v2237 = vadd.f32 %v1962, %v2203
      %s2238 = scalar_lea.vmem %s1, 384
      %v2239 = vld [vmem:[%s2238] sm:$0xff]
      %v2240 = vld [vmem:[%s2238 + $0x8] sm:$0xff]
      %v2241 = vld [vmem:[%s2238 + $0x10] sm:$0xff]
      %v2242 = vld [vmem:[%s2238 + $0x18] sm:$0xff]
      %v2243 = vld [vmem:[%s2238 + $0x20] sm:$0xff]
      %v2244 = vld [vmem:[%s2238 + $0x28] sm:$0xff]
      %v2245 = vld [vmem:[%s2238 + $0x30] sm:$0xff]
      %v2246 = vld [vmem:[%s2238 + $0x38] sm:$0xff]
      %v2248 = vsel %vm425, %v276, 0
      %v2251 = vsel %vm425, %v277, 0
      %2253 = vmatprep.subr.mxu0 0.0
      %2254 = vmatpush1.msra.mxu0 0.0
      %2255 = vmatprep.subr.mxu0 0.0
      %2256 = vmatpush1.msra.mxu0 0.0
      %2257 = vmatprep.subr.mxu0 0.0
      %2258 = vmatpush1.msra.mxu0 0.0
      %2259 = vmatprep.subr.mxu0 0.0
      %2260 = vmatpush1.msra.mxu0 0.0
      %2261 = vmatprep.subr.mxu0 0.0
      %2262 = vmatpush1.msra.mxu0 0.0
      %2263 = vmatprep.subr.mxu0 0.0
      %2264 = vmatpush1.msra.mxu0 0.0
      %2265 = vmatprep.subr.mxu0 0.0
      %2266 = vmatpush1.msra.mxu0 0.0
      %2267 = vmatprep.subr.mxu0 0.0
      %2268 = vmatpush1.msra.mxu0 0.0
      %2269 = vmatprep.subr.mxu0 0.0
      %2270 = vmatpush1.msra.mxu0 %v2246
      %2271 = vmatprep.subr.mxu0 0.0
      %2272 = vmatpush1.msra.mxu0 %v2245
      %2273 = vmatprep.subr.mxu0 0.0
      %2274 = vmatpush1.msra.mxu0 %v2244
      %2275 = vmatprep.subr.mxu0 0.0
      %2276 = vmatpush1.msra.mxu0 %v2243
      %2277 = vmatprep.subr.mxu0 0.0
      %2278 = vmatpush1.msra.mxu0 %v2242
      %2279 = vmatprep.subr.mxu0 0.0
      %2280 = vmatpush1.msra.mxu0 %v2241
      %2281 = vmatprep.subr.mxu0 0.0
      %2282 = vmatpush1.msra.mxu0 %v2240
      %2283 = vmatprep.subr.mxu0 0.0
      %2284 = vmatpush1.msra.mxu0 %v2239
      %2285 = vmatprep.subr.mxu0 0.0
      %2286 = vmatpush2.msra.mxu0 0.0
      %2287 = vmatprep.subr.mxu0 0.0
      %2288 = vmatpush2.msra.mxu0 0.0
      %2289 = vmatprep.subr.mxu0 0.0
      %2290 = vmatpush2.msra.mxu0 0.0
      %2291 = vmatprep.subr.mxu0 0.0
      %2292 = vmatpush2.msra.mxu0 0.0
      %2293 = vmatprep.subr.mxu0 0.0
      %2294 = vmatpush2.msra.mxu0 0.0
      %2295 = vmatprep.subr.mxu0 0.0
      %2296 = vmatpush2.msra.mxu0 0.0
      %2297 = vmatprep.subr.mxu0 0.0
      %2298 = vmatpush2.msra.mxu0 0.0
      %2299 = vmatprep.subr.mxu0 0.0
      %2300 = vmatpush2.msra.mxu0 0.0
      %2301 = vmatprep.subr.mxu0 0.0
      %2302 = vmatpush2.msra.mxu0 0.0
      %2303 = vmatprep.subr.mxu0 0.0
      %2304 = vmatpush2.msra.mxu0 0.0
      %2305 = vmatprep.subr.mxu0 0.0
      %2306 = vmatpush2.msra.mxu0 0.0
      %2307 = vmatprep.subr.mxu0 0.0
      %2308 = vmatpush2.msra.mxu0 0.0
      %2309 = vmatprep.subr.mxu0 0.0
      %2310 = vmatpush2.msra.mxu0 0.0
      %2311 = vmatprep.subr.mxu0 0.0
      %2312 = vmatpush2.msra.mxu0 0.0
      %2313 = vmatprep.subr.mxu0 0.0
      %2314 = vmatpush2.msra.mxu0 0.0
      %2315 = vmatprep.subr.mxu0 0.0
      %2316 = vmatpush2.msra.mxu0 0.0
      %2317 = vmatprep.mubr.f32.mxu0 0.0
      %2318 = vmatmul.mubr.f32.gmra.mxu0 %v723
      %v2319 = vpop.f32.mrf.mxu0
      %v2320 = vadd.f32 0.0, %v2319
      %v2321 = vpop.f32.mrf.mxu0
      %2322 = vmatprep.mubr.f32.mxu0 0.0
      %2323 = vmatmul.mubr.f32.gmra.mxu0 %v725
      %v2324 = vpop.f32.mrf.mxu0
      %v2325 = vadd.f32 0.0, %v2324
      %v2326 = vpop.f32.mrf.mxu0
      %2327 = vmatprep.mubr.f32.mxu0 0.0
      %2328 = vmatmul.mubr.f32.gmra.mxu0 %v727
      %v2329 = vpop.f32.mrf.mxu0
      %v2330 = vadd.f32 0.0, %v2329
      %v2331 = vpop.f32.mrf.mxu0
      %2332 = vmatprep.mubr.f32.mxu0 0.0
      %2333 = vmatmul.mubr.f32.gmra.mxu0 %v729
      %v2334 = vpop.f32.mrf.mxu0
      %v2335 = vadd.f32 0.0, %v2334
      %v2336 = vpop.f32.mrf.mxu0
      %2337 = vmatprep.mubr.f32.mxu0 0.0
      %2338 = vmatmul.mubr.f32.gmra.mxu0 %v731
      %v2339 = vpop.f32.mrf.mxu0
      %v2340 = vadd.f32 0.0, %v2339
      %v2341 = vpop.f32.mrf.mxu0
      %2342 = vmatprep.mubr.f32.mxu0 0.0
      %2343 = vmatmul.mubr.f32.gmra.mxu0 %v733
      %v2344 = vpop.f32.mrf.mxu0
      %v2345 = vadd.f32 0.0, %v2344
      %v2346 = vpop.f32.mrf.mxu0
      %2347 = vmatprep.mubr.f32.mxu0 0.0
      %2348 = vmatmul.mubr.f32.gmra.mxu0 %v735
      %v2349 = vpop.f32.mrf.mxu0
      %v2350 = vadd.f32 0.0, %v2349
      %v2351 = vpop.f32.mrf.mxu0
      %2352 = vmatprep.mubr.f32.mxu0 0.0
      %2353 = vmatmul.mubr.f32.gmra.mxu0 %v737
      %v2354 = vpop.f32.mrf.mxu0
      %v2355 = vadd.f32 0.0, %v2354
      %v2356 = vpop.f32.mrf.mxu0
      %2357 = vmatprep.mubr.f32.mxu0 0.0
      %2358 = vmatmul.mubr.f32.gmra.mxu0 %v739
      %v2359 = vpop.f32.mrf.mxu0
      %v2360 = vadd.f32 0.0, %v2359
      %v2361 = vpop.f32.mrf.mxu0
      %2362 = vmatprep.mubr.f32.mxu0 0.0
      %2363 = vmatmul.mubr.f32.gmra.mxu0 %v741
      %v2364 = vpop.f32.mrf.mxu0
      %v2365 = vadd.f32 0.0, %v2364
      %v2366 = vpop.f32.mrf.mxu0
      %2367 = vmatprep.mubr.f32.mxu0 0.0
      %2368 = vmatmul.mubr.f32.gmra.mxu0 %v743
      %v2369 = vpop.f32.mrf.mxu0
      %v2370 = vadd.f32 0.0, %v2369
      %v2371 = vpop.f32.mrf.mxu0
      %2372 = vmatprep.mubr.f32.mxu0 0.0
      %2373 = vmatmul.mubr.f32.gmra.mxu0 %v745
      %v2374 = vpop.f32.mrf.mxu0
      %v2375 = vadd.f32 0.0, %v2374
      %v2376 = vpop.f32.mrf.mxu0
      %2377 = vmatprep.mubr.f32.mxu0 0.0
      %2378 = vmatmul.mubr.f32.gmra.mxu0 %v747
      %v2379 = vpop.f32.mrf.mxu0
      %v2380 = vadd.f32 0.0, %v2379
      %v2381 = vpop.f32.mrf.mxu0
      %2382 = vmatprep.mubr.f32.mxu0 0.0
      %2383 = vmatmul.mubr.f32.gmra.mxu0 %v749
      %v2384 = vpop.f32.mrf.mxu0
      %v2385 = vadd.f32 0.0, %v2384
      %v2386 = vpop.f32.mrf.mxu0
      %2387 = vmatprep.mubr.f32.mxu0 0.0
      %2388 = vmatmul.mubr.f32.gmra.mxu0 %v751
      %v2389 = vpop.f32.mrf.mxu0
      %v2390 = vadd.f32 0.0, %v2389
      %v2391 = vpop.f32.mrf.mxu0
      %2392 = vmatprep.mubr.f32.mxu0 0.0
      %2393 = vmatmul.mubr.f32.gmra.mxu0 %v753
      %v2394 = vpop.f32.mrf.mxu0
      %v2395 = vadd.f32 0.0, %v2394
      %v2396 = vpop.f32.mrf.mxu0
      %2397 = vmatprep.mubr.f32.mxu0 0.0
      %2398 = vmatmul.mubr.f32.gmra.mxu0 %v755
      %v2399 = vpop.f32.mrf.mxu0
      %v2400 = vadd.f32 0.0, %v2399
      %v2401 = vpop.f32.mrf.mxu0
      %2402 = vmatprep.mubr.f32.mxu0 0.0
      %2403 = vmatmul.mubr.f32.gmra.mxu0 %v757
      %v2404 = vpop.f32.mrf.mxu0
      %v2405 = vadd.f32 0.0, %v2404
      %v2406 = vpop.f32.mrf.mxu0
      %2407 = vmatprep.mubr.f32.mxu0 0.0
      %2408 = vmatmul.mubr.f32.gmra.mxu0 %v759
      %v2409 = vpop.f32.mrf.mxu0
      %v2410 = vadd.f32 0.0, %v2409
      %v2411 = vpop.f32.mrf.mxu0
      %2412 = vmatprep.mubr.f32.mxu0 0.0
      %2413 = vmatmul.mubr.f32.gmra.mxu0 %v761
      %v2414 = vpop.f32.mrf.mxu0
      %v2415 = vadd.f32 0.0, %v2414
      %v2416 = vpop.f32.mrf.mxu0
      %2417 = vmatprep.mubr.f32.mxu0 0.0
      %2418 = vmatmul.mubr.f32.gmra.mxu0 %v763
      %v2419 = vpop.f32.mrf.mxu0
      %v2420 = vadd.f32 0.0, %v2419
      %v2421 = vpop.f32.mrf.mxu0
      %2422 = vmatprep.mubr.f32.mxu0 0.0
      %2423 = vmatmul.mubr.f32.gmra.mxu0 %v765
      %v2424 = vpop.f32.mrf.mxu0
      %v2425 = vadd.f32 0.0, %v2424
      %v2426 = vpop.f32.mrf.mxu0
      %2427 = vmatprep.mubr.f32.mxu0 0.0
      %2428 = vmatmul.mubr.f32.gmra.mxu0 %v767
      %v2429 = vpop.f32.mrf.mxu0
      %v2430 = vadd.f32 0.0, %v2429
      %v2431 = vpop.f32.mrf.mxu0
      %2432 = vmatprep.mubr.f32.mxu0 0.0
      %2433 = vmatmul.mubr.f32.gmra.mxu0 %v769
      %v2434 = vpop.f32.mrf.mxu0
      %v2435 = vadd.f32 0.0, %v2434
      %v2436 = vpop.f32.mrf.mxu0
      %2437 = vmatprep.mubr.f32.mxu0 0.0
      %2438 = vmatmul.mubr.f32.gmra.mxu0 %v771
      %v2439 = vpop.f32.mrf.mxu0
      %v2440 = vadd.f32 0.0, %v2439
      %v2441 = vpop.f32.mrf.mxu0
      %2442 = vmatprep.mubr.f32.mxu0 0.0
      %2443 = vmatmul.mubr.f32.gmra.mxu0 %v773
      %v2444 = vpop.f32.mrf.mxu0
      %v2445 = vadd.f32 0.0, %v2444
      %v2446 = vpop.f32.mrf.mxu0
      %2447 = vmatprep.mubr.f32.mxu0 0.0
      %2448 = vmatmul.mubr.f32.gmra.mxu0 %v775
      %v2449 = vpop.f32.mrf.mxu0
      %v2450 = vadd.f32 0.0, %v2449
      %v2451 = vpop.f32.mrf.mxu0
      %2452 = vmatprep.mubr.f32.mxu0 0.0
      %2453 = vmatmul.mubr.f32.gmra.mxu0 %v777
      %v2454 = vpop.f32.mrf.mxu0
      %v2455 = vadd.f32 0.0, %v2454
      %v2456 = vpop.f32.mrf.mxu0
      %2457 = vmatprep.mubr.f32.mxu0 0.0
      %2458 = vmatmul.mubr.f32.gmra.mxu0 %v1425
      %v2459 = vpop.f32.mrf.mxu0
      %v2460 = vadd.f32 0.0, %v2459
      %v2461 = vpop.f32.mrf.mxu0
      %2462 = vmatprep.mubr.f32.mxu0 0.0
      %2463 = vmatmul.mubr.f32.gmra.mxu0 %v1428
      %v2464 = vpop.f32.mrf.mxu0
      %v2465 = vadd.f32 0.0, %v2464
      %v2466 = vpop.f32.mrf.mxu0
      %2467 = vmatprep.mubr.f32.mxu0 0.0
      %2468 = vmatmul.mubr.f32.gmra.mxu0 %v2248
      %v2469 = vpop.f32.mrf.mxu0
      %v2470 = vadd.f32 0.0, %v2469
      %v2471 = vpop.f32.mrf.mxu0
      %2472 = vmatprep.mubr.f32.mxu0 0.0
      %2473 = vmatmul.mubr.f32.gmra.mxu0 %v2251
      %v2474 = vpop.f32.mrf.mxu0
      %v2475 = vadd.f32 0.0, %v2474
      %v2476 = vpop.f32.mrf.mxu0
      %2477 = vdwg.mxu0
      %v2478 = vadd.f32 %v2206, %v2320
      %v2479 = vadd.f32 %v2207, %v2325
      %v2480 = vadd.f32 %v2208, %v2330
      %v2481 = vadd.f32 %v2209, %v2335
      %v2482 = vadd.f32 %v2210, %v2340
      %v2483 = vadd.f32 %v2211, %v2345
      %v2484 = vadd.f32 %v2212, %v2350
      %v2485 = vadd.f32 %v2213, %v2355
      %v2486 = vadd.f32 %v2214, %v2360
      %v2487 = vadd.f32 %v2215, %v2365
      %v2488 = vadd.f32 %v2216, %v2370
      %v2489 = vadd.f32 %v2217, %v2375
      %v2490 = vadd.f32 %v2218, %v2380
      %v2491 = vadd.f32 %v2219, %v2385
      %v2492 = vadd.f32 %v2220, %v2390
      %v2493 = vadd.f32 %v2221, %v2395
      %v2494 = vadd.f32 %v2222, %v2400
      %v2495 = vadd.f32 %v2223, %v2405
      %v2496 = vadd.f32 %v2224, %v2410
      %v2497 = vadd.f32 %v2225, %v2415
      %v2498 = vadd.f32 %v2226, %v2420
      %v2499 = vadd.f32 %v2227, %v2425
      %v2500 = vadd.f32 %v2228, %v2430
      %v2501 = vadd.f32 %v2229, %v2435
      %v2502 = vadd.f32 %v2230, %v2440
      %v2503 = vadd.f32 %v2231, %v2445
      %v2504 = vadd.f32 %v2232, %v2450
      %v2505 = vadd.f32 %v2233, %v2455
      %v2506 = vadd.f32 %v2234, %v2460
      %v2507 = vadd.f32 %v2235, %v2465
      %v2508 = vadd.f32 %v2236, %v2470
      %v2509 = vadd.f32 %v2237, %v2475
      %v2511 = vrot.slane %v276, 1
      %v2512 = vrot.slane %v277, 1
      %v2513 = vsel %vm335, %v2511, %v2512
      %v2514 = vrot.slane %v278, 1
      %v2515 = vsel %vm335, %v2512, %v2514
      %s2516 = scalar_lea.vmem %s1, 448
      %v2517 = vld [vmem:[%s2516] sm:$0xff]
      %v2518 = vld [vmem:[%s2516 + $0x8] sm:$0xff]
      %v2519 = vld [vmem:[%s2516 + $0x10] sm:$0xff]
      %v2520 = vld [vmem:[%s2516 + $0x18] sm:$0xff]
      %v2521 = vld [vmem:[%s2516 + $0x20] sm:$0xff]
      %v2522 = vld [vmem:[%s2516 + $0x28] sm:$0xff]
      %v2523 = vld [vmem:[%s2516 + $0x30] sm:$0xff]
      %v2524 = vld [vmem:[%s2516 + $0x38] sm:$0xff]
      %v2525 = vsel %vm425, %v2513, 0
      %v2527 = vsel %vm425, %v2515, 0
      %2529 = vmatprep.subr.mxu0 0.0
      %2530 = vmatpush1.msra.mxu0 0.0
      %2531 = vmatprep.subr.mxu0 0.0
      %2532 = vmatpush1.msra.mxu0 0.0
      %2533 = vmatprep.subr.mxu0 0.0
      %2534 = vmatpush1.msra.mxu0 0.0
      %2535 = vmatprep.subr.mxu0 0.0
      %2536 = vmatpush1.msra.mxu0 0.0
      %2537 = vmatprep.subr.mxu0 0.0
      %2538 = vmatpush1.msra.mxu0 0.0
      %2539 = vmatprep.subr.mxu0 0.0
      %2540 = vmatpush1.msra.mxu0 0.0
      %2541 = vmatprep.subr.mxu0 0.0
      %2542 = vmatpush1.msra.mxu0 0.0
      %2543 = vmatprep.subr.mxu0 0.0
      %2544 = vmatpush1.msra.mxu0 0.0
      %2545 = vmatprep.subr.mxu0 0.0
      %2546 = vmatpush1.msra.mxu0 %v2524
      %2547 = vmatprep.subr.mxu0 0.0
      %2548 = vmatpush1.msra.mxu0 %v2523
      %2549 = vmatprep.subr.mxu0 0.0
      %2550 = vmatpush1.msra.mxu0 %v2522
      %2551 = vmatprep.subr.mxu0 0.0
      %2552 = vmatpush1.msra.mxu0 %v2521
      %2553 = vmatprep.subr.mxu0 0.0
      %2554 = vmatpush1.msra.mxu0 %v2520
      %2555 = vmatprep.subr.mxu0 0.0
      %2556 = vmatpush1.msra.mxu0 %v2519
      %2557 = vmatprep.subr.mxu0 0.0
      %2558 = vmatpush1.msra.mxu0 %v2518
      %2559 = vmatprep.subr.mxu0 0.0
      %2560 = vmatpush1.msra.mxu0 %v2517
      %2561 = vmatprep.subr.mxu0 0.0
      %2562 = vmatpush2.msra.mxu0 0.0
      %2563 = vmatprep.subr.mxu0 0.0
      %2564 = vmatpush2.msra.mxu0 0.0
      %2565 = vmatprep.subr.mxu0 0.0
      %2566 = vmatpush2.msra.mxu0 0.0
      %2567 = vmatprep.subr.mxu0 0.0
      %2568 = vmatpush2.msra.mxu0 0.0
      %2569 = vmatprep.subr.mxu0 0.0
      %2570 = vmatpush2.msra.mxu0 0.0
      %2571 = vmatprep.subr.mxu0 0.0
      %2572 = vmatpush2.msra.mxu0 0.0
      %2573 = vmatprep.subr.mxu0 0.0
      %2574 = vmatpush2.msra.mxu0 0.0
      %2575 = vmatprep.subr.mxu0 0.0
      %2576 = vmatpush2.msra.mxu0 0.0
      %2577 = vmatprep.subr.mxu0 0.0
      %2578 = vmatpush2.msra.mxu0 0.0
      %2579 = vmatprep.subr.mxu0 0.0
      %2580 = vmatpush2.msra.mxu0 0.0
      %2581 = vmatprep.subr.mxu0 0.0
      %2582 = vmatpush2.msra.mxu0 0.0
      %2583 = vmatprep.subr.mxu0 0.0
      %2584 = vmatpush2.msra.mxu0 0.0
      %2585 = vmatprep.subr.mxu0 0.0
      %2586 = vmatpush2.msra.mxu0 0.0
      %2587 = vmatprep.subr.mxu0 0.0
      %2588 = vmatpush2.msra.mxu0 0.0
      %2589 = vmatprep.subr.mxu0 0.0
      %2590 = vmatpush2.msra.mxu0 0.0
      %2591 = vmatprep.subr.mxu0 0.0
      %2592 = vmatpush2.msra.mxu0 0.0
      %2593 = vmatprep.mubr.f32.mxu0 0.0
      %2594 = vmatmul.mubr.f32.gmra.mxu0 %v434
      %v2595 = vpop.f32.mrf.mxu0
      %v2596 = vadd.f32 0.0, %v2595
      %v2597 = vpop.f32.mrf.mxu0
      %2598 = vmatprep.mubr.f32.mxu0 0.0
      %2599 = vmatmul.mubr.f32.gmra.mxu0 %v436
      %v2600 = vpop.f32.mrf.mxu0
      %v2601 = vadd.f32 0.0, %v2600
      %v2602 = vpop.f32.mrf.mxu0
      %2603 = vmatprep.mubr.f32.mxu0 0.0
      %2604 = vmatmul.mubr.f32.gmra.mxu0 %v438
      %v2605 = vpop.f32.mrf.mxu0
      %v2606 = vadd.f32 0.0, %v2605
      %v2607 = vpop.f32.mrf.mxu0
      %2608 = vmatprep.mubr.f32.mxu0 0.0
      %2609 = vmatmul.mubr.f32.gmra.mxu0 %v440
      %v2610 = vpop.f32.mrf.mxu0
      %v2611 = vadd.f32 0.0, %v2610
      %v2612 = vpop.f32.mrf.mxu0
      %2613 = vmatprep.mubr.f32.mxu0 0.0
      %2614 = vmatmul.mubr.f32.gmra.mxu0 %v442
      %v2615 = vpop.f32.mrf.mxu0
      %v2616 = vadd.f32 0.0, %v2615
      %v2617 = vpop.f32.mrf.mxu0
      %2618 = vmatprep.mubr.f32.mxu0 0.0
      %2619 = vmatmul.mubr.f32.gmra.mxu0 %v444
      %v2620 = vpop.f32.mrf.mxu0
      %v2621 = vadd.f32 0.0, %v2620
      %v2622 = vpop.f32.mrf.mxu0
      %2623 = vmatprep.mubr.f32.mxu0 0.0
      %2624 = vmatmul.mubr.f32.gmra.mxu0 %v446
      %v2625 = vpop.f32.mrf.mxu0
      %v2626 = vadd.f32 0.0, %v2625
      %v2627 = vpop.f32.mrf.mxu0
      %2628 = vmatprep.mubr.f32.mxu0 0.0
      %2629 = vmatmul.mubr.f32.gmra.mxu0 %v448
      %v2630 = vpop.f32.mrf.mxu0
      %v2631 = vadd.f32 0.0, %v2630
      %v2632 = vpop.f32.mrf.mxu0
      %2633 = vmatprep.mubr.f32.mxu0 0.0
      %2634 = vmatmul.mubr.f32.gmra.mxu0 %v450
      %v2635 = vpop.f32.mrf.mxu0
      %v2636 = vadd.f32 0.0, %v2635
      %v2637 = vpop.f32.mrf.mxu0
      %2638 = vmatprep.mubr.f32.mxu0 0.0
      %2639 = vmatmul.mubr.f32.gmra.mxu0 %v452
      %v2640 = vpop.f32.mrf.mxu0
      %v2641 = vadd.f32 0.0, %v2640
      %v2642 = vpop.f32.mrf.mxu0
      %2643 = vmatprep.mubr.f32.mxu0 0.0
      %2644 = vmatmul.mubr.f32.gmra.mxu0 %v454
      %v2645 = vpop.f32.mrf.mxu0
      %v2646 = vadd.f32 0.0, %v2645
      %v2647 = vpop.f32.mrf.mxu0
      %2648 = vmatprep.mubr.f32.mxu0 0.0
      %2649 = vmatmul.mubr.f32.gmra.mxu0 %v456
      %v2650 = vpop.f32.mrf.mxu0
      %v2651 = vadd.f32 0.0, %v2650
      %v2652 = vpop.f32.mrf.mxu0
      %2653 = vmatprep.mubr.f32.mxu0 0.0
      %2654 = vmatmul.mubr.f32.gmra.mxu0 %v458
      %v2655 = vpop.f32.mrf.mxu0
      %v2656 = vadd.f32 0.0, %v2655
      %v2657 = vpop.f32.mrf.mxu0
      %2658 = vmatprep.mubr.f32.mxu0 0.0
      %2659 = vmatmul.mubr.f32.gmra.mxu0 %v460
      %v2660 = vpop.f32.mrf.mxu0
      %v2661 = vadd.f32 0.0, %v2660
      %v2662 = vpop.f32.mrf.mxu0
      %2663 = vmatprep.mubr.f32.mxu0 0.0
      %2664 = vmatmul.mubr.f32.gmra.mxu0 %v462
      %v2665 = vpop.f32.mrf.mxu0
      %v2666 = vadd.f32 0.0, %v2665
      %v2667 = vpop.f32.mrf.mxu0
      %2668 = vmatprep.mubr.f32.mxu0 0.0
      %2669 = vmatmul.mubr.f32.gmra.mxu0 %v464
      %v2670 = vpop.f32.mrf.mxu0
      %v2671 = vadd.f32 0.0, %v2670
      %v2672 = vpop.f32.mrf.mxu0
      %2673 = vmatprep.mubr.f32.mxu0 0.0
      %2674 = vmatmul.mubr.f32.gmra.mxu0 %v466
      %v2675 = vpop.f32.mrf.mxu0
      %v2676 = vadd.f32 0.0, %v2675
      %v2677 = vpop.f32.mrf.mxu0
      %2678 = vmatprep.mubr.f32.mxu0 0.0
      %2679 = vmatmul.mubr.f32.gmra.mxu0 %v468
      %v2680 = vpop.f32.mrf.mxu0
      %v2681 = vadd.f32 0.0, %v2680
      %v2682 = vpop.f32.mrf.mxu0
      %2683 = vmatprep.mubr.f32.mxu0 0.0
      %2684 = vmatmul.mubr.f32.gmra.mxu0 %v470
      %v2685 = vpop.f32.mrf.mxu0
      %v2686 = vadd.f32 0.0, %v2685
      %v2687 = vpop.f32.mrf.mxu0
      %2688 = vmatprep.mubr.f32.mxu0 0.0
      %2689 = vmatmul.mubr.f32.gmra.mxu0 %v472
      %v2690 = vpop.f32.mrf.mxu0
      %v2691 = vadd.f32 0.0, %v2690
      %v2692 = vpop.f32.mrf.mxu0
      %2693 = vmatprep.mubr.f32.mxu0 0.0
      %2694 = vmatmul.mubr.f32.gmra.mxu0 %v474
      %v2695 = vpop.f32.mrf.mxu0
      %v2696 = vadd.f32 0.0, %v2695
      %v2697 = vpop.f32.mrf.mxu0
      %2698 = vmatprep.mubr.f32.mxu0 0.0
      %2699 = vmatmul.mubr.f32.gmra.mxu0 %v476
      %v2700 = vpop.f32.mrf.mxu0
      %v2701 = vadd.f32 0.0, %v2700
      %v2702 = vpop.f32.mrf.mxu0
      %2703 = vmatprep.mubr.f32.mxu0 0.0
      %2704 = vmatmul.mubr.f32.gmra.mxu0 %v478
      %v2705 = vpop.f32.mrf.mxu0
      %v2706 = vadd.f32 0.0, %v2705
      %v2707 = vpop.f32.mrf.mxu0
      %2708 = vmatprep.mubr.f32.mxu0 0.0
      %2709 = vmatmul.mubr.f32.gmra.mxu0 %v480
      %v2710 = vpop.f32.mrf.mxu0
      %v2711 = vadd.f32 0.0, %v2710
      %v2712 = vpop.f32.mrf.mxu0
      %2713 = vmatprep.mubr.f32.mxu0 0.0
      %2714 = vmatmul.mubr.f32.gmra.mxu0 %v482
      %v2715 = vpop.f32.mrf.mxu0
      %v2716 = vadd.f32 0.0, %v2715
      %v2717 = vpop.f32.mrf.mxu0
      %2718 = vmatprep.mubr.f32.mxu0 0.0
      %2719 = vmatmul.mubr.f32.gmra.mxu0 %v484
      %v2720 = vpop.f32.mrf.mxu0
      %v2721 = vadd.f32 0.0, %v2720
      %v2722 = vpop.f32.mrf.mxu0
      %2723 = vmatprep.mubr.f32.mxu0 0.0
      %2724 = vmatmul.mubr.f32.gmra.mxu0 %v486
      %v2725 = vpop.f32.mrf.mxu0
      %v2726 = vadd.f32 0.0, %v2725
      %v2727 = vpop.f32.mrf.mxu0
      %2728 = vmatprep.mubr.f32.mxu0 0.0
      %2729 = vmatmul.mubr.f32.gmra.mxu0 %v488
      %v2730 = vpop.f32.mrf.mxu0
      %v2731 = vadd.f32 0.0, %v2730
      %v2732 = vpop.f32.mrf.mxu0
      %2733 = vmatprep.mubr.f32.mxu0 0.0
      %2734 = vmatmul.mubr.f32.gmra.mxu0 %v1702
      %v2735 = vpop.f32.mrf.mxu0
      %v2736 = vadd.f32 0.0, %v2735
      %v2737 = vpop.f32.mrf.mxu0
      %2738 = vmatprep.mubr.f32.mxu0 0.0
      %2739 = vmatmul.mubr.f32.gmra.mxu0 %v1704
      %v2740 = vpop.f32.mrf.mxu0
      %v2741 = vadd.f32 0.0, %v2740
      %v2742 = vpop.f32.mrf.mxu0
      %2743 = vmatprep.mubr.f32.mxu0 0.0
      %2744 = vmatmul.mubr.f32.gmra.mxu0 %v2525
      %v2745 = vpop.f32.mrf.mxu0
      %v2746 = vadd.f32 0.0, %v2745
      %v2747 = vpop.f32.mrf.mxu0
      %2748 = vmatprep.mubr.f32.mxu0 0.0
      %2749 = vmatmul.mubr.f32.gmra.mxu0 %v2527
      %v2750 = vpop.f32.mrf.mxu0
      %v2751 = vadd.f32 0.0, %v2750
      %v2752 = vpop.f32.mrf.mxu0
      %2753 = vdwg.mxu0
      %v2754 = vadd.f32 %v2478, %v2596
      %v2755 = vadd.f32 %v2479, %v2601
      %v2756 = vadd.f32 %v2480, %v2606
      %v2757 = vadd.f32 %v2481, %v2611
      %v2758 = vadd.f32 %v2482, %v2616
      %v2759 = vadd.f32 %v2483, %v2621
      %v2760 = vadd.f32 %v2484, %v2626
      %v2761 = vadd.f32 %v2485, %v2631
      %v2762 = vadd.f32 %v2486, %v2636
      %v2763 = vadd.f32 %v2487, %v2641
      %v2764 = vadd.f32 %v2488, %v2646
      %v2765 = vadd.f32 %v2489, %v2651
      %v2766 = vadd.f32 %v2490, %v2656
      %v2767 = vadd.f32 %v2491, %v2661
      %v2768 = vadd.f32 %v2492, %v2666
      %v2769 = vadd.f32 %v2493, %v2671
      %v2770 = vadd.f32 %v2494, %v2676
      %v2771 = vadd.f32 %v2495, %v2681
      %v2772 = vadd.f32 %v2496, %v2686
      %v2773 = vadd.f32 %v2497, %v2691
      %v2774 = vadd.f32 %v2498, %v2696
      %v2775 = vadd.f32 %v2499, %v2701
      %v2776 = vadd.f32 %v2500, %v2706
      %v2777 = vadd.f32 %v2501, %v2711
      %v2778 = vadd.f32 %v2502, %v2716
      %v2779 = vadd.f32 %v2503, %v2721
      %v2780 = vadd.f32 %v2504, %v2726
      %v2781 = vadd.f32 %v2505, %v2731
      %v2782 = vadd.f32 %v2506, %v2736
      %v2783 = vadd.f32 %v2507, %v2741
      %v2784 = vadd.f32 %v2508, %v2746
      %v2785 = vadd.f32 %v2509, %v2751
      %v2786 = vrot.slane %v276, 2
      %v2787 = vrot.slane %v277, 2
      %v2788 = vsel %vm1004, %v2786, %v2787
      %v2789 = vrot.slane %v278, 2
      %v2790 = vsel %vm1004, %v2787, %v2789
      %s2791 = scalar_lea.vmem %s1, 512
      %v2792 = vld [vmem:[%s2791] sm:$0xff]
      %v2793 = vld [vmem:[%s2791 + $0x8] sm:$0xff]
      %v2794 = vld [vmem:[%s2791 + $0x10] sm:$0xff]
      %v2795 = vld [vmem:[%s2791 + $0x18] sm:$0xff]
      %v2796 = vld [vmem:[%s2791 + $0x20] sm:$0xff]
      %v2797 = vld [vmem:[%s2791 + $0x28] sm:$0xff]
      %v2798 = vld [vmem:[%s2791 + $0x30] sm:$0xff]
      %v2799 = vld [vmem:[%s2791 + $0x38] sm:$0xff]
      %v2800 = vsel %vm425, %v2788, 0
      %v2802 = vsel %vm425, %v2790, 0
      %2804 = vmatprep.subr.mxu0 0.0
      %2805 = vmatpush1.msra.mxu0 0.0
      %2806 = vmatprep.subr.mxu0 0.0
      %2807 = vmatpush1.msra.mxu0 0.0
      %2808 = vmatprep.subr.mxu0 0.0
      %2809 = vmatpush1.msra.mxu0 0.0
      %2810 = vmatprep.subr.mxu0 0.0
      %2811 = vmatpush1.msra.mxu0 0.0
      %2812 = vmatprep.subr.mxu0 0.0
      %2813 = vmatpush1.msra.mxu0 0.0
      %2814 = vmatprep.subr.mxu0 0.0
      %2815 = vmatpush1.msra.mxu0 0.0
      %2816 = vmatprep.subr.mxu0 0.0
      %2817 = vmatpush1.msra.mxu0 0.0
      %2818 = vmatprep.subr.mxu0 0.0
      %2819 = vmatpush1.msra.mxu0 0.0
      %2820 = vmatprep.subr.mxu0 0.0
      %2821 = vmatpush1.msra.mxu0 %v2799
      %2822 = vmatprep.subr.mxu0 0.0
      %2823 = vmatpush1.msra.mxu0 %v2798
      %2824 = vmatprep.subr.mxu0 0.0
      %2825 = vmatpush1.msra.mxu0 %v2797
      %2826 = vmatprep.subr.mxu0 0.0
      %2827 = vmatpush1.msra.mxu0 %v2796
      %2828 = vmatprep.subr.mxu0 0.0
      %2829 = vmatpush1.msra.mxu0 %v2795
      %2830 = vmatprep.subr.mxu0 0.0
      %2831 = vmatpush1.msra.mxu0 %v2794
      %2832 = vmatprep.subr.mxu0 0.0
      %2833 = vmatpush1.msra.mxu0 %v2793
      %2834 = vmatprep.subr.mxu0 0.0
      %2835 = vmatpush1.msra.mxu0 %v2792
      %2836 = vmatprep.subr.mxu0 0.0
      %2837 = vmatpush2.msra.mxu0 0.0
      %2838 = vmatprep.subr.mxu0 0.0
      %2839 = vmatpush2.msra.mxu0 0.0
      %2840 = vmatprep.subr.mxu0 0.0
      %2841 = vmatpush2.msra.mxu0 0.0
      %2842 = vmatprep.subr.mxu0 0.0
      %2843 = vmatpush2.msra.mxu0 0.0
      %2844 = vmatprep.subr.mxu0 0.0
      %2845 = vmatpush2.msra.mxu0 0.0
      %2846 = vmatprep.subr.mxu0 0.0
      %2847 = vmatpush2.msra.mxu0 0.0
      %2848 = vmatprep.subr.mxu0 0.0
      %2849 = vmatpush2.msra.mxu0 0.0
      %2850 = vmatprep.subr.mxu0 0.0
      %2851 = vmatpush2.msra.mxu0 0.0
      %2852 = vmatprep.subr.mxu0 0.0
      %2853 = vmatpush2.msra.mxu0 0.0
      %2854 = vmatprep.subr.mxu0 0.0
      %2855 = vmatpush2.msra.mxu0 0.0
      %2856 = vmatprep.subr.mxu0 0.0
      %2857 = vmatpush2.msra.mxu0 0.0
      %2858 = vmatprep.subr.mxu0 0.0
      %2859 = vmatpush2.msra.mxu0 0.0
      %2860 = vmatprep.subr.mxu0 0.0
      %2861 = vmatpush2.msra.mxu0 0.0
      %2862 = vmatprep.subr.mxu0 0.0
      %2863 = vmatpush2.msra.mxu0 0.0
      %2864 = vmatprep.subr.mxu0 0.0
      %2865 = vmatpush2.msra.mxu0 0.0
      %2866 = vmatprep.subr.mxu0 0.0
      %2867 = vmatpush2.msra.mxu0 0.0
      %2868 = vmatprep.mubr.f32.mxu0 0.0
      %2869 = vmatmul.mubr.f32.gmra.mxu0 %v1102
      %v2870 = vpop.f32.mrf.mxu0
      %v2871 = vadd.f32 0.0, %v2870
      %v2872 = vpop.f32.mrf.mxu0
      %2873 = vmatprep.mubr.f32.mxu0 0.0
      %2874 = vmatmul.mubr.f32.gmra.mxu0 %v1104
      %v2875 = vpop.f32.mrf.mxu0
      %v2876 = vadd.f32 0.0, %v2875
      %v2877 = vpop.f32.mrf.mxu0
      %2878 = vmatprep.mubr.f32.mxu0 0.0
      %2879 = vmatmul.mubr.f32.gmra.mxu0 %v1106
      %v2880 = vpop.f32.mrf.mxu0
      %v2881 = vadd.f32 0.0, %v2880
      %v2882 = vpop.f32.mrf.mxu0
      %2883 = vmatprep.mubr.f32.mxu0 0.0
      %2884 = vmatmul.mubr.f32.gmra.mxu0 %v1108
      %v2885 = vpop.f32.mrf.mxu0
      %v2886 = vadd.f32 0.0, %v2885
      %v2887 = vpop.f32.mrf.mxu0
      %2888 = vmatprep.mubr.f32.mxu0 0.0
      %2889 = vmatmul.mubr.f32.gmra.mxu0 %v1110
      %v2890 = vpop.f32.mrf.mxu0
      %v2891 = vadd.f32 0.0, %v2890
      %v2892 = vpop.f32.mrf.mxu0
      %2893 = vmatprep.mubr.f32.mxu0 0.0
      %2894 = vmatmul.mubr.f32.gmra.mxu0 %v1112
      %v2895 = vpop.f32.mrf.mxu0
      %v2896 = vadd.f32 0.0, %v2895
      %v2897 = vpop.f32.mrf.mxu0
      %2898 = vmatprep.mubr.f32.mxu0 0.0
      %2899 = vmatmul.mubr.f32.gmra.mxu0 %v1114
      %v2900 = vpop.f32.mrf.mxu0
      %v2901 = vadd.f32 0.0, %v2900
      %v2902 = vpop.f32.mrf.mxu0
      %2903 = vmatprep.mubr.f32.mxu0 0.0
      %2904 = vmatmul.mubr.f32.gmra.mxu0 %v1116
      %v2905 = vpop.f32.mrf.mxu0
      %v2906 = vadd.f32 0.0, %v2905
      %v2907 = vpop.f32.mrf.mxu0
      %2908 = vmatprep.mubr.f32.mxu0 0.0
      %2909 = vmatmul.mubr.f32.gmra.mxu0 %v1118
      %v2910 = vpop.f32.mrf.mxu0
      %v2911 = vadd.f32 0.0, %v2910
      %v2912 = vpop.f32.mrf.mxu0
      %2913 = vmatprep.mubr.f32.mxu0 0.0
      %2914 = vmatmul.mubr.f32.gmra.mxu0 %v1120
      %v2915 = vpop.f32.mrf.mxu0
      %v2916 = vadd.f32 0.0, %v2915
      %v2917 = vpop.f32.mrf.mxu0
      %2918 = vmatprep.mubr.f32.mxu0 0.0
      %2919 = vmatmul.mubr.f32.gmra.mxu0 %v1122
      %v2920 = vpop.f32.mrf.mxu0
      %v2921 = vadd.f32 0.0, %v2920
      %v2922 = vpop.f32.mrf.mxu0
      %2923 = vmatprep.mubr.f32.mxu0 0.0
      %2924 = vmatmul.mubr.f32.gmra.mxu0 %v1124
      %v2925 = vpop.f32.mrf.mxu0
      %v2926 = vadd.f32 0.0, %v2925
      %v2927 = vpop.f32.mrf.mxu0
      %2928 = vmatprep.mubr.f32.mxu0 0.0
      %2929 = vmatmul.mubr.f32.gmra.mxu0 %v1126
      %v2930 = vpop.f32.mrf.mxu0
      %v2931 = vadd.f32 0.0, %v2930
      %v2932 = vpop.f32.mrf.mxu0
      %2933 = vmatprep.mubr.f32.mxu0 0.0
      %2934 = vmatmul.mubr.f32.gmra.mxu0 %v1128
      %v2935 = vpop.f32.mrf.mxu0
      %v2936 = vadd.f32 0.0, %v2935
      %v2937 = vpop.f32.mrf.mxu0
      %2938 = vmatprep.mubr.f32.mxu0 0.0
      %2939 = vmatmul.mubr.f32.gmra.mxu0 %v1130
      %v2940 = vpop.f32.mrf.mxu0
      %v2941 = vadd.f32 0.0, %v2940
      %v2942 = vpop.f32.mrf.mxu0
      %2943 = vmatprep.mubr.f32.mxu0 0.0
      %2944 = vmatmul.mubr.f32.gmra.mxu0 %v1132
      %v2945 = vpop.f32.mrf.mxu0
      %v2946 = vadd.f32 0.0, %v2945
      %v2947 = vpop.f32.mrf.mxu0
      %2948 = vmatprep.mubr.f32.mxu0 0.0
      %2949 = vmatmul.mubr.f32.gmra.mxu0 %v1134
      %v2950 = vpop.f32.mrf.mxu0
      %v2951 = vadd.f32 0.0, %v2950
      %v2952 = vpop.f32.mrf.mxu0
      %2953 = vmatprep.mubr.f32.mxu0 0.0
      %2954 = vmatmul.mubr.f32.gmra.mxu0 %v1136
      %v2955 = vpop.f32.mrf.mxu0
      %v2956 = vadd.f32 0.0, %v2955
      %v2957 = vpop.f32.mrf.mxu0
      %2958 = vmatprep.mubr.f32.mxu0 0.0
      %2959 = vmatmul.mubr.f32.gmra.mxu0 %v1138
      %v2960 = vpop.f32.mrf.mxu0
      %v2961 = vadd.f32 0.0, %v2960
      %v2962 = vpop.f32.mrf.mxu0
      %2963 = vmatprep.mubr.f32.mxu0 0.0
      %2964 = vmatmul.mubr.f32.gmra.mxu0 %v1140
      %v2965 = vpop.f32.mrf.mxu0
      %v2966 = vadd.f32 0.0, %v2965
      %v2967 = vpop.f32.mrf.mxu0
      %2968 = vmatprep.mubr.f32.mxu0 0.0
      %2969 = vmatmul.mubr.f32.gmra.mxu0 %v1142
      %v2970 = vpop.f32.mrf.mxu0
      %v2971 = vadd.f32 0.0, %v2970
      %v2972 = vpop.f32.mrf.mxu0
      %2973 = vmatprep.mubr.f32.mxu0 0.0
      %2974 = vmatmul.mubr.f32.gmra.mxu0 %v1144
      %v2975 = vpop.f32.mrf.mxu0
      %v2976 = vadd.f32 0.0, %v2975
      %v2977 = vpop.f32.mrf.mxu0
      %2978 = vmatprep.mubr.f32.mxu0 0.0
      %2979 = vmatmul.mubr.f32.gmra.mxu0 %v1146
      %v2980 = vpop.f32.mrf.mxu0
      %v2981 = vadd.f32 0.0, %v2980
      %v2982 = vpop.f32.mrf.mxu0
      %2983 = vmatprep.mubr.f32.mxu0 0.0
      %2984 = vmatmul.mubr.f32.gmra.mxu0 %v1148
      %v2985 = vpop.f32.mrf.mxu0
      %v2986 = vadd.f32 0.0, %v2985
      %v2987 = vpop.f32.mrf.mxu0
      %2988 = vmatprep.mubr.f32.mxu0 0.0
      %2989 = vmatmul.mubr.f32.gmra.mxu0 %v1150
      %v2990 = vpop.f32.mrf.mxu0
      %v2991 = vadd.f32 0.0, %v2990
      %v2992 = vpop.f32.mrf.mxu0
      %2993 = vmatprep.mubr.f32.mxu0 0.0
      %2994 = vmatmul.mubr.f32.gmra.mxu0 %v1152
      %v2995 = vpop.f32.mrf.mxu0
      %v2996 = vadd.f32 0.0, %v2995
      %v2997 = vpop.f32.mrf.mxu0
      %2998 = vmatprep.mubr.f32.mxu0 0.0
      %2999 = vmatmul.mubr.f32.gmra.mxu0 %v1154
      %v3000 = vpop.f32.mrf.mxu0
      %v3001 = vadd.f32 0.0, %v3000
      %v3002 = vpop.f32.mrf.mxu0
      %3003 = vmatprep.mubr.f32.mxu0 0.0
      %3004 = vmatmul.mubr.f32.gmra.mxu0 %v1156
      %v3005 = vpop.f32.mrf.mxu0
      %v3006 = vadd.f32 0.0, %v3005
      %v3007 = vpop.f32.mrf.mxu0
      %3008 = vmatprep.mubr.f32.mxu0 0.0
      %3009 = vmatmul.mubr.f32.gmra.mxu0 %v1977
      %v3010 = vpop.f32.mrf.mxu0
      %v3011 = vadd.f32 0.0, %v3010
      %v3012 = vpop.f32.mrf.mxu0
      %3013 = vmatprep.mubr.f32.mxu0 0.0
      %3014 = vmatmul.mubr.f32.gmra.mxu0 %v1979
      %v3015 = vpop.f32.mrf.mxu0
      %v3016 = vadd.f32 0.0, %v3015
      %v3017 = vpop.f32.mrf.mxu0
      %3018 = vmatprep.mubr.f32.mxu0 0.0
      %3019 = vmatmul.mubr.f32.gmra.mxu0 %v2800
      %v3020 = vpop.f32.mrf.mxu0
      %v3021 = vadd.f32 0.0, %v3020
      %v3022 = vpop.f32.mrf.mxu0
      %3023 = vmatprep.mubr.f32.mxu0 0.0
      %3024 = vmatmul.mubr.f32.gmra.mxu0 %v2802
      %v3025 = vpop.f32.mrf.mxu0
      %v3026 = vadd.f32 0.0, %v3025
      %v3027 = vpop.f32.mrf.mxu0
      %3028 = vdwg.mxu0
      %v3029 = vadd.f32 %v2754, %v2871
      %v3030 = vadd.f32 %v2755, %v2876
      %v3031 = vadd.f32 %v2756, %v2881
      %v3032 = vadd.f32 %v2757, %v2886
      %v3033 = vadd.f32 %v2758, %v2891
      %v3034 = vadd.f32 %v2759, %v2896
      %v3035 = vadd.f32 %v2760, %v2901
      %v3036 = vadd.f32 %v2761, %v2906
      %v3037 = vadd.f32 %v2762, %v2911
      %v3038 = vadd.f32 %v2763, %v2916
      %v3039 = vadd.f32 %v2764, %v2921
      %v3040 = vadd.f32 %v2765, %v2926
      %v3041 = vadd.f32 %v2766, %v2931
      %v3042 = vadd.f32 %v2767, %v2936
      %v3043 = vadd.f32 %v2768, %v2941
      %v3044 = vadd.f32 %v2769, %v2946
      %v3045 = vadd.f32 %v2770, %v2951
      %v3046 = vadd.f32 %v2771, %v2956
      %v3047 = vadd.f32 %v2772, %v2961
      %v3048 = vadd.f32 %v2773, %v2966
      %v3049 = vadd.f32 %v2774, %v2971
      %v3050 = vadd.f32 %v2775, %v2976
      %v3051 = vadd.f32 %v2776, %v2981
      %v3052 = vadd.f32 %v2777, %v2986
      %v3053 = vadd.f32 %v2778, %v2991
      %v3054 = vadd.f32 %v2779, %v2996
      %v3055 = vadd.f32 %v2780, %v3001
      %v3056 = vadd.f32 %v2781, %v3006
      %v3057 = vadd.f32 %v2782, %v3011
      %v3058 = vadd.f32 %v2783, %v3016
      %v3059 = vadd.f32 %v2784, %v3021
      %v3060 = vadd.f32 %v2785, %v3026
      %v3061 = vld [vmem:[%s2] sm:$0x1]
      %v3063 = vlaneseq
      %v3064 = vshrl.u32 %v3063, 7
      %v3065 = vsub.s32 0, %v3064
      %v3066 = vrot.slane %v3061, %v3065
      %v3068 = vadd.f32 %v3029, %v3066
      %v3069 = vadd.f32 %v3030, %v3066
      %v3070 = vadd.f32 %v3031, %v3066
      %v3071 = vadd.f32 %v3032, %v3066
      %v3072 = vadd.f32 %v3033, %v3066
      %v3073 = vadd.f32 %v3034, %v3066
      %v3074 = vadd.f32 %v3035, %v3066
      %v3075 = vadd.f32 %v3036, %v3066
      %v3076 = vadd.f32 %v3037, %v3066
      %v3077 = vadd.f32 %v3038, %v3066
      %v3078 = vadd.f32 %v3039, %v3066
      %v3079 = vadd.f32 %v3040, %v3066
      %v3080 = vadd.f32 %v3041, %v3066
      %v3081 = vadd.f32 %v3042, %v3066
      %v3082 = vadd.f32 %v3043, %v3066
      %v3083 = vadd.f32 %v3044, %v3066
      %v3084 = vadd.f32 %v3045, %v3066
      %v3085 = vadd.f32 %v3046, %v3066
      %v3086 = vadd.f32 %v3047, %v3066
      %v3087 = vadd.f32 %v3048, %v3066
      %v3088 = vadd.f32 %v3049, %v3066
      %v3089 = vadd.f32 %v3050, %v3066
      %v3090 = vadd.f32 %v3051, %v3066
      %v3091 = vadd.f32 %v3052, %v3066
      %v3092 = vadd.f32 %v3053, %v3066
      %v3093 = vadd.f32 %v3054, %v3066
      %v3094 = vadd.f32 %v3055, %v3066
      %v3095 = vadd.f32 %v3056, %v3066
      %v3096 = vadd.f32 %v3057, %v3066
      %v3097 = vadd.f32 %v3058, %v3066
      %v3098 = vadd.f32 %v3059, %v3066
      %v3099 = vadd.f32 %v3060, %v3066
      %v3100 = vmax.f32 %v3068, 0.0
      %v3101 = vmax.f32 %v3069, 0.0
      %v3102 = vmax.f32 %v3070, 0.0
      %v3103 = vmax.f32 %v3071, 0.0
      %v3104 = vmax.f32 %v3072, 0.0
      %v3105 = vmax.f32 %v3073, 0.0
      %v3106 = vmax.f32 %v3074, 0.0
      %v3107 = vmax.f32 %v3075, 0.0
      %v3108 = vmax.f32 %v3076, 0.0
      %v3109 = vmax.f32 %v3077, 0.0
      %v3110 = vmax.f32 %v3078, 0.0
      %v3111 = vmax.f32 %v3079, 0.0
      %v3112 = vmax.f32 %v3080, 0.0
      %v3113 = vmax.f32 %v3081, 0.0
      %v3114 = vmax.f32 %v3082, 0.0
      %v3115 = vmax.f32 %v3083, 0.0
      %v3116 = vmax.f32 %v3084, 0.0
      %v3117 = vmax.f32 %v3085, 0.0
      %v3118 = vmax.f32 %v3086, 0.0
      %v3119 = vmax.f32 %v3087, 0.0
      %v3120 = vmax.f32 %v3088, 0.0
      %v3121 = vmax.f32 %v3089, 0.0
      %v3122 = vmax.f32 %v3090, 0.0
      %v3123 = vmax.f32 %v3091, 0.0
      %v3124 = vmax.f32 %v3092, 0.0
      %v3125 = vmax.f32 %v3093, 0.0
      %v3126 = vmax.f32 %v3094, 0.0
      %v3127 = vmax.f32 %v3095, 0.0
      %v3128 = vmax.f32 %v3096, 0.0
      %v3129 = vmax.f32 %v3097, 0.0
      %v3130 = vmax.f32 %v3098, 0.0
      %v3131 = vmax.f32 %v3099, 0.0
      %v3132 = vld [vmem:[%s3] sm:$0xff]
      %v3133 = vld [vmem:[%s3 + $0x8] sm:$0xff]
      %v3134 = vld [vmem:[%s3 + $0x10] sm:$0xff]
      %v3135 = vld [vmem:[%s3 + $0x18] sm:$0xff]
      %v3136 = vld [vmem:[%s4] sm:$0x1]
      %v3138 = vlaneseq
      %v3139 = vshrl.u32 %v3138, 7
      %v3140 = vsub.s32 0, %v3139
      %v3141 = vrot.slane %v3136, %v3140
      %vm3143 = vcmask 261120
      %v3145 = vsel %vm3143, %v3100, 0
      %v3148 = vsel %vm3143, %v3101, 0
      %v3151 = vsel %vm3143, %v3102, 0
      %v3154 = vsel %vm3143, %v3103, 0
      %v3157 = vsel %vm3143, %v3104, 0
      %v3160 = vsel %vm3143, %v3105, 0
      %v3163 = vsel %vm3143, %v3106, 0
      %v3166 = vsel %vm3143, %v3107, 0
      %v3169 = vsel %vm3143, %v3108, 0
      %v3172 = vsel %vm3143, %v3109, 0
      %v3175 = vsel %vm3143, %v3110, 0
      %v3178 = vsel %vm3143, %v3111, 0
      %v3181 = vsel %vm3143, %v3112, 0
      %v3184 = vsel %vm3143, %v3113, 0
      %v3187 = vsel %vm3143, %v3114, 0
      %v3190 = vsel %vm3143, %v3115, 0
      %v3193 = vsel %vm3143, %v3116, 0
      %v3196 = vsel %vm3143, %v3117, 0
      %v3199 = vsel %vm3143, %v3118, 0
      %v3202 = vsel %vm3143, %v3119, 0
      %v3205 = vsel %vm3143, %v3120, 0
      %v3208 = vsel %vm3143, %v3121, 0
      %v3211 = vsel %vm3143, %v3122, 0
      %v3214 = vsel %vm3143, %v3123, 0
      %v3217 = vsel %vm3143, %v3124, 0
      %v3220 = vsel %vm3143, %v3125, 0
      %v3223 = vsel %vm3143, %v3126, 0
      %v3226 = vsel %vm3143, %v3127, 0
      %v3229 = vsel %vm3143, %v3128, 0
      %v3232 = vsel %vm3143, %v3129, 0
      %v3235 = vsel %vm3143, %v3130, 0
      %v3238 = vsel %vm3143, %v3131, 0
      %3240 = vmatprep.subr.mxu0 0.0
      %3241 = vmatpush1.msra.mxu0 0.0
      %3242 = vmatprep.subr.mxu0 0.0
      %3243 = vmatpush1.msra.mxu0 0.0
      %3244 = vmatprep.subr.mxu0 0.0
      %3245 = vmatpush1.msra.mxu0 0.0
      %3246 = vmatprep.subr.mxu0 0.0
      %3247 = vmatpush1.msra.mxu0 0.0
      %3248 = vmatprep.subr.mxu0 0.0
      %3249 = vmatpush1.msra.mxu0 0.0
      %3250 = vmatprep.subr.mxu0 0.0
      %3251 = vmatpush1.msra.mxu0 0.0
      %3252 = vmatprep.subr.mxu0 0.0
      %3253 = vmatpush1.msra.mxu0 0.0
      %3254 = vmatprep.subr.mxu0 0.0
      %3255 = vmatpush1.msra.mxu0 0.0
      %3256 = vmatprep.subr.mxu0 0.0
      %3257 = vmatpush1.msra.mxu0 0.0
      %3258 = vmatprep.subr.mxu0 0.0
      %3259 = vmatpush1.msra.mxu0 0.0
      %3260 = vmatprep.subr.mxu0 0.0
      %3261 = vmatpush1.msra.mxu0 0.0
      %3262 = vmatprep.subr.mxu0 0.0
      %3263 = vmatpush1.msra.mxu0 0.0
      %3264 = vmatprep.subr.mxu0 0.0
      %3265 = vmatpush1.msra.mxu0 %v3135
      %3266 = vmatprep.subr.mxu0 0.0
      %3267 = vmatpush1.msra.mxu0 %v3134
      %3268 = vmatprep.subr.mxu0 0.0
      %3269 = vmatpush1.msra.mxu0 %v3133
      %3270 = vmatprep.subr.mxu0 0.0
      %3271 = vmatpush1.msra.mxu0 %v3132
      %3272 = vmatprep.subr.mxu0 0.0
      %3273 = vmatpush2.msra.mxu0 0.0
      %3274 = vmatprep.subr.mxu0 0.0
      %3275 = vmatpush2.msra.mxu0 0.0
      %3276 = vmatprep.subr.mxu0 0.0
      %3277 = vmatpush2.msra.mxu0 0.0
      %3278 = vmatprep.subr.mxu0 0.0
      %3279 = vmatpush2.msra.mxu0 0.0
      %3280 = vmatprep.subr.mxu0 0.0
      %3281 = vmatpush2.msra.mxu0 0.0
      %3282 = vmatprep.subr.mxu0 0.0
      %3283 = vmatpush2.msra.mxu0 0.0
      %3284 = vmatprep.subr.mxu0 0.0
      %3285 = vmatpush2.msra.mxu0 0.0
      %3286 = vmatprep.subr.mxu0 0.0
      %3287 = vmatpush2.msra.mxu0 0.0
      %3288 = vmatprep.subr.mxu0 0.0
      %3289 = vmatpush2.msra.mxu0 0.0
      %3290 = vmatprep.subr.mxu0 0.0
      %3291 = vmatpush2.msra.mxu0 0.0
      %3292 = vmatprep.subr.mxu0 0.0
      %3293 = vmatpush2.msra.mxu0 0.0
      %3294 = vmatprep.subr.mxu0 0.0
      %3295 = vmatpush2.msra.mxu0 0.0
      %3296 = vmatprep.subr.mxu0 0.0
      %3297 = vmatpush2.msra.mxu0 0.0
      %3298 = vmatprep.subr.mxu0 0.0
      %3299 = vmatpush2.msra.mxu0 0.0
      %3300 = vmatprep.subr.mxu0 0.0
      %3301 = vmatpush2.msra.mxu0 0.0
      %3302 = vmatprep.subr.mxu0 0.0
      %3303 = vmatpush2.msra.mxu0 0.0
      %3304 = vmatprep.mubr.f32.mxu0 0.0
      %3305 = vmatmul.mubr.f32.gmra.mxu0 %v3145
      %v3306 = vpop.f32.mrf.mxu0
      %v3307 = vadd.f32 %v3141, %v3306
      %v3308 = vpop.f32.mrf.mxu0
      %3309 = vmatprep.mubr.f32.mxu0 0.0
      %3310 = vmatmul.mubr.f32.gmra.mxu0 %v3148
      %v3311 = vpop.f32.mrf.mxu0
      %v3312 = vadd.f32 %v3141, %v3311
      %v3313 = vpop.f32.mrf.mxu0
      %3314 = vmatprep.mubr.f32.mxu0 0.0
      %3315 = vmatmul.mubr.f32.gmra.mxu0 %v3151
      %v3316 = vpop.f32.mrf.mxu0
      %v3317 = vadd.f32 %v3141, %v3316
      %v3318 = vpop.f32.mrf.mxu0
      %3319 = vmatprep.mubr.f32.mxu0 0.0
      %3320 = vmatmul.mubr.f32.gmra.mxu0 %v3154
      %v3321 = vpop.f32.mrf.mxu0
      %v3322 = vadd.f32 %v3141, %v3321
      %v3323 = vpop.f32.mrf.mxu0
      %3324 = vmatprep.mubr.f32.mxu0 0.0
      %3325 = vmatmul.mubr.f32.gmra.mxu0 %v3157
      %v3326 = vpop.f32.mrf.mxu0
      %v3327 = vadd.f32 %v3141, %v3326
      %v3328 = vpop.f32.mrf.mxu0
      %3329 = vmatprep.mubr.f32.mxu0 0.0
      %3330 = vmatmul.mubr.f32.gmra.mxu0 %v3160
      %v3331 = vpop.f32.mrf.mxu0
      %v3332 = vadd.f32 %v3141, %v3331
      %v3333 = vpop.f32.mrf.mxu0
      %3334 = vmatprep.mubr.f32.mxu0 0.0
      %3335 = vmatmul.mubr.f32.gmra.mxu0 %v3163
      %v3336 = vpop.f32.mrf.mxu0
      %v3337 = vadd.f32 %v3141, %v3336
      %v3338 = vpop.f32.mrf.mxu0
      %3339 = vmatprep.mubr.f32.mxu0 0.0
      %3340 = vmatmul.mubr.f32.gmra.mxu0 %v3166
      %v3341 = vpop.f32.mrf.mxu0
      %v3342 = vadd.f32 %v3141, %v3341
      %v3343 = vpop.f32.mrf.mxu0
      %3344 = vmatprep.mubr.f32.mxu0 0.0
      %3345 = vmatmul.mubr.f32.gmra.mxu0 %v3169
      %v3346 = vpop.f32.mrf.mxu0
      %v3347 = vadd.f32 %v3141, %v3346
      %v3348 = vpop.f32.mrf.mxu0
      %3349 = vmatprep.mubr.f32.mxu0 0.0
      %3350 = vmatmul.mubr.f32.gmra.mxu0 %v3172
      %v3351 = vpop.f32.mrf.mxu0
      %v3352 = vadd.f32 %v3141, %v3351
      %v3353 = vpop.f32.mrf.mxu0
      %3354 = vmatprep.mubr.f32.mxu0 0.0
      %3355 = vmatmul.mubr.f32.gmra.mxu0 %v3175
      %v3356 = vpop.f32.mrf.mxu0
      %v3357 = vadd.f32 %v3141, %v3356
      %v3358 = vpop.f32.mrf.mxu0
      %3359 = vmatprep.mubr.f32.mxu0 0.0
      %3360 = vmatmul.mubr.f32.gmra.mxu0 %v3178
      %v3361 = vpop.f32.mrf.mxu0
      %v3362 = vadd.f32 %v3141, %v3361
      %v3363 = vpop.f32.mrf.mxu0
      %3364 = vmatprep.mubr.f32.mxu0 0.0
      %3365 = vmatmul.mubr.f32.gmra.mxu0 %v3181
      %v3366 = vpop.f32.mrf.mxu0
      %v3367 = vadd.f32 %v3141, %v3366
      %v3368 = vpop.f32.mrf.mxu0
      %3369 = vmatprep.mubr.f32.mxu0 0.0
      %3370 = vmatmul.mubr.f32.gmra.mxu0 %v3184
      %v3371 = vpop.f32.mrf.mxu0
      %v3372 = vadd.f32 %v3141, %v3371
      %v3373 = vpop.f32.mrf.mxu0
      %3374 = vmatprep.mubr.f32.mxu0 0.0
      %3375 = vmatmul.mubr.f32.gmra.mxu0 %v3187
      %v3376 = vpop.f32.mrf.mxu0
      %v3377 = vadd.f32 %v3141, %v3376
      %v3378 = vpop.f32.mrf.mxu0
      %3379 = vmatprep.mubr.f32.mxu0 0.0
      %3380 = vmatmul.mubr.f32.gmra.mxu0 %v3190
      %v3381 = vpop.f32.mrf.mxu0
      %v3382 = vadd.f32 %v3141, %v3381
      %v3383 = vpop.f32.mrf.mxu0
      %3384 = vmatprep.mubr.f32.mxu0 0.0
      %3385 = vmatmul.mubr.f32.gmra.mxu0 %v3193
      %v3386 = vpop.f32.mrf.mxu0
      %v3387 = vadd.f32 %v3141, %v3386
      %v3388 = vpop.f32.mrf.mxu0
      %3389 = vmatprep.mubr.f32.mxu0 0.0
      %3390 = vmatmul.mubr.f32.gmra.mxu0 %v3196
      %v3391 = vpop.f32.mrf.mxu0
      %v3392 = vadd.f32 %v3141, %v3391
      %v3393 = vpop.f32.mrf.mxu0
      %3394 = vmatprep.mubr.f32.mxu0 0.0
      %3395 = vmatmul.mubr.f32.gmra.mxu0 %v3199
      %v3396 = vpop.f32.mrf.mxu0
      %v3397 = vadd.f32 %v3141, %v3396
      %v3398 = vpop.f32.mrf.mxu0
      %3399 = vmatprep.mubr.f32.mxu0 0.0
      %3400 = vmatmul.mubr.f32.gmra.mxu0 %v3202
      %v3401 = vpop.f32.mrf.mxu0
      %v3402 = vadd.f32 %v3141, %v3401
      %v3403 = vpop.f32.mrf.mxu0
      %3404 = vmatprep.mubr.f32.mxu0 0.0
      %3405 = vmatmul.mubr.f32.gmra.mxu0 %v3205
      %v3406 = vpop.f32.mrf.mxu0
      %v3407 = vadd.f32 %v3141, %v3406
      %v3408 = vpop.f32.mrf.mxu0
      %3409 = vmatprep.mubr.f32.mxu0 0.0
      %3410 = vmatmul.mubr.f32.gmra.mxu0 %v3208
      %v3411 = vpop.f32.mrf.mxu0
      %v3412 = vadd.f32 %v3141, %v3411
      %v3413 = vpop.f32.mrf.mxu0
      %3414 = vmatprep.mubr.f32.mxu0 0.0
      %3415 = vmatmul.mubr.f32.gmra.mxu0 %v3211
      %v3416 = vpop.f32.mrf.mxu0
      %v3417 = vadd.f32 %v3141, %v3416
      %v3418 = vpop.f32.mrf.mxu0
      %3419 = vmatprep.mubr.f32.mxu0 0.0
      %3420 = vmatmul.mubr.f32.gmra.mxu0 %v3214
      %v3421 = vpop.f32.mrf.mxu0
      %v3422 = vadd.f32 %v3141, %v3421
      %v3423 = vpop.f32.mrf.mxu0
      %3424 = vmatprep.mubr.f32.mxu0 0.0
      %3425 = vmatmul.mubr.f32.gmra.mxu0 %v3217
      %v3426 = vpop.f32.mrf.mxu0
      %v3427 = vadd.f32 %v3141, %v3426
      %v3428 = vpop.f32.mrf.mxu0
      %3429 = vmatprep.mubr.f32.mxu0 0.0
      %3430 = vmatmul.mubr.f32.gmra.mxu0 %v3220
      %v3431 = vpop.f32.mrf.mxu0
      %v3432 = vadd.f32 %v3141, %v3431
      %v3433 = vpop.f32.mrf.mxu0
      %3434 = vmatprep.mubr.f32.mxu0 0.0
      %3435 = vmatmul.mubr.f32.gmra.mxu0 %v3223
      %v3436 = vpop.f32.mrf.mxu0
      %v3437 = vadd.f32 %v3141, %v3436
      %v3438 = vpop.f32.mrf.mxu0
      %3439 = vmatprep.mubr.f32.mxu0 0.0
      %3440 = vmatmul.mubr.f32.gmra.mxu0 %v3226
      %v3441 = vpop.f32.mrf.mxu0
      %v3442 = vadd.f32 %v3141, %v3441
      %v3443 = vpop.f32.mrf.mxu0
      %3444 = vmatprep.mubr.f32.mxu0 0.0
      %3445 = vmatmul.mubr.f32.gmra.mxu0 %v3229
      %v3446 = vpop.f32.mrf.mxu0
      %v3447 = vadd.f32 %v3141, %v3446
      %v3448 = vpop.f32.mrf.mxu0
      %3449 = vmatprep.mubr.f32.mxu0 0.0
      %3450 = vmatmul.mubr.f32.gmra.mxu0 %v3232
      %v3451 = vpop.f32.mrf.mxu0
      %v3452 = vadd.f32 %v3141, %v3451
      %v3453 = vpop.f32.mrf.mxu0
      %3454 = vmatprep.mubr.f32.mxu0 0.0
      %3455 = vmatmul.mubr.f32.gmra.mxu0 %v3235
      %v3456 = vpop.f32.mrf.mxu0
      %v3457 = vadd.f32 %v3141, %v3456
      %v3458 = vpop.f32.mrf.mxu0
      %3459 = vmatprep.mubr.f32.mxu0 0.0
      %3460 = vmatmul.mubr.f32.gmra.mxu0 %v3238
      %v3461 = vpop.f32.mrf.mxu0
      %v3462 = vadd.f32 %v3141, %v3461
      %v3463 = vpop.f32.mrf.mxu0
      %3464 = vdwg.mxu0
      %vm3465 = vcmask 23552
      %3466 = vst.msk [vmem:[%s224] sm:$0xff] %vm3465, %v3307
      %3467 = vst.msk [vmem:[%s224 + $0x8] sm:$0xff] %vm3465, %v3312
      %3468 = vst.msk [vmem:[%s224 + $0x10] sm:$0xff] %vm3465, %v3317
      %3469 = vst.msk [vmem:[%s224 + $0x18] sm:$0xff] %vm3465, %v3322
      %3470 = vst.msk [vmem:[%s224 + $0x20] sm:$0xff] %vm3465, %v3327
      %3471 = vst.msk [vmem:[%s224 + $0x28] sm:$0xff] %vm3465, %v3332
      %3472 = vst.msk [vmem:[%s224 + $0x30] sm:$0xff] %vm3465, %v3337
      %3473 = vst.msk [vmem:[%s224 + $0x38] sm:$0xff] %vm3465, %v3342
      %3474 = vst.msk [vmem:[%s224 + $0x40] sm:$0xff] %vm3465, %v3347
      %3475 = vst.msk [vmem:[%s224 + $0x48] sm:$0xff] %vm3465, %v3352
      %3476 = vst.msk [vmem:[%s224 + $0x50] sm:$0xff] %vm3465, %v3357
      %3477 = vst.msk [vmem:[%s224 + $0x58] sm:$0xff] %vm3465, %v3362
      %3478 = vst.msk [vmem:[%s224 + $0x60] sm:$0xff] %vm3465, %v3367
      %3479 = vst.msk [vmem:[%s224 + $0x68] sm:$0xff] %vm3465, %v3372
      %3480 = vst.msk [vmem:[%s224 + $0x70] sm:$0xff] %vm3465, %v3377
      %3481 = vst.msk [vmem:[%s224 + $0x78] sm:$0xff] %vm3465, %v3382
      %3482 = vst.msk [vmem:[%s224 + $0x80] sm:$0xff] %vm3465, %v3387
      %3483 = vst.msk [vmem:[%s224 + $0x88] sm:$0xff] %vm3465, %v3392
      %3484 = vst.msk [vmem:[%s224 + $0x90] sm:$0xff] %vm3465, %v3397
      %3485 = vst.msk [vmem:[%s224 + $0x98] sm:$0xff] %vm3465, %v3402
      %3486 = vst.msk [vmem:[%s224 + $0xa0] sm:$0xff] %vm3465, %v3407
      %3487 = vst.msk [vmem:[%s224 + $0xa8] sm:$0xff] %vm3465, %v3412
      %3488 = vst.msk [vmem:[%s224 + $0xb0] sm:$0xff] %vm3465, %v3417
      %3489 = vst.msk [vmem:[%s224 + $0xb8] sm:$0xff] %vm3465, %v3422
      %3490 = vst.msk [vmem:[%s224 + $0xc0] sm:$0xff] %vm3465, %v3427
      %3491 = vst.msk [vmem:[%s224 + $0xc8] sm:$0xff] %vm3465, %v3432
      %3492 = vst.msk [vmem:[%s224 + $0xd0] sm:$0xff] %vm3465, %v3437
      %3493 = vst.msk [vmem:[%s224 + $0xd8] sm:$0xff] %vm3465, %v3442
      %3494 = vst.msk [vmem:[%s224 + $0xe0] sm:$0xff] %vm3465, %v3447
      %3495 = vst.msk [vmem:[%s224 + $0xe8] sm:$0xff] %vm3465, %v3452
      %3496 = vst.msk [vmem:[%s224 + $0xf0] sm:$0xff] %vm3465, %v3457
      %3497 = vst.msk [vmem:[%s224 + $0xf8] sm:$0xff] %vm3465, %v3462
      %p3498 = scmp.lt.s32.totalorder %s16, 1
      %s3499 = scalar_select %p3498, %s16, 1
      %s3500 = smul.addr %s3499, 32
      %s3501 = smul.addr %s3500, 8
      %s3502 = scalar_lea.vmem %s5, %s3501
      // Predicated region
      $region41: #{_lambda_.5} parent=39 // pred_check
        %p3503 = pneg %p144
      $region42: #{_lambda_.5} parent=39 // pred_check_branch
        %3505 = sbr.rel (%p3503) target = $region44
      $region43: #{_lambda_.5} parent=39 // pred_region
        _
      $region44: #{_lambda_.5} parent=39 // pred_fallthru
        _
    $region40: #{_lambda_.5} parent=5 // pred_fallthru
      _
    %p3506 = scmp.le.s32.totalorder 2, %s11
    // Predicated region
    $region45: #{_lambda_.5} parent=5 // pred_check
      %p3507 = pneg %p3506
    $region46: #{_lambda_.5} parent=5 // pred_check_branch
      %3509 = sbr.rel (%p3507) target = $region48
    $region47: #{_lambda_.5} parent=5 // pred_region
      %s3510 = ssub.s32 %s11, 2
      // Predicated region
      $region49: #{_lambda_.5} parent=47 // pred_check
        %p3511 = pneg %p150
      $region50: #{_lambda_.5} parent=47 // pred_check_branch
        %3513 = sbr.rel (%p3511) target = $region52
      $region51: #{_lambda_.5} parent=47 // pred_region
        %p3514 = scmp.lt.s32.totalorder %s17, 1
        %s3515 = scalar_select %p3514, %s17, 1
        %s3516 = smul.addr %s3515, 32
        %s3517 = smul.addr %s3516, 8
        %s3518 = scalar_lea.vmem %s5, %s3517
      $region52: #{_lambda_.5} parent=47 // pred_fallthru
        _
    $region48: #{_lambda_.5} parent=5 // pred_fallthru
      _
  $region6: #{_lambda_.5} parent=0 // loop_footer
    %s15 = sadd.s32 1, %s11
  $region7: #{_lambda_.5} parent=0 // loop_footer_branch
    %10 = sbr.rel target = $region3
  $region8: #{_lambda_.5} parent=0 // loop_exit
    _

</llo_original>
